<compile_context>
chip_gen: v5e
topology: v5e:2x2
jax: 0.10.0
libtpu: 0.0.40
codegen_flags: <defaults>
</compile_context>

<pallas_src>
import functools
import math

import jax
import jax.numpy as jnp
import numpy as np
from jax import lax
from jax.experimental import pallas as pl
from jax.experimental.pallas import tpu as pltpu

_LANE = 128
_SUBLANE = 8
_VMEM_LIMIT_BYTES = 48 * 1024 * 1024    # explicit scoped-VMEM limit (v5e default: 16 MiB)
_TC_VMEM_BUDGET = 32 * 1024 * 1024      # budget used when choosing the time-chunk size


def _round_up(x, m):
    return (x + m - 1) // m * m


def _chunk_vmem_bytes(tc, bp, in_w, hp, w_bytes):
    """Rough per-kernel VMEM footprint for a time-chunk of size tc."""
    x_buf = 2 * tc * bp * in_w * w_bytes           # double-buffered x chunk
    out_buf = 2 * tc * bp * hp * 4                 # double-buffered output chunk
    gx = tc * bp * 4 * hp * 4                      # gates_x scratch (f32)
    weights = (in_w * 4 * hp + hp * 4 * hp + bp * 4 * hp) * w_bytes * 2
    small = 8 * bp * hp * 4                        # h0/c0 blocks, h/c scratch, hn/cn
    return x_buf + out_buf + gx + weights + small


def _pick_chunk(seq_len, bp, in_w, hp, w_bytes, budget=_TC_VMEM_BUDGET):
    """VMEM-budget-driven time-chunk size (power of two, >= 8, <= 128)."""
    cap = min(128, _round_up(max(seq_len, 1), _SUBLANE))
    tc, best = 8, 8
    while tc <= cap:
        if _chunk_vmem_bytes(tc, bp, in_w, hp, w_bytes) <= budget:
            best = tc
        tc *= 2
    return best


def _pad_gate_cols(w_t, H, Hp):
    """w_t: (rows, 4H), gates [i|f|g|o] concatenated along the last axis.
    Returns (rows, 4Hp): each gate block zero-padded from H to Hp lanes."""
    if Hp == H:
        return w_t
    blocks = [jnp.pad(w_t[:, k * H:(k + 1) * H], ((0, 0), (0, Hp - H)))
              for k in range(4)]
    return jnp.concatenate(blocks, axis=-1)


# ----------------------------------------------------------------------------
# Pallas kernel: one LSTM layer, all directions, whole (padded) sequence.
# grid = (num_directions, num_chunks). Direction axis "parallel" (independent
# recurrences; megacore-shardable on v7x), chunk axis "arbitrary" (h/c carried
# in VMEM scratch). Backward direction walks chunks via the index_map and
# in-chunk steps via index arithmetic, both in reverse.
# ----------------------------------------------------------------------------
def _lstm_layer_kernel(x_ref, wih_ref, whh_ref, b_ref, h0_ref, c0_ref,
                       out_ref, hn_ref, cn_ref,
                       gx_sc, h_sc, c_sc,
                       *, seq_len, unroll):
    d_idx = pl.program_id(0)          # direction: 0 = forward, 1 = backward
    c_idx = pl.program_id(1)          # chunk index along this direction's walk
    nc = pl.num_programs(1)

    tc, bp, in_w = x_ref.shape
    hp = h_sc.shape[-1]
    cdt = whh_ref.dtype               # compute dtype for the MXU dots

    @pl.when(c_idx == 0)
    def _():
        h_sc[...] = h0_ref[...]
        c_sc[...] = c0_ref[...]

    # Fused input projection for the whole chunk: one MXU-efficient
    # (tc*bp, in_w) @ (in_w, 4hp) matmul; result (+bias) lands in VMEM scratch.
    x2d = x_ref[...].reshape(tc * bp, in_w).astype(cdt)
    gx = jnp.dot(x2d, wih_ref[...], preferred_element_type=jnp.float32)
    gx_sc[...] = gx.reshape(tc, bp, 4 * hp) + b_ref[...]

    # Global time-block handled by this grid step (reverse walk for backward).
    time_block = c_idx + d_idx * (nc - 1 - 2 * c_idx)
    needs_mask = (seq_len % tc) != 0          # static: S was padded to mult of tc

    def _sigmoid(v):                          # one EUP op (tanh identity)
        return 0.5 * jnp.tanh(0.5 * v) + 0.5

    def step(i, carry):
        h, c = carry
        # forward walks local t = i, backward walks local t = tc-1-i
        t = i + d_idx * (tc - 1 - 2 * i)
        gates = (jnp.dot(h.astype(cdt), whh_ref[...],
                         preferred_element_type=jnp.float32) + gx_sc[t])
        i_g = _sigmoid(gates[:, 0 * hp:1 * hp])
        f_g = _sigmoid(gates[:, 1 * hp:2 * hp])
        g_g = jnp.tanh(gates[:, 2 * hp:3 * hp])
        o_g = _sigmoid(gates[:, 3 * hp:4 * hp])
        c_new = f_g * c + i_g * g_g
        h_new = o_g * jnp.tanh(c_new)
        if needs_mask:
            valid = (time_block * tc + t) < seq_len
            h_new = jnp.where(valid, h_new, h)
            c_new = jnp.where(valid, c_new, c)
        out_ref[t] = h_new
        return (h_new, c_new)

    h_fin, c_fin = lax.fori_loop(0, tc, step, (h_sc[...], c_sc[...]),
                                 unroll=unroll)
    h_sc[...] = h_fin
    c_sc[...] = c_fin
    # hn/cn blocks are resident across the chunk axis; writing every chunk is
    # a cheap VMEM store and avoids relying on last-chunk-only semantics.
    hn_ref[...] = h_fin
    cn_ref[...] = c_fin


def lstm_layer_pallas(x_p, wih_p, whh_p, b_p, h0_p, c0_p, *, seq_len, chunk):
    """One LSTM layer, all directions, over a padded sequence.

    x_p   (Sp, Bp, in_w)   padded layer input (in_w is a multiple of 128)
    wih_p (D, in_w, 4Hp)   W_ih^T (gate columns lane-padded)
    whh_p (D, Hp, 4Hp)     W_hh^T
    b_p   (D, Bp, 4Hp)     b_ih + b_hh, broadcast over sublanes
    h0_p, c0_p (D, Bp, Hp)
    returns out_p (Sp, Bp, D*Hp), hn_p (D, Bp, Hp), cn_p (D, Bp, Hp)
    """
    Sp, Bp, in_w = x_p.shape
    D = wih_p.shape[0]
    Hp = whh_p.shape[1]
    nc = Sp // chunk
    unroll = int(min(chunk, 8))

    def time_map(d, c):
        # forward (d=0): chunk c ; backward (d=1): chunk nc-1-c (reverse walk)
        return (c + d * (nc - 1 - 2 * c), 0, 0)

    def dir_map(d, c):
        return (d, 0, 0)

    def out_map(d, c):
        # direction d owns its Hp-wide lane block -> interleaved output layout
        return (c + d * (nc - 1 - 2 * c), 0, d)

    kernel = functools.partial(_lstm_layer_kernel, seq_len=seq_len, unroll=unroll)

    return pl.pallas_call(
        kernel,
        out_shape=(jax.ShapeDtypeStruct((Sp, Bp, D * Hp), jnp.float32),
                   jax.ShapeDtypeStruct((D, Bp, Hp), jnp.float32),
                   jax.ShapeDtypeStruct((D, Bp, Hp), jnp.float32)),
        grid_spec=pltpu.PrefetchScalarGridSpec(
            num_scalar_prefetch=0,
            grid=(D, nc),
            in_specs=[
                pl.BlockSpec((chunk, Bp, in_w), time_map),      # x chunk
                pl.BlockSpec((None, in_w, 4 * Hp), dir_map),    # W_ih^T (resident)
                pl.BlockSpec((None, Hp, 4 * Hp), dir_map),      # W_hh^T (resident)
                pl.BlockSpec((None, Bp, 4 * Hp), dir_map),      # bias
                pl.BlockSpec((None, Bp, Hp), dir_map),          # h0
                pl.BlockSpec((None, Bp, Hp), dir_map),          # c0
            ],
            out_specs=[
                pl.BlockSpec((chunk, Bp, Hp), out_map),         # lane-dense slab
                pl.BlockSpec((None, Bp, Hp), dir_map),          # h_n
                pl.BlockSpec((None, Bp, Hp), dir_map),          # c_n
            ],
            scratch_shapes=[pltpu.VMEM((chunk, Bp, 4 * Hp), jnp.float32),  # gates_x
                            pltpu.VMEM((Bp, Hp), jnp.float32),             # h carry
                            pltpu.VMEM((Bp, Hp), jnp.float32)],            # c carry
        ),
        compiler_params=pltpu.CompilerParams(
            dimension_semantics=("parallel", "arbitrary"),
            vmem_limit_bytes=_VMEM_LIMIT_BYTES),
    )(x_p, wih_p, whh_p, b_p, h0_p, c0_p)


def _build_layer_weights(layer_params, *, H, Hp, Bp, in_rows, first_layer,
                         prev_num_dir, weight_dtype):
    """Returns wih_p (D, in_rows, 4Hp), whh_p (D, Hp, 4Hp), b_p (D, Bp, 4Hp)."""
    wihs, whhs, bs = [], [], []
    for p in layer_params:
        w_ih_t = jnp.transpose(p["w_ih"]).astype(jnp.float32)      # (in_size, 4H)
        if first_layer:
            wih = _pad_gate_cols(w_ih_t, H, Hp)                    # (I, 4Hp)
            wih = jnp.pad(wih, ((0, in_rows - wih.shape[0]), (0, 0)))
        else:
            # previous layer output layout: prev_num_dir blocks of Hp lanes,
            # first H lanes of each block valid (padded lanes provably zero)
            blocks = []
            for dprev in range(prev_num_dir):
                blk = _pad_gate_cols(w_ih_t[dprev * H:(dprev + 1) * H], H, Hp)
                blocks.append(jnp.pad(blk, ((0, Hp - H), (0, 0))))
            wih = jnp.concatenate(blocks, axis=0)                  # (prev_D*Hp, 4Hp)
        whh = jnp.pad(_pad_gate_cols(jnp.transpose(p["w_hh"]), H, Hp),
                      ((0, Hp - H), (0, 0)))                       # (Hp, 4Hp)
        b = _pad_gate_cols((p["b_ih"] + p["b_hh"]).reshape(1, 4 * H), H, Hp)
        b = jnp.broadcast_to(b, (Bp, 4 * Hp))
        wihs.append(wih)
        whhs.append(whh)
        bs.append(b)
    return (jnp.stack(wihs).astype(weight_dtype),
            jnp.stack(whhs).astype(weight_dtype),
            jnp.stack(bs).astype(jnp.float32))


# ----------------------------------------------------------------------------
# LSTMFrame.forward (uniform-length, dense-tensor path)
# ----------------------------------------------------------------------------
def lstm_frame_forward(x, params, num_layers, num_directions,
                       batch_first=False, init_state=None,
                       weight_dtype=jnp.float32):
    if batch_first:
        x = jnp.transpose(x, (1, 0, 2))                   # -> (S, B, I)
    x = x.astype(jnp.float32)
    S, B, I = x.shape
    D = num_directions
    H = params[0][0]["w_hh"].shape[1]
    Hp = _round_up(H, _LANE)       # lane-dense hidden (padded lanes stay zero)
    Bp = _round_up(B, _SUBLANE)    # sublane-dense batch (padded rows discarded)
    Ip = _round_up(I, _LANE)       # lane-dense layer-0 input

    # budget-driven time-chunk size (shared by all layers); pad S to a multiple
    w_bytes = jnp.dtype(weight_dtype).itemsize
    max_in_w = max([Ip] + ([D * Hp] if num_layers > 1 else []))
    Tc = _pick_chunk(S, Bp, max_in_w, Hp, w_bytes)
    Sp = _round_up(S, Tc)

    if init_state is None:
        zeros = jnp.zeros((num_layers * D, B, H), jnp.float32)
        init_state = (zeros, zeros)
    init_h, init_c = init_state

    # pad once; stay in the padded (Sp, Bp, lane-padded) layout across layers
    layer_in = jnp.pad(x, ((0, Sp - S), (0, Bp - B), (0, Ip - I)))
    if weight_dtype != jnp.float32:
        layer_in = layer_in.astype(weight_dtype)

    last_h, last_c = [], []
    out_p = None
    for layer_idx in range(num_layers):
        # TODO(synk): dropout > 0 between layers not implemented (identity).
        base = layer_idx * D
        h0_p = jnp.pad(init_h[base:base + D].astype(jnp.float32),
                       ((0, 0), (0, Bp - B), (0, Hp - H)))
        c0_p = jnp.pad(init_c[base:base + D].astype(jnp.float32),
                       ((0, 0), (0, Bp - B), (0, Hp - H)))
        wih_p, whh_p, b_p = _build_layer_weights(
            params[layer_idx], H=H, Hp=Hp, Bp=Bp,
            in_rows=Ip, first_layer=(layer_idx == 0),
            prev_num_dir=D, weight_dtype=weight_dtype)
        out_p, hn_p, cn_p = lstm_layer_pallas(
            layer_in, wih_p, whh_p, b_p, h0_p, c0_p, seq_len=S, chunk=Tc)
        for d in range(D):
            last_h.append(hn_p[d, :B, :H])
            last_c.append(cn_p[d, :B, :H])
        layer_in = out_p if weight_dtype == jnp.float32 else out_p.astype(weight_dtype)

    # unpad + direction interleave: (Sp, Bp, D*Hp) -> (S, B, D*H)
    output = jnp.concatenate(
        [out_p[:S, :B, d * Hp:d * Hp + H] for d in range(D)], axis=-1)
    if batch_first:
        output = jnp.transpose(output, (1, 0, 2))
    return output, (jnp.stack(last_h, axis=0), jnp.stack(last_c, axis=0))


# ----------------------------------------------------------------------------
# Pure-JAX reference (lax.scan LSTMCell) for validation
# ----------------------------------------------------------------------------
def _lstm_layer_ref(x, w_ih, w_hh, b_ih, b_hh, h0, c0, reverse=False):
    H = h0.shape[-1]
    if reverse:
        x = x[::-1]
    hi = jax.lax.Precision.HIGHEST

    def step(carry, x_t):
        h, c = carry
        gates = (jnp.dot(x_t, w_ih.T, precision=hi) + b_ih
                 + jnp.dot(h, w_hh.T, precision=hi) + b_hh)
        i = jax.nn.sigmoid(gates[:, 0 * H:1 * H])
        f = jax.nn.sigmoid(gates[:, 1 * H:2 * H])
        g = jnp.tanh(gates[:, 2 * H:3 * H])
        o = jax.nn.sigmoid(gates[:, 3 * H:4 * H])
        c = f * c + i * g
        h = o * jnp.tanh(c)
        return (h, c), h

    (h_n, c_n), out = lax.scan(step, (h0, c0), x)
    if reverse:
        out = out[::-1]
    return out, h_n, c_n


def lstm_frame_forward_ref(x, params, num_layers, num_directions,
                           batch_first=False):
    if batch_first:
        x = jnp.transpose(x, (1, 0, 2))
    S, B, _ = x.shape
    H = params[0][0]["w_hh"].shape[1]
    last_h, last_c = [], []
    layer_out = x
    for l in range(num_layers):
        layer_in = layer_out
        dir_outs = []
        for d in range(num_directions):
            p = params[l][d]
            out, hn, cn = _lstm_layer_ref(
                layer_in, p["w_ih"], p["w_hh"], p["b_ih"], p["b_hh"],
                jnp.zeros((B, H), jnp.float32), jnp.zeros((B, H), jnp.float32),
                reverse=(d == 1))
            dir_outs.append(out)
            last_h.append(hn)
            last_c.append(cn)
        if num_directions == 2:
            layer_out = jnp.stack(dir_outs, axis=2).reshape(S, B, -1)
        else:
            layer_out = dir_outs[0]
    output = layer_out
    if batch_first:
        output = jnp.transpose(output, (1, 0, 2))
    return output, (jnp.stack(last_h, 0), jnp.stack(last_c, 0))


# ----------------------------------------------------------------------------
# Deterministic parameter init (nn.LSTMCell default: U(-1/sqrt(H), 1/sqrt(H)))
# ----------------------------------------------------------------------------
def init_params(key, num_layers, num_directions, input_size, hidden_size):
    stdv = 1.0 / math.sqrt(hidden_size)
    params = []
    for l in range(num_layers):
        in_size = input_size if l == 0 else hidden_size * num_directions
        layer = []
        for d in range(num_directions):
            key, k1, k2, k3, k4 = jax.random.split(key, 5)
            layer.append({
                "w_ih": jax.random.uniform(k1, (4 * hidden_size, in_size),
                                           jnp.float32, -stdv, stdv),
                "w_hh": jax.random.uniform(k2, (4 * hidden_size, hidden_size),
                                           jnp.float32, -stdv, stdv),
                "b_ih": jax.random.uniform(k3, (4 * hidden_size,),
                                           jnp.float32, -stdv, stdv),
                "b_hh": jax.random.uniform(k4, (4 * hidden_size,),
                                           jnp.float32, -stdv, stdv),
            })
        params.append(layer)
    return params


if __name__ == "__main__":
    def run_case(seq, batch, inp, hidden, layers, bidirectional, batch_first, key):
        nd = 2 if bidirectional else 1
        key, kx = jax.random.split(key)
        shape = (batch, seq, inp) if batch_first else (seq, batch, inp)
        x = jax.random.normal(kx, shape, jnp.float32)
        params = init_params(key, layers, nd, inp, hidden)

        fwd = functools.partial(lstm_frame_forward, num_layers=layers,
                                num_directions=nd, batch_first=batch_first)
        out, (h_n, c_n) = jax.jit(fwd)(x, params)
        jax.block_until_ready((out, h_n, c_n))

        exp_out = ((batch, seq, nd * hidden) if batch_first
                   else (seq, batch, nd * hidden))
        assert out.shape == exp_out
        assert h_n.shape == (layers * nd, batch, hidden)
        assert c_n.shape == (layers * nd, batch, hidden)

        out_r, (h_r, c_r) = lstm_frame_forward_ref(
            x, params, layers, nd, batch_first=batch_first)
        np.testing.assert_allclose(np.asarray(out), np.asarray(out_r),
                                   rtol=1e-4, atol=1e-4)
        np.testing.assert_allclose(np.asarray(h_n), np.asarray(h_r),
                                   rtol=1e-4, atol=1e-4)
        np.testing.assert_allclose(np.asarray(c_n), np.asarray(c_r),
                                   rtol=1e-4, atol=1e-4)

    key = jax.random.PRNGKey(0)
    k1, k2 = jax.random.split(key)
    # bidirectional, 2 layers, seq divides the time chunk
    run_case(seq=8, batch=2, inp=16, hidden=32, layers=2,
             bidirectional=True, batch_first=False, key=k1)
    # unidirectional, batch_first, odd seq length (exercises S-padding + masking)
    run_case(seq=5, batch=3, inp=12, hidden=24, layers=1,
             bidirectional=False, batch_first=True, key=k2)

    print("KERNEL_OK")
</pallas_src>

<mosaic_0001>
module attributes {stable_mosaic.version = 11 : i64} {
  func.func @_lstm_layer_kernel(%arg0: i32, %arg1: i32, %arg2: memref<8x8x128xf32, #tpu.memory_space<vmem>>, %arg3: memref<1x128x512xf32, #tpu.memory_space<vmem>>, %arg4: memref<1x128x512xf32, #tpu.memory_space<vmem>>, %arg5: memref<1x8x512xf32, #tpu.memory_space<vmem>>, %arg6: memref<1x8x128xf32, #tpu.memory_space<vmem>>, %arg7: memref<1x8x128xf32, #tpu.memory_space<vmem>>, %arg8: memref<8x8x128xf32, #tpu.memory_space<vmem>>, %arg9: memref<1x8x128xf32, #tpu.memory_space<vmem>>, %arg10: memref<1x8x128xf32, #tpu.memory_space<vmem>>, %arg11: memref<8x8x512xf32, #tpu.memory_space<vmem>>, %arg12: memref<8x128xf32, #tpu.memory_space<vmem>>, %arg13: memref<8x128xf32, #tpu.memory_space<vmem>>) attributes {dimension_semantics = [#tpu.dimension_semantics<parallel>, #tpu.dimension_semantics<arbitrary>], iteration_bounds = array<i64: 2, 1>, scalar_prefetch = 0 : i64, scratch_operands = 3 : i64, tpu.core_type = #tpu.core_type<tc>, window_params = [{transform_indices = @transform_0, window_bounds = array<i64: 8, 8, 128>}, {transform_indices = @transform_1, window_bounds = array<i64: 1, 128, 512>}, {transform_indices = @transform_2, window_bounds = array<i64: 1, 128, 512>}, {transform_indices = @transform_3, window_bounds = array<i64: 1, 8, 512>}, {transform_indices = @transform_4, window_bounds = array<i64: 1, 8, 128>}, {transform_indices = @transform_5, window_bounds = array<i64: 1, 8, 128>}, {transform_indices = @transform_6, window_bounds = array<i64: 8, 8, 128>}, {transform_indices = @transform_7, window_bounds = array<i64: 1, 8, 128>}, {transform_indices = @transform_8, window_bounds = array<i64: 1, 8, 128>}]} {
    %c0_i32 = arith.constant 0 : i32
    %0 = arith.cmpi eq, %arg1, %c0_i32 : i32
    %1 = arith.extui %0 : i1 to i32
    %c0_i32_0 = arith.constant 0 : i32
    %2 = arith.cmpi ne, %1, %c0_i32_0 : i32
    scf.if %2 {
      %c0_179 = arith.constant 0 : index
      %c0_180 = arith.constant 0 : index
      %c0_181 = arith.constant 0 : index
      %393 = vector.load %arg6[%c0_179, %c0_180, %c0_181] : memref<1x8x128xf32, #tpu.memory_space<vmem>>, vector<1x8x128xf32>
      %394 = vector.shape_cast %393 : vector<1x8x128xf32> to vector<8x128xf32>
      %c0_182 = arith.constant 0 : index
      %c0_183 = arith.constant 0 : index
      %395 = vector.load %arg12[%c0_182, %c0_183] : memref<8x128xf32, #tpu.memory_space<vmem>>, vector<8x128xf32>
      tpu.vector_store %arg12[%c0_182, %c0_183], %394 {strides = array<i32>} : memref<8x128xf32, #tpu.memory_space<vmem>>, vector<8x128xf32>,
      %c0_184 = arith.constant 0 : index
      %c0_185 = arith.constant 0 : index
      %c0_186 = arith.constant 0 : index
      %396 = vector.load %arg7[%c0_184, %c0_185, %c0_186] : memref<1x8x128xf32, #tpu.memory_space<vmem>>, vector<1x8x128xf32>
      %397 = vector.shape_cast %396 : vector<1x8x128xf32> to vector<8x128xf32>
      %c0_187 = arith.constant 0 : index
      %c0_188 = arith.constant 0 : index
      %398 = vector.load %arg13[%c0_187, %c0_188] : memref<8x128xf32, #tpu.memory_space<vmem>>, vector<8x128xf32>
      tpu.vector_store %arg13[%c0_187, %c0_188], %397 {strides = array<i32>} : memref<8x128xf32, #tpu.memory_space<vmem>>, vector<8x128xf32>,
    } else {
    }
    %c0 = arith.constant 0 : index
    %c0_1 = arith.constant 0 : index
    %c0_2 = arith.constant 0 : index
    %3 = vector.load %arg2[%c0, %c0_1, %c0_2] : memref<8x8x128xf32, #tpu.memory_space<vmem>>, vector<8x8x128xf32>
    %4 = vector.shape_cast %3 : vector<8x8x128xf32> to vector<64x128xf32>
    %c0_3 = arith.constant 0 : index
    %c0_4 = arith.constant 0 : index
    %c0_5 = arith.constant 0 : index
    %5 = vector.load %arg3[%c0_3, %c0_4, %c0_5] : memref<1x128x512xf32, #tpu.memory_space<vmem>>, vector<1x128x512xf32>
    %6 = vector.shape_cast %5 : vector<1x128x512xf32> to vector<128x512xf32>
    %cst = arith.constant dense<0.000000e+00> : vector<64x512xf32>
    %7 = tpu.matmul %4, %6, %cst {dimension_numbers = #tpu.dot_dimension_numbers<[1], [0], [0], [1], [0, 0, 1, 1], [], []>} : vector<64x128xf32>, vector<128x512xf32>, vector<64x512xf32> -> vector<64x512xf32>
    %8 = vector.shape_cast %7 : vector<64x512xf32> to vector<8x8x512xf32>
    %c0_6 = arith.constant 0 : index
    %c0_7 = arith.constant 0 : index
    %c0_8 = arith.constant 0 : index
    %9 = vector.load %arg5[%c0_6, %c0_7, %c0_8] : memref<1x8x512xf32, #tpu.memory_space<vmem>>, vector<1x8x512xf32>
    %10 = vector.shape_cast %9 : vector<1x8x512xf32> to vector<8x512xf32>
    %11 = vector.shape_cast %10 : vector<8x512xf32> to vector<1x8x512xf32>
    %12 = vector.broadcast %11 : vector<1x8x512xf32> to vector<8x8x512xf32>
    %13 = arith.addf %8, %12 : vector<8x8x512xf32>
    %c0_9 = arith.constant 0 : index
    %c0_10 = arith.constant 0 : index
    %c0_11 = arith.constant 0 : index
    %14 = vector.load %arg11[%c0_9, %c0_10, %c0_11] : memref<8x8x512xf32, #tpu.memory_space<vmem>>, vector<8x8x512xf32>
    tpu.vector_store %arg11[%c0_9, %c0_10, %c0_11], %13 {strides = array<i32>} : memref<8x8x512xf32, #tpu.memory_space<vmem>>, vector<8x8x512xf32>,
    %c0_12 = arith.constant 0 : index
    %c0_13 = arith.constant 0 : index
    %15 = vector.load %arg12[%c0_12, %c0_13] : memref<8x128xf32, #tpu.memory_space<vmem>>, vector<8x128xf32>
    %c0_14 = arith.constant 0 : index
    %c0_15 = arith.constant 0 : index
    %16 = vector.load %arg13[%c0_14, %c0_15] : memref<8x128xf32, #tpu.memory_space<vmem>>, vector<8x128xf32>
    %c0_i32_16 = arith.constant 0 : i32
    %c2_i32 = arith.constant 2 : i32
    %17 = arith.muli %c2_i32, %c0_i32_16 : i32
    %c7_i32 = arith.constant 7 : i32
    %18 = arith.subi %c7_i32, %17 : i32
    %19 = arith.muli %arg0, %18 : i32
    %20 = arith.addi %c0_i32_16, %19 : i32
    %c0_17 = arith.constant 0 : index
    %c0_18 = arith.constant 0 : index
    %c0_19 = arith.constant 0 : index
    %21 = vector.load %arg4[%c0_17, %c0_18, %c0_19] : memref<1x128x512xf32, #tpu.memory_space<vmem>>, vector<1x128x512xf32>
    %22 = vector.shape_cast %21 : vector<1x128x512xf32> to vector<128x512xf32>
    %cst_20 = arith.constant dense<0.000000e+00> : vector<8x512xf32>
    %23 = tpu.matmul %15, %22, %cst_20 {dimension_numbers = #tpu.dot_dimension_numbers<[1], [0], [0], [1], [0, 0, 1, 1], [], []>} : vector<8x128xf32>, vector<128x512xf32>, vector<8x512xf32> -> vector<8x512xf32>
    %24 = arith.index_cast %20 : i32 to index
    %c0_21 = arith.constant 0 : index
    %c0_22 = arith.constant 0 : index
    %25 = vector.load %arg11[%24, %c0_21, %c0_22] : memref<8x8x512xf32, #tpu.memory_space<vmem>>, vector<1x8x512xf32>
    %26 = vector.shape_cast %25 : vector<1x8x512xf32> to vector<8x512xf32>
    %27 = arith.addf %23, %26 : vector<8x512xf32>
    %28 = vector.extract_strided_slice %27 {offsets = [0, 0], sizes = [8, 128], strides = [1, 1]} : vector<8x512xf32> to vector<8x128xf32>
    %cst_23 = arith.constant 5.000000e-01 : f32
    %29 = vector.broadcast %cst_23 : f32 to vector<8x128xf32>
    %30 = arith.mulf %29, %28 : vector<8x128xf32>
    %31 = math.tanh %30 : vector<8x128xf32>
    %cst_24 = arith.constant 5.000000e-01 : f32
    %32 = vector.broadcast %cst_24 : f32 to vector<8x128xf32>
    %33 = arith.mulf %32, %31 : vector<8x128xf32>
    %cst_25 = arith.constant 5.000000e-01 : f32
    %34 = vector.broadcast %cst_25 : f32 to vector<8x128xf32>
    %35 = arith.addf %33, %34 : vector<8x128xf32>
    %36 = vector.extract_strided_slice %27 {offsets = [0, 128], sizes = [8, 128], strides = [1, 1]} : vector<8x512xf32> to vector<8x128xf32>
    %cst_26 = arith.constant 5.000000e-01 : f32
    %37 = vector.broadcast %cst_26 : f32 to vector<8x128xf32>
    %38 = arith.mulf %37, %36 : vector<8x128xf32>
    %39 = math.tanh %38 : vector<8x128xf32>
    %cst_27 = arith.constant 5.000000e-01 : f32
    %40 = vector.broadcast %cst_27 : f32 to vector<8x128xf32>
    %41 = arith.mulf %40, %39 : vector<8x128xf32>
    %cst_28 = arith.constant 5.000000e-01 : f32
    %42 = vector.broadcast %cst_28 : f32 to vector<8x128xf32>
    %43 = arith.addf %41, %42 : vector<8x128xf32>
    %44 = vector.extract_strided_slice %27 {offsets = [0, 256], sizes = [8, 128], strides = [1, 1]} : vector<8x512xf32> to vector<8x128xf32>
    %45 = math.tanh %44 : vector<8x128xf32>
    %46 = vector.extract_strided_slice %27 {offsets = [0, 384], sizes = [8, 128], strides = [1, 1]} : vector<8x512xf32> to vector<8x128xf32>
    %cst_29 = arith.constant 5.000000e-01 : f32
    %47 = vector.broadcast %cst_29 : f32 to vector<8x128xf32>
    %48 = arith.mulf %47, %46 : vector<8x128xf32>
    %49 = math.tanh %48 : vector<8x128xf32>
    %cst_30 = arith.constant 5.000000e-01 : f32
    %50 = vector.broadcast %cst_30 : f32 to vector<8x128xf32>
    %51 = arith.mulf %50, %49 : vector<8x128xf32>
    %cst_31 = arith.constant 5.000000e-01 : f32
    %52 = vector.broadcast %cst_31 : f32 to vector<8x128xf32>
    %53 = arith.addf %51, %52 : vector<8x128xf32>
    %54 = arith.mulf %43, %16 : vector<8x128xf32>
    %55 = arith.mulf %35, %45 : vector<8x128xf32>
    %56 = arith.addf %54, %55 : vector<8x128xf32>
    %57 = math.tanh %56 : vector<8x128xf32>
    %58 = arith.mulf %53, %57 : vector<8x128xf32>
    %59 = arith.index_cast %20 : i32 to index
    %c0_32 = arith.constant 0 : index
    %c0_33 = arith.constant 0 : index
    %60 = vector.load %arg8[%59, %c0_32, %c0_33] : memref<8x8x128xf32, #tpu.memory_space<vmem>>, vector<1x8x128xf32>
    %61 = vector.shape_cast %60 : vector<1x8x128xf32> to vector<8x128xf32>
    %62 = vector.shape_cast %58 : vector<8x128xf32> to vector<1x8x128xf32>
    tpu.vector_store %arg8[%59, %c0_32, %c0_33], %62 {strides = array<i32>} : memref<8x8x128xf32, #tpu.memory_space<vmem>>, vector<1x8x128xf32>,
    %c1_i32 = arith.constant 1 : i32
    %c2_i32_34 = arith.constant 2 : i32
    %63 = arith.muli %c2_i32_34, %c1_i32 : i32
    %c7_i32_35 = arith.constant 7 : i32
    %64 = arith.subi %c7_i32_35, %63 : i32
    %65 = arith.muli %arg0, %64 : i32
    %66 = arith.addi %c1_i32, %65 : i32
    %c0_36 = arith.constant 0 : index
    %c0_37 = arith.constant 0 : index
    %c0_38 = arith.constant 0 : index
    %67 = vector.load %arg4[%c0_36, %c0_37, %c0_38] : memref<1x128x512xf32, #tpu.memory_space<vmem>>, vector<1x128x512xf32>
    %68 = vector.shape_cast %67 : vector<1x128x512xf32> to vector<128x512xf32>
    %cst_39 = arith.constant dense<0.000000e+00> : vector<8x512xf32>
    %69 = tpu.matmul %58, %68, %cst_39 {dimension_numbers = #tpu.dot_dimension_numbers<[1], [0], [0], [1], [0, 0, 1, 1], [], []>} : vector<8x128xf32>, vector<128x512xf32>, vector<8x512xf32> -> vector<8x512xf32>
    %70 = arith.index_cast %66 : i32 to index
    %c0_40 = arith.constant 0 : index
    %c0_41 = arith.constant 0 : index
    %71 = vector.load %arg11[%70, %c0_40, %c0_41] : memref<8x8x512xf32, #tpu.memory_space<vmem>>, vector<1x8x512xf32>
    %72 = vector.shape_cast %71 : vector<1x8x512xf32> to vector<8x512xf32>
    %73 = arith.addf %69, %72 : vector<8x512xf32>
    %74 = vector.extract_strided_slice %73 {offsets = [0, 0], sizes = [8, 128], strides = [1, 1]} : vector<8x512xf32> to vector<8x128xf32>
    %cst_42 = arith.constant 5.000000e-01 : f32
    %75 = vector.broadcast %cst_42 : f32 to vector<8x128xf32>
    %76 = arith.mulf %75, %74 : vector<8x128xf32>
    %77 = math.tanh %76 : vector<8x128xf32>
    %cst_43 = arith.constant 5.000000e-01 : f32
    %78 = vector.broadcast %cst_43 : f32 to vector<8x128xf32>
    %79 = arith.mulf %78, %77 : vector<8x128xf32>
    %cst_44 = arith.constant 5.000000e-01 : f32
    %80 = vector.broadcast %cst_44 : f32 to vector<8x128xf32>
    %81 = arith.addf %79, %80 : vector<8x128xf32>
    %82 = vector.extract_strided_slice %73 {offsets = [0, 128], sizes = [8, 128], strides = [1, 1]} : vector<8x512xf32> to vector<8x128xf32>
    %cst_45 = arith.constant 5.000000e-01 : f32
    %83 = vector.broadcast %cst_45 : f32 to vector<8x128xf32>
    %84 = arith.mulf %83, %82 : vector<8x128xf32>
    %85 = math.tanh %84 : vector<8x128xf32>
    %cst_46 = arith.constant 5.000000e-01 : f32
    %86 = vector.broadcast %cst_46 : f32 to vector<8x128xf32>
    %87 = arith.mulf %86, %85 : vector<8x128xf32>
    %cst_47 = arith.constant 5.000000e-01 : f32
    %88 = vector.broadcast %cst_47 : f32 to vector<8x128xf32>
    %89 = arith.addf %87, %88 : vector<8x128xf32>
    %90 = vector.extract_strided_slice %73 {offsets = [0, 256], sizes = [8, 128], strides = [1, 1]} : vector<8x512xf32> to vector<8x128xf32>
    %91 = math.tanh %90 : vector<8x128xf32>
    %92 = vector.extract_strided_slice %73 {offsets = [0, 384], sizes = [8, 128], strides = [1, 1]} : vector<8x512xf32> to vector<8x128xf32>
    %cst_48 = arith.constant 5.000000e-01 : f32
    %93 = vector.broadcast %cst_48 : f32 to vector<8x128xf32>
    %94 = arith.mulf %93, %92 : vector<8x128xf32>
    %95 = math.tanh %94 : vector<8x128xf32>
    %cst_49 = arith.constant 5.000000e-01 : f32
    %96 = vector.broadcast %cst_49 : f32 to vector<8x128xf32>
    %97 = arith.mulf %96, %95 : vector<8x128xf32>
    %cst_50 = arith.constant 5.000000e-01 : f32
    %98 = vector.broadcast %cst_50 : f32 to vector<8x128xf32>
    %99 = arith.addf %97, %98 : vector<8x128xf32>
    %100 = arith.mulf %89, %56 : vector<8x128xf32>
    %101 = arith.mulf %81, %91 : vector<8x128xf32>
    %102 = arith.addf %100, %101 : vector<8x128xf32>
    %103 = math.tanh %102 : vector<8x128xf32>
    %104 = arith.mulf %99, %103 : vector<8x128xf32>
    %105 = arith.index_cast %66 : i32 to index
    %c0_51 = arith.constant 0 : index
    %c0_52 = arith.constant 0 : index
    %106 = vector.load %arg8[%105, %c0_51, %c0_52] : memref<8x8x128xf32, #tpu.memory_space<vmem>>, vector<1x8x128xf32>
    %107 = vector.shape_cast %106 : vector<1x8x128xf32> to vector<8x128xf32>
    %108 = vector.shape_cast %104 : vector<8x128xf32> to vector<1x8x128xf32>
    tpu.vector_store %arg8[%105, %c0_51, %c0_52], %108 {strides = array<i32>} : memref<8x8x128xf32, #tpu.memory_space<vmem>>, vector<1x8x128xf32>,
    %c2_i32_53 = arith.constant 2 : i32
    %c2_i32_54 = arith.constant 2 : i32
    %109 = arith.muli %c2_i32_54, %c2_i32_53 : i32
    %c7_i32_55 = arith.constant 7 : i32
    %110 = arith.subi %c7_i32_55, %109 : i32
    %111 = arith.muli %arg0, %110 : i32
    %112 = arith.addi %c2_i32_53, %111 : i32
    %c0_56 = arith.constant 0 : index
    %c0_57 = arith.constant 0 : index
    %c0_58 = arith.constant 0 : index
    %113 = vector.load %arg4[%c0_56, %c0_57, %c0_58] : memref<1x128x512xf32, #tpu.memory_space<vmem>>, vector<1x128x512xf32>
    %114 = vector.shape_cast %113 : vector<1x128x512xf32> to vector<128x512xf32>
    %cst_59 = arith.constant dense<0.000000e+00> : vector<8x512xf32>
    %115 = tpu.matmul %104, %114, %cst_59 {dimension_numbers = #tpu.dot_dimension_numbers<[1], [0], [0], [1], [0, 0, 1, 1], [], []>} : vector<8x128xf32>, vector<128x512xf32>, vector<8x512xf32> -> vector<8x512xf32>
    %116 = arith.index_cast %112 : i32 to index
    %c0_60 = arith.constant 0 : index
    %c0_61 = arith.constant 0 : index
    %117 = vector.load %arg11[%116, %c0_60, %c0_61] : memref<8x8x512xf32, #tpu.memory_space<vmem>>, vector<1x8x512xf32>
    %118 = vector.shape_cast %117 : vector<1x8x512xf32> to vector<8x512xf32>
    %119 = arith.addf %115, %118 : vector<8x512xf32>
    %120 = vector.extract_strided_slice %119 {offsets = [0, 0], sizes = [8, 128], strides = [1, 1]} : vector<8x512xf32> to vector<8x128xf32>
    %cst_62 = arith.constant 5.000000e-01 : f32
    %121 = vector.broadcast %cst_62 : f32 to vector<8x128xf32>
    %122 = arith.mulf %121, %120 : vector<8x128xf32>
    %123 = math.tanh %122 : vector<8x128xf32>
    %cst_63 = arith.constant 5.000000e-01 : f32
    %124 = vector.broadcast %cst_63 : f32 to vector<8x128xf32>
    %125 = arith.mulf %124, %123 : vector<8x128xf32>
    %cst_64 = arith.constant 5.000000e-01 : f32
    %126 = vector.broadcast %cst_64 : f32 to vector<8x128xf32>
    %127 = arith.addf %125, %126 : vector<8x128xf32>
    %128 = vector.extract_strided_slice %119 {offsets = [0, 128], sizes = [8, 128], strides = [1, 1]} : vector<8x512xf32> to vector<8x128xf32>
    %cst_65 = arith.constant 5.000000e-01 : f32
    %129 = vector.broadcast %cst_65 : f32 to vector<8x128xf32>
    %130 = arith.mulf %129, %128 : vector<8x128xf32>
    %131 = math.tanh %130 : vector<8x128xf32>
    %cst_66 = arith.constant 5.000000e-01 : f32
    %132 = vector.broadcast %cst_66 : f32 to vector<8x128xf32>
    %133 = arith.mulf %132, %131 : vector<8x128xf32>
    %cst_67 = arith.constant 5.000000e-01 : f32
    %134 = vector.broadcast %cst_67 : f32 to vector<8x128xf32>
    %135 = arith.addf %133, %134 : vector<8x128xf32>
    %136 = vector.extract_strided_slice %119 {offsets = [0, 256], sizes = [8, 128], strides = [1, 1]} : vector<8x512xf32> to vector<8x128xf32>
    %137 = math.tanh %136 : vector<8x128xf32>
    %138 = vector.extract_strided_slice %119 {offsets = [0, 384], sizes = [8, 128], strides = [1, 1]} : vector<8x512xf32> to vector<8x128xf32>
    %cst_68 = arith.constant 5.000000e-01 : f32
    %139 = vector.broadcast %cst_68 : f32 to vector<8x128xf32>
    %140 = arith.mulf %139, %138 : vector<8x128xf32>
    %141 = math.tanh %140 : vector<8x128xf32>
    %cst_69 = arith.constant 5.000000e-01 : f32
    %142 = vector.broadcast %cst_69 : f32 to vector<8x128xf32>
    %143 = arith.mulf %142, %141 : vector<8x128xf32>
    %cst_70 = arith.constant 5.000000e-01 : f32
    %144 = vector.broadcast %cst_70 : f32 to vector<8x128xf32>
    %145 = arith.addf %143, %144 : vector<8x128xf32>
    %146 = arith.mulf %135, %102 : vector<8x128xf32>
    %147 = arith.mulf %127, %137 : vector<8x128xf32>
    %148 = arith.addf %146, %147 : vector<8x128xf32>
    %149 = math.tanh %148 : vector<8x128xf32>
    %150 = arith.mulf %145, %149 : vector<8x128xf32>
    %151 = arith.index_cast %112 : i32 to index
    %c0_71 = arith.constant 0 : index
    %c0_72 = arith.constant 0 : index
    %152 = vector.load %arg8[%151, %c0_71, %c0_72] : memref<8x8x128xf32, #tpu.memory_space<vmem>>, vector<1x8x128xf32>
    %153 = vector.shape_cast %152 : vector<1x8x128xf32> to vector<8x128xf32>
    %154 = vector.shape_cast %150 : vector<8x128xf32> to vector<1x8x128xf32>
    tpu.vector_store %arg8[%151, %c0_71, %c0_72], %154 {strides = array<i32>} : memref<8x8x128xf32, #tpu.memory_space<vmem>>, vector<1x8x128xf32>,
    %c3_i32 = arith.constant 3 : i32
    %c2_i32_73 = arith.constant 2 : i32
    %155 = arith.muli %c2_i32_73, %c3_i32 : i32
    %c7_i32_74 = arith.constant 7 : i32
    %156 = arith.subi %c7_i32_74, %155 : i32
    %157 = arith.muli %arg0, %156 : i32
    %158 = arith.addi %c3_i32, %157 : i32
    %c0_75 = arith.constant 0 : index
    %c0_76 = arith.constant 0 : index
    %c0_77 = arith.constant 0 : index
    %159 = vector.load %arg4[%c0_75, %c0_76, %c0_77] : memref<1x128x512xf32, #tpu.memory_space<vmem>>, vector<1x128x512xf32>
    %160 = vector.shape_cast %159 : vector<1x128x512xf32> to vector<128x512xf32>
    %cst_78 = arith.constant dense<0.000000e+00> : vector<8x512xf32>
    %161 = tpu.matmul %150, %160, %cst_78 {dimension_numbers = #tpu.dot_dimension_numbers<[1], [0], [0], [1], [0, 0, 1, 1], [], []>} : vector<8x128xf32>, vector<128x512xf32>, vector<8x512xf32> -> vector<8x512xf32>
    %162 = arith.index_cast %158 : i32 to index
    %c0_79 = arith.constant 0 : index
    %c0_80 = arith.constant 0 : index
    %163 = vector.load %arg11[%162, %c0_79, %c0_80] : memref<8x8x512xf32, #tpu.memory_space<vmem>>, vector<1x8x512xf32>
    %164 = vector.shape_cast %163 : vector<1x8x512xf32> to vector<8x512xf32>
    %165 = arith.addf %161, %164 : vector<8x512xf32>
    %166 = vector.extract_strided_slice %165 {offsets = [0, 0], sizes = [8, 128], strides = [1, 1]} : vector<8x512xf32> to vector<8x128xf32>
    %cst_81 = arith.constant 5.000000e-01 : f32
    %167 = vector.broadcast %cst_81 : f32 to vector<8x128xf32>
    %168 = arith.mulf %167, %166 : vector<8x128xf32>
    %169 = math.tanh %168 : vector<8x128xf32>
    %cst_82 = arith.constant 5.000000e-01 : f32
    %170 = vector.broadcast %cst_82 : f32 to vector<8x128xf32>
    %171 = arith.mulf %170, %169 : vector<8x128xf32>
    %cst_83 = arith.constant 5.000000e-01 : f32
    %172 = vector.broadcast %cst_83 : f32 to vector<8x128xf32>
    %173 = arith.addf %171, %172 : vector<8x128xf32>
    %174 = vector.extract_strided_slice %165 {offsets = [0, 128], sizes = [8, 128], strides = [1, 1]} : vector<8x512xf32> to vector<8x128xf32>
    %cst_84 = arith.constant 5.000000e-01 : f32
    %175 = vector.broadcast %cst_84 : f32 to vector<8x128xf32>
    %176 = arith.mulf %175, %174 : vector<8x128xf32>
    %177 = math.tanh %176 : vector<8x128xf32>
    %cst_85 = arith.constant 5.000000e-01 : f32
    %178 = vector.broadcast %cst_85 : f32 to vector<8x128xf32>
    %179 = arith.mulf %178, %177 : vector<8x128xf32>
    %cst_86 = arith.constant 5.000000e-01 : f32
    %180 = vector.broadcast %cst_86 : f32 to vector<8x128xf32>
    %181 = arith.addf %179, %180 : vector<8x128xf32>
    %182 = vector.extract_strided_slice %165 {offsets = [0, 256], sizes = [8, 128], strides = [1, 1]} : vector<8x512xf32> to vector<8x128xf32>
    %183 = math.tanh %182 : vector<8x128xf32>
    %184 = vector.extract_strided_slice %165 {offsets = [0, 384], sizes = [8, 128], strides = [1, 1]} : vector<8x512xf32> to vector<8x128xf32>
    %cst_87 = arith.constant 5.000000e-01 : f32
    %185 = vector.broadcast %cst_87 : f32 to vector<8x128xf32>
    %186 = arith.mulf %185, %184 : vector<8x128xf32>
    %187 = math.tanh %186 : vector<8x128xf32>
    %cst_88 = arith.constant 5.000000e-01 : f32
    %188 = vector.broadcast %cst_88 : f32 to vector<8x128xf32>
    %189 = arith.mulf %188, %187 : vector<8x128xf32>
    %cst_89 = arith.constant 5.000000e-01 : f32
    %190 = vector.broadcast %cst_89 : f32 to vector<8x128xf32>
    %191 = arith.addf %189, %190 : vector<8x128xf32>
    %192 = arith.mulf %181, %148 : vector<8x128xf32>
    %193 = arith.mulf %173, %183 : vector<8x128xf32>
    %194 = arith.addf %192, %193 : vector<8x128xf32>
    %195 = math.tanh %194 : vector<8x128xf32>
    %196 = arith.mulf %191, %195 : vector<8x128xf32>
    %197 = arith.index_cast %158 : i32 to index
    %c0_90 = arith.constant 0 : index
    %c0_91 = arith.constant 0 : index
    %198 = vector.load %arg8[%197, %c0_90, %c0_91] : memref<8x8x128xf32, #tpu.memory_space<vmem>>, vector<1x8x128xf32>
    %199 = vector.shape_cast %198 : vector<1x8x128xf32> to vector<8x128xf32>
    %200 = vector.shape_cast %196 : vector<8x128xf32> to vector<1x8x128xf32>
    tpu.vector_store %arg8[%197, %c0_90, %c0_91], %200 {strides = array<i32>} : memref<8x8x128xf32, #tpu.memory_space<vmem>>, vector<1x8x128xf32>,
    %c4_i32 = arith.constant 4 : i32
    %c2_i32_92 = arith.constant 2 : i32
    %201 = arith.muli %c2_i32_92, %c4_i32 : i32
    %c7_i32_93 = arith.constant 7 : i32
    %202 = arith.subi %c7_i32_93, %201 : i32
    %203 = arith.muli %arg0, %202 : i32
    %204 = arith.addi %c4_i32, %203 : i32
    %c0_94 = arith.constant 0 : index
    %c0_95 = arith.constant 0 : index
    %c0_96 = arith.constant 0 : index
    %205 = vector.load %arg4[%c0_94, %c0_95, %c0_96] : memref<1x128x512xf32, #tpu.memory_space<vmem>>, vector<1x128x512xf32>
    %206 = vector.shape_cast %205 : vector<1x128x512xf32> to vector<128x512xf32>
    %cst_97 = arith.constant dense<0.000000e+00> : vector<8x512xf32>
    %207 = tpu.matmul %196, %206, %cst_97 {dimension_numbers = #tpu.dot_dimension_numbers<[1], [0], [0], [1], [0, 0, 1, 1], [], []>} : vector<8x128xf32>, vector<128x512xf32>, vector<8x512xf32> -> vector<8x512xf32>
    %208 = arith.index_cast %204 : i32 to index
    %c0_98 = arith.constant 0 : index
    %c0_99 = arith.constant 0 : index
    %209 = vector.load %arg11[%208, %c0_98, %c0_99] : memref<8x8x512xf32, #tpu.memory_space<vmem>>, vector<1x8x512xf32>
    %210 = vector.shape_cast %209 : vector<1x8x512xf32> to vector<8x512xf32>
    %211 = arith.addf %207, %210 : vector<8x512xf32>
    %212 = vector.extract_strided_slice %211 {offsets = [0, 0], sizes = [8, 128], strides = [1, 1]} : vector<8x512xf32> to vector<8x128xf32>
    %cst_100 = arith.constant 5.000000e-01 : f32
    %213 = vector.broadcast %cst_100 : f32 to vector<8x128xf32>
    %214 = arith.mulf %213, %212 : vector<8x128xf32>
    %215 = math.tanh %214 : vector<8x128xf32>
    %cst_101 = arith.constant 5.000000e-01 : f32
    %216 = vector.broadcast %cst_101 : f32 to vector<8x128xf32>
    %217 = arith.mulf %216, %215 : vector<8x128xf32>
    %cst_102 = arith.constant 5.000000e-01 : f32
    %218 = vector.broadcast %cst_102 : f32 to vector<8x128xf32>
    %219 = arith.addf %217, %218 : vector<8x128xf32>
    %220 = vector.extract_strided_slice %211 {offsets = [0, 128], sizes = [8, 128], strides = [1, 1]} : vector<8x512xf32> to vector<8x128xf32>
    %cst_103 = arith.constant 5.000000e-01 : f32
    %221 = vector.broadcast %cst_103 : f32 to vector<8x128xf32>
    %222 = arith.mulf %221, %220 : vector<8x128xf32>
    %223 = math.tanh %222 : vector<8x128xf32>
    %cst_104 = arith.constant 5.000000e-01 : f32
    %224 = vector.broadcast %cst_104 : f32 to vector<8x128xf32>
    %225 = arith.mulf %224, %223 : vector<8x128xf32>
    %cst_105 = arith.constant 5.000000e-01 : f32
    %226 = vector.broadcast %cst_105 : f32 to vector<8x128xf32>
    %227 = arith.addf %225, %226 : vector<8x128xf32>
    %228 = vector.extract_strided_slice %211 {offsets = [0, 256], sizes = [8, 128], strides = [1, 1]} : vector<8x512xf32> to vector<8x128xf32>
    %229 = math.tanh %228 : vector<8x128xf32>
    %230 = vector.extract_strided_slice %211 {offsets = [0, 384], sizes = [8, 128], strides = [1, 1]} : vector<8x512xf32> to vector<8x128xf32>
    %cst_106 = arith.constant 5.000000e-01 : f32
    %231 = vector.broadcast %cst_106 : f32 to vector<8x128xf32>
    %232 = arith.mulf %231, %230 : vector<8x128xf32>
    %233 = math.tanh %232 : vector<8x128xf32>
    %cst_107 = arith.constant 5.000000e-01 : f32
    %234 = vector.broadcast %cst_107 : f32 to vector<8x128xf32>
    %235 = arith.mulf %234, %233 : vector<8x128xf32>
    %cst_108 = arith.constant 5.000000e-01 : f32
    %236 = vector.broadcast %cst_108 : f32 to vector<8x128xf32>
    %237 = arith.addf %235, %236 : vector<8x128xf32>
    %238 = arith.mulf %227, %194 : vector<8x128xf32>
    %239 = arith.mulf %219, %229 : vector<8x128xf32>
    %240 = arith.addf %238, %239 : vector<8x128xf32>
    %241 = math.tanh %240 : vector<8x128xf32>
    %242 = arith.mulf %237, %241 : vector<8x128xf32>
    %243 = arith.index_cast %204 : i32 to index
    %c0_109 = arith.constant 0 : index
    %c0_110 = arith.constant 0 : index
    %244 = vector.load %arg8[%243, %c0_109, %c0_110] : memref<8x8x128xf32, #tpu.memory_space<vmem>>, vector<1x8x128xf32>
    %245 = vector.shape_cast %244 : vector<1x8x128xf32> to vector<8x128xf32>
    %246 = vector.shape_cast %242 : vector<8x128xf32> to vector<1x8x128xf32>
    tpu.vector_store %arg8[%243, %c0_109, %c0_110], %246 {strides = array<i32>} : memref<8x8x128xf32, #tpu.memory_space<vmem>>, vector<1x8x128xf32>,
    %c5_i32 = arith.constant 5 : i32
    %c2_i32_111 = arith.constant 2 : i32
    %247 = arith.muli %c2_i32_111, %c5_i32 : i32
    %c7_i32_112 = arith.constant 7 : i32
    %248 = arith.subi %c7_i32_112, %247 : i32
    %249 = arith.muli %arg0, %248 : i32
    %250 = arith.addi %c5_i32, %249 : i32
    %c0_113 = arith.constant 0 : index
    %c0_114 = arith.constant 0 : index
    %c0_115 = arith.constant 0 : index
    %251 = vector.load %arg4[%c0_113, %c0_114, %c0_115] : memref<1x128x512xf32, #tpu.memory_space<vmem>>, vector<1x128x512xf32>
    %252 = vector.shape_cast %251 : vector<1x128x512xf32> to vector<128x512xf32>
    %cst_116 = arith.constant dense<0.000000e+00> : vector<8x512xf32>
    %253 = tpu.matmul %242, %252, %cst_116 {dimension_numbers = #tpu.dot_dimension_numbers<[1], [0], [0], [1], [0, 0, 1, 1], [], []>} : vector<8x128xf32>, vector<128x512xf32>, vector<8x512xf32> -> vector<8x512xf32>
    %254 = arith.index_cast %250 : i32 to index
    %c0_117 = arith.constant 0 : index
    %c0_118 = arith.constant 0 : index
    %255 = vector.load %arg11[%254, %c0_117, %c0_118] : memref<8x8x512xf32, #tpu.memory_space<vmem>>, vector<1x8x512xf32>
    %256 = vector.shape_cast %255 : vector<1x8x512xf32> to vector<8x512xf32>
    %257 = arith.addf %253, %256 : vector<8x512xf32>
    %258 = vector.extract_strided_slice %257 {offsets = [0, 0], sizes = [8, 128], strides = [1, 1]} : vector<8x512xf32> to vector<8x128xf32>
    %cst_119 = arith.constant 5.000000e-01 : f32
    %259 = vector.broadcast %cst_119 : f32 to vector<8x128xf32>
    %260 = arith.mulf %259, %258 : vector<8x128xf32>
    %261 = math.tanh %260 : vector<8x128xf32>
    %cst_120 = arith.constant 5.000000e-01 : f32
    %262 = vector.broadcast %cst_120 : f32 to vector<8x128xf32>
    %263 = arith.mulf %262, %261 : vector<8x128xf32>
    %cst_121 = arith.constant 5.000000e-01 : f32
    %264 = vector.broadcast %cst_121 : f32 to vector<8x128xf32>
    %265 = arith.addf %263, %264 : vector<8x128xf32>
    %266 = vector.extract_strided_slice %257 {offsets = [0, 128], sizes = [8, 128], strides = [1, 1]} : vector<8x512xf32> to vector<8x128xf32>
    %cst_122 = arith.constant 5.000000e-01 : f32
    %267 = vector.broadcast %cst_122 : f32 to vector<8x128xf32>
    %268 = arith.mulf %267, %266 : vector<8x128xf32>
    %269 = math.tanh %268 : vector<8x128xf32>
    %cst_123 = arith.constant 5.000000e-01 : f32
    %270 = vector.broadcast %cst_123 : f32 to vector<8x128xf32>
    %271 = arith.mulf %270, %269 : vector<8x128xf32>
    %cst_124 = arith.constant 5.000000e-01 : f32
    %272 = vector.broadcast %cst_124 : f32 to vector<8x128xf32>
    %273 = arith.addf %271, %272 : vector<8x128xf32>
    %274 = vector.extract_strided_slice %257 {offsets = [0, 256], sizes = [8, 128], strides = [1, 1]} : vector<8x512xf32> to vector<8x128xf32>
    %275 = math.tanh %274 : vector<8x128xf32>
    %276 = vector.extract_strided_slice %257 {offsets = [0, 384], sizes = [8, 128], strides = [1, 1]} : vector<8x512xf32> to vector<8x128xf32>
    %cst_125 = arith.constant 5.000000e-01 : f32
    %277 = vector.broadcast %cst_125 : f32 to vector<8x128xf32>
    %278 = arith.mulf %277, %276 : vector<8x128xf32>
    %279 = math.tanh %278 : vector<8x128xf32>
    %cst_126 = arith.constant 5.000000e-01 : f32
    %280 = vector.broadcast %cst_126 : f32 to vector<8x128xf32>
    %281 = arith.mulf %280, %279 : vector<8x128xf32>
    %cst_127 = arith.constant 5.000000e-01 : f32
    %282 = vector.broadcast %cst_127 : f32 to vector<8x128xf32>
    %283 = arith.addf %281, %282 : vector<8x128xf32>
    %284 = arith.mulf %273, %240 : vector<8x128xf32>
    %285 = arith.mulf %265, %275 : vector<8x128xf32>
    %286 = arith.addf %284, %285 : vector<8x128xf32>
    %287 = math.tanh %286 : vector<8x128xf32>
    %288 = arith.mulf %283, %287 : vector<8x128xf32>
    %289 = arith.index_cast %250 : i32 to index
    %c0_128 = arith.constant 0 : index
    %c0_129 = arith.constant 0 : index
    %290 = vector.load %arg8[%289, %c0_128, %c0_129] : memref<8x8x128xf32, #tpu.memory_space<vmem>>, vector<1x8x128xf32>
    %291 = vector.shape_cast %290 : vector<1x8x128xf32> to vector<8x128xf32>
    %292 = vector.shape_cast %288 : vector<8x128xf32> to vector<1x8x128xf32>
    tpu.vector_store %arg8[%289, %c0_128, %c0_129], %292 {strides = array<i32>} : memref<8x8x128xf32, #tpu.memory_space<vmem>>, vector<1x8x128xf32>,
    %c6_i32 = arith.constant 6 : i32
    %c2_i32_130 = arith.constant 2 : i32
    %293 = arith.muli %c2_i32_130, %c6_i32 : i32
    %c7_i32_131 = arith.constant 7 : i32
    %294 = arith.subi %c7_i32_131, %293 : i32
    %295 = arith.muli %arg0, %294 : i32
    %296 = arith.addi %c6_i32, %295 : i32
    %c0_132 = arith.constant 0 : index
    %c0_133 = arith.constant 0 : index
    %c0_134 = arith.constant 0 : index
    %297 = vector.load %arg4[%c0_132, %c0_133, %c0_134] : memref<1x128x512xf32, #tpu.memory_space<vmem>>, vector<1x128x512xf32>
    %298 = vector.shape_cast %297 : vector<1x128x512xf32> to vector<128x512xf32>
    %cst_135 = arith.constant dense<0.000000e+00> : vector<8x512xf32>
    %299 = tpu.matmul %288, %298, %cst_135 {dimension_numbers = #tpu.dot_dimension_numbers<[1], [0], [0], [1], [0, 0, 1, 1], [], []>} : vector<8x128xf32>, vector<128x512xf32>, vector<8x512xf32> -> vector<8x512xf32>
    %300 = arith.index_cast %296 : i32 to index
    %c0_136 = arith.constant 0 : index
    %c0_137 = arith.constant 0 : index
    %301 = vector.load %arg11[%300, %c0_136, %c0_137] : memref<8x8x512xf32, #tpu.memory_space<vmem>>, vector<1x8x512xf32>
    %302 = vector.shape_cast %301 : vector<1x8x512xf32> to vector<8x512xf32>
    %303 = arith.addf %299, %302 : vector<8x512xf32>
    %304 = vector.extract_strided_slice %303 {offsets = [0, 0], sizes = [8, 128], strides = [1, 1]} : vector<8x512xf32> to vector<8x128xf32>
    %cst_138 = arith.constant 5.000000e-01 : f32
    %305 = vector.broadcast %cst_138 : f32 to vector<8x128xf32>
    %306 = arith.mulf %305, %304 : vector<8x128xf32>
    %307 = math.tanh %306 : vector<8x128xf32>
    %cst_139 = arith.constant 5.000000e-01 : f32
    %308 = vector.broadcast %cst_139 : f32 to vector<8x128xf32>
    %309 = arith.mulf %308, %307 : vector<8x128xf32>
    %cst_140 = arith.constant 5.000000e-01 : f32
    %310 = vector.broadcast %cst_140 : f32 to vector<8x128xf32>
    %311 = arith.addf %309, %310 : vector<8x128xf32>
    %312 = vector.extract_strided_slice %303 {offsets = [0, 128], sizes = [8, 128], strides = [1, 1]} : vector<8x512xf32> to vector<8x128xf32>
    %cst_141 = arith.constant 5.000000e-01 : f32
    %313 = vector.broadcast %cst_141 : f32 to vector<8x128xf32>
    %314 = arith.mulf %313, %312 : vector<8x128xf32>
    %315 = math.tanh %314 : vector<8x128xf32>
    %cst_142 = arith.constant 5.000000e-01 : f32
    %316 = vector.broadcast %cst_142 : f32 to vector<8x128xf32>
    %317 = arith.mulf %316, %315 : vector<8x128xf32>
    %cst_143 = arith.constant 5.000000e-01 : f32
    %318 = vector.broadcast %cst_143 : f32 to vector<8x128xf32>
    %319 = arith.addf %317, %318 : vector<8x128xf32>
    %320 = vector.extract_strided_slice %303 {offsets = [0, 256], sizes = [8, 128], strides = [1, 1]} : vector<8x512xf32> to vector<8x128xf32>
    %321 = math.tanh %320 : vector<8x128xf32>
    %322 = vector.extract_strided_slice %303 {offsets = [0, 384], sizes = [8, 128], strides = [1, 1]} : vector<8x512xf32> to vector<8x128xf32>
    %cst_144 = arith.constant 5.000000e-01 : f32
    %323 = vector.broadcast %cst_144 : f32 to vector<8x128xf32>
    %324 = arith.mulf %323, %322 : vector<8x128xf32>
    %325 = math.tanh %324 : vector<8x128xf32>
    %cst_145 = arith.constant 5.000000e-01 : f32
    %326 = vector.broadcast %cst_145 : f32 to vector<8x128xf32>
    %327 = arith.mulf %326, %325 : vector<8x128xf32>
    %cst_146 = arith.constant 5.000000e-01 : f32
    %328 = vector.broadcast %cst_146 : f32 to vector<8x128xf32>
    %329 = arith.addf %327, %328 : vector<8x128xf32>
    %330 = arith.mulf %319, %286 : vector<8x128xf32>
    %331 = arith.mulf %311, %321 : vector<8x128xf32>
    %332 = arith.addf %330, %331 : vector<8x128xf32>
    %333 = math.tanh %332 : vector<8x128xf32>
    %334 = arith.mulf %329, %333 : vector<8x128xf32>
    %335 = arith.index_cast %296 : i32 to index
    %c0_147 = arith.constant 0 : index
    %c0_148 = arith.constant 0 : index
    %336 = vector.load %arg8[%335, %c0_147, %c0_148] : memref<8x8x128xf32, #tpu.memory_space<vmem>>, vector<1x8x128xf32>
    %337 = vector.shape_cast %336 : vector<1x8x128xf32> to vector<8x128xf32>
    %338 = vector.shape_cast %334 : vector<8x128xf32> to vector<1x8x128xf32>
    tpu.vector_store %arg8[%335, %c0_147, %c0_148], %338 {strides = array<i32>} : memref<8x8x128xf32, #tpu.memory_space<vmem>>, vector<1x8x128xf32>,
    %c7_i32_149 = arith.constant 7 : i32
    %c2_i32_150 = arith.constant 2 : i32
    %339 = arith.muli %c2_i32_150, %c7_i32_149 : i32
    %c7_i32_151 = arith.constant 7 : i32
    %340 = arith.subi %c7_i32_151, %339 : i32
    %341 = arith.muli %arg0, %340 : i32
    %342 = arith.addi %c7_i32_149, %341 : i32
    %c0_152 = arith.constant 0 : index
    %c0_153 = arith.constant 0 : index
    %c0_154 = arith.constant 0 : index
    %343 = vector.load %arg4[%c0_152, %c0_153, %c0_154] : memref<1x128x512xf32, #tpu.memory_space<vmem>>, vector<1x128x512xf32>
    %344 = vector.shape_cast %343 : vector<1x128x512xf32> to vector<128x512xf32>
    %cst_155 = arith.constant dense<0.000000e+00> : vector<8x512xf32>
    %345 = tpu.matmul %334, %344, %cst_155 {dimension_numbers = #tpu.dot_dimension_numbers<[1], [0], [0], [1], [0, 0, 1, 1], [], []>} : vector<8x128xf32>, vector<128x512xf32>, vector<8x512xf32> -> vector<8x512xf32>
    %346 = arith.index_cast %342 : i32 to index
    %c0_156 = arith.constant 0 : index
    %c0_157 = arith.constant 0 : index
    %347 = vector.load %arg11[%346, %c0_156, %c0_157] : memref<8x8x512xf32, #tpu.memory_space<vmem>>, vector<1x8x512xf32>
    %348 = vector.shape_cast %347 : vector<1x8x512xf32> to vector<8x512xf32>
    %349 = arith.addf %345, %348 : vector<8x512xf32>
    %350 = vector.extract_strided_slice %349 {offsets = [0, 0], sizes = [8, 128], strides = [1, 1]} : vector<8x512xf32> to vector<8x128xf32>
    %cst_158 = arith.constant 5.000000e-01 : f32
    %351 = vector.broadcast %cst_158 : f32 to vector<8x128xf32>
    %352 = arith.mulf %351, %350 : vector<8x128xf32>
    %353 = math.tanh %352 : vector<8x128xf32>
    %cst_159 = arith.constant 5.000000e-01 : f32
    %354 = vector.broadcast %cst_159 : f32 to vector<8x128xf32>
    %355 = arith.mulf %354, %353 : vector<8x128xf32>
    %cst_160 = arith.constant 5.000000e-01 : f32
    %356 = vector.broadcast %cst_160 : f32 to vector<8x128xf32>
    %357 = arith.addf %355, %356 : vector<8x128xf32>
    %358 = vector.extract_strided_slice %349 {offsets = [0, 128], sizes = [8, 128], strides = [1, 1]} : vector<8x512xf32> to vector<8x128xf32>
    %cst_161 = arith.constant 5.000000e-01 : f32
    %359 = vector.broadcast %cst_161 : f32 to vector<8x128xf32>
    %360 = arith.mulf %359, %358 : vector<8x128xf32>
    %361 = math.tanh %360 : vector<8x128xf32>
    %cst_162 = arith.constant 5.000000e-01 : f32
    %362 = vector.broadcast %cst_162 : f32 to vector<8x128xf32>
    %363 = arith.mulf %362, %361 : vector<8x128xf32>
    %cst_163 = arith.constant 5.000000e-01 : f32
    %364 = vector.broadcast %cst_163 : f32 to vector<8x128xf32>
    %365 = arith.addf %363, %364 : vector<8x128xf32>
    %366 = vector.extract_strided_slice %349 {offsets = [0, 256], sizes = [8, 128], strides = [1, 1]} : vector<8x512xf32> to vector<8x128xf32>
    %367 = math.tanh %366 : vector<8x128xf32>
    %368 = vector.extract_strided_slice %349 {offsets = [0, 384], sizes = [8, 128], strides = [1, 1]} : vector<8x512xf32> to vector<8x128xf32>
    %cst_164 = arith.constant 5.000000e-01 : f32
    %369 = vector.broadcast %cst_164 : f32 to vector<8x128xf32>
    %370 = arith.mulf %369, %368 : vector<8x128xf32>
    %371 = math.tanh %370 : vector<8x128xf32>
    %cst_165 = arith.constant 5.000000e-01 : f32
    %372 = vector.broadcast %cst_165 : f32 to vector<8x128xf32>
    %373 = arith.mulf %372, %371 : vector<8x128xf32>
    %cst_166 = arith.constant 5.000000e-01 : f32
    %374 = vector.broadcast %cst_166 : f32 to vector<8x128xf32>
    %375 = arith.addf %373, %374 : vector<8x128xf32>
    %376 = arith.mulf %365, %332 : vector<8x128xf32>
    %377 = arith.mulf %357, %367 : vector<8x128xf32>
    %378 = arith.addf %376, %377 : vector<8x128xf32>
    %379 = math.tanh %378 : vector<8x128xf32>
    %380 = arith.mulf %375, %379 : vector<8x128xf32>
    %381 = arith.index_cast %342 : i32 to index
    %c0_167 = arith.constant 0 : index
    %c0_168 = arith.constant 0 : index
    %382 = vector.load %arg8[%381, %c0_167, %c0_168] : memref<8x8x128xf32, #tpu.memory_space<vmem>>, vector<1x8x128xf32>
    %383 = vector.shape_cast %382 : vector<1x8x128xf32> to vector<8x128xf32>
    %384 = vector.shape_cast %380 : vector<8x128xf32> to vector<1x8x128xf32>
    tpu.vector_store %arg8[%381, %c0_167, %c0_168], %384 {strides = array<i32>} : memref<8x8x128xf32, #tpu.memory_space<vmem>>, vector<1x8x128xf32>,
    %c8_i32 = arith.constant 8 : i32
    %c0_169 = arith.constant 0 : index
    %c0_170 = arith.constant 0 : index
    %385 = vector.load %arg12[%c0_169, %c0_170] : memref<8x128xf32, #tpu.memory_space<vmem>>, vector<8x128xf32>
    tpu.vector_store %arg12[%c0_169, %c0_170], %380 {strides = array<i32>} : memref<8x128xf32, #tpu.memory_space<vmem>>, vector<8x128xf32>,
    %c0_171 = arith.constant 0 : index
    %c0_172 = arith.constant 0 : index
    %386 = vector.load %arg13[%c0_171, %c0_172] : memref<8x128xf32, #tpu.memory_space<vmem>>, vector<8x128xf32>
    tpu.vector_store %arg13[%c0_171, %c0_172], %378 {strides = array<i32>} : memref<8x128xf32, #tpu.memory_space<vmem>>, vector<8x128xf32>,
    %c0_173 = arith.constant 0 : index
    %c0_174 = arith.constant 0 : index
    %c0_175 = arith.constant 0 : index
    %387 = vector.load %arg9[%c0_173, %c0_174, %c0_175] : memref<1x8x128xf32, #tpu.memory_space<vmem>>, vector<1x8x128xf32>
    %388 = vector.shape_cast %387 : vector<1x8x128xf32> to vector<8x128xf32>
    %389 = vector.shape_cast %380 : vector<8x128xf32> to vector<1x8x128xf32>
    tpu.vector_store %arg9[%c0_173, %c0_174, %c0_175], %389 {strides = array<i32>} : memref<1x8x128xf32, #tpu.memory_space<vmem>>, vector<1x8x128xf32>,
    %c0_176 = arith.constant 0 : index
    %c0_177 = arith.constant 0 : index
    %c0_178 = arith.constant 0 : index
    %390 = vector.load %arg10[%c0_176, %c0_177, %c0_178] : memref<1x8x128xf32, #tpu.memory_space<vmem>>, vector<1x8x128xf32>
    %391 = vector.shape_cast %390 : vector<1x8x128xf32> to vector<8x128xf32>
    %392 = vector.shape_cast %378 : vector<8x128xf32> to vector<1x8x128xf32>
    tpu.vector_store %arg10[%c0_176, %c0_177, %c0_178], %392 {strides = array<i32>} : memref<1x8x128xf32, #tpu.memory_space<vmem>>, vector<1x8x128xf32>,
    return
  }
  func.func @transform_0(%arg0: i32, %arg1: i32) -> (i32, i32, i32) {
    %c2_i32 = arith.constant 2 : i32
    %0 = arith.muli %c2_i32, %arg1 : i32
    %c0_i32 = arith.constant 0 : i32
    %1 = arith.subi %c0_i32, %0 : i32
    %2 = arith.muli %arg0, %1 : i32
    %3 = arith.addi %arg1, %2 : i32
    %c0_i32_0 = arith.constant 0 : i32
    %c0_i32_1 = arith.constant 0 : i32
    %c0_i32_2 = arith.constant 0 : i32
    return %3, %c0_i32_0, %c0_i32_1 : i32, i32, i32
  }
  func.func @transform_1(%arg0: i32, %arg1: i32) -> (i32, i32, i32) {
    %c0_i32 = arith.constant 0 : i32
    %c0_i32_0 = arith.constant 0 : i32
    %c0_i32_1 = arith.constant 0 : i32
    return %arg0, %c0_i32, %c0_i32_0 : i32, i32, i32
  }
  func.func @transform_2(%arg0: i32, %arg1: i32) -> (i32, i32, i32) {
    %c0_i32 = arith.constant 0 : i32
    %c0_i32_0 = arith.constant 0 : i32
    %c0_i32_1 = arith.constant 0 : i32
    return %arg0, %c0_i32, %c0_i32_0 : i32, i32, i32
  }
  func.func @transform_3(%arg0: i32, %arg1: i32) -> (i32, i32, i32) {
    %c0_i32 = arith.constant 0 : i32
    %c0_i32_0 = arith.constant 0 : i32
    %c0_i32_1 = arith.constant 0 : i32
    return %arg0, %c0_i32, %c0_i32_0 : i32, i32, i32
  }
  func.func @transform_4(%arg0: i32, %arg1: i32) -> (i32, i32, i32) {
    %c0_i32 = arith.constant 0 : i32
    %c0_i32_0 = arith.constant 0 : i32
    %c0_i32_1 = arith.constant 0 : i32
    return %arg0, %c0_i32, %c0_i32_0 : i32, i32, i32
  }
  func.func @transform_5(%arg0: i32, %arg1: i32) -> (i32, i32, i32) {
    %c0_i32 = arith.constant 0 : i32
    %c0_i32_0 = arith.constant 0 : i32
    %c0_i32_1 = arith.constant 0 : i32
    return %arg0, %c0_i32, %c0_i32_0 : i32, i32, i32
  }
  func.func @transform_6(%arg0: i32, %arg1: i32) -> (i32, i32, i32) {
    %c2_i32 = arith.constant 2 : i32
    %0 = arith.muli %c2_i32, %arg1 : i32
    %c0_i32 = arith.constant 0 : i32
    %1 = arith.subi %c0_i32, %0 : i32
    %2 = arith.muli %arg0, %1 : i32
    %3 = arith.addi %arg1, %2 : i32
    %c0_i32_0 = arith.constant 0 : i32
    %c0_i32_1 = arith.constant 0 : i32
    return %3, %c0_i32_0, %arg0 : i32, i32, i32
  }
  func.func @transform_7(%arg0: i32, %arg1: i32) -> (i32, i32, i32) {
    %c0_i32 = arith.constant 0 : i32
    %c0_i32_0 = arith.constant 0 : i32
    %c0_i32_1 = arith.constant 0 : i32
    return %arg0, %c0_i32, %c0_i32_0 : i32, i32, i32
  }
  func.func @transform_8(%arg0: i32, %arg1: i32) -> (i32, i32, i32) {
    %c0_i32 = arith.constant 0 : i32
    %c0_i32_0 = arith.constant 0 : i32
    %c0_i32_1 = arith.constant 0 : i32
    return %arg0, %c0_i32, %c0_i32_0 : i32, i32, i32
  }
}

module attributes {stable_mosaic.version = 11 : i64} {
  func.func @_lstm_layer_kernel(%arg0: i32, %arg1: i32, %arg2: memref<8x8x256xf32, #tpu.memory_space<vmem>>, %arg3: memref<1x256x512xf32, #tpu.memory_space<vmem>>, %arg4: memref<1x128x512xf32, #tpu.memory_space<vmem>>, %arg5: memref<1x8x512xf32, #tpu.memory_space<vmem>>, %arg6: memref<1x8x128xf32, #tpu.memory_space<vmem>>, %arg7: memref<1x8x128xf32, #tpu.memory_space<vmem>>, %arg8: memref<8x8x128xf32, #tpu.memory_space<vmem>>, %arg9: memref<1x8x128xf32, #tpu.memory_space<vmem>>, %arg10: memref<1x8x128xf32, #tpu.memory_space<vmem>>, %arg11: memref<8x8x512xf32, #tpu.memory_space<vmem>>, %arg12: memref<8x128xf32, #tpu.memory_space<vmem>>, %arg13: memref<8x128xf32, #tpu.memory_space<vmem>>) attributes {dimension_semantics = [#tpu.dimension_semantics<parallel>, #tpu.dimension_semantics<arbitrary>], iteration_bounds = array<i64: 2, 1>, scalar_prefetch = 0 : i64, scratch_operands = 3 : i64, tpu.core_type = #tpu.core_type<tc>, window_params = [{transform_indices = @transform_0, window_bounds = array<i64: 8, 8, 256>}, {transform_indices = @transform_1, window_bounds = array<i64: 1, 256, 512>}, {transform_indices = @transform_2, window_bounds = array<i64: 1, 128, 512>}, {transform_indices = @transform_3, window_bounds = array<i64: 1, 8, 512>}, {transform_indices = @transform_4, window_bounds = array<i64: 1, 8, 128>}, {transform_indices = @transform_5, window_bounds = array<i64: 1, 8, 128>}, {transform_indices = @transform_6, window_bounds = array<i64: 8, 8, 128>}, {transform_indices = @transform_7, window_bounds = array<i64: 1, 8, 128>}, {transform_indices = @transform_8, window_bounds = array<i64: 1, 8, 128>}]} {
    %c0_i32 = arith.constant 0 : i32
    %0 = arith.cmpi eq, %arg1, %c0_i32 : i32
    %1 = arith.extui %0 : i1 to i32
    %c0_i32_0 = arith.constant 0 : i32
    %2 = arith.cmpi ne, %1, %c0_i32_0 : i32
    scf.if %2 {
      %c0_179 = arith.constant 0 : index
      %c0_180 = arith.constant 0 : index
      %c0_181 = arith.constant 0 : index
      %393 = vector.load %arg6[%c0_179, %c0_180, %c0_181] : memref<1x8x128xf32, #tpu.memory_space<vmem>>, vector<1x8x128xf32>
      %394 = vector.shape_cast %393 : vector<1x8x128xf32> to vector<8x128xf32>
      %c0_182 = arith.constant 0 : index
      %c0_183 = arith.constant 0 : index
      %395 = vector.load %arg12[%c0_182, %c0_183] : memref<8x128xf32, #tpu.memory_space<vmem>>, vector<8x128xf32>
      tpu.vector_store %arg12[%c0_182, %c0_183], %394 {strides = array<i32>} : memref<8x128xf32, #tpu.memory_space<vmem>>, vector<8x128xf32>,
      %c0_184 = arith.constant 0 : index
      %c0_185 = arith.constant 0 : index
      %c0_186 = arith.constant 0 : index
      %396 = vector.load %arg7[%c0_184, %c0_185, %c0_186] : memref<1x8x128xf32, #tpu.memory_space<vmem>>, vector<1x8x128xf32>
      %397 = vector.shape_cast %396 : vector<1x8x128xf32> to vector<8x128xf32>
      %c0_187 = arith.constant 0 : index
      %c0_188 = arith.constant 0 : index
      %398 = vector.load %arg13[%c0_187, %c0_188] : memref<8x128xf32, #tpu.memory_space<vmem>>, vector<8x128xf32>
      tpu.vector_store %arg13[%c0_187, %c0_188], %397 {strides = array<i32>} : memref<8x128xf32, #tpu.memory_space<vmem>>, vector<8x128xf32>,
    } else {
    }
    %c0 = arith.constant 0 : index
    %c0_1 = arith.constant 0 : index
    %c0_2 = arith.constant 0 : index
    %3 = vector.load %arg2[%c0, %c0_1, %c0_2] : memref<8x8x256xf32, #tpu.memory_space<vmem>>, vector<8x8x256xf32>
    %4 = vector.shape_cast %3 : vector<8x8x256xf32> to vector<64x256xf32>
    %c0_3 = arith.constant 0 : index
    %c0_4 = arith.constant 0 : index
    %c0_5 = arith.constant 0 : index
    %5 = vector.load %arg3[%c0_3, %c0_4, %c0_5] : memref<1x256x512xf32, #tpu.memory_space<vmem>>, vector<1x256x512xf32>
    %6 = vector.shape_cast %5 : vector<1x256x512xf32> to vector<256x512xf32>
    %cst = arith.constant dense<0.000000e+00> : vector<64x512xf32>
    %7 = tpu.matmul %4, %6, %cst {dimension_numbers = #tpu.dot_dimension_numbers<[1], [0], [0], [1], [0, 0, 1, 1], [], []>} : vector<64x256xf32>, vector<256x512xf32>, vector<64x512xf32> -> vector<64x512xf32>
    %8 = vector.shape_cast %7 : vector<64x512xf32> to vector<8x8x512xf32>
    %c0_6 = arith.constant 0 : index
    %c0_7 = arith.constant 0 : index
    %c0_8 = arith.constant 0 : index
    %9 = vector.load %arg5[%c0_6, %c0_7, %c0_8] : memref<1x8x512xf32, #tpu.memory_space<vmem>>, vector<1x8x512xf32>
    %10 = vector.shape_cast %9 : vector<1x8x512xf32> to vector<8x512xf32>
    %11 = vector.shape_cast %10 : vector<8x512xf32> to vector<1x8x512xf32>
    %12 = vector.broadcast %11 : vector<1x8x512xf32> to vector<8x8x512xf32>
    %13 = arith.addf %8, %12 : vector<8x8x512xf32>
    %c0_9 = arith.constant 0 : index
    %c0_10 = arith.constant 0 : index
    %c0_11 = arith.constant 0 : index
    %14 = vector.load %arg11[%c0_9, %c0_10, %c0_11] : memref<8x8x512xf32, #tpu.memory_space<vmem>>, vector<8x8x512xf32>
    tpu.vector_store %arg11[%c0_9, %c0_10, %c0_11], %13 {strides = array<i32>} : memref<8x8x512xf32, #tpu.memory_space<vmem>>, vector<8x8x512xf32>,
    %c0_12 = arith.constant 0 : index
    %c0_13 = arith.constant 0 : index
    %15 = vector.load %arg12[%c0_12, %c0_13] : memref<8x128xf32, #tpu.memory_space<vmem>>, vector<8x128xf32>
    %c0_14 = arith.constant 0 : index
    %c0_15 = arith.constant 0 : index
    %16 = vector.load %arg13[%c0_14, %c0_15] : memref<8x128xf32, #tpu.memory_space<vmem>>, vector<8x128xf32>
    %c0_i32_16 = arith.constant 0 : i32
    %c2_i32 = arith.constant 2 : i32
    %17 = arith.muli %c2_i32, %c0_i32_16 : i32
    %c7_i32 = arith.constant 7 : i32
    %18 = arith.subi %c7_i32, %17 : i32
    %19 = arith.muli %arg0, %18 : i32
    %20 = arith.addi %c0_i32_16, %19 : i32
    %c0_17 = arith.constant 0 : index
    %c0_18 = arith.constant 0 : index
    %c0_19 = arith.constant 0 : index
    %21 = vector.load %arg4[%c0_17, %c0_18, %c0_19] : memref<1x128x512xf32, #tpu.memory_space<vmem>>, vector<1x128x512xf32>
    %22 = vector.shape_cast %21 : vector<1x128x512xf32> to vector<128x512xf32>
    %cst_20 = arith.constant dense<0.000000e+00> : vector<8x512xf32>
    %23 = tpu.matmul %15, %22, %cst_20 {dimension_numbers = #tpu.dot_dimension_numbers<[1], [0], [0], [1], [0, 0, 1, 1], [], []>} : vector<8x128xf32>, vector<128x512xf32>, vector<8x512xf32> -> vector<8x512xf32>
    %24 = arith.index_cast %20 : i32 to index
    %c0_21 = arith.constant 0 : index
    %c0_22 = arith.constant 0 : index
    %25 = vector.load %arg11[%24, %c0_21, %c0_22] : memref<8x8x512xf32, #tpu.memory_space<vmem>>, vector<1x8x512xf32>
    %26 = vector.shape_cast %25 : vector<1x8x512xf32> to vector<8x512xf32>
    %27 = arith.addf %23, %26 : vector<8x512xf32>
    %28 = vector.extract_strided_slice %27 {offsets = [0, 0], sizes = [8, 128], strides = [1, 1]} : vector<8x512xf32> to vector<8x128xf32>
    %cst_23 = arith.constant 5.000000e-01 : f32
    %29 = vector.broadcast %cst_23 : f32 to vector<8x128xf32>
    %30 = arith.mulf %29, %28 : vector<8x128xf32>
    %31 = math.tanh %30 : vector<8x128xf32>
    %cst_24 = arith.constant 5.000000e-01 : f32
    %32 = vector.broadcast %cst_24 : f32 to vector<8x128xf32>
    %33 = arith.mulf %32, %31 : vector<8x128xf32>
    %cst_25 = arith.constant 5.000000e-01 : f32
    %34 = vector.broadcast %cst_25 : f32 to vector<8x128xf32>
    %35 = arith.addf %33, %34 : vector<8x128xf32>
    %36 = vector.extract_strided_slice %27 {offsets = [0, 128], sizes = [8, 128], strides = [1, 1]} : vector<8x512xf32> to vector<8x128xf32>
    %cst_26 = arith.constant 5.000000e-01 : f32
    %37 = vector.broadcast %cst_26 : f32 to vector<8x128xf32>
    %38 = arith.mulf %37, %36 : vector<8x128xf32>
    %39 = math.tanh %38 : vector<8x128xf32>
    %cst_27 = arith.constant 5.000000e-01 : f32
    %40 = vector.broadcast %cst_27 : f32 to vector<8x128xf32>
    %41 = arith.mulf %40, %39 : vector<8x128xf32>
    %cst_28 = arith.constant 5.000000e-01 : f32
    %42 = vector.broadcast %cst_28 : f32 to vector<8x128xf32>
    %43 = arith.addf %41, %42 : vector<8x128xf32>
    %44 = vector.extract_strided_slice %27 {offsets = [0, 256], sizes = [8, 128], strides = [1, 1]} : vector<8x512xf32> to vector<8x128xf32>
    %45 = math.tanh %44 : vector<8x128xf32>
    %46 = vector.extract_strided_slice %27 {offsets = [0, 384], sizes = [8, 128], strides = [1, 1]} : vector<8x512xf32> to vector<8x128xf32>
    %cst_29 = arith.constant 5.000000e-01 : f32
    %47 = vector.broadcast %cst_29 : f32 to vector<8x128xf32>
    %48 = arith.mulf %47, %46 : vector<8x128xf32>
    %49 = math.tanh %48 : vector<8x128xf32>
    %cst_30 = arith.constant 5.000000e-01 : f32
    %50 = vector.broadcast %cst_30 : f32 to vector<8x128xf32>
    %51 = arith.mulf %50, %49 : vector<8x128xf32>
    %cst_31 = arith.constant 5.000000e-01 : f32
    %52 = vector.broadcast %cst_31 : f32 to vector<8x128xf32>
    %53 = arith.addf %51, %52 : vector<8x128xf32>
    %54 = arith.mulf %43, %16 : vector<8x128xf32>
    %55 = arith.mulf %35, %45 : vector<8x128xf32>
    %56 = arith.addf %54, %55 : vector<8x128xf32>
    %57 = math.tanh %56 : vector<8x128xf32>
    %58 = arith.mulf %53, %57 : vector<8x128xf32>
    %59 = arith.index_cast %20 : i32 to index
    %c0_32 = arith.constant 0 : index
    %c0_33 = arith.constant 0 : index
    %60 = vector.load %arg8[%59, %c0_32, %c0_33] : memref<8x8x128xf32, #tpu.memory_space<vmem>>, vector<1x8x128xf32>
    %61 = vector.shape_cast %60 : vector<1x8x128xf32> to vector<8x128xf32>
    %62 = vector.shape_cast %58 : vector<8x128xf32> to vector<1x8x128xf32>
    tpu.vector_store %arg8[%59, %c0_32, %c0_33], %62 {strides = array<i32>} : memref<8x8x128xf32, #tpu.memory_space<vmem>>, vector<1x8x128xf32>,
    %c1_i32 = arith.constant 1 : i32
    %c2_i32_34 = arith.constant 2 : i32
    %63 = arith.muli %c2_i32_34, %c1_i32 : i32
    %c7_i32_35 = arith.constant 7 : i32
    %64 = arith.subi %c7_i32_35, %63 : i32
    %65 = arith.muli %arg0, %64 : i32
    %66 = arith.addi %c1_i32, %65 : i32
    %c0_36 = arith.constant 0 : index
    %c0_37 = arith.constant 0 : index
    %c0_38 = arith.constant 0 : index
    %67 = vector.load %arg4[%c0_36, %c0_37, %c0_38] : memref<1x128x512xf32, #tpu.memory_space<vmem>>, vector<1x128x512xf32>
    %68 = vector.shape_cast %67 : vector<1x128x512xf32> to vector<128x512xf32>
    %cst_39 = arith.constant dense<0.000000e+00> : vector<8x512xf32>
    %69 = tpu.matmul %58, %68, %cst_39 {dimension_numbers = #tpu.dot_dimension_numbers<[1], [0], [0], [1], [0, 0, 1, 1], [], []>} : vector<8x128xf32>, vector<128x512xf32>, vector<8x512xf32> -> vector<8x512xf32>
    %70 = arith.index_cast %66 : i32 to index
    %c0_40 = arith.constant 0 : index
    %c0_41 = arith.constant 0 : index
    %71 = vector.load %arg11[%70, %c0_40, %c0_41] : memref<8x8x512xf32, #tpu.memory_space<vmem>>, vector<1x8x512xf32>
    %72 = vector.shape_cast %71 : vector<1x8x512xf32> to vector<8x512xf32>
    %73 = arith.addf %69, %72 : vector<8x512xf32>
    %74 = vector.extract_strided_slice %73 {offsets = [0, 0], sizes = [8, 128], strides = [1, 1]} : vector<8x512xf32> to vector<8x128xf32>
    %cst_42 = arith.constant 5.000000e-01 : f32
    %75 = vector.broadcast %cst_42 : f32 to vector<8x128xf32>
    %76 = arith.mulf %75, %74 : vector<8x128xf32>
    %77 = math.tanh %76 : vector<8x128xf32>
    %cst_43 = arith.constant 5.000000e-01 : f32
    %78 = vector.broadcast %cst_43 : f32 to vector<8x128xf32>
    %79 = arith.mulf %78, %77 : vector<8x128xf32>
    %cst_44 = arith.constant 5.000000e-01 : f32
    %80 = vector.broadcast %cst_44 : f32 to vector<8x128xf32>
    %81 = arith.addf %79, %80 : vector<8x128xf32>
    %82 = vector.extract_strided_slice %73 {offsets = [0, 128], sizes = [8, 128], strides = [1, 1]} : vector<8x512xf32> to vector<8x128xf32>
    %cst_45 = arith.constant 5.000000e-01 : f32
    %83 = vector.broadcast %cst_45 : f32 to vector<8x128xf32>
    %84 = arith.mulf %83, %82 : vector<8x128xf32>
    %85 = math.tanh %84 : vector<8x128xf32>
    %cst_46 = arith.constant 5.000000e-01 : f32
    %86 = vector.broadcast %cst_46 : f32 to vector<8x128xf32>
    %87 = arith.mulf %86, %85 : vector<8x128xf32>
    %cst_47 = arith.constant 5.000000e-01 : f32
    %88 = vector.broadcast %cst_47 : f32 to vector<8x128xf32>
    %89 = arith.addf %87, %88 : vector<8x128xf32>
    %90 = vector.extract_strided_slice %73 {offsets = [0, 256], sizes = [8, 128], strides = [1, 1]} : vector<8x512xf32> to vector<8x128xf32>
    %91 = math.tanh %90 : vector<8x128xf32>
    %92 = vector.extract_strided_slice %73 {offsets = [0, 384], sizes = [8, 128], strides = [1, 1]} : vector<8x512xf32> to vector<8x128xf32>
    %cst_48 = arith.constant 5.000000e-01 : f32
    %93 = vector.broadcast %cst_48 : f32 to vector<8x128xf32>
    %94 = arith.mulf %93, %92 : vector<8x128xf32>
    %95 = math.tanh %94 : vector<8x128xf32>
    %cst_49 = arith.constant 5.000000e-01 : f32
    %96 = vector.broadcast %cst_49 : f32 to vector<8x128xf32>
    %97 = arith.mulf %96, %95 : vector<8x128xf32>
    %cst_50 = arith.constant 5.000000e-01 : f32
    %98 = vector.broadcast %cst_50 : f32 to vector<8x128xf32>
    %99 = arith.addf %97, %98 : vector<8x128xf32>
    %100 = arith.mulf %89, %56 : vector<8x128xf32>
    %101 = arith.mulf %81, %91 : vector<8x128xf32>
    %102 = arith.addf %100, %101 : vector<8x128xf32>
    %103 = math.tanh %102 : vector<8x128xf32>
    %104 = arith.mulf %99, %103 : vector<8x128xf32>
    %105 = arith.index_cast %66 : i32 to index
    %c0_51 = arith.constant 0 : index
    %c0_52 = arith.constant 0 : index
    %106 = vector.load %arg8[%105, %c0_51, %c0_52] : memref<8x8x128xf32, #tpu.memory_space<vmem>>, vector<1x8x128xf32>
    %107 = vector.shape_cast %106 : vector<1x8x128xf32> to vector<8x128xf32>
    %108 = vector.shape_cast %104 : vector<8x128xf32> to vector<1x8x128xf32>
    tpu.vector_store %arg8[%105, %c0_51, %c0_52], %108 {strides = array<i32>} : memref<8x8x128xf32, #tpu.memory_space<vmem>>, vector<1x8x128xf32>,
    %c2_i32_53 = arith.constant 2 : i32
    %c2_i32_54 = arith.constant 2 : i32
    %109 = arith.muli %c2_i32_54, %c2_i32_53 : i32
    %c7_i32_55 = arith.constant 7 : i32
    %110 = arith.subi %c7_i32_55, %109 : i32
    %111 = arith.muli %arg0, %110 : i32
    %112 = arith.addi %c2_i32_53, %111 : i32
    %c0_56 = arith.constant 0 : index
    %c0_57 = arith.constant 0 : index
    %c0_58 = arith.constant 0 : index
    %113 = vector.load %arg4[%c0_56, %c0_57, %c0_58] : memref<1x128x512xf32, #tpu.memory_space<vmem>>, vector<1x128x512xf32>
    %114 = vector.shape_cast %113 : vector<1x128x512xf32> to vector<128x512xf32>
    %cst_59 = arith.constant dense<0.000000e+00> : vector<8x512xf32>
    %115 = tpu.matmul %104, %114, %cst_59 {dimension_numbers = #tpu.dot_dimension_numbers<[1], [0], [0], [1], [0, 0, 1, 1], [], []>} : vector<8x128xf32>, vector<128x512xf32>, vector<8x512xf32> -> vector<8x512xf32>
    %116 = arith.index_cast %112 : i32 to index
    %c0_60 = arith.constant 0 : index
    %c0_61 = arith.constant 0 : index
    %117 = vector.load %arg11[%116, %c0_60, %c0_61] : memref<8x8x512xf32, #tpu.memory_space<vmem>>, vector<1x8x512xf32>
    %118 = vector.shape_cast %117 : vector<1x8x512xf32> to vector<8x512xf32>
    %119 = arith.addf %115, %118 : vector<8x512xf32>
    %120 = vector.extract_strided_slice %119 {offsets = [0, 0], sizes = [8, 128], strides = [1, 1]} : vector<8x512xf32> to vector<8x128xf32>
    %cst_62 = arith.constant 5.000000e-01 : f32
    %121 = vector.broadcast %cst_62 : f32 to vector<8x128xf32>
    %122 = arith.mulf %121, %120 : vector<8x128xf32>
    %123 = math.tanh %122 : vector<8x128xf32>
    %cst_63 = arith.constant 5.000000e-01 : f32
    %124 = vector.broadcast %cst_63 : f32 to vector<8x128xf32>
    %125 = arith.mulf %124, %123 : vector<8x128xf32>
    %cst_64 = arith.constant 5.000000e-01 : f32
    %126 = vector.broadcast %cst_64 : f32 to vector<8x128xf32>
    %127 = arith.addf %125, %126 : vector<8x128xf32>
    %128 = vector.extract_strided_slice %119 {offsets = [0, 128], sizes = [8, 128], strides = [1, 1]} : vector<8x512xf32> to vector<8x128xf32>
    %cst_65 = arith.constant 5.000000e-01 : f32
    %129 = vector.broadcast %cst_65 : f32 to vector<8x128xf32>
    %130 = arith.mulf %129, %128 : vector<8x128xf32>
    %131 = math.tanh %130 : vector<8x128xf32>
    %cst_66 = arith.constant 5.000000e-01 : f32
    %132 = vector.broadcast %cst_66 : f32 to vector<8x128xf32>
    %133 = arith.mulf %132, %131 : vector<8x128xf32>
    %cst_67 = arith.constant 5.000000e-01 : f32
    %134 = vector.broadcast %cst_67 : f32 to vector<8x128xf32>
    %135 = arith.addf %133, %134 : vector<8x128xf32>
    %136 = vector.extract_strided_slice %119 {offsets = [0, 256], sizes = [8, 128], strides = [1, 1]} : vector<8x512xf32> to vector<8x128xf32>
    %137 = math.tanh %136 : vector<8x128xf32>
    %138 = vector.extract_strided_slice %119 {offsets = [0, 384], sizes = [8, 128], strides = [1, 1]} : vector<8x512xf32> to vector<8x128xf32>
    %cst_68 = arith.constant 5.000000e-01 : f32
    %139 = vector.broadcast %cst_68 : f32 to vector<8x128xf32>
    %140 = arith.mulf %139, %138 : vector<8x128xf32>
    %141 = math.tanh %140 : vector<8x128xf32>
    %cst_69 = arith.constant 5.000000e-01 : f32
    %142 = vector.broadcast %cst_69 : f32 to vector<8x128xf32>
    %143 = arith.mulf %142, %141 : vector<8x128xf32>
    %cst_70 = arith.constant 5.000000e-01 : f32
    %144 = vector.broadcast %cst_70 : f32 to vector<8x128xf32>
    %145 = arith.addf %143, %144 : vector<8x128xf32>
    %146 = arith.mulf %135, %102 : vector<8x128xf32>
    %147 = arith.mulf %127, %137 : vector<8x128xf32>
    %148 = arith.addf %146, %147 : vector<8x128xf32>
    %149 = math.tanh %148 : vector<8x128xf32>
    %150 = arith.mulf %145, %149 : vector<8x128xf32>
    %151 = arith.index_cast %112 : i32 to index
    %c0_71 = arith.constant 0 : index
    %c0_72 = arith.constant 0 : index
    %152 = vector.load %arg8[%151, %c0_71, %c0_72] : memref<8x8x128xf32, #tpu.memory_space<vmem>>, vector<1x8x128xf32>
    %153 = vector.shape_cast %152 : vector<1x8x128xf32> to vector<8x128xf32>
    %154 = vector.shape_cast %150 : vector<8x128xf32> to vector<1x8x128xf32>
    tpu.vector_store %arg8[%151, %c0_71, %c0_72], %154 {strides = array<i32>} : memref<8x8x128xf32, #tpu.memory_space<vmem>>, vector<1x8x128xf32>,
    %c3_i32 = arith.constant 3 : i32
    %c2_i32_73 = arith.constant 2 : i32
    %155 = arith.muli %c2_i32_73, %c3_i32 : i32
    %c7_i32_74 = arith.constant 7 : i32
    %156 = arith.subi %c7_i32_74, %155 : i32
    %157 = arith.muli %arg0, %156 : i32
    %158 = arith.addi %c3_i32, %157 : i32
    %c0_75 = arith.constant 0 : index
    %c0_76 = arith.constant 0 : index
    %c0_77 = arith.constant 0 : index
    %159 = vector.load %arg4[%c0_75, %c0_76, %c0_77] : memref<1x128x512xf32, #tpu.memory_space<vmem>>, vector<1x128x512xf32>
    %160 = vector.shape_cast %159 : vector<1x128x512xf32> to vector<128x512xf32>
    %cst_78 = arith.constant dense<0.000000e+00> : vector<8x512xf32>
    %161 = tpu.matmul %150, %160, %cst_78 {dimension_numbers = #tpu.dot_dimension_numbers<[1], [0], [0], [1], [0, 0, 1, 1], [], []>} : vector<8x128xf32>, vector<128x512xf32>, vector<8x512xf32> -> vector<8x512xf32>
    %162 = arith.index_cast %158 : i32 to index
    %c0_79 = arith.constant 0 : index
    %c0_80 = arith.constant 0 : index
    %163 = vector.load %arg11[%162, %c0_79, %c0_80] : memref<8x8x512xf32, #tpu.memory_space<vmem>>, vector<1x8x512xf32>
    %164 = vector.shape_cast %163 : vector<1x8x512xf32> to vector<8x512xf32>
    %165 = arith.addf %161, %164 : vector<8x512xf32>
    %166 = vector.extract_strided_slice %165 {offsets = [0, 0], sizes = [8, 128], strides = [1, 1]} : vector<8x512xf32> to vector<8x128xf32>
    %cst_81 = arith.constant 5.000000e-01 : f32
    %167 = vector.broadcast %cst_81 : f32 to vector<8x128xf32>
    %168 = arith.mulf %167, %166 : vector<8x128xf32>
    %169 = math.tanh %168 : vector<8x128xf32>
    %cst_82 = arith.constant 5.000000e-01 : f32
    %170 = vector.broadcast %cst_82 : f32 to vector<8x128xf32>
    %171 = arith.mulf %170, %169 : vector<8x128xf32>
    %cst_83 = arith.constant 5.000000e-01 : f32
    %172 = vector.broadcast %cst_83 : f32 to vector<8x128xf32>
    %173 = arith.addf %171, %172 : vector<8x128xf32>
    %174 = vector.extract_strided_slice %165 {offsets = [0, 128], sizes = [8, 128], strides = [1, 1]} : vector<8x512xf32> to vector<8x128xf32>
    %cst_84 = arith.constant 5.000000e-01 : f32
    %175 = vector.broadcast %cst_84 : f32 to vector<8x128xf32>
    %176 = arith.mulf %175, %174 : vector<8x128xf32>
    %177 = math.tanh %176 : vector<8x128xf32>
    %cst_85 = arith.constant 5.000000e-01 : f32
    %178 = vector.broadcast %cst_85 : f32 to vector<8x128xf32>
    %179 = arith.mulf %178, %177 : vector<8x128xf32>
    %cst_86 = arith.constant 5.000000e-01 : f32
    %180 = vector.broadcast %cst_86 : f32 to vector<8x128xf32>
    %181 = arith.addf %179, %180 : vector<8x128xf32>
    %182 = vector.extract_strided_slice %165 {offsets = [0, 256], sizes = [8, 128], strides = [1, 1]} : vector<8x512xf32> to vector<8x128xf32>
    %183 = math.tanh %182 : vector<8x128xf32>
    %184 = vector.extract_strided_slice %165 {offsets = [0, 384], sizes = [8, 128], strides = [1, 1]} : vector<8x512xf32> to vector<8x128xf32>
    %cst_87 = arith.constant 5.000000e-01 : f32
    %185 = vector.broadcast %cst_87 : f32 to vector<8x128xf32>
    %186 = arith.mulf %185, %184 : vector<8x128xf32>
    %187 = math.tanh %186 : vector<8x128xf32>
    %cst_88 = arith.constant 5.000000e-01 : f32
    %188 = vector.broadcast %cst_88 : f32 to vector<8x128xf32>
    %189 = arith.mulf %188, %187 : vector<8x128xf32>
    %cst_89 = arith.constant 5.000000e-01 : f32
    %190 = vector.broadcast %cst_89 : f32 to vector<8x128xf32>
    %191 = arith.addf %189, %190 : vector<8x128xf32>
    %192 = arith.mulf %181, %148 : vector<8x128xf32>
    %193 = arith.mulf %173, %183 : vector<8x128xf32>
    %194 = arith.addf %192, %193 : vector<8x128xf32>
    %195 = math.tanh %194 : vector<8x128xf32>
    %196 = arith.mulf %191, %195 : vector<8x128xf32>
    %197 = arith.index_cast %158 : i32 to index
    %c0_90 = arith.constant 0 : index
    %c0_91 = arith.constant 0 : index
    %198 = vector.load %arg8[%197, %c0_90, %c0_91] : memref<8x8x128xf32, #tpu.memory_space<vmem>>, vector<1x8x128xf32>
    %199 = vector.shape_cast %198 : vector<1x8x128xf32> to vector<8x128xf32>
    %200 = vector.shape_cast %196 : vector<8x128xf32> to vector<1x8x128xf32>
    tpu.vector_store %arg8[%197, %c0_90, %c0_91], %200 {strides = array<i32>} : memref<8x8x128xf32, #tpu.memory_space<vmem>>, vector<1x8x128xf32>,
    %c4_i32 = arith.constant 4 : i32
    %c2_i32_92 = arith.constant 2 : i32
    %201 = arith.muli %c2_i32_92, %c4_i32 : i32
    %c7_i32_93 = arith.constant 7 : i32
    %202 = arith.subi %c7_i32_93, %201 : i32
    %203 = arith.muli %arg0, %202 : i32
    %204 = arith.addi %c4_i32, %203 : i32
    %c0_94 = arith.constant 0 : index
    %c0_95 = arith.constant 0 : index
    %c0_96 = arith.constant 0 : index
    %205 = vector.load %arg4[%c0_94, %c0_95, %c0_96] : memref<1x128x512xf32, #tpu.memory_space<vmem>>, vector<1x128x512xf32>
    %206 = vector.shape_cast %205 : vector<1x128x512xf32> to vector<128x512xf32>
    %cst_97 = arith.constant dense<0.000000e+00> : vector<8x512xf32>
    %207 = tpu.matmul %196, %206, %cst_97 {dimension_numbers = #tpu.dot_dimension_numbers<[1], [0], [0], [1], [0, 0, 1, 1], [], []>} : vector<8x128xf32>, vector<128x512xf32>, vector<8x512xf32> -> vector<8x512xf32>
    %208 = arith.index_cast %204 : i32 to index
    %c0_98 = arith.constant 0 : index
    %c0_99 = arith.constant 0 : index
    %209 = vector.load %arg11[%208, %c0_98, %c0_99] : memref<8x8x512xf32, #tpu.memory_space<vmem>>, vector<1x8x512xf32>
    %210 = vector.shape_cast %209 : vector<1x8x512xf32> to vector<8x512xf32>
    %211 = arith.addf %207, %210 : vector<8x512xf32>
    %212 = vector.extract_strided_slice %211 {offsets = [0, 0], sizes = [8, 128], strides = [1, 1]} : vector<8x512xf32> to vector<8x128xf32>
    %cst_100 = arith.constant 5.000000e-01 : f32
    %213 = vector.broadcast %cst_100 : f32 to vector<8x128xf32>
    %214 = arith.mulf %213, %212 : vector<8x128xf32>
    %215 = math.tanh %214 : vector<8x128xf32>
    %cst_101 = arith.constant 5.000000e-01 : f32
    %216 = vector.broadcast %cst_101 : f32 to vector<8x128xf32>
    %217 = arith.mulf %216, %215 : vector<8x128xf32>
    %cst_102 = arith.constant 5.000000e-01 : f32
    %218 = vector.broadcast %cst_102 : f32 to vector<8x128xf32>
    %219 = arith.addf %217, %218 : vector<8x128xf32>
    %220 = vector.extract_strided_slice %211 {offsets = [0, 128], sizes = [8, 128], strides = [1, 1]} : vector<8x512xf32> to vector<8x128xf32>
    %cst_103 = arith.constant 5.000000e-01 : f32
    %221 = vector.broadcast %cst_103 : f32 to vector<8x128xf32>
    %222 = arith.mulf %221, %220 : vector<8x128xf32>
    %223 = math.tanh %222 : vector<8x128xf32>
    %cst_104 = arith.constant 5.000000e-01 : f32
    %224 = vector.broadcast %cst_104 : f32 to vector<8x128xf32>
    %225 = arith.mulf %224, %223 : vector<8x128xf32>
    %cst_105 = arith.constant 5.000000e-01 : f32
    %226 = vector.broadcast %cst_105 : f32 to vector<8x128xf32>
    %227 = arith.addf %225, %226 : vector<8x128xf32>
    %228 = vector.extract_strided_slice %211 {offsets = [0, 256], sizes = [8, 128], strides = [1, 1]} : vector<8x512xf32> to vector<8x128xf32>
    %229 = math.tanh %228 : vector<8x128xf32>
    %230 = vector.extract_strided_slice %211 {offsets = [0, 384], sizes = [8, 128], strides = [1, 1]} : vector<8x512xf32> to vector<8x128xf32>
    %cst_106 = arith.constant 5.000000e-01 : f32
    %231 = vector.broadcast %cst_106 : f32 to vector<8x128xf32>
    %232 = arith.mulf %231, %230 : vector<8x128xf32>
    %233 = math.tanh %232 : vector<8x128xf32>
    %cst_107 = arith.constant 5.000000e-01 : f32
    %234 = vector.broadcast %cst_107 : f32 to vector<8x128xf32>
    %235 = arith.mulf %234, %233 : vector<8x128xf32>
    %cst_108 = arith.constant 5.000000e-01 : f32
    %236 = vector.broadcast %cst_108 : f32 to vector<8x128xf32>
    %237 = arith.addf %235, %236 : vector<8x128xf32>
    %238 = arith.mulf %227, %194 : vector<8x128xf32>
    %239 = arith.mulf %219, %229 : vector<8x128xf32>
    %240 = arith.addf %238, %239 : vector<8x128xf32>
    %241 = math.tanh %240 : vector<8x128xf32>
    %242 = arith.mulf %237, %241 : vector<8x128xf32>
    %243 = arith.index_cast %204 : i32 to index
    %c0_109 = arith.constant 0 : index
    %c0_110 = arith.constant 0 : index
    %244 = vector.load %arg8[%243, %c0_109, %c0_110] : memref<8x8x128xf32, #tpu.memory_space<vmem>>, vector<1x8x128xf32>
    %245 = vector.shape_cast %244 : vector<1x8x128xf32> to vector<8x128xf32>
    %246 = vector.shape_cast %242 : vector<8x128xf32> to vector<1x8x128xf32>
    tpu.vector_store %arg8[%243, %c0_109, %c0_110], %246 {strides = array<i32>} : memref<8x8x128xf32, #tpu.memory_space<vmem>>, vector<1x8x128xf32>,
    %c5_i32 = arith.constant 5 : i32
    %c2_i32_111 = arith.constant 2 : i32
    %247 = arith.muli %c2_i32_111, %c5_i32 : i32
    %c7_i32_112 = arith.constant 7 : i32
    %248 = arith.subi %c7_i32_112, %247 : i32
    %249 = arith.muli %arg0, %248 : i32
    %250 = arith.addi %c5_i32, %249 : i32
    %c0_113 = arith.constant 0 : index
    %c0_114 = arith.constant 0 : index
    %c0_115 = arith.constant 0 : index
    %251 = vector.load %arg4[%c0_113, %c0_114, %c0_115] : memref<1x128x512xf32, #tpu.memory_space<vmem>>, vector<1x128x512xf32>
    %252 = vector.shape_cast %251 : vector<1x128x512xf32> to vector<128x512xf32>
    %cst_116 = arith.constant dense<0.000000e+00> : vector<8x512xf32>
    %253 = tpu.matmul %242, %252, %cst_116 {dimension_numbers = #tpu.dot_dimension_numbers<[1], [0], [0], [1], [0, 0, 1, 1], [], []>} : vector<8x128xf32>, vector<128x512xf32>, vector<8x512xf32> -> vector<8x512xf32>
    %254 = arith.index_cast %250 : i32 to index
    %c0_117 = arith.constant 0 : index
    %c0_118 = arith.constant 0 : index
    %255 = vector.load %arg11[%254, %c0_117, %c0_118] : memref<8x8x512xf32, #tpu.memory_space<vmem>>, vector<1x8x512xf32>
    %256 = vector.shape_cast %255 : vector<1x8x512xf32> to vector<8x512xf32>
    %257 = arith.addf %253, %256 : vector<8x512xf32>
    %258 = vector.extract_strided_slice %257 {offsets = [0, 0], sizes = [8, 128], strides = [1, 1]} : vector<8x512xf32> to vector<8x128xf32>
    %cst_119 = arith.constant 5.000000e-01 : f32
    %259 = vector.broadcast %cst_119 : f32 to vector<8x128xf32>
    %260 = arith.mulf %259, %258 : vector<8x128xf32>
    %261 = math.tanh %260 : vector<8x128xf32>
    %cst_120 = arith.constant 5.000000e-01 : f32
    %262 = vector.broadcast %cst_120 : f32 to vector<8x128xf32>
    %263 = arith.mulf %262, %261 : vector<8x128xf32>
    %cst_121 = arith.constant 5.000000e-01 : f32
    %264 = vector.broadcast %cst_121 : f32 to vector<8x128xf32>
    %265 = arith.addf %263, %264 : vector<8x128xf32>
    %266 = vector.extract_strided_slice %257 {offsets = [0, 128], sizes = [8, 128], strides = [1, 1]} : vector<8x512xf32> to vector<8x128xf32>
    %cst_122 = arith.constant 5.000000e-01 : f32
    %267 = vector.broadcast %cst_122 : f32 to vector<8x128xf32>
    %268 = arith.mulf %267, %266 : vector<8x128xf32>
    %269 = math.tanh %268 : vector<8x128xf32>
    %cst_123 = arith.constant 5.000000e-01 : f32
    %270 = vector.broadcast %cst_123 : f32 to vector<8x128xf32>
    %271 = arith.mulf %270, %269 : vector<8x128xf32>
    %cst_124 = arith.constant 5.000000e-01 : f32
    %272 = vector.broadcast %cst_124 : f32 to vector<8x128xf32>
    %273 = arith.addf %271, %272 : vector<8x128xf32>
    %274 = vector.extract_strided_slice %257 {offsets = [0, 256], sizes = [8, 128], strides = [1, 1]} : vector<8x512xf32> to vector<8x128xf32>
    %275 = math.tanh %274 : vector<8x128xf32>
    %276 = vector.extract_strided_slice %257 {offsets = [0, 384], sizes = [8, 128], strides = [1, 1]} : vector<8x512xf32> to vector<8x128xf32>
    %cst_125 = arith.constant 5.000000e-01 : f32
    %277 = vector.broadcast %cst_125 : f32 to vector<8x128xf32>
    %278 = arith.mulf %277, %276 : vector<8x128xf32>
    %279 = math.tanh %278 : vector<8x128xf32>
    %cst_126 = arith.constant 5.000000e-01 : f32
    %280 = vector.broadcast %cst_126 : f32 to vector<8x128xf32>
    %281 = arith.mulf %280, %279 : vector<8x128xf32>
    %cst_127 = arith.constant 5.000000e-01 : f32
    %282 = vector.broadcast %cst_127 : f32 to vector<8x128xf32>
    %283 = arith.addf %281, %282 : vector<8x128xf32>
    %284 = arith.mulf %273, %240 : vector<8x128xf32>
    %285 = arith.mulf %265, %275 : vector<8x128xf32>
    %286 = arith.addf %284, %285 : vector<8x128xf32>
    %287 = math.tanh %286 : vector<8x128xf32>
    %288 = arith.mulf %283, %287 : vector<8x128xf32>
    %289 = arith.index_cast %250 : i32 to index
    %c0_128 = arith.constant 0 : index
    %c0_129 = arith.constant 0 : index
    %290 = vector.load %arg8[%289, %c0_128, %c0_129] : memref<8x8x128xf32, #tpu.memory_space<vmem>>, vector<1x8x128xf32>
    %291 = vector.shape_cast %290 : vector<1x8x128xf32> to vector<8x128xf32>
    %292 = vector.shape_cast %288 : vector<8x128xf32> to vector<1x8x128xf32>
    tpu.vector_store %arg8[%289, %c0_128, %c0_129], %292 {strides = array<i32>} : memref<8x8x128xf32, #tpu.memory_space<vmem>>, vector<1x8x128xf32>,
    %c6_i32 = arith.constant 6 : i32
    %c2_i32_130 = arith.constant 2 : i32
    %293 = arith.muli %c2_i32_130, %c6_i32 : i32
    %c7_i32_131 = arith.constant 7 : i32
    %294 = arith.subi %c7_i32_131, %293 : i32
    %295 = arith.muli %arg0, %294 : i32
    %296 = arith.addi %c6_i32, %295 : i32
    %c0_132 = arith.constant 0 : index
    %c0_133 = arith.constant 0 : index
    %c0_134 = arith.constant 0 : index
    %297 = vector.load %arg4[%c0_132, %c0_133, %c0_134] : memref<1x128x512xf32, #tpu.memory_space<vmem>>, vector<1x128x512xf32>
    %298 = vector.shape_cast %297 : vector<1x128x512xf32> to vector<128x512xf32>
    %cst_135 = arith.constant dense<0.000000e+00> : vector<8x512xf32>
    %299 = tpu.matmul %288, %298, %cst_135 {dimension_numbers = #tpu.dot_dimension_numbers<[1], [0], [0], [1], [0, 0, 1, 1], [], []>} : vector<8x128xf32>, vector<128x512xf32>, vector<8x512xf32> -> vector<8x512xf32>
    %300 = arith.index_cast %296 : i32 to index
    %c0_136 = arith.constant 0 : index
    %c0_137 = arith.constant 0 : index
    %301 = vector.load %arg11[%300, %c0_136, %c0_137] : memref<8x8x512xf32, #tpu.memory_space<vmem>>, vector<1x8x512xf32>
    %302 = vector.shape_cast %301 : vector<1x8x512xf32> to vector<8x512xf32>
    %303 = arith.addf %299, %302 : vector<8x512xf32>
    %304 = vector.extract_strided_slice %303 {offsets = [0, 0], sizes = [8, 128], strides = [1, 1]} : vector<8x512xf32> to vector<8x128xf32>
    %cst_138 = arith.constant 5.000000e-01 : f32
    %305 = vector.broadcast %cst_138 : f32 to vector<8x128xf32>
    %306 = arith.mulf %305, %304 : vector<8x128xf32>
    %307 = math.tanh %306 : vector<8x128xf32>
    %cst_139 = arith.constant 5.000000e-01 : f32
    %308 = vector.broadcast %cst_139 : f32 to vector<8x128xf32>
    %309 = arith.mulf %308, %307 : vector<8x128xf32>
    %cst_140 = arith.constant 5.000000e-01 : f32
    %310 = vector.broadcast %cst_140 : f32 to vector<8x128xf32>
    %311 = arith.addf %309, %310 : vector<8x128xf32>
    %312 = vector.extract_strided_slice %303 {offsets = [0, 128], sizes = [8, 128], strides = [1, 1]} : vector<8x512xf32> to vector<8x128xf32>
    %cst_141 = arith.constant 5.000000e-01 : f32
    %313 = vector.broadcast %cst_141 : f32 to vector<8x128xf32>
    %314 = arith.mulf %313, %312 : vector<8x128xf32>
    %315 = math.tanh %314 : vector<8x128xf32>
    %cst_142 = arith.constant 5.000000e-01 : f32
    %316 = vector.broadcast %cst_142 : f32 to vector<8x128xf32>
    %317 = arith.mulf %316, %315 : vector<8x128xf32>
    %cst_143 = arith.constant 5.000000e-01 : f32
    %318 = vector.broadcast %cst_143 : f32 to vector<8x128xf32>
    %319 = arith.addf %317, %318 : vector<8x128xf32>
    %320 = vector.extract_strided_slice %303 {offsets = [0, 256], sizes = [8, 128], strides = [1, 1]} : vector<8x512xf32> to vector<8x128xf32>
    %321 = math.tanh %320 : vector<8x128xf32>
    %322 = vector.extract_strided_slice %303 {offsets = [0, 384], sizes = [8, 128], strides = [1, 1]} : vector<8x512xf32> to vector<8x128xf32>
    %cst_144 = arith.constant 5.000000e-01 : f32
    %323 = vector.broadcast %cst_144 : f32 to vector<8x128xf32>
    %324 = arith.mulf %323, %322 : vector<8x128xf32>
    %325 = math.tanh %324 : vector<8x128xf32>
    %cst_145 = arith.constant 5.000000e-01 : f32
    %326 = vector.broadcast %cst_145 : f32 to vector<8x128xf32>
    %327 = arith.mulf %326, %325 : vector<8x128xf32>
    %cst_146 = arith.constant 5.000000e-01 : f32
    %328 = vector.broadcast %cst_146 : f32 to vector<8x128xf32>
    %329 = arith.addf %327, %328 : vector<8x128xf32>
    %330 = arith.mulf %319, %286 : vector<8x128xf32>
    %331 = arith.mulf %311, %321 : vector<8x128xf32>
    %332 = arith.addf %330, %331 : vector<8x128xf32>
    %333 = math.tanh %332 : vector<8x128xf32>
    %334 = arith.mulf %329, %333 : vector<8x128xf32>
    %335 = arith.index_cast %296 : i32 to index
    %c0_147 = arith.constant 0 : index
    %c0_148 = arith.constant 0 : index
    %336 = vector.load %arg8[%335, %c0_147, %c0_148] : memref<8x8x128xf32, #tpu.memory_space<vmem>>, vector<1x8x128xf32>
    %337 = vector.shape_cast %336 : vector<1x8x128xf32> to vector<8x128xf32>
    %338 = vector.shape_cast %334 : vector<8x128xf32> to vector<1x8x128xf32>
    tpu.vector_store %arg8[%335, %c0_147, %c0_148], %338 {strides = array<i32>} : memref<8x8x128xf32, #tpu.memory_space<vmem>>, vector<1x8x128xf32>,
    %c7_i32_149 = arith.constant 7 : i32
    %c2_i32_150 = arith.constant 2 : i32
    %339 = arith.muli %c2_i32_150, %c7_i32_149 : i32
    %c7_i32_151 = arith.constant 7 : i32
    %340 = arith.subi %c7_i32_151, %339 : i32
    %341 = arith.muli %arg0, %340 : i32
    %342 = arith.addi %c7_i32_149, %341 : i32
    %c0_152 = arith.constant 0 : index
    %c0_153 = arith.constant 0 : index
    %c0_154 = arith.constant 0 : index
    %343 = vector.load %arg4[%c0_152, %c0_153, %c0_154] : memref<1x128x512xf32, #tpu.memory_space<vmem>>, vector<1x128x512xf32>
    %344 = vector.shape_cast %343 : vector<1x128x512xf32> to vector<128x512xf32>
    %cst_155 = arith.constant dense<0.000000e+00> : vector<8x512xf32>
    %345 = tpu.matmul %334, %344, %cst_155 {dimension_numbers = #tpu.dot_dimension_numbers<[1], [0], [0], [1], [0, 0, 1, 1], [], []>} : vector<8x128xf32>, vector<128x512xf32>, vector<8x512xf32> -> vector<8x512xf32>
    %346 = arith.index_cast %342 : i32 to index
    %c0_156 = arith.constant 0 : index
    %c0_157 = arith.constant 0 : index
    %347 = vector.load %arg11[%346, %c0_156, %c0_157] : memref<8x8x512xf32, #tpu.memory_space<vmem>>, vector<1x8x512xf32>
    %348 = vector.shape_cast %347 : vector<1x8x512xf32> to vector<8x512xf32>
    %349 = arith.addf %345, %348 : vector<8x512xf32>
    %350 = vector.extract_strided_slice %349 {offsets = [0, 0], sizes = [8, 128], strides = [1, 1]} : vector<8x512xf32> to vector<8x128xf32>
    %cst_158 = arith.constant 5.000000e-01 : f32
    %351 = vector.broadcast %cst_158 : f32 to vector<8x128xf32>
    %352 = arith.mulf %351, %350 : vector<8x128xf32>
    %353 = math.tanh %352 : vector<8x128xf32>
    %cst_159 = arith.constant 5.000000e-01 : f32
    %354 = vector.broadcast %cst_159 : f32 to vector<8x128xf32>
    %355 = arith.mulf %354, %353 : vector<8x128xf32>
    %cst_160 = arith.constant 5.000000e-01 : f32
    %356 = vector.broadcast %cst_160 : f32 to vector<8x128xf32>
    %357 = arith.addf %355, %356 : vector<8x128xf32>
    %358 = vector.extract_strided_slice %349 {offsets = [0, 128], sizes = [8, 128], strides = [1, 1]} : vector<8x512xf32> to vector<8x128xf32>
    %cst_161 = arith.constant 5.000000e-01 : f32
    %359 = vector.broadcast %cst_161 : f32 to vector<8x128xf32>
    %360 = arith.mulf %359, %358 : vector<8x128xf32>
    %361 = math.tanh %360 : vector<8x128xf32>
    %cst_162 = arith.constant 5.000000e-01 : f32
    %362 = vector.broadcast %cst_162 : f32 to vector<8x128xf32>
    %363 = arith.mulf %362, %361 : vector<8x128xf32>
    %cst_163 = arith.constant 5.000000e-01 : f32
    %364 = vector.broadcast %cst_163 : f32 to vector<8x128xf32>
    %365 = arith.addf %363, %364 : vector<8x128xf32>
    %366 = vector.extract_strided_slice %349 {offsets = [0, 256], sizes = [8, 128], strides = [1, 1]} : vector<8x512xf32> to vector<8x128xf32>
    %367 = math.tanh %366 : vector<8x128xf32>
    %368 = vector.extract_strided_slice %349 {offsets = [0, 384], sizes = [8, 128], strides = [1, 1]} : vector<8x512xf32> to vector<8x128xf32>
    %cst_164 = arith.constant 5.000000e-01 : f32
    %369 = vector.broadcast %cst_164 : f32 to vector<8x128xf32>
    %370 = arith.mulf %369, %368 : vector<8x128xf32>
    %371 = math.tanh %370 : vector<8x128xf32>
    %cst_165 = arith.constant 5.000000e-01 : f32
    %372 = vector.broadcast %cst_165 : f32 to vector<8x128xf32>
    %373 = arith.mulf %372, %371 : vector<8x128xf32>
    %cst_166 = arith.constant 5.000000e-01 : f32
    %374 = vector.broadcast %cst_166 : f32 to vector<8x128xf32>
    %375 = arith.addf %373, %374 : vector<8x128xf32>
    %376 = arith.mulf %365, %332 : vector<8x128xf32>
    %377 = arith.mulf %357, %367 : vector<8x128xf32>
    %378 = arith.addf %376, %377 : vector<8x128xf32>
    %379 = math.tanh %378 : vector<8x128xf32>
    %380 = arith.mulf %375, %379 : vector<8x128xf32>
    %381 = arith.index_cast %342 : i32 to index
    %c0_167 = arith.constant 0 : index
    %c0_168 = arith.constant 0 : index
    %382 = vector.load %arg8[%381, %c0_167, %c0_168] : memref<8x8x128xf32, #tpu.memory_space<vmem>>, vector<1x8x128xf32>
    %383 = vector.shape_cast %382 : vector<1x8x128xf32> to vector<8x128xf32>
    %384 = vector.shape_cast %380 : vector<8x128xf32> to vector<1x8x128xf32>
    tpu.vector_store %arg8[%381, %c0_167, %c0_168], %384 {strides = array<i32>} : memref<8x8x128xf32, #tpu.memory_space<vmem>>, vector<1x8x128xf32>,
    %c8_i32 = arith.constant 8 : i32
    %c0_169 = arith.constant 0 : index
    %c0_170 = arith.constant 0 : index
    %385 = vector.load %arg12[%c0_169, %c0_170] : memref<8x128xf32, #tpu.memory_space<vmem>>, vector<8x128xf32>
    tpu.vector_store %arg12[%c0_169, %c0_170], %380 {strides = array<i32>} : memref<8x128xf32, #tpu.memory_space<vmem>>, vector<8x128xf32>,
    %c0_171 = arith.constant 0 : index
    %c0_172 = arith.constant 0 : index
    %386 = vector.load %arg13[%c0_171, %c0_172] : memref<8x128xf32, #tpu.memory_space<vmem>>, vector<8x128xf32>
    tpu.vector_store %arg13[%c0_171, %c0_172], %378 {strides = array<i32>} : memref<8x128xf32, #tpu.memory_space<vmem>>, vector<8x128xf32>,
    %c0_173 = arith.constant 0 : index
    %c0_174 = arith.constant 0 : index
    %c0_175 = arith.constant 0 : index
    %387 = vector.load %arg9[%c0_173, %c0_174, %c0_175] : memref<1x8x128xf32, #tpu.memory_space<vmem>>, vector<1x8x128xf32>
    %388 = vector.shape_cast %387 : vector<1x8x128xf32> to vector<8x128xf32>
    %389 = vector.shape_cast %380 : vector<8x128xf32> to vector<1x8x128xf32>
    tpu.vector_store %arg9[%c0_173, %c0_174, %c0_175], %389 {strides = array<i32>} : memref<1x8x128xf32, #tpu.memory_space<vmem>>, vector<1x8x128xf32>,
    %c0_176 = arith.constant 0 : index
    %c0_177 = arith.constant 0 : index
    %c0_178 = arith.constant 0 : index
    %390 = vector.load %arg10[%c0_176, %c0_177, %c0_178] : memref<1x8x128xf32, #tpu.memory_space<vmem>>, vector<1x8x128xf32>
    %391 = vector.shape_cast %390 : vector<1x8x128xf32> to vector<8x128xf32>
    %392 = vector.shape_cast %378 : vector<8x128xf32> to vector<1x8x128xf32>
    tpu.vector_store %arg10[%c0_176, %c0_177, %c0_178], %392 {strides = array<i32>} : memref<1x8x128xf32, #tpu.memory_space<vmem>>, vector<1x8x128xf32>,
    return
  }
  func.func @transform_0(%arg0: i32, %arg1: i32) -> (i32, i32, i32) {
    %c2_i32 = arith.constant 2 : i32
    %0 = arith.muli %c2_i32, %arg1 : i32
    %c0_i32 = arith.constant 0 : i32
    %1 = arith.subi %c0_i32, %0 : i32
    %2 = arith.muli %arg0, %1 : i32
    %3 = arith.addi %arg1, %2 : i32
    %c0_i32_0 = arith.constant 0 : i32
    %c0_i32_1 = arith.constant 0 : i32
    %c0_i32_2 = arith.constant 0 : i32
    return %3, %c0_i32_0, %c0_i32_1 : i32, i32, i32
  }
  func.func @transform_1(%arg0: i32, %arg1: i32) -> (i32, i32, i32) {
    %c0_i32 = arith.constant 0 : i32
    %c0_i32_0 = arith.constant 0 : i32
    %c0_i32_1 = arith.constant 0 : i32
    return %arg0, %c0_i32, %c0_i32_0 : i32, i32, i32
  }
  func.func @transform_2(%arg0: i32, %arg1: i32) -> (i32, i32, i32) {
    %c0_i32 = arith.constant 0 : i32
    %c0_i32_0 = arith.constant 0 : i32
    %c0_i32_1 = arith.constant 0 : i32
    return %arg0, %c0_i32, %c0_i32_0 : i32, i32, i32
  }
  func.func @transform_3(%arg0: i32, %arg1: i32) -> (i32, i32, i32) {
    %c0_i32 = arith.constant 0 : i32
    %c0_i32_0 = arith.constant 0 : i32
    %c0_i32_1 = arith.constant 0 : i32
    return %arg0, %c0_i32, %c0_i32_0 : i32, i32, i32
  }
  func.func @transform_4(%arg0: i32, %arg1: i32) -> (i32, i32, i32) {
    %c0_i32 = arith.constant 0 : i32
    %c0_i32_0 = arith.constant 0 : i32
    %c0_i32_1 = arith.constant 0 : i32
    return %arg0, %c0_i32, %c0_i32_0 : i32, i32, i32
  }
  func.func @transform_5(%arg0: i32, %arg1: i32) -> (i32, i32, i32) {
    %c0_i32 = arith.constant 0 : i32
    %c0_i32_0 = arith.constant 0 : i32
    %c0_i32_1 = arith.constant 0 : i32
    return %arg0, %c0_i32, %c0_i32_0 : i32, i32, i32
  }
  func.func @transform_6(%arg0: i32, %arg1: i32) -> (i32, i32, i32) {
    %c2_i32 = arith.constant 2 : i32
    %0 = arith.muli %c2_i32, %arg1 : i32
    %c0_i32 = arith.constant 0 : i32
    %1 = arith.subi %c0_i32, %0 : i32
    %2 = arith.muli %arg0, %1 : i32
    %3 = arith.addi %arg1, %2 : i32
    %c0_i32_0 = arith.constant 0 : i32
    %c0_i32_1 = arith.constant 0 : i32
    return %3, %c0_i32_0, %arg0 : i32, i32, i32
  }
  func.func @transform_7(%arg0: i32, %arg1: i32) -> (i32, i32, i32) {
    %c0_i32 = arith.constant 0 : i32
    %c0_i32_0 = arith.constant 0 : i32
    %c0_i32_1 = arith.constant 0 : i32
    return %arg0, %c0_i32, %c0_i32_0 : i32, i32, i32
  }
  func.func @transform_8(%arg0: i32, %arg1: i32) -> (i32, i32, i32) {
    %c0_i32 = arith.constant 0 : i32
    %c0_i32_0 = arith.constant 0 : i32
    %c0_i32_1 = arith.constant 0 : i32
    return %arg0, %c0_i32, %c0_i32_0 : i32, i32, i32
  }
}

</mosaic_0001>

<llo_original>
// kernel: lstm_frame_forward.3
$region0: #{lstm_frame_forward.3}
  #allocation0 [shape = 'u32[]', space=smem, size = 0x4, offset = 0x4, fixed_abs, tag = 'smem constant byte address 0x4 - core index']
  #allocation1 [shape = 'u32[72,128]{1,0:T(1,128)}', space=vmem, size = 0x9000, scoped, tag = 'internal scratch']
  #allocation2 [shape = 'f32[8,8,512]{2,1,0:T(8,128)}', space=vmem, size = 0x20000, scoped, tag = 'scratch operand']
  #allocation3 [shape = 'f32[8,128]{1,0:T(8,128)}', space=vmem, size = 0x1000, scoped, tag = 'scratch operand']
  #allocation4 [shape = 'f32[8,128]{1,0:T(8,128)}', space=vmem, size = 0x1000, scoped, tag = 'scratch operand']
  %s0 = inlined_call_operand.vmem [shape: f32[8,8,256], index: 0, kind: input, shape index: {}]
  %s1 = inlined_call_operand.vmem [shape: f32[2,256,512], index: 1, kind: input, shape index: {}]
  %s2 = inlined_call_operand.vmem [shape: f32[2,128,512], index: 2, kind: input, shape index: {}]
  %s3 = inlined_call_operand.vmem [shape: f32[2,8,512], index: 3, kind: input, shape index: {}]
  %s4 = inlined_call_operand.vmem [shape: f32[2,8,128], index: 4, kind: input, shape index: {}, may-alias: {4,5}]
  %s5 = inlined_call_operand.vmem [shape: f32[2,8,128], index: 5, kind: input, shape index: {}, may-alias: {4,5}]
  %s6 = inlined_call_operand.vmem [shape: f32[8,8,256], index: 6, kind: output, shape index: {0}]
  %s7 = inlined_call_operand.vmem [shape: f32[2,8,128], index: 7, kind: output, shape index: {1}]
  %s8 = inlined_call_operand.vmem [shape: f32[2,8,128], index: 8, kind: output, shape index: {2}]
  %9 = xla_tuple %s6, %s7, %s8
  %s10 = sld [smem:[#allocation0]]
  $region111: #{lstm_frame_forward.3} parent=0
    _
  %s12 = ssub.s32 1, %s10
  %s13 = scalar_select 0, %s12, %s10
  $region1: #{lstm_frame_forward.3} parent=0
    #allocation5 [shape = 'u8[65536]{0}', space=vmem, size = 0x10000, scoped, tag = 'output window, operand 0']
    loop: start=0, step=1, limit=4
    $region2: #{lstm_frame_forward.3} parent=1 // loop_pre_header
      _
    $region3: #{lstm_frame_forward.3} parent=1 // loop_header
      %s15 = sphi 0, %s19
      %p16 = scmp.ge.s32.totalorder %s15, 4
      %s22 = sphi 0, %s34
      %s23 = sphi 0, %s30
      %s24 = sphi 0, %s22
      %s25 = sphi 0, %s23
      %s26 = sphi 0, %s24
      %s27 = sphi 0, %s25
      %s45 = sphi 0, %s47
      %s48 = sphi 0, %s45
      %s49 = sphi 0, %s48
      %s65 = sphi 0, %s49
      %s71 = sphi 0, %s73
      %s74 = sphi 0, %s71
      %s75 = sphi 0, %s74
      %s91 = sphi 0, %s75
      %s97 = sphi 0, %s99
      %s100 = sphi 0, %s97
      %s101 = sphi 0, %s100
      %s117 = sphi 0, %s101
      %s123 = sphi 0, %s125
      %s126 = sphi 0, %s123
      %s127 = sphi 0, %s126
      %s143 = sphi 0, %s127
      %s149 = sphi 0, %s151
      %s152 = sphi 0, %s149
      %s153 = sphi 0, %s152
      %s169 = sphi 0, %s153
      %s175 = sphi 0, %s177
      %s178 = sphi 0, %s175
      %s179 = sphi 0, %s178
      %s195 = sphi 0, %s179
      %s211 = sphi 0, %s213
      %s214 = sphi 0, %s211
      %s215 = sphi 0, %s214
      %s231 = sphi 0, %s215
      %s237 = sphi 0, %s239
      %s240 = sphi 0, %s237
      %s241 = sphi 0, %s240
      %s257 = sphi 0, %s241
      %s263 = sphi 0, %s265
      %s266 = sphi 0, %s263
      %s267 = sphi 0, %s266
      %s283 = sphi 0, %s267
    $region4: #{lstm_frame_forward.3} parent=1 // loop_header_branch
      %18 = sbr.rel (%p16) target = $region8
    $region5: #{lstm_frame_forward.3} parent=1 // loop_body
      %s20 = ssub.s32 %s15, 1
      %s21 = ssub.s32 %s15, 2
      %s28 = sadd.s32 1, %s23
      %p29 = scmp.ge.s32.totalorder %s28, 1
      %s30 = scalar_select %p29, 0, %s28
      %s31 = sadd.s32 1, %s22
      %s32 = scalar_select %p29, %s31, %s22
      %p33 = scmp.ge.s32.totalorder %s32, 2
      %s34 = scalar_select %p33, 0, %s32
      %s35 = smul.u32 %s23, 2
      %s36 = ssub.s32 0, %s35
      %s37 = smul.u32 %s22, %s36
      %s38 = sadd.s32 %s23, %s37
      %s39 = smul.u32 %s30, 2
      %s40 = ssub.s32 0, %s39
      %s41 = smul.u32 %s34, %s40
      %s42 = sadd.s32 %s30, %s41
      %s43 = ssub.s32 %s38, %s42
      %p44 = scmp.eq.s32.totalorder %s43, 0
      %s46 = sadd.s32 %s45, 1
      %s47 = scalar_select %p44, %s45, %s46
      %p50 = pneg %p44
      %p51 = scmp.eq.s32.totalorder %s15, 1
      %p52 = por %p50, %p51
      %p53 = scmp.ne.s32.totalorder %s45, %s48
      %p54 = scmp.eq.s32.totalorder %s15, 0
      %p55 = por %p53, %p54
      %p56 = scmp.ne.s32.totalorder %s45, %s48
      %p57 = scmp.eq.s32.totalorder %s20, 1
      %p58 = por %p56, %p57
      %p59 = scmp.ne.s32.totalorder %s48, %s49
      %p60 = scmp.eq.s32.totalorder %s20, 0
      %p61 = por %p59, %p60
      %p62 = scmp.ne.s32.totalorder %s48, %s49
      %p63 = scmp.eq.s32.totalorder %s21, 1
      %p64 = por %p62, %p63
      %p66 = scmp.ne.s32.totalorder %s49, %s65
      %p67 = scmp.eq.s32.totalorder %s21, 0
      %p68 = por %p66, %p67
      %s69 = ssub.s32 %s22, %s34
      %p70 = scmp.eq.s32.totalorder %s69, 0
      %s72 = sadd.s32 %s71, 1
      %s73 = scalar_select %p70, %s71, %s72
      %p76 = pneg %p70
      %p77 = scmp.eq.s32.totalorder %s15, 1
      %p78 = por %p76, %p77
      %p79 = scmp.ne.s32.totalorder %s71, %s74
      %p80 = scmp.eq.s32.totalorder %s15, 0
      %p81 = por %p79, %p80
      %p82 = scmp.ne.s32.totalorder %s71, %s74
      %p83 = scmp.eq.s32.totalorder %s20, 1
      %p84 = por %p82, %p83
      %p85 = scmp.ne.s32.totalorder %s74, %s75
      %p86 = scmp.eq.s32.totalorder %s20, 0
      %p87 = por %p85, %p86
      %p88 = scmp.ne.s32.totalorder %s74, %s75
      %p89 = scmp.eq.s32.totalorder %s21, 1
      %p90 = por %p88, %p89
      %p92 = scmp.ne.s32.totalorder %s75, %s91
      %p93 = scmp.eq.s32.totalorder %s21, 0
      %p94 = por %p92, %p93
      %s95 = ssub.s32 %s22, %s34
      %p96 = scmp.eq.s32.totalorder %s95, 0
      %s98 = sadd.s32 %s97, 1
      %s99 = scalar_select %p96, %s97, %s98
      %p102 = pneg %p96
      %p103 = scmp.eq.s32.totalorder %s15, 1
      %p104 = por %p102, %p103
      %p105 = scmp.ne.s32.totalorder %s97, %s100
      %p106 = scmp.eq.s32.totalorder %s15, 0
      %p107 = por %p105, %p106
      %p108 = scmp.ne.s32.totalorder %s97, %s100
      %p109 = scmp.eq.s32.totalorder %s20, 1
      %p110 = por %p108, %p109
      %p111 = scmp.ne.s32.totalorder %s100, %s101
      %p112 = scmp.eq.s32.totalorder %s20, 0
      %p113 = por %p111, %p112
      %p114 = scmp.ne.s32.totalorder %s100, %s101
      %p115 = scmp.eq.s32.totalorder %s21, 1
      %p116 = por %p114, %p115
      %p118 = scmp.ne.s32.totalorder %s101, %s117
      %p119 = scmp.eq.s32.totalorder %s21, 0
      %p120 = por %p118, %p119
      %s121 = ssub.s32 %s22, %s34
      %p122 = scmp.eq.s32.totalorder %s121, 0
      %s124 = sadd.s32 %s123, 1
      %s125 = scalar_select %p122, %s123, %s124
      %p128 = pneg %p122
      %p129 = scmp.eq.s32.totalorder %s15, 1
      %p130 = por %p128, %p129
      %p131 = scmp.ne.s32.totalorder %s123, %s126
      %p132 = scmp.eq.s32.totalorder %s15, 0
      %p133 = por %p131, %p132
      %p134 = scmp.ne.s32.totalorder %s123, %s126
      %p135 = scmp.eq.s32.totalorder %s20, 1
      %p136 = por %p134, %p135
      %p137 = scmp.ne.s32.totalorder %s126, %s127
      %p138 = scmp.eq.s32.totalorder %s20, 0
      %p139 = por %p137, %p138
      %p140 = scmp.ne.s32.totalorder %s126, %s127
      %p141 = scmp.eq.s32.totalorder %s21, 1
      %p142 = por %p140, %p141
      %p144 = scmp.ne.s32.totalorder %s127, %s143
      %p145 = scmp.eq.s32.totalorder %s21, 0
      %p146 = por %p144, %p145
      %s147 = ssub.s32 %s22, %s34
      %p148 = scmp.eq.s32.totalorder %s147, 0
      %s150 = sadd.s32 %s149, 1
      %s151 = scalar_select %p148, %s149, %s150
      %p154 = pneg %p148
      %p155 = scmp.eq.s32.totalorder %s15, 1
      %p156 = por %p154, %p155
      %p157 = scmp.ne.s32.totalorder %s149, %s152
      %p158 = scmp.eq.s32.totalorder %s15, 0
      %p159 = por %p157, %p158
      %p160 = scmp.ne.s32.totalorder %s149, %s152
      %p161 = scmp.eq.s32.totalorder %s20, 1
      %p162 = por %p160, %p161
      %p163 = scmp.ne.s32.totalorder %s152, %s153
      %p164 = scmp.eq.s32.totalorder %s20, 0
      %p165 = por %p163, %p164
      %p166 = scmp.ne.s32.totalorder %s152, %s153
      %p167 = scmp.eq.s32.totalorder %s21, 1
      %p168 = por %p166, %p167
      %p170 = scmp.ne.s32.totalorder %s153, %s169
      %p171 = scmp.eq.s32.totalorder %s21, 0
      %p172 = por %p170, %p171
      %s173 = ssub.s32 %s22, %s34
      %p174 = scmp.eq.s32.totalorder %s173, 0
      %s176 = sadd.s32 %s175, 1
      %s177 = scalar_select %p174, %s175, %s176
      %p180 = pneg %p174
      %p181 = scmp.eq.s32.totalorder %s15, 1
      %p182 = por %p180, %p181
      %p183 = scmp.ne.s32.totalorder %s175, %s178
      %p184 = scmp.eq.s32.totalorder %s15, 0
      %p185 = por %p183, %p184
      %p186 = scmp.ne.s32.totalorder %s175, %s178
      %p187 = scmp.eq.s32.totalorder %s20, 1
      %p188 = por %p186, %p187
      %p189 = scmp.ne.s32.totalorder %s178, %s179
      %p190 = scmp.eq.s32.totalorder %s20, 0
      %p191 = por %p189, %p190
      %p192 = scmp.ne.s32.totalorder %s178, %s179
      %p193 = scmp.eq.s32.totalorder %s21, 1
      %p194 = por %p192, %p193
      %p196 = scmp.ne.s32.totalorder %s179, %s195
      %p197 = scmp.eq.s32.totalorder %s21, 0
      %p198 = por %p196, %p197
      %s199 = smul.u32 %s23, 2
      %s200 = ssub.s32 0, %s199
      %s201 = smul.u32 %s22, %s200
      %s202 = sadd.s32 %s23, %s201
      %s203 = smul.u32 %s30, 2
      %s204 = ssub.s32 0, %s203
      %s205 = smul.u32 %s34, %s204
      %s206 = sadd.s32 %s30, %s205
      %s207 = ssub.s32 %s202, %s206
      %s208 = ssub.s32 %s22, %s34
      %s209 = sor.u32 %s207, %s208
      %p210 = scmp.eq.s32.totalorder %s209, 0
      %s212 = sadd.s32 %s211, 1
      %s213 = scalar_select %p210, %s211, %s212
      %p216 = pneg %p210
      %p217 = scmp.eq.s32.totalorder %s15, 1
      %p218 = por %p216, %p217
      %p219 = scmp.ne.s32.totalorder %s211, %s214
      %p220 = scmp.eq.s32.totalorder %s15, 0
      %p221 = por %p219, %p220
      %p222 = scmp.ne.s32.totalorder %s211, %s214
      %p223 = scmp.eq.s32.totalorder %s20, 1
      %p224 = por %p222, %p223
      %p225 = scmp.ne.s32.totalorder %s214, %s215
      %p226 = scmp.eq.s32.totalorder %s20, 0
      %p227 = por %p225, %p226
      %p228 = scmp.ne.s32.totalorder %s214, %s215
      %p229 = scmp.eq.s32.totalorder %s21, 1
      %p230 = por %p228, %p229
      %p232 = scmp.ne.s32.totalorder %s215, %s231
      %p233 = scmp.eq.s32.totalorder %s21, 0
      %p234 = por %p232, %p233
      %s235 = ssub.s32 %s22, %s34
      %p236 = scmp.eq.s32.totalorder %s235, 0
      %s238 = sadd.s32 %s237, 1
      %s239 = scalar_select %p236, %s237, %s238
      %p242 = pneg %p236
      %p243 = scmp.eq.s32.totalorder %s15, 1
      %p244 = por %p242, %p243
      %p245 = scmp.ne.s32.totalorder %s237, %s240
      %p246 = scmp.eq.s32.totalorder %s15, 0
      %p247 = por %p245, %p246
      %p248 = scmp.ne.s32.totalorder %s237, %s240
      %p249 = scmp.eq.s32.totalorder %s20, 1
      %p250 = por %p248, %p249
      %p251 = scmp.ne.s32.totalorder %s240, %s241
      %p252 = scmp.eq.s32.totalorder %s20, 0
      %p253 = por %p251, %p252
      %p254 = scmp.ne.s32.totalorder %s240, %s241
      %p255 = scmp.eq.s32.totalorder %s21, 1
      %p256 = por %p254, %p255
      %p258 = scmp.ne.s32.totalorder %s241, %s257
      %p259 = scmp.eq.s32.totalorder %s21, 0
      %p260 = por %p258, %p259
      %s261 = ssub.s32 %s22, %s34
      %p262 = scmp.eq.s32.totalorder %s261, 0
      %s264 = sadd.s32 %s263, 1
      %s265 = scalar_select %p262, %s263, %s264
      %p268 = pneg %p262
      %p269 = scmp.eq.s32.totalorder %s15, 1
      %p270 = por %p268, %p269
      %p271 = scmp.ne.s32.totalorder %s263, %s266
      %p272 = scmp.eq.s32.totalorder %s15, 0
      %p273 = por %p271, %p272
      %p274 = scmp.ne.s32.totalorder %s263, %s266
      %p275 = scmp.eq.s32.totalorder %s20, 1
      %p276 = por %p274, %p275
      %p277 = scmp.ne.s32.totalorder %s266, %s267
      %p278 = scmp.eq.s32.totalorder %s20, 0
      %p279 = por %p277, %p278
      %p280 = scmp.ne.s32.totalorder %s266, %s267
      %p281 = scmp.eq.s32.totalorder %s21, 1
      %p282 = por %p280, %p281
      %p284 = scmp.ne.s32.totalorder %s267, %s283
      %p285 = scmp.eq.s32.totalorder %s21, 0
      %p286 = por %p284, %p285
      %p287 = scmp.le.s32.totalorder 1, %s15
      %p288 = scmp.lt.s32.totalorder %s15, 3
      %p289 = pnand %p287, %p288
      %p290 = pneg %p289
      // Predicated region
      $region9: #{lstm_frame_forward.3} parent=5 // pred_check
        _
      $region10: #{lstm_frame_forward.3} parent=5 // pred_check_branch
        %292 = sbr.rel (%p289) target = $region12
      $region11: #{lstm_frame_forward.3} parent=5 // pred_region
        %s293 = ssub.s32 %s15, 1
      $region12: #{lstm_frame_forward.3} parent=5 // pred_fallthru
        _
      %p294 = scmp.lt.s32.totalorder %s15, 2
      // Predicated region
      $region13: #{lstm_frame_forward.3} parent=5 // pred_check
        %p295 = pneg %p294
      $region14: #{lstm_frame_forward.3} parent=5 // pred_check_branch
        %297 = sbr.rel (%p295) target = $region16
      $region15: #{lstm_frame_forward.3} parent=5 // pred_region
        // Predicated region
        $region17: #{lstm_frame_forward.3} parent=15 // pred_check
          %p298 = pneg %p55
        $region18: #{lstm_frame_forward.3} parent=15 // pred_check_branch
          %300 = sbr.rel (%p298) target = $region20
        $region19: #{lstm_frame_forward.3} parent=15 // pred_region
          %s301 = smul.u32 %s23, 2
          %s302 = ssub.s32 0, %s301
          %s303 = smul.u32 %s22, %s302
          %s304 = sadd.s32 %s23, %s303
          %s305 = smul.u32 8, %s304
          %p306 = scmp.lt.s32.totalorder %s305, 7
          %s307 = scalar_select %p306, %s305, 7
          %s308 = smul.addr %s307, 2
          %s309 = smul.addr %s308, 8
          %s310 = scalar_lea.vmem %s0, %s309
          %s311 = smul.u32 %s23, 2
          %s312 = ssub.s32 0, %s311
          %s313 = smul.u32 %s22, %s312
          %s314 = sadd.s32 %s23, %s313
          %s315 = smul.u32 8, %s314
        $region20: #{lstm_frame_forward.3} parent=15 // pred_fallthru
          _
        // Predicated region
        $region21: #{lstm_frame_forward.3} parent=15 // pred_check
          %p316 = pneg %p81
        $region22: #{lstm_frame_forward.3} parent=15 // pred_check_branch
          %318 = sbr.rel (%p316) target = $region24
        $region23: #{lstm_frame_forward.3} parent=15 // pred_region
          %p319 = scmp.lt.s32.totalorder %s22, 1
          %s320 = scalar_select %p319, %s22, 1
          %s321 = smul.addr %s320, 128
          %s322 = smul.addr %s321, 8
          %s323 = scalar_lea.vmem %s1, %s322
        $region24: #{lstm_frame_forward.3} parent=15 // pred_fallthru
          _
        // Predicated region
        $region25: #{lstm_frame_forward.3} parent=15 // pred_check
          %p324 = pneg %p107
        $region26: #{lstm_frame_forward.3} parent=15 // pred_check_branch
          %326 = sbr.rel (%p324) target = $region28
        $region27: #{lstm_frame_forward.3} parent=15 // pred_region
          %p327 = scmp.lt.s32.totalorder %s22, 1
          %s328 = scalar_select %p327, %s22, 1
          %s329 = smul.addr %s328, 64
          %s330 = smul.addr %s329, 8
          %s331 = scalar_lea.vmem %s2, %s330
        $region28: #{lstm_frame_forward.3} parent=15 // pred_fallthru
          _
        // Predicated region
        $region29: #{lstm_frame_forward.3} parent=15 // pred_check
          %p332 = pneg %p133
        $region30: #{lstm_frame_forward.3} parent=15 // pred_check_branch
          %334 = sbr.rel (%p332) target = $region32
        $region31: #{lstm_frame_forward.3} parent=15 // pred_region
          %p335 = scmp.lt.s32.totalorder %s22, 1
          %s336 = scalar_select %p335, %s22, 1
          %s337 = smul.addr %s336, 4
          %s338 = smul.addr %s337, 8
          %s339 = scalar_lea.vmem %s3, %s338
        $region32: #{lstm_frame_forward.3} parent=15 // pred_fallthru
          _
        // Predicated region
        $region33: #{lstm_frame_forward.3} parent=15 // pred_check
          %p340 = pneg %p159
        $region34: #{lstm_frame_forward.3} parent=15 // pred_check_branch
          %342 = sbr.rel (%p340) target = $region36
        $region35: #{lstm_frame_forward.3} parent=15 // pred_region
          %p343 = scmp.lt.s32.totalorder %s22, 1
          %s344 = scalar_select %p343, %s22, 1
          %s345 = smul.addr %s344, 8
          %s346 = scalar_lea.vmem %s4, %s345
        $region36: #{lstm_frame_forward.3} parent=15 // pred_fallthru
          _
        // Predicated region
        $region37: #{lstm_frame_forward.3} parent=15 // pred_check
          %p347 = pneg %p185
        $region38: #{lstm_frame_forward.3} parent=15 // pred_check_branch
          %349 = sbr.rel (%p347) target = $region40
        $region39: #{lstm_frame_forward.3} parent=15 // pred_region
          %p350 = scmp.lt.s32.totalorder %s22, 1
          %s351 = scalar_select %p350, %s22, 1
          %s352 = smul.addr %s351, 8
          %s353 = scalar_lea.vmem %s5, %s352
        $region40: #{lstm_frame_forward.3} parent=15 // pred_fallthru
          _
      $region16: #{lstm_frame_forward.3} parent=5 // pred_fallthru
        _
      %p354 = scmp.le.s32.totalorder 1, %s15
      %p355 = scmp.lt.s32.totalorder %s15, 3
      %p356 = pnand %p354, %p355
      %p357 = pneg %p356
      // Predicated region
      $region41: #{lstm_frame_forward.3} parent=5 // pred_check
        _
      $region42: #{lstm_frame_forward.3} parent=5 // pred_check_branch
        %359 = sbr.rel (%p356) target = $region44
      $region43: #{lstm_frame_forward.3} parent=5 // pred_region
        %s360 = ssub.s32 %s15, 1
        %s361 = smul.u32 %s25, 2
        %s362 = ssub.s32 0, %s361
        %s363 = smul.u32 %s24, %s362
        %s364 = sadd.s32 %s25, %s363
        %s365 = smul.u32 8, %s364
        %p366 = scmp.lt.s32.totalorder %s365, 7
        %s367 = scalar_select %p366, %s365, 7
        %s368 = smul.addr %s367, 2
        %s369 = smul.addr %s368, 8
        %s370 = scalar_lea.vmem %s0, %s369
        %p371 = pneg %p61
        %p372 = pneg %p58
        %p373 = scmp.lt.s32.totalorder %s24, 1
        %s374 = scalar_select %p373, %s24, 1
        %s375 = smul.addr %s374, 128
        %s376 = smul.addr %s375, 8
        %s377 = scalar_lea.vmem %s1, %s376
        %p378 = pneg %p87
        %p379 = pneg %p84
        %p380 = scmp.lt.s32.totalorder %s24, 1
        %s381 = scalar_select %p380, %s24, 1
        %s382 = smul.addr %s381, 64
        %s383 = smul.addr %s382, 8
        %s384 = scalar_lea.vmem %s2, %s383
        %p385 = pneg %p113
        %p386 = pneg %p110
        %p387 = scmp.lt.s32.totalorder %s24, 1
        %s388 = scalar_select %p387, %s24, 1
        %s389 = smul.addr %s388, 4
        %s390 = smul.addr %s389, 8
        %s391 = scalar_lea.vmem %s3, %s390
        %p392 = pneg %p139
        %p393 = pneg %p136
        %p394 = scmp.lt.s32.totalorder %s24, 1
        %s395 = scalar_select %p394, %s24, 1
        %s396 = smul.addr %s395, 8
        %s397 = scalar_lea.vmem %s4, %s396
        %p398 = pneg %p165
        %p399 = pneg %p162
        %p400 = scmp.lt.s32.totalorder %s24, 1
        %s401 = scalar_select %p400, %s24, 1
        %s402 = smul.addr %s401, 8
        %s403 = scalar_lea.vmem %s5, %s402
        %p404 = pneg %p191
        %p405 = pneg %p188
        %p406 = pneg %p227
        %p407 = pneg %p224
        %s408 = sand.u32 %s214, 1
        %s409 = sand.u32 %s214, 1
        %s410 = smul.addr %s409, 64
        %s411 = scalar_lea.vmem [#allocation5], %s410
        %p412 = pneg %p253
        %p413 = pneg %p250
        %p414 = scmp.lt.s32.totalorder %s24, 1
        %s415 = scalar_select %p414, %s24, 1
        %s416 = smul.addr %s415, 8
        %s417 = scalar_lea.vmem %s7, %s416
        %p418 = pneg %p279
        %p419 = pneg %p276
        %p420 = scmp.lt.s32.totalorder %s24, 1
        %s421 = scalar_select %p420, %s24, 1
        %s422 = smul.addr %s421, 8
        %s423 = scalar_lea.vmem %s8, %s422
        %s424 = smul.u32 %s25, 2
        %s425 = ssub.s32 0, %s424
        %s426 = smul.u32 %s24, %s425
        %s427 = sadd.s32 %s25, %s426
        %s428 = smul.u32 8, %s427
        %p429 = scmp.lt.s32.totalorder %s428, 7
        %s430 = scalar_select %p429, %s428, 7
        %s431 = smul.addr %s430, 2
        %s432 = smul.addr %s431, 8
        %s433 = scalar_lea.vmem %s0, %s432
        %s434 = smul.u32 %s25, 2
        %s435 = ssub.s32 0, %s434
        %s436 = smul.u32 %s24, %s435
        %s437 = sadd.s32 %s25, %s436
        %s438 = smul.u32 8, %s437
        %p439 = scmp.lt.s32.totalorder %s24, 1
        %s440 = scalar_select %p439, %s24, 1
        %s441 = smul.addr %s440, 128
        %s442 = smul.addr %s441, 8
        %s443 = scalar_lea.vmem %s1, %s442
        %p444 = scmp.lt.s32.totalorder %s24, 1
        %s445 = scalar_select %p444, %s24, 1
        %s446 = smul.addr %s445, 64
        %s447 = smul.addr %s446, 8
        %s448 = scalar_lea.vmem %s2, %s447
        %p449 = scmp.lt.s32.totalorder %s24, 1
        %s450 = scalar_select %p449, %s24, 1
        %s451 = smul.addr %s450, 4
        %s452 = smul.addr %s451, 8
        %s453 = scalar_lea.vmem %s3, %s452
        %p454 = scmp.lt.s32.totalorder %s24, 1
        %s455 = scalar_select %p454, %s24, 1
        %s456 = smul.addr %s455, 8
        %s457 = scalar_lea.vmem %s4, %s456
        %p458 = scmp.lt.s32.totalorder %s24, 1
        %s459 = scalar_select %p458, %s24, 1
        %s460 = smul.addr %s459, 8
        %s461 = scalar_lea.vmem %s5, %s460
        %s462 = smul.u32 %s25, 2
        %s463 = ssub.s32 0, %s462
        %s464 = smul.u32 %s24, %s463
        %s465 = sadd.s32 %s25, %s464
        %s466 = smul.u32 8, %s465
        %p467 = scmp.lt.s32.totalorder %s24, 1
        %s468 = scalar_select %p467, %s24, 1
        %s469 = smul.addr %s468, 8
        %s470 = scalar_lea.vmem %s7, %s469
        %p471 = scmp.lt.s32.totalorder %s24, 1
        %s472 = scalar_select %p471, %s24, 1
        %s473 = smul.addr %s472, 8
        %s474 = scalar_lea.vmem %s8, %s473
        %p475 = scmp.eq.s32.totalorder %s25, 0
        // Predicated region
        $region45: #{lstm_frame_forward.3} parent=43 // pred_check
          %p476 = pneg %p475
        $region46: #{lstm_frame_forward.3} parent=43 // pred_check_branch
          %478 = sbr.rel (%p476) target = $region48
        $region47: #{lstm_frame_forward.3} parent=43 // pred_region
          %v479 = vld [vmem:[%s457] sm:$0xff]
          %480 = vst [vmem:[#allocation3] sm:$0xff] %v479
          %v481 = vld [vmem:[%s461] sm:$0xff]
          %482 = vst [vmem:[#allocation4] sm:$0xff] %v481
        $region48: #{lstm_frame_forward.3} parent=43 // pred_fallthru
          _
        %v483 = vld [vmem:[%s433] sm:$0xff]
        %v484 = vld [vmem:[%s433 + $0x8] sm:$0xff]
        %v485 = vld [vmem:[%s433 + $0x10] sm:$0xff]
        %v486 = vld [vmem:[%s433 + $0x18] sm:$0xff]
        %v487 = vld [vmem:[%s433 + $0x20] sm:$0xff]
        %v488 = vld [vmem:[%s433 + $0x28] sm:$0xff]
        %v489 = vld [vmem:[%s433 + $0x30] sm:$0xff]
        %v490 = vld [vmem:[%s433 + $0x38] sm:$0xff]
        %v491 = vld [vmem:[%s433 + $0x40] sm:$0xff]
        %v492 = vld [vmem:[%s433 + $0x48] sm:$0xff]
        %v493 = vld [vmem:[%s433 + $0x50] sm:$0xff]
        %v494 = vld [vmem:[%s433 + $0x58] sm:$0xff]
        %v495 = vld [vmem:[%s433 + $0x60] sm:$0xff]
        %v496 = vld [vmem:[%s433 + $0x68] sm:$0xff]
        %v497 = vld [vmem:[%s433 + $0x70] sm:$0xff]
        %v498 = vld [vmem:[%s433 + $0x78] sm:$0xff]
        %v499 = vld [vmem:[%s443] sm:$0xff]
        %v500 = vld [vmem:[%s443 + $0x8] sm:$0xff]
        %v501 = vld [vmem:[%s443 + $0x10] sm:$0xff]
        %v502 = vld [vmem:[%s443 + $0x18] sm:$0xff]
        %v503 = vld [vmem:[%s443 + $0x20] sm:$0xff]
        %v504 = vld [vmem:[%s443 + $0x28] sm:$0xff]
        %v505 = vld [vmem:[%s443 + $0x30] sm:$0xff]
        %v506 = vld [vmem:[%s443 + $0x38] sm:$0xff]
        %v507 = vld [vmem:[%s443 + $0x40] sm:$0xff]
        %v508 = vld [vmem:[%s443 + $0x48] sm:$0xff]
        %v509 = vld [vmem:[%s443 + $0x50] sm:$0xff]
        %v510 = vld [vmem:[%s443 + $0x58] sm:$0xff]
        %v511 = vld [vmem:[%s443 + $0x60] sm:$0xff]
        %v512 = vld [vmem:[%s443 + $0x68] sm:$0xff]
        %v513 = vld [vmem:[%s443 + $0x70] sm:$0xff]
        %v514 = vld [vmem:[%s443 + $0x78] sm:$0xff]
        %v515 = vld [vmem:[%s443 + $0x80] sm:$0xff]
        %v516 = vld [vmem:[%s443 + $0x88] sm:$0xff]
        %v517 = vld [vmem:[%s443 + $0x90] sm:$0xff]
        %v518 = vld [vmem:[%s443 + $0x98] sm:$0xff]
        %v519 = vld [vmem:[%s443 + $0xa0] sm:$0xff]
        %v520 = vld [vmem:[%s443 + $0xa8] sm:$0xff]
        %v521 = vld [vmem:[%s443 + $0xb0] sm:$0xff]
        %v522 = vld [vmem:[%s443 + $0xb8] sm:$0xff]
        %v523 = vld [vmem:[%s443 + $0xc0] sm:$0xff]
        %v524 = vld [vmem:[%s443 + $0xc8] sm:$0xff]
        %v525 = vld [vmem:[%s443 + $0xd0] sm:$0xff]
        %v526 = vld [vmem:[%s443 + $0xd8] sm:$0xff]
        %v527 = vld [vmem:[%s443 + $0xe0] sm:$0xff]
        %v528 = vld [vmem:[%s443 + $0xe8] sm:$0xff]
        %v529 = vld [vmem:[%s443 + $0xf0] sm:$0xff]
        %v530 = vld [vmem:[%s443 + $0xf8] sm:$0xff]
        %v531 = vld [vmem:[%s443 + $0x100] sm:$0xff]
        %v532 = vld [vmem:[%s443 + $0x108] sm:$0xff]
        %v533 = vld [vmem:[%s443 + $0x110] sm:$0xff]
        %v534 = vld [vmem:[%s443 + $0x118] sm:$0xff]
        %v535 = vld [vmem:[%s443 + $0x120] sm:$0xff]
        %v536 = vld [vmem:[%s443 + $0x128] sm:$0xff]
        %v537 = vld [vmem:[%s443 + $0x130] sm:$0xff]
        %v538 = vld [vmem:[%s443 + $0x138] sm:$0xff]
        %v539 = vld [vmem:[%s443 + $0x140] sm:$0xff]
        %v540 = vld [vmem:[%s443 + $0x148] sm:$0xff]
        %v541 = vld [vmem:[%s443 + $0x150] sm:$0xff]
        %v542 = vld [vmem:[%s443 + $0x158] sm:$0xff]
        %v543 = vld [vmem:[%s443 + $0x160] sm:$0xff]
        %v544 = vld [vmem:[%s443 + $0x168] sm:$0xff]
        %v545 = vld [vmem:[%s443 + $0x170] sm:$0xff]
        %v546 = vld [vmem:[%s443 + $0x178] sm:$0xff]
        %v547 = vld [vmem:[%s443 + $0x180] sm:$0xff]
        %v548 = vld [vmem:[%s443 + $0x188] sm:$0xff]
        %v549 = vld [vmem:[%s443 + $0x190] sm:$0xff]
        %v550 = vld [vmem:[%s443 + $0x198] sm:$0xff]
        %v551 = vld [vmem:[%s443 + $0x1a0] sm:$0xff]
        %v552 = vld [vmem:[%s443 + $0x1a8] sm:$0xff]
        %v553 = vld [vmem:[%s443 + $0x1b0] sm:$0xff]
        %v554 = vld [vmem:[%s443 + $0x1b8] sm:$0xff]
        %v555 = vld [vmem:[%s443 + $0x1c0] sm:$0xff]
        %v556 = vld [vmem:[%s443 + $0x1c8] sm:$0xff]
        %v557 = vld [vmem:[%s443 + $0x1d0] sm:$0xff]
        %v558 = vld [vmem:[%s443 + $0x1d8] sm:$0xff]
        %v559 = vld [vmem:[%s443 + $0x1e0] sm:$0xff]
        %v560 = vld [vmem:[%s443 + $0x1e8] sm:$0xff]
        %v561 = vld [vmem:[%s443 + $0x1f0] sm:$0xff]
        %v562 = vld [vmem:[%s443 + $0x1f8] sm:$0xff]
        %v563 = vld [vmem:[%s443 + $0x200] sm:$0xff]
        %v564 = vld [vmem:[%s443 + $0x208] sm:$0xff]
        %v565 = vld [vmem:[%s443 + $0x210] sm:$0xff]
        %v566 = vld [vmem:[%s443 + $0x218] sm:$0xff]
        %v567 = vld [vmem:[%s443 + $0x220] sm:$0xff]
        %v568 = vld [vmem:[%s443 + $0x228] sm:$0xff]
        %v569 = vld [vmem:[%s443 + $0x230] sm:$0xff]
        %v570 = vld [vmem:[%s443 + $0x238] sm:$0xff]
        %v571 = vld [vmem:[%s443 + $0x240] sm:$0xff]
        %v572 = vld [vmem:[%s443 + $0x248] sm:$0xff]
        %v573 = vld [vmem:[%s443 + $0x250] sm:$0xff]
        %v574 = vld [vmem:[%s443 + $0x258] sm:$0xff]
        %v575 = vld [vmem:[%s443 + $0x260] sm:$0xff]
        %v576 = vld [vmem:[%s443 + $0x268] sm:$0xff]
        %v577 = vld [vmem:[%s443 + $0x270] sm:$0xff]
        %v578 = vld [vmem:[%s443 + $0x278] sm:$0xff]
        %v579 = vld [vmem:[%s443 + $0x280] sm:$0xff]
        %v580 = vld [vmem:[%s443 + $0x288] sm:$0xff]
        %v581 = vld [vmem:[%s443 + $0x290] sm:$0xff]
        %v582 = vld [vmem:[%s443 + $0x298] sm:$0xff]
        %v583 = vld [vmem:[%s443 + $0x2a0] sm:$0xff]
        %v584 = vld [vmem:[%s443 + $0x2a8] sm:$0xff]
        %v585 = vld [vmem:[%s443 + $0x2b0] sm:$0xff]
        %v586 = vld [vmem:[%s443 + $0x2b8] sm:$0xff]
        %v587 = vld [vmem:[%s443 + $0x2c0] sm:$0xff]
        %v588 = vld [vmem:[%s443 + $0x2c8] sm:$0xff]
        %v589 = vld [vmem:[%s443 + $0x2d0] sm:$0xff]
        %v590 = vld [vmem:[%s443 + $0x2d8] sm:$0xff]
        %v591 = vld [vmem:[%s443 + $0x2e0] sm:$0xff]
        %v592 = vld [vmem:[%s443 + $0x2e8] sm:$0xff]
        %v593 = vld [vmem:[%s443 + $0x2f0] sm:$0xff]
        %v594 = vld [vmem:[%s443 + $0x2f8] sm:$0xff]
        %v595 = vld [vmem:[%s443 + $0x300] sm:$0xff]
        %v596 = vld [vmem:[%s443 + $0x308] sm:$0xff]
        %v597 = vld [vmem:[%s443 + $0x310] sm:$0xff]
        %v598 = vld [vmem:[%s443 + $0x318] sm:$0xff]
        %v599 = vld [vmem:[%s443 + $0x320] sm:$0xff]
        %v600 = vld [vmem:[%s443 + $0x328] sm:$0xff]
        %v601 = vld [vmem:[%s443 + $0x330] sm:$0xff]
        %v602 = vld [vmem:[%s443 + $0x338] sm:$0xff]
        %v603 = vld [vmem:[%s443 + $0x340] sm:$0xff]
        %v604 = vld [vmem:[%s443 + $0x348] sm:$0xff]
        %v605 = vld [vmem:[%s443 + $0x350] sm:$0xff]
        %v606 = vld [vmem:[%s443 + $0x358] sm:$0xff]
        %v607 = vld [vmem:[%s443 + $0x360] sm:$0xff]
        %v608 = vld [vmem:[%s443 + $0x368] sm:$0xff]
        %v609 = vld [vmem:[%s443 + $0x370] sm:$0xff]
        %v610 = vld [vmem:[%s443 + $0x378] sm:$0xff]
        %v611 = vld [vmem:[%s443 + $0x380] sm:$0xff]
        %v612 = vld [vmem:[%s443 + $0x388] sm:$0xff]
        %v613 = vld [vmem:[%s443 + $0x390] sm:$0xff]
        %v614 = vld [vmem:[%s443 + $0x398] sm:$0xff]
        %v615 = vld [vmem:[%s443 + $0x3a0] sm:$0xff]
        %v616 = vld [vmem:[%s443 + $0x3a8] sm:$0xff]
        %v617 = vld [vmem:[%s443 + $0x3b0] sm:$0xff]
        %v618 = vld [vmem:[%s443 + $0x3b8] sm:$0xff]
        %v619 = vld [vmem:[%s443 + $0x3c0] sm:$0xff]
        %v620 = vld [vmem:[%s443 + $0x3c8] sm:$0xff]
        %v621 = vld [vmem:[%s443 + $0x3d0] sm:$0xff]
        %v622 = vld [vmem:[%s443 + $0x3d8] sm:$0xff]
        %v623 = vld [vmem:[%s443 + $0x3e0] sm:$0xff]
        %v624 = vld [vmem:[%s443 + $0x3e8] sm:$0xff]
        %v625 = vld [vmem:[%s443 + $0x3f0] sm:$0xff]
        %v626 = vld [vmem:[%s443 + $0x3f8] sm:$0xff]
        %627 = vmatpush.msra.mxu0 %v559
        %628 = vmatpush.msra.mxu0 %v555
        %629 = vmatpush.msra.mxu0 %v551
        %630 = vmatpush.msra.mxu0 %v547
        %631 = vmatpush.msra.mxu0 %v543
        %632 = vmatpush.msra.mxu0 %v539
        %633 = vmatpush.msra.mxu0 %v535
        %634 = vmatpush.msra.mxu0 %v531
        %635 = vmatpush.msra.mxu0 %v527
        %636 = vmatpush.msra.mxu0 %v523
        %637 = vmatpush.msra.mxu0 %v519
        %638 = vmatpush.msra.mxu0 %v515
        %639 = vmatpush.msra.mxu0 %v511
        %640 = vmatpush.msra.mxu0 %v507
        %641 = vmatpush.msra.mxu0 %v503
        %642 = vmatpush.msra.mxu0 %v499
        %643 = vmatmul.f32.gmra.mxu0 %v483
        %v644 = vpop.f32.mrf.mxu0
        %v645 = vadd.f32 0.0, %v644
        %646 = vmatmul.f32.gmra.mxu0 %v485
        %v647 = vpop.f32.mrf.mxu0
        %v648 = vadd.f32 0.0, %v647
        %649 = vmatmul.f32.gmra.mxu0 %v487
        %v650 = vpop.f32.mrf.mxu0
        %v651 = vadd.f32 0.0, %v650
        %652 = vmatmul.f32.gmra.mxu0 %v489
        %v653 = vpop.f32.mrf.mxu0
        %v654 = vadd.f32 0.0, %v653
        %655 = vmatmul.f32.gmra.mxu0 %v491
        %v656 = vpop.f32.mrf.mxu0
        %v657 = vadd.f32 0.0, %v656
        %658 = vmatmul.f32.gmra.mxu0 %v493
        %v659 = vpop.f32.mrf.mxu0
        %v660 = vadd.f32 0.0, %v659
        %661 = vmatmul.f32.gmra.mxu0 %v495
        %v662 = vpop.f32.mrf.mxu0
        %v663 = vadd.f32 0.0, %v662
        %664 = vmatmul.f32.gmra.mxu0 %v497
        %v665 = vpop.f32.mrf.mxu0
        %v666 = vadd.f32 0.0, %v665
        %667 = vdwg.mxu0
        %668 = vmatpush.msra.mxu0 %v623
        %669 = vmatpush.msra.mxu0 %v619
        %670 = vmatpush.msra.mxu0 %v615
        %671 = vmatpush.msra.mxu0 %v611
        %672 = vmatpush.msra.mxu0 %v607
        %673 = vmatpush.msra.mxu0 %v603
        %674 = vmatpush.msra.mxu0 %v599
        %675 = vmatpush.msra.mxu0 %v595
        %676 = vmatpush.msra.mxu0 %v591
        %677 = vmatpush.msra.mxu0 %v587
        %678 = vmatpush.msra.mxu0 %v583
        %679 = vmatpush.msra.mxu0 %v579
        %680 = vmatpush.msra.mxu0 %v575
        %681 = vmatpush.msra.mxu0 %v571
        %682 = vmatpush.msra.mxu0 %v567
        %683 = vmatpush.msra.mxu0 %v563
        %684 = vmatmul.f32.gmra.mxu0 %v484
        %v685 = vpop.f32.mrf.mxu0
        %v686 = vadd.f32 %v645, %v685
        %687 = vmatmul.f32.gmra.mxu0 %v486
        %v688 = vpop.f32.mrf.mxu0
        %v689 = vadd.f32 %v648, %v688
        %690 = vmatmul.f32.gmra.mxu0 %v488
        %v691 = vpop.f32.mrf.mxu0
        %v692 = vadd.f32 %v651, %v691
        %693 = vmatmul.f32.gmra.mxu0 %v490
        %v694 = vpop.f32.mrf.mxu0
        %v695 = vadd.f32 %v654, %v694
        %696 = vmatmul.f32.gmra.mxu0 %v492
        %v697 = vpop.f32.mrf.mxu0
        %v698 = vadd.f32 %v657, %v697
        %699 = vmatmul.f32.gmra.mxu0 %v494
        %v700 = vpop.f32.mrf.mxu0
        %v701 = vadd.f32 %v660, %v700
        %702 = vmatmul.f32.gmra.mxu0 %v496
        %v703 = vpop.f32.mrf.mxu0
        %v704 = vadd.f32 %v663, %v703
        %705 = vmatmul.f32.gmra.mxu0 %v498
        %v706 = vpop.f32.mrf.mxu0
        %v707 = vadd.f32 %v666, %v706
        %708 = vdwg.mxu0
        %709 = vmatpush.msra.mxu0 %v560
        %710 = vmatpush.msra.mxu0 %v556
        %711 = vmatpush.msra.mxu0 %v552
        %712 = vmatpush.msra.mxu0 %v548
        %713 = vmatpush.msra.mxu0 %v544
        %714 = vmatpush.msra.mxu0 %v540
        %715 = vmatpush.msra.mxu0 %v536
        %716 = vmatpush.msra.mxu0 %v532
        %717 = vmatpush.msra.mxu0 %v528
        %718 = vmatpush.msra.mxu0 %v524
        %719 = vmatpush.msra.mxu0 %v520
        %720 = vmatpush.msra.mxu0 %v516
        %721 = vmatpush.msra.mxu0 %v512
        %722 = vmatpush.msra.mxu0 %v508
        %723 = vmatpush.msra.mxu0 %v504
        %724 = vmatpush.msra.mxu0 %v500
        %725 = vmatmul.f32.gmra.mxu0 %v483
        %v726 = vpop.f32.mrf.mxu0
        %v727 = vadd.f32 0.0, %v726
        %728 = vmatmul.f32.gmra.mxu0 %v485
        %v729 = vpop.f32.mrf.mxu0
        %v730 = vadd.f32 0.0, %v729
        %731 = vmatmul.f32.gmra.mxu0 %v487
        %v732 = vpop.f32.mrf.mxu0
        %v733 = vadd.f32 0.0, %v732
        %734 = vmatmul.f32.gmra.mxu0 %v489
        %v735 = vpop.f32.mrf.mxu0
        %v736 = vadd.f32 0.0, %v735
        %737 = vmatmul.f32.gmra.mxu0 %v491
        %v738 = vpop.f32.mrf.mxu0
        %v739 = vadd.f32 0.0, %v738
        %740 = vmatmul.f32.gmra.mxu0 %v493
        %v741 = vpop.f32.mrf.mxu0
        %v742 = vadd.f32 0.0, %v741
        %743 = vmatmul.f32.gmra.mxu0 %v495
        %v744 = vpop.f32.mrf.mxu0
        %v745 = vadd.f32 0.0, %v744
        %746 = vmatmul.f32.gmra.mxu0 %v497
        %v747 = vpop.f32.mrf.mxu0
        %v748 = vadd.f32 0.0, %v747
        %749 = vdwg.mxu0
        %750 = vmatpush.msra.mxu0 %v624
        %751 = vmatpush.msra.mxu0 %v620
        %752 = vmatpush.msra.mxu0 %v616
        %753 = vmatpush.msra.mxu0 %v612
        %754 = vmatpush.msra.mxu0 %v608
        %755 = vmatpush.msra.mxu0 %v604
        %756 = vmatpush.msra.mxu0 %v600
        %757 = vmatpush.msra.mxu0 %v596
        %758 = vmatpush.msra.mxu0 %v592
        %759 = vmatpush.msra.mxu0 %v588
        %760 = vmatpush.msra.mxu0 %v584
        %761 = vmatpush.msra.mxu0 %v580
        %762 = vmatpush.msra.mxu0 %v576
        %763 = vmatpush.msra.mxu0 %v572
        %764 = vmatpush.msra.mxu0 %v568
        %765 = vmatpush.msra.mxu0 %v564
        %766 = vmatmul.f32.gmra.mxu0 %v484
        %v767 = vpop.f32.mrf.mxu0
        %v768 = vadd.f32 %v727, %v767
        %769 = vmatmul.f32.gmra.mxu0 %v486
        %v770 = vpop.f32.mrf.mxu0
        %v771 = vadd.f32 %v730, %v770
        %772 = vmatmul.f32.gmra.mxu0 %v488
        %v773 = vpop.f32.mrf.mxu0
        %v774 = vadd.f32 %v733, %v773
        %775 = vmatmul.f32.gmra.mxu0 %v490
        %v776 = vpop.f32.mrf.mxu0
        %v777 = vadd.f32 %v736, %v776
        %778 = vmatmul.f32.gmra.mxu0 %v492
        %v779 = vpop.f32.mrf.mxu0
        %v780 = vadd.f32 %v739, %v779
        %781 = vmatmul.f32.gmra.mxu0 %v494
        %v782 = vpop.f32.mrf.mxu0
        %v783 = vadd.f32 %v742, %v782
        %784 = vmatmul.f32.gmra.mxu0 %v496
        %v785 = vpop.f32.mrf.mxu0
        %v786 = vadd.f32 %v745, %v785
        %787 = vmatmul.f32.gmra.mxu0 %v498
        %v788 = vpop.f32.mrf.mxu0
        %v789 = vadd.f32 %v748, %v788
        %790 = vdwg.mxu0
        %791 = vmatpush.msra.mxu0 %v561
        %792 = vmatpush.msra.mxu0 %v557
        %793 = vmatpush.msra.mxu0 %v553
        %794 = vmatpush.msra.mxu0 %v549
        %795 = vmatpush.msra.mxu0 %v545
        %796 = vmatpush.msra.mxu0 %v541
        %797 = vmatpush.msra.mxu0 %v537
        %798 = vmatpush.msra.mxu0 %v533
        %799 = vmatpush.msra.mxu0 %v529
        %800 = vmatpush.msra.mxu0 %v525
        %801 = vmatpush.msra.mxu0 %v521
        %802 = vmatpush.msra.mxu0 %v517
        %803 = vmatpush.msra.mxu0 %v513
        %804 = vmatpush.msra.mxu0 %v509
        %805 = vmatpush.msra.mxu0 %v505
        %806 = vmatpush.msra.mxu0 %v501
        %807 = vmatmul.f32.gmra.mxu0 %v483
        %v808 = vpop.f32.mrf.mxu0
        %v809 = vadd.f32 0.0, %v808
        %810 = vmatmul.f32.gmra.mxu0 %v485
        %v811 = vpop.f32.mrf.mxu0
        %v812 = vadd.f32 0.0, %v811
        %813 = vmatmul.f32.gmra.mxu0 %v487
        %v814 = vpop.f32.mrf.mxu0
        %v815 = vadd.f32 0.0, %v814
        %816 = vmatmul.f32.gmra.mxu0 %v489
        %v817 = vpop.f32.mrf.mxu0
        %v818 = vadd.f32 0.0, %v817
        %819 = vmatmul.f32.gmra.mxu0 %v491
        %v820 = vpop.f32.mrf.mxu0
        %v821 = vadd.f32 0.0, %v820
        %822 = vmatmul.f32.gmra.mxu0 %v493
        %v823 = vpop.f32.mrf.mxu0
        %v824 = vadd.f32 0.0, %v823
        %825 = vmatmul.f32.gmra.mxu0 %v495
        %v826 = vpop.f32.mrf.mxu0
        %v827 = vadd.f32 0.0, %v826
        %828 = vmatmul.f32.gmra.mxu0 %v497
        %v829 = vpop.f32.mrf.mxu0
        %v830 = vadd.f32 0.0, %v829
        %831 = vdwg.mxu0
        %832 = vmatpush.msra.mxu0 %v625
        %833 = vmatpush.msra.mxu0 %v621
        %834 = vmatpush.msra.mxu0 %v617
        %835 = vmatpush.msra.mxu0 %v613
        %836 = vmatpush.msra.mxu0 %v609
        %837 = vmatpush.msra.mxu0 %v605
        %838 = vmatpush.msra.mxu0 %v601
        %839 = vmatpush.msra.mxu0 %v597
        %840 = vmatpush.msra.mxu0 %v593
        %841 = vmatpush.msra.mxu0 %v589
        %842 = vmatpush.msra.mxu0 %v585
        %843 = vmatpush.msra.mxu0 %v581
        %844 = vmatpush.msra.mxu0 %v577
        %845 = vmatpush.msra.mxu0 %v573
        %846 = vmatpush.msra.mxu0 %v569
        %847 = vmatpush.msra.mxu0 %v565
        %848 = vmatmul.f32.gmra.mxu0 %v484
        %v849 = vpop.f32.mrf.mxu0
        %v850 = vadd.f32 %v809, %v849
        %851 = vmatmul.f32.gmra.mxu0 %v486
        %v852 = vpop.f32.mrf.mxu0
        %v853 = vadd.f32 %v812, %v852
        %854 = vmatmul.f32.gmra.mxu0 %v488
        %v855 = vpop.f32.mrf.mxu0
        %v856 = vadd.f32 %v815, %v855
        %857 = vmatmul.f32.gmra.mxu0 %v490
        %v858 = vpop.f32.mrf.mxu0
        %v859 = vadd.f32 %v818, %v858
        %860 = vmatmul.f32.gmra.mxu0 %v492
        %v861 = vpop.f32.mrf.mxu0
        %v862 = vadd.f32 %v821, %v861
        %863 = vmatmul.f32.gmra.mxu0 %v494
        %v864 = vpop.f32.mrf.mxu0
        %v865 = vadd.f32 %v824, %v864
        %866 = vmatmul.f32.gmra.mxu0 %v496
        %v867 = vpop.f32.mrf.mxu0
        %v868 = vadd.f32 %v827, %v867
        %869 = vmatmul.f32.gmra.mxu0 %v498
        %v870 = vpop.f32.mrf.mxu0
        %v871 = vadd.f32 %v830, %v870
        %872 = vdwg.mxu0
        %873 = vmatpush.msra.mxu0 %v562
        %874 = vmatpush.msra.mxu0 %v558
        %875 = vmatpush.msra.mxu0 %v554
        %876 = vmatpush.msra.mxu0 %v550
        %877 = vmatpush.msra.mxu0 %v546
        %878 = vmatpush.msra.mxu0 %v542
        %879 = vmatpush.msra.mxu0 %v538
        %880 = vmatpush.msra.mxu0 %v534
        %881 = vmatpush.msra.mxu0 %v530
        %882 = vmatpush.msra.mxu0 %v526
        %883 = vmatpush.msra.mxu0 %v522
        %884 = vmatpush.msra.mxu0 %v518
        %885 = vmatpush.msra.mxu0 %v514
        %886 = vmatpush.msra.mxu0 %v510
        %887 = vmatpush.msra.mxu0 %v506
        %888 = vmatpush.msra.mxu0 %v502
        %889 = vmatmul.f32.gmra.mxu0 %v483
        %v890 = vpop.f32.mrf.mxu0
        %v891 = vadd.f32 0.0, %v890
        %892 = vmatmul.f32.gmra.mxu0 %v485
        %v893 = vpop.f32.mrf.mxu0
        %v894 = vadd.f32 0.0, %v893
        %895 = vmatmul.f32.gmra.mxu0 %v487
        %v896 = vpop.f32.mrf.mxu0
        %v897 = vadd.f32 0.0, %v896
        %898 = vmatmul.f32.gmra.mxu0 %v489
        %v899 = vpop.f32.mrf.mxu0
        %v900 = vadd.f32 0.0, %v899
        %901 = vmatmul.f32.gmra.mxu0 %v491
        %v902 = vpop.f32.mrf.mxu0
        %v903 = vadd.f32 0.0, %v902
        %904 = vmatmul.f32.gmra.mxu0 %v493
        %v905 = vpop.f32.mrf.mxu0
        %v906 = vadd.f32 0.0, %v905
        %907 = vmatmul.f32.gmra.mxu0 %v495
        %v908 = vpop.f32.mrf.mxu0
        %v909 = vadd.f32 0.0, %v908
        %910 = vmatmul.f32.gmra.mxu0 %v497
        %v911 = vpop.f32.mrf.mxu0
        %v912 = vadd.f32 0.0, %v911
        %913 = vdwg.mxu0
        %914 = vmatpush.msra.mxu0 %v626
        %915 = vmatpush.msra.mxu0 %v622
        %916 = vmatpush.msra.mxu0 %v618
        %917 = vmatpush.msra.mxu0 %v614
        %918 = vmatpush.msra.mxu0 %v610
        %919 = vmatpush.msra.mxu0 %v606
        %920 = vmatpush.msra.mxu0 %v602
        %921 = vmatpush.msra.mxu0 %v598
        %922 = vmatpush.msra.mxu0 %v594
        %923 = vmatpush.msra.mxu0 %v590
        %924 = vmatpush.msra.mxu0 %v586
        %925 = vmatpush.msra.mxu0 %v582
        %926 = vmatpush.msra.mxu0 %v578
        %927 = vmatpush.msra.mxu0 %v574
        %928 = vmatpush.msra.mxu0 %v570
        %929 = vmatpush.msra.mxu0 %v566
        %930 = vmatmul.f32.gmra.mxu0 %v484
        %v931 = vpop.f32.mrf.mxu0
        %v932 = vadd.f32 %v891, %v931
        %933 = vmatmul.f32.gmra.mxu0 %v486
        %v934 = vpop.f32.mrf.mxu0
        %v935 = vadd.f32 %v894, %v934
        %936 = vmatmul.f32.gmra.mxu0 %v488
        %v937 = vpop.f32.mrf.mxu0
        %v938 = vadd.f32 %v897, %v937
        %939 = vmatmul.f32.gmra.mxu0 %v490
        %v940 = vpop.f32.mrf.mxu0
        %v941 = vadd.f32 %v900, %v940
        %942 = vmatmul.f32.gmra.mxu0 %v492
        %v943 = vpop.f32.mrf.mxu0
        %v944 = vadd.f32 %v903, %v943
        %945 = vmatmul.f32.gmra.mxu0 %v494
        %v946 = vpop.f32.mrf.mxu0
        %v947 = vadd.f32 %v906, %v946
        %948 = vmatmul.f32.gmra.mxu0 %v496
        %v949 = vpop.f32.mrf.mxu0
        %v950 = vadd.f32 %v909, %v949
        %951 = vmatmul.f32.gmra.mxu0 %v498
        %v952 = vpop.f32.mrf.mxu0
        %v953 = vadd.f32 %v912, %v952
        %954 = vdwg.mxu0
        %v955 = vld [vmem:[%s453] sm:$0xff]
        %v956 = vld [vmem:[%s453 + $0x8] sm:$0xff]
        %v957 = vld [vmem:[%s453 + $0x10] sm:$0xff]
        %v958 = vld [vmem:[%s453 + $0x18] sm:$0xff]
        %v959 = vadd.f32 %v686, %v955
        %v960 = vadd.f32 %v768, %v956
        %v961 = vadd.f32 %v850, %v957
        %v962 = vadd.f32 %v932, %v958
        %v963 = vadd.f32 %v689, %v955
        %v964 = vadd.f32 %v771, %v956
        %v965 = vadd.f32 %v853, %v957
        %v966 = vadd.f32 %v935, %v958
        %v967 = vadd.f32 %v692, %v955
        %v968 = vadd.f32 %v774, %v956
        %v969 = vadd.f32 %v856, %v957
        %v970 = vadd.f32 %v938, %v958
        %v971 = vadd.f32 %v695, %v955
        %v972 = vadd.f32 %v777, %v956
        %v973 = vadd.f32 %v859, %v957
        %v974 = vadd.f32 %v941, %v958
        %v975 = vadd.f32 %v698, %v955
        %v976 = vadd.f32 %v780, %v956
        %v977 = vadd.f32 %v862, %v957
        %v978 = vadd.f32 %v944, %v958
        %v979 = vadd.f32 %v701, %v955
        %v980 = vadd.f32 %v783, %v956
        %v981 = vadd.f32 %v865, %v957
        %v982 = vadd.f32 %v947, %v958
        %v983 = vadd.f32 %v704, %v955
        %v984 = vadd.f32 %v786, %v956
        %v985 = vadd.f32 %v868, %v957
        %v986 = vadd.f32 %v950, %v958
        %v987 = vadd.f32 %v707, %v955
        %v988 = vadd.f32 %v789, %v956
        %v989 = vadd.f32 %v871, %v957
        %v990 = vadd.f32 %v953, %v958
        %991 = vst [vmem:[#allocation2] sm:$0xff] %v959
        %992 = vst [vmem:[#allocation2 + $0x8] sm:$0xff] %v960
        %993 = vst [vmem:[#allocation2 + $0x10] sm:$0xff] %v961
        %994 = vst [vmem:[#allocation2 + $0x18] sm:$0xff] %v962
        %995 = vst [vmem:[#allocation2 + $0x20] sm:$0xff] %v963
        %996 = vst [vmem:[#allocation2 + $0x28] sm:$0xff] %v964
        %997 = vst [vmem:[#allocation2 + $0x30] sm:$0xff] %v965
        %998 = vst [vmem:[#allocation2 + $0x38] sm:$0xff] %v966
        %999 = vst [vmem:[#allocation2 + $0x40] sm:$0xff] %v967
        %1000 = vst [vmem:[#allocation2 + $0x48] sm:$0xff] %v968
        %1001 = vst [vmem:[#allocation2 + $0x50] sm:$0xff] %v969
        %1002 = vst [vmem:[#allocation2 + $0x58] sm:$0xff] %v970
        %1003 = vst [vmem:[#allocation2 + $0x60] sm:$0xff] %v971
        %1004 = vst [vmem:[#allocation2 + $0x68] sm:$0xff] %v972
        %1005 = vst [vmem:[#allocation2 + $0x70] sm:$0xff] %v973
        %1006 = vst [vmem:[#allocation2 + $0x78] sm:$0xff] %v974
        %1007 = vst [vmem:[#allocation2 + $0x80] sm:$0xff] %v975
        %1008 = vst [vmem:[#allocation2 + $0x88] sm:$0xff] %v976
        %1009 = vst [vmem:[#allocation2 + $0x90] sm:$0xff] %v977
        %1010 = vst [vmem:[#allocation2 + $0x98] sm:$0xff] %v978
        %1011 = vst [vmem:[#allocation2 + $0xa0] sm:$0xff] %v979
        %1012 = vst [vmem:[#allocation2 + $0xa8] sm:$0xff] %v980
        %1013 = vst [vmem:[#allocation2 + $0xb0] sm:$0xff] %v981
        %1014 = vst [vmem:[#allocation2 + $0xb8] sm:$0xff] %v982
        %1015 = vst [vmem:[#allocation2 + $0xc0] sm:$0xff] %v983
        %1016 = vst [vmem:[#allocation2 + $0xc8] sm:$0xff] %v984
        %1017 = vst [vmem:[#allocation2 + $0xd0] sm:$0xff] %v985
        %1018 = vst [vmem:[#allocation2 + $0xd8] sm:$0xff] %v986
        %1019 = vst [vmem:[#allocation2 + $0xe0] sm:$0xff] %v987
        %1020 = vst [vmem:[#allocation2 + $0xe8] sm:$0xff] %v988
        %1021 = vst [vmem:[#allocation2 + $0xf0] sm:$0xff] %v989
        %1022 = vst [vmem:[#allocation2 + $0xf8] sm:$0xff] %v990
        %v1023 = vld [vmem:[#allocation3] sm:$0xff]
        %v1024 = vld [vmem:[#allocation4] sm:$0xff]
        %s1025 = smul.u32 %s24, 7
        %v1026 = vld [vmem:[%s448] sm:$0xff]
        %v1027 = vld [vmem:[%s448 + $0x8] sm:$0xff]
        %v1028 = vld [vmem:[%s448 + $0x10] sm:$0xff]
        %v1029 = vld [vmem:[%s448 + $0x18] sm:$0xff]
        %v1030 = vld [vmem:[%s448 + $0x20] sm:$0xff]
        %v1031 = vld [vmem:[%s448 + $0x28] sm:$0xff]
        %v1032 = vld [vmem:[%s448 + $0x30] sm:$0xff]
        %v1033 = vld [vmem:[%s448 + $0x38] sm:$0xff]
        %v1034 = vld [vmem:[%s448 + $0x40] sm:$0xff]
        %v1035 = vld [vmem:[%s448 + $0x48] sm:$0xff]
        %v1036 = vld [vmem:[%s448 + $0x50] sm:$0xff]
        %v1037 = vld [vmem:[%s448 + $0x58] sm:$0xff]
        %v1038 = vld [vmem:[%s448 + $0x60] sm:$0xff]
        %v1039 = vld [vmem:[%s448 + $0x68] sm:$0xff]
        %v1040 = vld [vmem:[%s448 + $0x70] sm:$0xff]
        %v1041 = vld [vmem:[%s448 + $0x78] sm:$0xff]
        %v1042 = vld [vmem:[%s448 + $0x80] sm:$0xff]
        %v1043 = vld [vmem:[%s448 + $0x88] sm:$0xff]
        %v1044 = vld [vmem:[%s448 + $0x90] sm:$0xff]
        %v1045 = vld [vmem:[%s448 + $0x98] sm:$0xff]
        %v1046 = vld [vmem:[%s448 + $0xa0] sm:$0xff]
        %v1047 = vld [vmem:[%s448 + $0xa8] sm:$0xff]
        %v1048 = vld [vmem:[%s448 + $0xb0] sm:$0xff]
        %v1049 = vld [vmem:[%s448 + $0xb8] sm:$0xff]
        %v1050 = vld [vmem:[%s448 + $0xc0] sm:$0xff]
        %v1051 = vld [vmem:[%s448 + $0xc8] sm:$0xff]
        %v1052 = vld [vmem:[%s448 + $0xd0] sm:$0xff]
        %v1053 = vld [vmem:[%s448 + $0xd8] sm:$0xff]
        %v1054 = vld [vmem:[%s448 + $0xe0] sm:$0xff]
        %v1055 = vld [vmem:[%s448 + $0xe8] sm:$0xff]
        %v1056 = vld [vmem:[%s448 + $0xf0] sm:$0xff]
        %v1057 = vld [vmem:[%s448 + $0xf8] sm:$0xff]
        %v1058 = vld [vmem:[%s448 + $0x100] sm:$0xff]
        %v1059 = vld [vmem:[%s448 + $0x108] sm:$0xff]
        %v1060 = vld [vmem:[%s448 + $0x110] sm:$0xff]
        %v1061 = vld [vmem:[%s448 + $0x118] sm:$0xff]
        %v1062 = vld [vmem:[%s448 + $0x120] sm:$0xff]
        %v1063 = vld [vmem:[%s448 + $0x128] sm:$0xff]
        %v1064 = vld [vmem:[%s448 + $0x130] sm:$0xff]
        %v1065 = vld [vmem:[%s448 + $0x138] sm:$0xff]
        %v1066 = vld [vmem:[%s448 + $0x140] sm:$0xff]
        %v1067 = vld [vmem:[%s448 + $0x148] sm:$0xff]
        %v1068 = vld [vmem:[%s448 + $0x150] sm:$0xff]
        %v1069 = vld [vmem:[%s448 + $0x158] sm:$0xff]
        %v1070 = vld [vmem:[%s448 + $0x160] sm:$0xff]
        %v1071 = vld [vmem:[%s448 + $0x168] sm:$0xff]
        %v1072 = vld [vmem:[%s448 + $0x170] sm:$0xff]
        %v1073 = vld [vmem:[%s448 + $0x178] sm:$0xff]
        %v1074 = vld [vmem:[%s448 + $0x180] sm:$0xff]
        %v1075 = vld [vmem:[%s448 + $0x188] sm:$0xff]
        %v1076 = vld [vmem:[%s448 + $0x190] sm:$0xff]
        %v1077 = vld [vmem:[%s448 + $0x198] sm:$0xff]
        %v1078 = vld [vmem:[%s448 + $0x1a0] sm:$0xff]
        %v1079 = vld [vmem:[%s448 + $0x1a8] sm:$0xff]
        %v1080 = vld [vmem:[%s448 + $0x1b0] sm:$0xff]
        %v1081 = vld [vmem:[%s448 + $0x1b8] sm:$0xff]
        %v1082 = vld [vmem:[%s448 + $0x1c0] sm:$0xff]
        %v1083 = vld [vmem:[%s448 + $0x1c8] sm:$0xff]
        %v1084 = vld [vmem:[%s448 + $0x1d0] sm:$0xff]
        %v1085 = vld [vmem:[%s448 + $0x1d8] sm:$0xff]
        %v1086 = vld [vmem:[%s448 + $0x1e0] sm:$0xff]
        %v1087 = vld [vmem:[%s448 + $0x1e8] sm:$0xff]
        %v1088 = vld [vmem:[%s448 + $0x1f0] sm:$0xff]
        %v1089 = vld [vmem:[%s448 + $0x1f8] sm:$0xff]
        %s1090 = smul.u32 %s1025, 4
        %s1091 = smul.addr %s1090, 8
        %s1092 = scalar_lea.vmem [#allocation2], %s1091
        %v1093 = vld [vmem:[%s1092] sm:$0xff]
        %v1094 = vld [vmem:[%s1092 + $0x8] sm:$0xff]
        %v1095 = vld [vmem:[%s1092 + $0x10] sm:$0xff]
        %v1096 = vld [vmem:[%s1092 + $0x18] sm:$0xff]
        %1097 = vmatpush.msra.mxu0 %v1086
        %1098 = vmatpush.msra.mxu0 %v1082
        %1099 = vmatpush.msra.mxu0 %v1078
        %1100 = vmatpush.msra.mxu0 %v1074
        %1101 = vmatpush.msra.mxu0 %v1070
        %1102 = vmatpush.msra.mxu0 %v1066
        %1103 = vmatpush.msra.mxu0 %v1062
        %1104 = vmatpush.msra.mxu0 %v1058
        %1105 = vmatpush.msra.mxu0 %v1054
        %1106 = vmatpush.msra.mxu0 %v1050
        %1107 = vmatpush.msra.mxu0 %v1046
        %1108 = vmatpush.msra.mxu0 %v1042
        %1109 = vmatpush.msra.mxu0 %v1038
        %1110 = vmatpush.msra.mxu0 %v1034
        %1111 = vmatpush.msra.mxu0 %v1030
        %1112 = vmatpush.msra.mxu0 %v1026
        %1113 = vmatmul.f32.gmra.mxu0 %v1023
        %v1114 = vpop.f32.mrf.mxu0
        %v1115 = vadd.f32 %v1093, %v1114
        %1116 = vdwg.mxu0
        %1117 = vmatpush.msra.mxu0 %v1087
        %1118 = vmatpush.msra.mxu0 %v1083
        %1119 = vmatpush.msra.mxu0 %v1079
        %1120 = vmatpush.msra.mxu0 %v1075
        %1121 = vmatpush.msra.mxu0 %v1071
        %1122 = vmatpush.msra.mxu0 %v1067
        %1123 = vmatpush.msra.mxu0 %v1063
        %1124 = vmatpush.msra.mxu0 %v1059
        %1125 = vmatpush.msra.mxu0 %v1055
        %1126 = vmatpush.msra.mxu0 %v1051
        %1127 = vmatpush.msra.mxu0 %v1047
        %1128 = vmatpush.msra.mxu0 %v1043
        %1129 = vmatpush.msra.mxu0 %v1039
        %1130 = vmatpush.msra.mxu0 %v1035
        %1131 = vmatpush.msra.mxu0 %v1031
        %1132 = vmatpush.msra.mxu0 %v1027
        %1133 = vmatmul.f32.gmra.mxu0 %v1023
        %v1134 = vpop.f32.mrf.mxu0
        %v1135 = vadd.f32 %v1094, %v1134
        %1136 = vdwg.mxu0
        %1137 = vmatpush.msra.mxu0 %v1088
        %1138 = vmatpush.msra.mxu0 %v1084
        %1139 = vmatpush.msra.mxu0 %v1080
        %1140 = vmatpush.msra.mxu0 %v1076
        %1141 = vmatpush.msra.mxu0 %v1072
        %1142 = vmatpush.msra.mxu0 %v1068
        %1143 = vmatpush.msra.mxu0 %v1064
        %1144 = vmatpush.msra.mxu0 %v1060
        %1145 = vmatpush.msra.mxu0 %v1056
        %1146 = vmatpush.msra.mxu0 %v1052
        %1147 = vmatpush.msra.mxu0 %v1048
        %1148 = vmatpush.msra.mxu0 %v1044
        %1149 = vmatpush.msra.mxu0 %v1040
        %1150 = vmatpush.msra.mxu0 %v1036
        %1151 = vmatpush.msra.mxu0 %v1032
        %1152 = vmatpush.msra.mxu0 %v1028
        %1153 = vmatmul.f32.gmra.mxu0 %v1023
        %v1154 = vpop.f32.mrf.mxu0
        %v1155 = vadd.f32 %v1095, %v1154
        %1156 = vdwg.mxu0
        %1157 = vmatpush.msra.mxu0 %v1089
        %1158 = vmatpush.msra.mxu0 %v1085
        %1159 = vmatpush.msra.mxu0 %v1081
        %1160 = vmatpush.msra.mxu0 %v1077
        %1161 = vmatpush.msra.mxu0 %v1073
        %1162 = vmatpush.msra.mxu0 %v1069
        %1163 = vmatpush.msra.mxu0 %v1065
        %1164 = vmatpush.msra.mxu0 %v1061
        %1165 = vmatpush.msra.mxu0 %v1057
        %1166 = vmatpush.msra.mxu0 %v1053
        %1167 = vmatpush.msra.mxu0 %v1049
        %1168 = vmatpush.msra.mxu0 %v1045
        %1169 = vmatpush.msra.mxu0 %v1041
        %1170 = vmatpush.msra.mxu0 %v1037
        %1171 = vmatpush.msra.mxu0 %v1033
        %1172 = vmatpush.msra.mxu0 %v1029
        %1173 = vmatmul.f32.gmra.mxu0 %v1023
        %v1174 = vpop.f32.mrf.mxu0
        %v1175 = vadd.f32 %v1096, %v1174
        %1176 = vdwg.mxu0
        %v1177 = vmul.f32 %v1115, 0.5
        %v1178 = vtanh.pop %v1177
        %v1179 = vmul.f32 %v1178, 0.5
        %v1180 = vadd.f32 %v1179, 0.5
        %v1181 = vmul.f32 %v1135, 0.5
        %v1182 = vtanh.pop %v1181
        %v1183 = vmul.f32 %v1182, 0.5
        %v1184 = vadd.f32 %v1183, 0.5
        %v1185 = vtanh.pop %v1155
        %v1186 = vmul.f32 %v1175, 0.5
        %v1187 = vtanh.pop %v1186
        %v1188 = vmul.f32 %v1187, 0.5
        %v1189 = vadd.f32 %v1188, 0.5
        %v1190 = vmul.f32 %v1184, %v1024
        %v1191 = vmul.f32 %v1180, %v1185
        %v1192 = vadd.f32 %v1190, %v1191
        %v1193 = vtanh.pop %v1192
        %v1194 = vmul.f32 %v1189, %v1193
        %s1195 = smul.u32 %s1025, 8
        %s1196 = scalar_lea.vmem %s411, %s1195 [#allocation5]
        %1197 = vst [vmem:[%s1196] sm:$0xff] %v1194
        %s1198 = smul.u32 %s24, 5
        %s1199 = sadd.s32 %s1198, 1
        %v1200 = vld [vmem:[%s448] sm:$0xff]
        %v1201 = vld [vmem:[%s448 + $0x8] sm:$0xff]
        %v1202 = vld [vmem:[%s448 + $0x10] sm:$0xff]
        %v1203 = vld [vmem:[%s448 + $0x18] sm:$0xff]
        %v1204 = vld [vmem:[%s448 + $0x20] sm:$0xff]
        %v1205 = vld [vmem:[%s448 + $0x28] sm:$0xff]
        %v1206 = vld [vmem:[%s448 + $0x30] sm:$0xff]
        %v1207 = vld [vmem:[%s448 + $0x38] sm:$0xff]
        %v1208 = vld [vmem:[%s448 + $0x40] sm:$0xff]
        %v1209 = vld [vmem:[%s448 + $0x48] sm:$0xff]
        %v1210 = vld [vmem:[%s448 + $0x50] sm:$0xff]
        %v1211 = vld [vmem:[%s448 + $0x58] sm:$0xff]
        %v1212 = vld [vmem:[%s448 + $0x60] sm:$0xff]
        %v1213 = vld [vmem:[%s448 + $0x68] sm:$0xff]
        %v1214 = vld [vmem:[%s448 + $0x70] sm:$0xff]
        %v1215 = vld [vmem:[%s448 + $0x78] sm:$0xff]
        %v1216 = vld [vmem:[%s448 + $0x80] sm:$0xff]
        %v1217 = vld [vmem:[%s448 + $0x88] sm:$0xff]
        %v1218 = vld [vmem:[%s448 + $0x90] sm:$0xff]
        %v1219 = vld [vmem:[%s448 + $0x98] sm:$0xff]
        %v1220 = vld [vmem:[%s448 + $0xa0] sm:$0xff]
        %v1221 = vld [vmem:[%s448 + $0xa8] sm:$0xff]
        %v1222 = vld [vmem:[%s448 + $0xb0] sm:$0xff]
        %v1223 = vld [vmem:[%s448 + $0xb8] sm:$0xff]
        %v1224 = vld [vmem:[%s448 + $0xc0] sm:$0xff]
        %v1225 = vld [vmem:[%s448 + $0xc8] sm:$0xff]
        %v1226 = vld [vmem:[%s448 + $0xd0] sm:$0xff]
        %v1227 = vld [vmem:[%s448 + $0xd8] sm:$0xff]
        %v1228 = vld [vmem:[%s448 + $0xe0] sm:$0xff]
        %v1229 = vld [vmem:[%s448 + $0xe8] sm:$0xff]
        %v1230 = vld [vmem:[%s448 + $0xf0] sm:$0xff]
        %v1231 = vld [vmem:[%s448 + $0xf8] sm:$0xff]
        %v1232 = vld [vmem:[%s448 + $0x100] sm:$0xff]
        %v1233 = vld [vmem:[%s448 + $0x108] sm:$0xff]
        %v1234 = vld [vmem:[%s448 + $0x110] sm:$0xff]
        %v1235 = vld [vmem:[%s448 + $0x118] sm:$0xff]
        %v1236 = vld [vmem:[%s448 + $0x120] sm:$0xff]
        %v1237 = vld [vmem:[%s448 + $0x128] sm:$0xff]
        %v1238 = vld [vmem:[%s448 + $0x130] sm:$0xff]
        %v1239 = vld [vmem:[%s448 + $0x138] sm:$0xff]
        %v1240 = vld [vmem:[%s448 + $0x140] sm:$0xff]
        %v1241 = vld [vmem:[%s448 + $0x148] sm:$0xff]
        %v1242 = vld [vmem:[%s448 + $0x150] sm:$0xff]
        %v1243 = vld [vmem:[%s448 + $0x158] sm:$0xff]
        %v1244 = vld [vmem:[%s448 + $0x160] sm:$0xff]
        %v1245 = vld [vmem:[%s448 + $0x168] sm:$0xff]
        %v1246 = vld [vmem:[%s448 + $0x170] sm:$0xff]
        %v1247 = vld [vmem:[%s448 + $0x178] sm:$0xff]
        %v1248 = vld [vmem:[%s448 + $0x180] sm:$0xff]
        %v1249 = vld [vmem:[%s448 + $0x188] sm:$0xff]
        %v1250 = vld [vmem:[%s448 + $0x190] sm:$0xff]
        %v1251 = vld [vmem:[%s448 + $0x198] sm:$0xff]
        %v1252 = vld [vmem:[%s448 + $0x1a0] sm:$0xff]
        %v1253 = vld [vmem:[%s448 + $0x1a8] sm:$0xff]
        %v1254 = vld [vmem:[%s448 + $0x1b0] sm:$0xff]
        %v1255 = vld [vmem:[%s448 + $0x1b8] sm:$0xff]
        %v1256 = vld [vmem:[%s448 + $0x1c0] sm:$0xff]
        %v1257 = vld [vmem:[%s448 + $0x1c8] sm:$0xff]
        %v1258 = vld [vmem:[%s448 + $0x1d0] sm:$0xff]
        %v1259 = vld [vmem:[%s448 + $0x1d8] sm:$0xff]
        %v1260 = vld [vmem:[%s448 + $0x1e0] sm:$0xff]
        %v1261 = vld [vmem:[%s448 + $0x1e8] sm:$0xff]
        %v1262 = vld [vmem:[%s448 + $0x1f0] sm:$0xff]
        %v1263 = vld [vmem:[%s448 + $0x1f8] sm:$0xff]
        %s1264 = smul.u32 %s1199, 4
        %s1265 = smul.addr %s1264, 8
        %s1266 = scalar_lea.vmem [#allocation2], %s1265
        %v1267 = vld [vmem:[%s1266] sm:$0xff]
        %v1268 = vld [vmem:[%s1266 + $0x8] sm:$0xff]
        %v1269 = vld [vmem:[%s1266 + $0x10] sm:$0xff]
        %v1270 = vld [vmem:[%s1266 + $0x18] sm:$0xff]
        %1271 = vmatpush.msra.mxu0 %v1260
        %1272 = vmatpush.msra.mxu0 %v1256
        %1273 = vmatpush.msra.mxu0 %v1252
        %1274 = vmatpush.msra.mxu0 %v1248
        %1275 = vmatpush.msra.mxu0 %v1244
        %1276 = vmatpush.msra.mxu0 %v1240
        %1277 = vmatpush.msra.mxu0 %v1236
        %1278 = vmatpush.msra.mxu0 %v1232
        %1279 = vmatpush.msra.mxu0 %v1228
        %1280 = vmatpush.msra.mxu0 %v1224
        %1281 = vmatpush.msra.mxu0 %v1220
        %1282 = vmatpush.msra.mxu0 %v1216
        %1283 = vmatpush.msra.mxu0 %v1212
        %1284 = vmatpush.msra.mxu0 %v1208
        %1285 = vmatpush.msra.mxu0 %v1204
        %1286 = vmatpush.msra.mxu0 %v1200
        %1287 = vmatmul.f32.gmra.mxu0 %v1194
        %v1288 = vpop.f32.mrf.mxu0
        %v1289 = vadd.f32 %v1267, %v1288
        %1290 = vdwg.mxu0
        %1291 = vmatpush.msra.mxu0 %v1261
        %1292 = vmatpush.msra.mxu0 %v1257
        %1293 = vmatpush.msra.mxu0 %v1253
        %1294 = vmatpush.msra.mxu0 %v1249
        %1295 = vmatpush.msra.mxu0 %v1245
        %1296 = vmatpush.msra.mxu0 %v1241
        %1297 = vmatpush.msra.mxu0 %v1237
        %1298 = vmatpush.msra.mxu0 %v1233
        %1299 = vmatpush.msra.mxu0 %v1229
        %1300 = vmatpush.msra.mxu0 %v1225
        %1301 = vmatpush.msra.mxu0 %v1221
        %1302 = vmatpush.msra.mxu0 %v1217
        %1303 = vmatpush.msra.mxu0 %v1213
        %1304 = vmatpush.msra.mxu0 %v1209
        %1305 = vmatpush.msra.mxu0 %v1205
        %1306 = vmatpush.msra.mxu0 %v1201
        %1307 = vmatmul.f32.gmra.mxu0 %v1194
        %v1308 = vpop.f32.mrf.mxu0
        %v1309 = vadd.f32 %v1268, %v1308
        %1310 = vdwg.mxu0
        %1311 = vmatpush.msra.mxu0 %v1262
        %1312 = vmatpush.msra.mxu0 %v1258
        %1313 = vmatpush.msra.mxu0 %v1254
        %1314 = vmatpush.msra.mxu0 %v1250
        %1315 = vmatpush.msra.mxu0 %v1246
        %1316 = vmatpush.msra.mxu0 %v1242
        %1317 = vmatpush.msra.mxu0 %v1238
        %1318 = vmatpush.msra.mxu0 %v1234
        %1319 = vmatpush.msra.mxu0 %v1230
        %1320 = vmatpush.msra.mxu0 %v1226
        %1321 = vmatpush.msra.mxu0 %v1222
        %1322 = vmatpush.msra.mxu0 %v1218
        %1323 = vmatpush.msra.mxu0 %v1214
        %1324 = vmatpush.msra.mxu0 %v1210
        %1325 = vmatpush.msra.mxu0 %v1206
        %1326 = vmatpush.msra.mxu0 %v1202
        %1327 = vmatmul.f32.gmra.mxu0 %v1194
        %v1328 = vpop.f32.mrf.mxu0
        %v1329 = vadd.f32 %v1269, %v1328
        %1330 = vdwg.mxu0
        %1331 = vmatpush.msra.mxu0 %v1263
        %1332 = vmatpush.msra.mxu0 %v1259
        %1333 = vmatpush.msra.mxu0 %v1255
        %1334 = vmatpush.msra.mxu0 %v1251
        %1335 = vmatpush.msra.mxu0 %v1247
        %1336 = vmatpush.msra.mxu0 %v1243
        %1337 = vmatpush.msra.mxu0 %v1239
        %1338 = vmatpush.msra.mxu0 %v1235
        %1339 = vmatpush.msra.mxu0 %v1231
        %1340 = vmatpush.msra.mxu0 %v1227
        %1341 = vmatpush.msra.mxu0 %v1223
        %1342 = vmatpush.msra.mxu0 %v1219
        %1343 = vmatpush.msra.mxu0 %v1215
        %1344 = vmatpush.msra.mxu0 %v1211
        %1345 = vmatpush.msra.mxu0 %v1207
        %1346 = vmatpush.msra.mxu0 %v1203
        %1347 = vmatmul.f32.gmra.mxu0 %v1194
        %v1348 = vpop.f32.mrf.mxu0
        %v1349 = vadd.f32 %v1270, %v1348
        %1350 = vdwg.mxu0
        %v1351 = vmul.f32 %v1289, 0.5
        %v1352 = vtanh.pop %v1351
        %v1353 = vmul.f32 %v1352, 0.5
        %v1354 = vadd.f32 %v1353, 0.5
        %v1355 = vmul.f32 %v1309, 0.5
        %v1356 = vtanh.pop %v1355
        %v1357 = vmul.f32 %v1356, 0.5
        %v1358 = vadd.f32 %v1357, 0.5
        %v1359 = vtanh.pop %v1329
        %v1360 = vmul.f32 %v1349, 0.5
        %v1361 = vtanh.pop %v1360
        %v1362 = vmul.f32 %v1361, 0.5
        %v1363 = vadd.f32 %v1362, 0.5
        %v1364 = vmul.f32 %v1358, %v1192
        %v1365 = vmul.f32 %v1354, %v1359
        %v1366 = vadd.f32 %v1364, %v1365
        %v1367 = vtanh.pop %v1366
        %v1368 = vmul.f32 %v1363, %v1367
        %s1369 = smul.u32 %s1199, 8
        %s1370 = scalar_lea.vmem %s411, %s1369 [#allocation5]
        %1371 = vst [vmem:[%s1370] sm:$0xff] %v1368
        %s1372 = smul.u32 %s24, 3
        %s1373 = sadd.s32 %s1372, 2
        %v1374 = vld [vmem:[%s448] sm:$0xff]
        %v1375 = vld [vmem:[%s448 + $0x8] sm:$0xff]
        %v1376 = vld [vmem:[%s448 + $0x10] sm:$0xff]
        %v1377 = vld [vmem:[%s448 + $0x18] sm:$0xff]
        %v1378 = vld [vmem:[%s448 + $0x20] sm:$0xff]
        %v1379 = vld [vmem:[%s448 + $0x28] sm:$0xff]
        %v1380 = vld [vmem:[%s448 + $0x30] sm:$0xff]
        %v1381 = vld [vmem:[%s448 + $0x38] sm:$0xff]
        %v1382 = vld [vmem:[%s448 + $0x40] sm:$0xff]
        %v1383 = vld [vmem:[%s448 + $0x48] sm:$0xff]
        %v1384 = vld [vmem:[%s448 + $0x50] sm:$0xff]
        %v1385 = vld [vmem:[%s448 + $0x58] sm:$0xff]
        %v1386 = vld [vmem:[%s448 + $0x60] sm:$0xff]
        %v1387 = vld [vmem:[%s448 + $0x68] sm:$0xff]
        %v1388 = vld [vmem:[%s448 + $0x70] sm:$0xff]
        %v1389 = vld [vmem:[%s448 + $0x78] sm:$0xff]
        %v1390 = vld [vmem:[%s448 + $0x80] sm:$0xff]
        %v1391 = vld [vmem:[%s448 + $0x88] sm:$0xff]
        %v1392 = vld [vmem:[%s448 + $0x90] sm:$0xff]
        %v1393 = vld [vmem:[%s448 + $0x98] sm:$0xff]
        %v1394 = vld [vmem:[%s448 + $0xa0] sm:$0xff]
        %v1395 = vld [vmem:[%s448 + $0xa8] sm:$0xff]
        %v1396 = vld [vmem:[%s448 + $0xb0] sm:$0xff]
        %v1397 = vld [vmem:[%s448 + $0xb8] sm:$0xff]
        %v1398 = vld [vmem:[%s448 + $0xc0] sm:$0xff]
        %v1399 = vld [vmem:[%s448 + $0xc8] sm:$0xff]
        %v1400 = vld [vmem:[%s448 + $0xd0] sm:$0xff]
        %v1401 = vld [vmem:[%s448 + $0xd8] sm:$0xff]
        %v1402 = vld [vmem:[%s448 + $0xe0] sm:$0xff]
        %v1403 = vld [vmem:[%s448 + $0xe8] sm:$0xff]
        %v1404 = vld [vmem:[%s448 + $0xf0] sm:$0xff]
        %v1405 = vld [vmem:[%s448 + $0xf8] sm:$0xff]
        %v1406 = vld [vmem:[%s448 + $0x100] sm:$0xff]
        %v1407 = vld [vmem:[%s448 + $0x108] sm:$0xff]
        %v1408 = vld [vmem:[%s448 + $0x110] sm:$0xff]
        %v1409 = vld [vmem:[%s448 + $0x118] sm:$0xff]
        %v1410 = vld [vmem:[%s448 + $0x120] sm:$0xff]
        %v1411 = vld [vmem:[%s448 + $0x128] sm:$0xff]
        %v1412 = vld [vmem:[%s448 + $0x130] sm:$0xff]
        %v1413 = vld [vmem:[%s448 + $0x138] sm:$0xff]
        %v1414 = vld [vmem:[%s448 + $0x140] sm:$0xff]
        %v1415 = vld [vmem:[%s448 + $0x148] sm:$0xff]
        %v1416 = vld [vmem:[%s448 + $0x150] sm:$0xff]
        %v1417 = vld [vmem:[%s448 + $0x158] sm:$0xff]
        %v1418 = vld [vmem:[%s448 + $0x160] sm:$0xff]
        %v1419 = vld [vmem:[%s448 + $0x168] sm:$0xff]
        %v1420 = vld [vmem:[%s448 + $0x170] sm:$0xff]
        %v1421 = vld [vmem:[%s448 + $0x178] sm:$0xff]
        %v1422 = vld [vmem:[%s448 + $0x180] sm:$0xff]
        %v1423 = vld [vmem:[%s448 + $0x188] sm:$0xff]
        %v1424 = vld [vmem:[%s448 + $0x190] sm:$0xff]
        %v1425 = vld [vmem:[%s448 + $0x198] sm:$0xff]
        %v1426 = vld [vmem:[%s448 + $0x1a0] sm:$0xff]
        %v1427 = vld [vmem:[%s448 + $0x1a8] sm:$0xff]
        %v1428 = vld [vmem:[%s448 + $0x1b0] sm:$0xff]
        %v1429 = vld [vmem:[%s448 + $0x1b8] sm:$0xff]
        %v1430 = vld [vmem:[%s448 + $0x1c0] sm:$0xff]
        %v1431 = vld [vmem:[%s448 + $0x1c8] sm:$0xff]
        %v1432 = vld [vmem:[%s448 + $0x1d0] sm:$0xff]
        %v1433 = vld [vmem:[%s448 + $0x1d8] sm:$0xff]
        %v1434 = vld [vmem:[%s448 + $0x1e0] sm:$0xff]
        %v1435 = vld [vmem:[%s448 + $0x1e8] sm:$0xff]
        %v1436 = vld [vmem:[%s448 + $0x1f0] sm:$0xff]
        %v1437 = vld [vmem:[%s448 + $0x1f8] sm:$0xff]
        %s1438 = smul.u32 %s1373, 4
        %s1439 = smul.addr %s1438, 8
        %s1440 = scalar_lea.vmem [#allocation2], %s1439
        %v1441 = vld [vmem:[%s1440] sm:$0xff]
        %v1442 = vld [vmem:[%s1440 + $0x8] sm:$0xff]
        %v1443 = vld [vmem:[%s1440 + $0x10] sm:$0xff]
        %v1444 = vld [vmem:[%s1440 + $0x18] sm:$0xff]
        %1445 = vmatpush.msra.mxu0 %v1434
        %1446 = vmatpush.msra.mxu0 %v1430
        %1447 = vmatpush.msra.mxu0 %v1426
        %1448 = vmatpush.msra.mxu0 %v1422
        %1449 = vmatpush.msra.mxu0 %v1418
        %1450 = vmatpush.msra.mxu0 %v1414
        %1451 = vmatpush.msra.mxu0 %v1410
        %1452 = vmatpush.msra.mxu0 %v1406
        %1453 = vmatpush.msra.mxu0 %v1402
        %1454 = vmatpush.msra.mxu0 %v1398
        %1455 = vmatpush.msra.mxu0 %v1394
        %1456 = vmatpush.msra.mxu0 %v1390
        %1457 = vmatpush.msra.mxu0 %v1386
        %1458 = vmatpush.msra.mxu0 %v1382
        %1459 = vmatpush.msra.mxu0 %v1378
        %1460 = vmatpush.msra.mxu0 %v1374
        %1461 = vmatmul.f32.gmra.mxu0 %v1368
        %v1462 = vpop.f32.mrf.mxu0
        %v1463 = vadd.f32 %v1441, %v1462
        %1464 = vdwg.mxu0
        %1465 = vmatpush.msra.mxu0 %v1435
        %1466 = vmatpush.msra.mxu0 %v1431
        %1467 = vmatpush.msra.mxu0 %v1427
        %1468 = vmatpush.msra.mxu0 %v1423
        %1469 = vmatpush.msra.mxu0 %v1419
        %1470 = vmatpush.msra.mxu0 %v1415
        %1471 = vmatpush.msra.mxu0 %v1411
        %1472 = vmatpush.msra.mxu0 %v1407
        %1473 = vmatpush.msra.mxu0 %v1403
        %1474 = vmatpush.msra.mxu0 %v1399
        %1475 = vmatpush.msra.mxu0 %v1395
        %1476 = vmatpush.msra.mxu0 %v1391
        %1477 = vmatpush.msra.mxu0 %v1387
        %1478 = vmatpush.msra.mxu0 %v1383
        %1479 = vmatpush.msra.mxu0 %v1379
        %1480 = vmatpush.msra.mxu0 %v1375
        %1481 = vmatmul.f32.gmra.mxu0 %v1368
        %v1482 = vpop.f32.mrf.mxu0
        %v1483 = vadd.f32 %v1442, %v1482
        %1484 = vdwg.mxu0
        %1485 = vmatpush.msra.mxu0 %v1436
        %1486 = vmatpush.msra.mxu0 %v1432
        %1487 = vmatpush.msra.mxu0 %v1428
        %1488 = vmatpush.msra.mxu0 %v1424
        %1489 = vmatpush.msra.mxu0 %v1420
        %1490 = vmatpush.msra.mxu0 %v1416
        %1491 = vmatpush.msra.mxu0 %v1412
        %1492 = vmatpush.msra.mxu0 %v1408
        %1493 = vmatpush.msra.mxu0 %v1404
        %1494 = vmatpush.msra.mxu0 %v1400
        %1495 = vmatpush.msra.mxu0 %v1396
        %1496 = vmatpush.msra.mxu0 %v1392
        %1497 = vmatpush.msra.mxu0 %v1388
        %1498 = vmatpush.msra.mxu0 %v1384
        %1499 = vmatpush.msra.mxu0 %v1380
        %1500 = vmatpush.msra.mxu0 %v1376
        %1501 = vmatmul.f32.gmra.mxu0 %v1368
        %v1502 = vpop.f32.mrf.mxu0
        %v1503 = vadd.f32 %v1443, %v1502
        %1504 = vdwg.mxu0
        %1505 = vmatpush.msra.mxu0 %v1437
        %1506 = vmatpush.msra.mxu0 %v1433
        %1507 = vmatpush.msra.mxu0 %v1429
        %1508 = vmatpush.msra.mxu0 %v1425
        %1509 = vmatpush.msra.mxu0 %v1421
        %1510 = vmatpush.msra.mxu0 %v1417
        %1511 = vmatpush.msra.mxu0 %v1413
        %1512 = vmatpush.msra.mxu0 %v1409
        %1513 = vmatpush.msra.mxu0 %v1405
        %1514 = vmatpush.msra.mxu0 %v1401
        %1515 = vmatpush.msra.mxu0 %v1397
        %1516 = vmatpush.msra.mxu0 %v1393
        %1517 = vmatpush.msra.mxu0 %v1389
        %1518 = vmatpush.msra.mxu0 %v1385
        %1519 = vmatpush.msra.mxu0 %v1381
        %1520 = vmatpush.msra.mxu0 %v1377
        %1521 = vmatmul.f32.gmra.mxu0 %v1368
        %v1522 = vpop.f32.mrf.mxu0
        %v1523 = vadd.f32 %v1444, %v1522
        %1524 = vdwg.mxu0
        %v1525 = vmul.f32 %v1463, 0.5
        %v1526 = vtanh.pop %v1525
        %v1527 = vmul.f32 %v1526, 0.5
        %v1528 = vadd.f32 %v1527, 0.5
        %v1529 = vmul.f32 %v1483, 0.5
        %v1530 = vtanh.pop %v1529
        %v1531 = vmul.f32 %v1530, 0.5
        %v1532 = vadd.f32 %v1531, 0.5
        %v1533 = vtanh.pop %v1503
        %v1534 = vmul.f32 %v1523, 0.5
        %v1535 = vtanh.pop %v1534
        %v1536 = vmul.f32 %v1535, 0.5
        %v1537 = vadd.f32 %v1536, 0.5
        %v1538 = vmul.f32 %v1532, %v1366
        %v1539 = vmul.f32 %v1528, %v1533
        %v1540 = vadd.f32 %v1538, %v1539
        %v1541 = vtanh.pop %v1540
        %v1542 = vmul.f32 %v1537, %v1541
        %s1543 = smul.u32 %s1373, 8
        %s1544 = scalar_lea.vmem %s411, %s1543 [#allocation5]
        %1545 = vst [vmem:[%s1544] sm:$0xff] %v1542
        %s1546 = sadd.s32 %s24, 3
        %v1547 = vld [vmem:[%s448] sm:$0xff]
        %v1548 = vld [vmem:[%s448 + $0x8] sm:$0xff]
        %v1549 = vld [vmem:[%s448 + $0x10] sm:$0xff]
        %v1550 = vld [vmem:[%s448 + $0x18] sm:$0xff]
        %v1551 = vld [vmem:[%s448 + $0x20] sm:$0xff]
        %v1552 = vld [vmem:[%s448 + $0x28] sm:$0xff]
        %v1553 = vld [vmem:[%s448 + $0x30] sm:$0xff]
        %v1554 = vld [vmem:[%s448 + $0x38] sm:$0xff]
        %v1555 = vld [vmem:[%s448 + $0x40] sm:$0xff]
        %v1556 = vld [vmem:[%s448 + $0x48] sm:$0xff]
        %v1557 = vld [vmem:[%s448 + $0x50] sm:$0xff]
        %v1558 = vld [vmem:[%s448 + $0x58] sm:$0xff]
        %v1559 = vld [vmem:[%s448 + $0x60] sm:$0xff]
        %v1560 = vld [vmem:[%s448 + $0x68] sm:$0xff]
        %v1561 = vld [vmem:[%s448 + $0x70] sm:$0xff]
        %v1562 = vld [vmem:[%s448 + $0x78] sm:$0xff]
        %v1563 = vld [vmem:[%s448 + $0x80] sm:$0xff]
        %v1564 = vld [vmem:[%s448 + $0x88] sm:$0xff]
        %v1565 = vld [vmem:[%s448 + $0x90] sm:$0xff]
        %v1566 = vld [vmem:[%s448 + $0x98] sm:$0xff]
        %v1567 = vld [vmem:[%s448 + $0xa0] sm:$0xff]
        %v1568 = vld [vmem:[%s448 + $0xa8] sm:$0xff]
        %v1569 = vld [vmem:[%s448 + $0xb0] sm:$0xff]
        %v1570 = vld [vmem:[%s448 + $0xb8] sm:$0xff]
        %v1571 = vld [vmem:[%s448 + $0xc0] sm:$0xff]
        %v1572 = vld [vmem:[%s448 + $0xc8] sm:$0xff]
        %v1573 = vld [vmem:[%s448 + $0xd0] sm:$0xff]
        %v1574 = vld [vmem:[%s448 + $0xd8] sm:$0xff]
        %v1575 = vld [vmem:[%s448 + $0xe0] sm:$0xff]
        %v1576 = vld [vmem:[%s448 + $0xe8] sm:$0xff]
        %v1577 = vld [vmem:[%s448 + $0xf0] sm:$0xff]
        %v1578 = vld [vmem:[%s448 + $0xf8] sm:$0xff]
        %v1579 = vld [vmem:[%s448 + $0x100] sm:$0xff]
        %v1580 = vld [vmem:[%s448 + $0x108] sm:$0xff]
        %v1581 = vld [vmem:[%s448 + $0x110] sm:$0xff]
        %v1582 = vld [vmem:[%s448 + $0x118] sm:$0xff]
        %v1583 = vld [vmem:[%s448 + $0x120] sm:$0xff]
        %v1584 = vld [vmem:[%s448 + $0x128] sm:$0xff]
        %v1585 = vld [vmem:[%s448 + $0x130] sm:$0xff]
        %v1586 = vld [vmem:[%s448 + $0x138] sm:$0xff]
        %v1587 = vld [vmem:[%s448 + $0x140] sm:$0xff]
        %v1588 = vld [vmem:[%s448 + $0x148] sm:$0xff]
        %v1589 = vld [vmem:[%s448 + $0x150] sm:$0xff]
        %v1590 = vld [vmem:[%s448 + $0x158] sm:$0xff]
        %v1591 = vld [vmem:[%s448 + $0x160] sm:$0xff]
        %v1592 = vld [vmem:[%s448 + $0x168] sm:$0xff]
        %v1593 = vld [vmem:[%s448 + $0x170] sm:$0xff]
        %v1594 = vld [vmem:[%s448 + $0x178] sm:$0xff]
        %v1595 = vld [vmem:[%s448 + $0x180] sm:$0xff]
        %v1596 = vld [vmem:[%s448 + $0x188] sm:$0xff]
        %v1597 = vld [vmem:[%s448 + $0x190] sm:$0xff]
        %v1598 = vld [vmem:[%s448 + $0x198] sm:$0xff]
        %v1599 = vld [vmem:[%s448 + $0x1a0] sm:$0xff]
        %v1600 = vld [vmem:[%s448 + $0x1a8] sm:$0xff]
        %v1601 = vld [vmem:[%s448 + $0x1b0] sm:$0xff]
        %v1602 = vld [vmem:[%s448 + $0x1b8] sm:$0xff]
        %v1603 = vld [vmem:[%s448 + $0x1c0] sm:$0xff]
        %v1604 = vld [vmem:[%s448 + $0x1c8] sm:$0xff]
        %v1605 = vld [vmem:[%s448 + $0x1d0] sm:$0xff]
        %v1606 = vld [vmem:[%s448 + $0x1d8] sm:$0xff]
        %v1607 = vld [vmem:[%s448 + $0x1e0] sm:$0xff]
        %v1608 = vld [vmem:[%s448 + $0x1e8] sm:$0xff]
        %v1609 = vld [vmem:[%s448 + $0x1f0] sm:$0xff]
        %v1610 = vld [vmem:[%s448 + $0x1f8] sm:$0xff]
        %s1611 = smul.u32 %s1546, 4
        %s1612 = smul.addr %s1611, 8
        %s1613 = scalar_lea.vmem [#allocation2], %s1612
        %v1614 = vld [vmem:[%s1613] sm:$0xff]
        %v1615 = vld [vmem:[%s1613 + $0x8] sm:$0xff]
        %v1616 = vld [vmem:[%s1613 + $0x10] sm:$0xff]
        %v1617 = vld [vmem:[%s1613 + $0x18] sm:$0xff]
        %1618 = vmatpush.msra.mxu0 %v1607
        %1619 = vmatpush.msra.mxu0 %v1603
        %1620 = vmatpush.msra.mxu0 %v1599
        %1621 = vmatpush.msra.mxu0 %v1595
        %1622 = vmatpush.msra.mxu0 %v1591
        %1623 = vmatpush.msra.mxu0 %v1587
        %1624 = vmatpush.msra.mxu0 %v1583
        %1625 = vmatpush.msra.mxu0 %v1579
        %1626 = vmatpush.msra.mxu0 %v1575
        %1627 = vmatpush.msra.mxu0 %v1571
        %1628 = vmatpush.msra.mxu0 %v1567
        %1629 = vmatpush.msra.mxu0 %v1563
        %1630 = vmatpush.msra.mxu0 %v1559
        %1631 = vmatpush.msra.mxu0 %v1555
        %1632 = vmatpush.msra.mxu0 %v1551
        %1633 = vmatpush.msra.mxu0 %v1547
        %1634 = vmatmul.f32.gmra.mxu0 %v1542
        %v1635 = vpop.f32.mrf.mxu0
        %v1636 = vadd.f32 %v1614, %v1635
        %1637 = vdwg.mxu0
        %1638 = vmatpush.msra.mxu0 %v1608
        %1639 = vmatpush.msra.mxu0 %v1604
        %1640 = vmatpush.msra.mxu0 %v1600
        %1641 = vmatpush.msra.mxu0 %v1596
        %1642 = vmatpush.msra.mxu0 %v1592
        %1643 = vmatpush.msra.mxu0 %v1588
        %1644 = vmatpush.msra.mxu0 %v1584
        %1645 = vmatpush.msra.mxu0 %v1580
        %1646 = vmatpush.msra.mxu0 %v1576
        %1647 = vmatpush.msra.mxu0 %v1572
        %1648 = vmatpush.msra.mxu0 %v1568
        %1649 = vmatpush.msra.mxu0 %v1564
        %1650 = vmatpush.msra.mxu0 %v1560
        %1651 = vmatpush.msra.mxu0 %v1556
        %1652 = vmatpush.msra.mxu0 %v1552
        %1653 = vmatpush.msra.mxu0 %v1548
        %1654 = vmatmul.f32.gmra.mxu0 %v1542
        %v1655 = vpop.f32.mrf.mxu0
        %v1656 = vadd.f32 %v1615, %v1655
        %1657 = vdwg.mxu0
        %1658 = vmatpush.msra.mxu0 %v1609
        %1659 = vmatpush.msra.mxu0 %v1605
        %1660 = vmatpush.msra.mxu0 %v1601
        %1661 = vmatpush.msra.mxu0 %v1597
        %1662 = vmatpush.msra.mxu0 %v1593
        %1663 = vmatpush.msra.mxu0 %v1589
        %1664 = vmatpush.msra.mxu0 %v1585
        %1665 = vmatpush.msra.mxu0 %v1581
        %1666 = vmatpush.msra.mxu0 %v1577
        %1667 = vmatpush.msra.mxu0 %v1573
        %1668 = vmatpush.msra.mxu0 %v1569
        %1669 = vmatpush.msra.mxu0 %v1565
        %1670 = vmatpush.msra.mxu0 %v1561
        %1671 = vmatpush.msra.mxu0 %v1557
        %1672 = vmatpush.msra.mxu0 %v1553
        %1673 = vmatpush.msra.mxu0 %v1549
        %1674 = vmatmul.f32.gmra.mxu0 %v1542
        %v1675 = vpop.f32.mrf.mxu0
        %v1676 = vadd.f32 %v1616, %v1675
        %1677 = vdwg.mxu0
        %1678 = vmatpush.msra.mxu0 %v1610
        %1679 = vmatpush.msra.mxu0 %v1606
        %1680 = vmatpush.msra.mxu0 %v1602
        %1681 = vmatpush.msra.mxu0 %v1598
        %1682 = vmatpush.msra.mxu0 %v1594
        %1683 = vmatpush.msra.mxu0 %v1590
        %1684 = vmatpush.msra.mxu0 %v1586
        %1685 = vmatpush.msra.mxu0 %v1582
        %1686 = vmatpush.msra.mxu0 %v1578
        %1687 = vmatpush.msra.mxu0 %v1574
        %1688 = vmatpush.msra.mxu0 %v1570
        %1689 = vmatpush.msra.mxu0 %v1566
        %1690 = vmatpush.msra.mxu0 %v1562
        %1691 = vmatpush.msra.mxu0 %v1558
        %1692 = vmatpush.msra.mxu0 %v1554
        %1693 = vmatpush.msra.mxu0 %v1550
        %1694 = vmatmul.f32.gmra.mxu0 %v1542
        %v1695 = vpop.f32.mrf.mxu0
        %v1696 = vadd.f32 %v1617, %v1695
        %1697 = vdwg.mxu0
        %v1698 = vmul.f32 %v1636, 0.5
        %v1699 = vtanh.pop %v1698
        %v1700 = vmul.f32 %v1699, 0.5
        %v1701 = vadd.f32 %v1700, 0.5
        %v1702 = vmul.f32 %v1656, 0.5
        %v1703 = vtanh.pop %v1702
        %v1704 = vmul.f32 %v1703, 0.5
        %v1705 = vadd.f32 %v1704, 0.5
        %v1706 = vtanh.pop %v1676
        %v1707 = vmul.f32 %v1696, 0.5
        %v1708 = vtanh.pop %v1707
        %v1709 = vmul.f32 %v1708, 0.5
        %v1710 = vadd.f32 %v1709, 0.5
        %v1711 = vmul.f32 %v1705, %v1540
        %v1712 = vmul.f32 %v1701, %v1706
        %v1713 = vadd.f32 %v1711, %v1712
        %v1714 = vtanh.pop %v1713
        %v1715 = vmul.f32 %v1710, %v1714
        %s1716 = smul.u32 %s1546, 8
        %s1717 = scalar_lea.vmem %s411, %s1716 [#allocation5]
        %1718 = vst [vmem:[%s1717] sm:$0xff] %v1715
        %s1719 = ssub.s32 4, %s24
        %v1720 = vld [vmem:[%s448] sm:$0xff]
        %v1721 = vld [vmem:[%s448 + $0x8] sm:$0xff]
        %v1722 = vld [vmem:[%s448 + $0x10] sm:$0xff]
        %v1723 = vld [vmem:[%s448 + $0x18] sm:$0xff]
        %v1724 = vld [vmem:[%s448 + $0x20] sm:$0xff]
        %v1725 = vld [vmem:[%s448 + $0x28] sm:$0xff]
        %v1726 = vld [vmem:[%s448 + $0x30] sm:$0xff]
        %v1727 = vld [vmem:[%s448 + $0x38] sm:$0xff]
        %v1728 = vld [vmem:[%s448 + $0x40] sm:$0xff]
        %v1729 = vld [vmem:[%s448 + $0x48] sm:$0xff]
        %v1730 = vld [vmem:[%s448 + $0x50] sm:$0xff]
        %v1731 = vld [vmem:[%s448 + $0x58] sm:$0xff]
        %v1732 = vld [vmem:[%s448 + $0x60] sm:$0xff]
        %v1733 = vld [vmem:[%s448 + $0x68] sm:$0xff]
        %v1734 = vld [vmem:[%s448 + $0x70] sm:$0xff]
        %v1735 = vld [vmem:[%s448 + $0x78] sm:$0xff]
        %v1736 = vld [vmem:[%s448 + $0x80] sm:$0xff]
        %v1737 = vld [vmem:[%s448 + $0x88] sm:$0xff]
        %v1738 = vld [vmem:[%s448 + $0x90] sm:$0xff]
        %v1739 = vld [vmem:[%s448 + $0x98] sm:$0xff]
        %v1740 = vld [vmem:[%s448 + $0xa0] sm:$0xff]
        %v1741 = vld [vmem:[%s448 + $0xa8] sm:$0xff]
        %v1742 = vld [vmem:[%s448 + $0xb0] sm:$0xff]
        %v1743 = vld [vmem:[%s448 + $0xb8] sm:$0xff]
        %v1744 = vld [vmem:[%s448 + $0xc0] sm:$0xff]
        %v1745 = vld [vmem:[%s448 + $0xc8] sm:$0xff]
        %v1746 = vld [vmem:[%s448 + $0xd0] sm:$0xff]
        %v1747 = vld [vmem:[%s448 + $0xd8] sm:$0xff]
        %v1748 = vld [vmem:[%s448 + $0xe0] sm:$0xff]
        %v1749 = vld [vmem:[%s448 + $0xe8] sm:$0xff]
        %v1750 = vld [vmem:[%s448 + $0xf0] sm:$0xff]
        %v1751 = vld [vmem:[%s448 + $0xf8] sm:$0xff]
        %v1752 = vld [vmem:[%s448 + $0x100] sm:$0xff]
        %v1753 = vld [vmem:[%s448 + $0x108] sm:$0xff]
        %v1754 = vld [vmem:[%s448 + $0x110] sm:$0xff]
        %v1755 = vld [vmem:[%s448 + $0x118] sm:$0xff]
        %v1756 = vld [vmem:[%s448 + $0x120] sm:$0xff]
        %v1757 = vld [vmem:[%s448 + $0x128] sm:$0xff]
        %v1758 = vld [vmem:[%s448 + $0x130] sm:$0xff]
        %v1759 = vld [vmem:[%s448 + $0x138] sm:$0xff]
        %v1760 = vld [vmem:[%s448 + $0x140] sm:$0xff]
        %v1761 = vld [vmem:[%s448 + $0x148] sm:$0xff]
        %v1762 = vld [vmem:[%s448 + $0x150] sm:$0xff]
        %v1763 = vld [vmem:[%s448 + $0x158] sm:$0xff]
        %v1764 = vld [vmem:[%s448 + $0x160] sm:$0xff]
        %v1765 = vld [vmem:[%s448 + $0x168] sm:$0xff]
        %v1766 = vld [vmem:[%s448 + $0x170] sm:$0xff]
        %v1767 = vld [vmem:[%s448 + $0x178] sm:$0xff]
        %v1768 = vld [vmem:[%s448 + $0x180] sm:$0xff]
        %v1769 = vld [vmem:[%s448 + $0x188] sm:$0xff]
        %v1770 = vld [vmem:[%s448 + $0x190] sm:$0xff]
        %v1771 = vld [vmem:[%s448 + $0x198] sm:$0xff]
        %v1772 = vld [vmem:[%s448 + $0x1a0] sm:$0xff]
        %v1773 = vld [vmem:[%s448 + $0x1a8] sm:$0xff]
        %v1774 = vld [vmem:[%s448 + $0x1b0] sm:$0xff]
        %v1775 = vld [vmem:[%s448 + $0x1b8] sm:$0xff]
        %v1776 = vld [vmem:[%s448 + $0x1c0] sm:$0xff]
        %v1777 = vld [vmem:[%s448 + $0x1c8] sm:$0xff]
        %v1778 = vld [vmem:[%s448 + $0x1d0] sm:$0xff]
        %v1779 = vld [vmem:[%s448 + $0x1d8] sm:$0xff]
        %v1780 = vld [vmem:[%s448 + $0x1e0] sm:$0xff]
        %v1781 = vld [vmem:[%s448 + $0x1e8] sm:$0xff]
        %v1782 = vld [vmem:[%s448 + $0x1f0] sm:$0xff]
        %v1783 = vld [vmem:[%s448 + $0x1f8] sm:$0xff]
        %s1784 = smul.u32 %s1719, 4
        %s1785 = smul.addr %s1784, 8
        %s1786 = scalar_lea.vmem [#allocation2], %s1785
        %v1787 = vld [vmem:[%s1786] sm:$0xff]
        %v1788 = vld [vmem:[%s1786 + $0x8] sm:$0xff]
        %v1789 = vld [vmem:[%s1786 + $0x10] sm:$0xff]
        %v1790 = vld [vmem:[%s1786 + $0x18] sm:$0xff]
        %1791 = vmatpush.msra.mxu0 %v1780
        %1792 = vmatpush.msra.mxu0 %v1776
        %1793 = vmatpush.msra.mxu0 %v1772
        %1794 = vmatpush.msra.mxu0 %v1768
        %1795 = vmatpush.msra.mxu0 %v1764
        %1796 = vmatpush.msra.mxu0 %v1760
        %1797 = vmatpush.msra.mxu0 %v1756
        %1798 = vmatpush.msra.mxu0 %v1752
        %1799 = vmatpush.msra.mxu0 %v1748
        %1800 = vmatpush.msra.mxu0 %v1744
        %1801 = vmatpush.msra.mxu0 %v1740
        %1802 = vmatpush.msra.mxu0 %v1736
        %1803 = vmatpush.msra.mxu0 %v1732
        %1804 = vmatpush.msra.mxu0 %v1728
        %1805 = vmatpush.msra.mxu0 %v1724
        %1806 = vmatpush.msra.mxu0 %v1720
        %1807 = vmatmul.f32.gmra.mxu0 %v1715
        %v1808 = vpop.f32.mrf.mxu0
        %v1809 = vadd.f32 %v1787, %v1808
        %1810 = vdwg.mxu0
        %1811 = vmatpush.msra.mxu0 %v1781
        %1812 = vmatpush.msra.mxu0 %v1777
        %1813 = vmatpush.msra.mxu0 %v1773
        %1814 = vmatpush.msra.mxu0 %v1769
        %1815 = vmatpush.msra.mxu0 %v1765
        %1816 = vmatpush.msra.mxu0 %v1761
        %1817 = vmatpush.msra.mxu0 %v1757
        %1818 = vmatpush.msra.mxu0 %v1753
        %1819 = vmatpush.msra.mxu0 %v1749
        %1820 = vmatpush.msra.mxu0 %v1745
        %1821 = vmatpush.msra.mxu0 %v1741
        %1822 = vmatpush.msra.mxu0 %v1737
        %1823 = vmatpush.msra.mxu0 %v1733
        %1824 = vmatpush.msra.mxu0 %v1729
        %1825 = vmatpush.msra.mxu0 %v1725
        %1826 = vmatpush.msra.mxu0 %v1721
        %1827 = vmatmul.f32.gmra.mxu0 %v1715
        %v1828 = vpop.f32.mrf.mxu0
        %v1829 = vadd.f32 %v1788, %v1828
        %1830 = vdwg.mxu0
        %1831 = vmatpush.msra.mxu0 %v1782
        %1832 = vmatpush.msra.mxu0 %v1778
        %1833 = vmatpush.msra.mxu0 %v1774
        %1834 = vmatpush.msra.mxu0 %v1770
        %1835 = vmatpush.msra.mxu0 %v1766
        %1836 = vmatpush.msra.mxu0 %v1762
        %1837 = vmatpush.msra.mxu0 %v1758
        %1838 = vmatpush.msra.mxu0 %v1754
        %1839 = vmatpush.msra.mxu0 %v1750
        %1840 = vmatpush.msra.mxu0 %v1746
        %1841 = vmatpush.msra.mxu0 %v1742
        %1842 = vmatpush.msra.mxu0 %v1738
        %1843 = vmatpush.msra.mxu0 %v1734
        %1844 = vmatpush.msra.mxu0 %v1730
        %1845 = vmatpush.msra.mxu0 %v1726
        %1846 = vmatpush.msra.mxu0 %v1722
        %1847 = vmatmul.f32.gmra.mxu0 %v1715
        %v1848 = vpop.f32.mrf.mxu0
        %v1849 = vadd.f32 %v1789, %v1848
        %1850 = vdwg.mxu0
        %1851 = vmatpush.msra.mxu0 %v1783
        %1852 = vmatpush.msra.mxu0 %v1779
        %1853 = vmatpush.msra.mxu0 %v1775
        %1854 = vmatpush.msra.mxu0 %v1771
        %1855 = vmatpush.msra.mxu0 %v1767
        %1856 = vmatpush.msra.mxu0 %v1763
        %1857 = vmatpush.msra.mxu0 %v1759
        %1858 = vmatpush.msra.mxu0 %v1755
        %1859 = vmatpush.msra.mxu0 %v1751
        %1860 = vmatpush.msra.mxu0 %v1747
        %1861 = vmatpush.msra.mxu0 %v1743
        %1862 = vmatpush.msra.mxu0 %v1739
        %1863 = vmatpush.msra.mxu0 %v1735
        %1864 = vmatpush.msra.mxu0 %v1731
        %1865 = vmatpush.msra.mxu0 %v1727
        %1866 = vmatpush.msra.mxu0 %v1723
        %1867 = vmatmul.f32.gmra.mxu0 %v1715
        %v1868 = vpop.f32.mrf.mxu0
        %v1869 = vadd.f32 %v1790, %v1868
        %1870 = vdwg.mxu0
        %v1871 = vmul.f32 %v1809, 0.5
        %v1872 = vtanh.pop %v1871
        %v1873 = vmul.f32 %v1872, 0.5
        %v1874 = vadd.f32 %v1873, 0.5
        %v1875 = vmul.f32 %v1829, 0.5
        %v1876 = vtanh.pop %v1875
        %v1877 = vmul.f32 %v1876, 0.5
        %v1878 = vadd.f32 %v1877, 0.5
        %v1879 = vtanh.pop %v1849
        %v1880 = vmul.f32 %v1869, 0.5
        %v1881 = vtanh.pop %v1880
        %v1882 = vmul.f32 %v1881, 0.5
        %v1883 = vadd.f32 %v1882, 0.5
        %v1884 = vmul.f32 %v1878, %v1713
        %v1885 = vmul.f32 %v1874, %v1879
        %v1886 = vadd.f32 %v1884, %v1885
        %v1887 = vtanh.pop %v1886
        %v1888 = vmul.f32 %v1883, %v1887
        %s1889 = smul.u32 %s1719, 8
        %s1890 = scalar_lea.vmem %s411, %s1889 [#allocation5]
        %1891 = vst [vmem:[%s1890] sm:$0xff] %v1888
        %s1892 = smul.u32 %s24, 4294967293
        %s1893 = sadd.s32 %s1892, 5
        %v1894 = vld [vmem:[%s448] sm:$0xff]
        %v1895 = vld [vmem:[%s448 + $0x8] sm:$0xff]
        %v1896 = vld [vmem:[%s448 + $0x10] sm:$0xff]
        %v1897 = vld [vmem:[%s448 + $0x18] sm:$0xff]
        %v1898 = vld [vmem:[%s448 + $0x20] sm:$0xff]
        %v1899 = vld [vmem:[%s448 + $0x28] sm:$0xff]
        %v1900 = vld [vmem:[%s448 + $0x30] sm:$0xff]
        %v1901 = vld [vmem:[%s448 + $0x38] sm:$0xff]
        %v1902 = vld [vmem:[%s448 + $0x40] sm:$0xff]
        %v1903 = vld [vmem:[%s448 + $0x48] sm:$0xff]
        %v1904 = vld [vmem:[%s448 + $0x50] sm:$0xff]
        %v1905 = vld [vmem:[%s448 + $0x58] sm:$0xff]
        %v1906 = vld [vmem:[%s448 + $0x60] sm:$0xff]
        %v1907 = vld [vmem:[%s448 + $0x68] sm:$0xff]
        %v1908 = vld [vmem:[%s448 + $0x70] sm:$0xff]
        %v1909 = vld [vmem:[%s448 + $0x78] sm:$0xff]
        %v1910 = vld [vmem:[%s448 + $0x80] sm:$0xff]
        %v1911 = vld [vmem:[%s448 + $0x88] sm:$0xff]
        %v1912 = vld [vmem:[%s448 + $0x90] sm:$0xff]
        %v1913 = vld [vmem:[%s448 + $0x98] sm:$0xff]
        %v1914 = vld [vmem:[%s448 + $0xa0] sm:$0xff]
        %v1915 = vld [vmem:[%s448 + $0xa8] sm:$0xff]
        %v1916 = vld [vmem:[%s448 + $0xb0] sm:$0xff]
        %v1917 = vld [vmem:[%s448 + $0xb8] sm:$0xff]
        %v1918 = vld [vmem:[%s448 + $0xc0] sm:$0xff]
        %v1919 = vld [vmem:[%s448 + $0xc8] sm:$0xff]
        %v1920 = vld [vmem:[%s448 + $0xd0] sm:$0xff]
        %v1921 = vld [vmem:[%s448 + $0xd8] sm:$0xff]
        %v1922 = vld [vmem:[%s448 + $0xe0] sm:$0xff]
        %v1923 = vld [vmem:[%s448 + $0xe8] sm:$0xff]
        %v1924 = vld [vmem:[%s448 + $0xf0] sm:$0xff]
        %v1925 = vld [vmem:[%s448 + $0xf8] sm:$0xff]
        %v1926 = vld [vmem:[%s448 + $0x100] sm:$0xff]
        %v1927 = vld [vmem:[%s448 + $0x108] sm:$0xff]
        %v1928 = vld [vmem:[%s448 + $0x110] sm:$0xff]
        %v1929 = vld [vmem:[%s448 + $0x118] sm:$0xff]
        %v1930 = vld [vmem:[%s448 + $0x120] sm:$0xff]
        %v1931 = vld [vmem:[%s448 + $0x128] sm:$0xff]
        %v1932 = vld [vmem:[%s448 + $0x130] sm:$0xff]
        %v1933 = vld [vmem:[%s448 + $0x138] sm:$0xff]
        %v1934 = vld [vmem:[%s448 + $0x140] sm:$0xff]
        %v1935 = vld [vmem:[%s448 + $0x148] sm:$0xff]
        %v1936 = vld [vmem:[%s448 + $0x150] sm:$0xff]
        %v1937 = vld [vmem:[%s448 + $0x158] sm:$0xff]
        %v1938 = vld [vmem:[%s448 + $0x160] sm:$0xff]
        %v1939 = vld [vmem:[%s448 + $0x168] sm:$0xff]
        %v1940 = vld [vmem:[%s448 + $0x170] sm:$0xff]
        %v1941 = vld [vmem:[%s448 + $0x178] sm:$0xff]
        %v1942 = vld [vmem:[%s448 + $0x180] sm:$0xff]
        %v1943 = vld [vmem:[%s448 + $0x188] sm:$0xff]
        %v1944 = vld [vmem:[%s448 + $0x190] sm:$0xff]
        %v1945 = vld [vmem:[%s448 + $0x198] sm:$0xff]
        %v1946 = vld [vmem:[%s448 + $0x1a0] sm:$0xff]
        %v1947 = vld [vmem:[%s448 + $0x1a8] sm:$0xff]
        %v1948 = vld [vmem:[%s448 + $0x1b0] sm:$0xff]
        %v1949 = vld [vmem:[%s448 + $0x1b8] sm:$0xff]
        %v1950 = vld [vmem:[%s448 + $0x1c0] sm:$0xff]
        %v1951 = vld [vmem:[%s448 + $0x1c8] sm:$0xff]
        %v1952 = vld [vmem:[%s448 + $0x1d0] sm:$0xff]
        %v1953 = vld [vmem:[%s448 + $0x1d8] sm:$0xff]
        %v1954 = vld [vmem:[%s448 + $0x1e0] sm:$0xff]
        %v1955 = vld [vmem:[%s448 + $0x1e8] sm:$0xff]
        %v1956 = vld [vmem:[%s448 + $0x1f0] sm:$0xff]
        %v1957 = vld [vmem:[%s448 + $0x1f8] sm:$0xff]
        %s1958 = smul.u32 %s1893, 4
        %s1959 = smul.addr %s1958, 8
        %s1960 = scalar_lea.vmem [#allocation2], %s1959
        %v1961 = vld [vmem:[%s1960] sm:$0xff]
        %v1962 = vld [vmem:[%s1960 + $0x8] sm:$0xff]
        %v1963 = vld [vmem:[%s1960 + $0x10] sm:$0xff]
        %v1964 = vld [vmem:[%s1960 + $0x18] sm:$0xff]
        %1965 = vmatpush.msra.mxu0 %v1954
        %1966 = vmatpush.msra.mxu0 %v1950
        %1967 = vmatpush.msra.mxu0 %v1946
        %1968 = vmatpush.msra.mxu0 %v1942
        %1969 = vmatpush.msra.mxu0 %v1938
        %1970 = vmatpush.msra.mxu0 %v1934
        %1971 = vmatpush.msra.mxu0 %v1930
        %1972 = vmatpush.msra.mxu0 %v1926
        %1973 = vmatpush.msra.mxu0 %v1922
        %1974 = vmatpush.msra.mxu0 %v1918
        %1975 = vmatpush.msra.mxu0 %v1914
        %1976 = vmatpush.msra.mxu0 %v1910
        %1977 = vmatpush.msra.mxu0 %v1906
        %1978 = vmatpush.msra.mxu0 %v1902
        %1979 = vmatpush.msra.mxu0 %v1898
        %1980 = vmatpush.msra.mxu0 %v1894
        %1981 = vmatmul.f32.gmra.mxu0 %v1888
        %v1982 = vpop.f32.mrf.mxu0
        %v1983 = vadd.f32 %v1961, %v1982
        %1984 = vdwg.mxu0
        %1985 = vmatpush.msra.mxu0 %v1955
        %1986 = vmatpush.msra.mxu0 %v1951
        %1987 = vmatpush.msra.mxu0 %v1947
        %1988 = vmatpush.msra.mxu0 %v1943
        %1989 = vmatpush.msra.mxu0 %v1939
        %1990 = vmatpush.msra.mxu0 %v1935
        %1991 = vmatpush.msra.mxu0 %v1931
        %1992 = vmatpush.msra.mxu0 %v1927
        %1993 = vmatpush.msra.mxu0 %v1923
        %1994 = vmatpush.msra.mxu0 %v1919
        %1995 = vmatpush.msra.mxu0 %v1915
        %1996 = vmatpush.msra.mxu0 %v1911
        %1997 = vmatpush.msra.mxu0 %v1907
        %1998 = vmatpush.msra.mxu0 %v1903
        %1999 = vmatpush.msra.mxu0 %v1899
        %2000 = vmatpush.msra.mxu0 %v1895
        %2001 = vmatmul.f32.gmra.mxu0 %v1888
        %v2002 = vpop.f32.mrf.mxu0
        %v2003 = vadd.f32 %v1962, %v2002
        %2004 = vdwg.mxu0
        %2005 = vmatpush.msra.mxu0 %v1956
        %2006 = vmatpush.msra.mxu0 %v1952
        %2007 = vmatpush.msra.mxu0 %v1948
        %2008 = vmatpush.msra.mxu0 %v1944
        %2009 = vmatpush.msra.mxu0 %v1940
        %2010 = vmatpush.msra.mxu0 %v1936
        %2011 = vmatpush.msra.mxu0 %v1932
        %2012 = vmatpush.msra.mxu0 %v1928
        %2013 = vmatpush.msra.mxu0 %v1924
        %2014 = vmatpush.msra.mxu0 %v1920
        %2015 = vmatpush.msra.mxu0 %v1916
        %2016 = vmatpush.msra.mxu0 %v1912
        %2017 = vmatpush.msra.mxu0 %v1908
        %2018 = vmatpush.msra.mxu0 %v1904
        %2019 = vmatpush.msra.mxu0 %v1900
        %2020 = vmatpush.msra.mxu0 %v1896
        %2021 = vmatmul.f32.gmra.mxu0 %v1888
        %v2022 = vpop.f32.mrf.mxu0
        %v2023 = vadd.f32 %v1963, %v2022
        %2024 = vdwg.mxu0
        %2025 = vmatpush.msra.mxu0 %v1957
        %2026 = vmatpush.msra.mxu0 %v1953
        %2027 = vmatpush.msra.mxu0 %v1949
        %2028 = vmatpush.msra.mxu0 %v1945
        %2029 = vmatpush.msra.mxu0 %v1941
        %2030 = vmatpush.msra.mxu0 %v1937
        %2031 = vmatpush.msra.mxu0 %v1933
        %2032 = vmatpush.msra.mxu0 %v1929
        %2033 = vmatpush.msra.mxu0 %v1925
        %2034 = vmatpush.msra.mxu0 %v1921
        %2035 = vmatpush.msra.mxu0 %v1917
        %2036 = vmatpush.msra.mxu0 %v1913
        %2037 = vmatpush.msra.mxu0 %v1909
        %2038 = vmatpush.msra.mxu0 %v1905
        %2039 = vmatpush.msra.mxu0 %v1901
        %2040 = vmatpush.msra.mxu0 %v1897
        %2041 = vmatmul.f32.gmra.mxu0 %v1888
        %v2042 = vpop.f32.mrf.mxu0
        %v2043 = vadd.f32 %v1964, %v2042
        %2044 = vdwg.mxu0
        %v2045 = vmul.f32 %v1983, 0.5
        %v2046 = vtanh.pop %v2045
        %v2047 = vmul.f32 %v2046, 0.5
        %v2048 = vadd.f32 %v2047, 0.5
        %v2049 = vmul.f32 %v2003, 0.5
        %v2050 = vtanh.pop %v2049
        %v2051 = vmul.f32 %v2050, 0.5
        %v2052 = vadd.f32 %v2051, 0.5
        %v2053 = vtanh.pop %v2023
        %v2054 = vmul.f32 %v2043, 0.5
        %v2055 = vtanh.pop %v2054
        %v2056 = vmul.f32 %v2055, 0.5
        %v2057 = vadd.f32 %v2056, 0.5
        %v2058 = vmul.f32 %v2052, %v1886
        %v2059 = vmul.f32 %v2048, %v2053
        %v2060 = vadd.f32 %v2058, %v2059
        %v2061 = vtanh.pop %v2060
        %v2062 = vmul.f32 %v2057, %v2061
        %s2063 = smul.u32 %s1893, 8
        %s2064 = scalar_lea.vmem %s411, %s2063 [#allocation5]
        %2065 = vst [vmem:[%s2064] sm:$0xff] %v2062
        %s2066 = smul.u32 %s24, 4294967291
        %s2067 = sadd.s32 %s2066, 6
        %v2068 = vld [vmem:[%s448] sm:$0xff]
        %v2069 = vld [vmem:[%s448 + $0x8] sm:$0xff]
        %v2070 = vld [vmem:[%s448 + $0x10] sm:$0xff]
        %v2071 = vld [vmem:[%s448 + $0x18] sm:$0xff]
        %v2072 = vld [vmem:[%s448 + $0x20] sm:$0xff]
        %v2073 = vld [vmem:[%s448 + $0x28] sm:$0xff]
        %v2074 = vld [vmem:[%s448 + $0x30] sm:$0xff]
        %v2075 = vld [vmem:[%s448 + $0x38] sm:$0xff]
        %v2076 = vld [vmem:[%s448 + $0x40] sm:$0xff]
        %v2077 = vld [vmem:[%s448 + $0x48] sm:$0xff]
        %v2078 = vld [vmem:[%s448 + $0x50] sm:$0xff]
        %v2079 = vld [vmem:[%s448 + $0x58] sm:$0xff]
        %v2080 = vld [vmem:[%s448 + $0x60] sm:$0xff]
        %v2081 = vld [vmem:[%s448 + $0x68] sm:$0xff]
        %v2082 = vld [vmem:[%s448 + $0x70] sm:$0xff]
        %v2083 = vld [vmem:[%s448 + $0x78] sm:$0xff]
        %v2084 = vld [vmem:[%s448 + $0x80] sm:$0xff]
        %v2085 = vld [vmem:[%s448 + $0x88] sm:$0xff]
        %v2086 = vld [vmem:[%s448 + $0x90] sm:$0xff]
        %v2087 = vld [vmem:[%s448 + $0x98] sm:$0xff]
        %v2088 = vld [vmem:[%s448 + $0xa0] sm:$0xff]
        %v2089 = vld [vmem:[%s448 + $0xa8] sm:$0xff]
        %v2090 = vld [vmem:[%s448 + $0xb0] sm:$0xff]
        %v2091 = vld [vmem:[%s448 + $0xb8] sm:$0xff]
        %v2092 = vld [vmem:[%s448 + $0xc0] sm:$0xff]
        %v2093 = vld [vmem:[%s448 + $0xc8] sm:$0xff]
        %v2094 = vld [vmem:[%s448 + $0xd0] sm:$0xff]
        %v2095 = vld [vmem:[%s448 + $0xd8] sm:$0xff]
        %v2096 = vld [vmem:[%s448 + $0xe0] sm:$0xff]
        %v2097 = vld [vmem:[%s448 + $0xe8] sm:$0xff]
        %v2098 = vld [vmem:[%s448 + $0xf0] sm:$0xff]
        %v2099 = vld [vmem:[%s448 + $0xf8] sm:$0xff]
        %v2100 = vld [vmem:[%s448 + $0x100] sm:$0xff]
        %v2101 = vld [vmem:[%s448 + $0x108] sm:$0xff]
        %v2102 = vld [vmem:[%s448 + $0x110] sm:$0xff]
        %v2103 = vld [vmem:[%s448 + $0x118] sm:$0xff]
        %v2104 = vld [vmem:[%s448 + $0x120] sm:$0xff]
        %v2105 = vld [vmem:[%s448 + $0x128] sm:$0xff]
        %v2106 = vld [vmem:[%s448 + $0x130] sm:$0xff]
        %v2107 = vld [vmem:[%s448 + $0x138] sm:$0xff]
        %v2108 = vld [vmem:[%s448 + $0x140] sm:$0xff]
        %v2109 = vld [vmem:[%s448 + $0x148] sm:$0xff]
        %v2110 = vld [vmem:[%s448 + $0x150] sm:$0xff]
        %v2111 = vld [vmem:[%s448 + $0x158] sm:$0xff]
        %v2112 = vld [vmem:[%s448 + $0x160] sm:$0xff]
        %v2113 = vld [vmem:[%s448 + $0x168] sm:$0xff]
        %v2114 = vld [vmem:[%s448 + $0x170] sm:$0xff]
        %v2115 = vld [vmem:[%s448 + $0x178] sm:$0xff]
        %v2116 = vld [vmem:[%s448 + $0x180] sm:$0xff]
        %v2117 = vld [vmem:[%s448 + $0x188] sm:$0xff]
        %v2118 = vld [vmem:[%s448 + $0x190] sm:$0xff]
        %v2119 = vld [vmem:[%s448 + $0x198] sm:$0xff]
        %v2120 = vld [vmem:[%s448 + $0x1a0] sm:$0xff]
        %v2121 = vld [vmem:[%s448 + $0x1a8] sm:$0xff]
        %v2122 = vld [vmem:[%s448 + $0x1b0] sm:$0xff]
        %v2123 = vld [vmem:[%s448 + $0x1b8] sm:$0xff]
        %v2124 = vld [vmem:[%s448 + $0x1c0] sm:$0xff]
        %v2125 = vld [vmem:[%s448 + $0x1c8] sm:$0xff]
        %v2126 = vld [vmem:[%s448 + $0x1d0] sm:$0xff]
        %v2127 = vld [vmem:[%s448 + $0x1d8] sm:$0xff]
        %v2128 = vld [vmem:[%s448 + $0x1e0] sm:$0xff]
        %v2129 = vld [vmem:[%s448 + $0x1e8] sm:$0xff]
        %v2130 = vld [vmem:[%s448 + $0x1f0] sm:$0xff]
        %v2131 = vld [vmem:[%s448 + $0x1f8] sm:$0xff]
        %s2132 = smul.u32 %s2067, 4
        %s2133 = smul.addr %s2132, 8
        %s2134 = scalar_lea.vmem [#allocation2], %s2133
        %v2135 = vld [vmem:[%s2134] sm:$0xff]
        %v2136 = vld [vmem:[%s2134 + $0x8] sm:$0xff]
        %v2137 = vld [vmem:[%s2134 + $0x10] sm:$0xff]
        %v2138 = vld [vmem:[%s2134 + $0x18] sm:$0xff]
        %2139 = vmatpush.msra.mxu0 %v2128
        %2140 = vmatpush.msra.mxu0 %v2124
        %2141 = vmatpush.msra.mxu0 %v2120
        %2142 = vmatpush.msra.mxu0 %v2116
        %2143 = vmatpush.msra.mxu0 %v2112
        %2144 = vmatpush.msra.mxu0 %v2108
        %2145 = vmatpush.msra.mxu0 %v2104
        %2146 = vmatpush.msra.mxu0 %v2100
        %2147 = vmatpush.msra.mxu0 %v2096
        %2148 = vmatpush.msra.mxu0 %v2092
        %2149 = vmatpush.msra.mxu0 %v2088
        %2150 = vmatpush.msra.mxu0 %v2084
        %2151 = vmatpush.msra.mxu0 %v2080
        %2152 = vmatpush.msra.mxu0 %v2076
        %2153 = vmatpush.msra.mxu0 %v2072
        %2154 = vmatpush.msra.mxu0 %v2068
        %2155 = vmatmul.f32.gmra.mxu0 %v2062
        %v2156 = vpop.f32.mrf.mxu0
        %v2157 = vadd.f32 %v2135, %v2156
        %2158 = vdwg.mxu0
        %2159 = vmatpush.msra.mxu0 %v2129
        %2160 = vmatpush.msra.mxu0 %v2125
        %2161 = vmatpush.msra.mxu0 %v2121
        %2162 = vmatpush.msra.mxu0 %v2117
        %2163 = vmatpush.msra.mxu0 %v2113
        %2164 = vmatpush.msra.mxu0 %v2109
        %2165 = vmatpush.msra.mxu0 %v2105
        %2166 = vmatpush.msra.mxu0 %v2101
        %2167 = vmatpush.msra.mxu0 %v2097
        %2168 = vmatpush.msra.mxu0 %v2093
        %2169 = vmatpush.msra.mxu0 %v2089
        %2170 = vmatpush.msra.mxu0 %v2085
        %2171 = vmatpush.msra.mxu0 %v2081
        %2172 = vmatpush.msra.mxu0 %v2077
        %2173 = vmatpush.msra.mxu0 %v2073
        %2174 = vmatpush.msra.mxu0 %v2069
        %2175 = vmatmul.f32.gmra.mxu0 %v2062
        %v2176 = vpop.f32.mrf.mxu0
        %v2177 = vadd.f32 %v2136, %v2176
        %2178 = vdwg.mxu0
        %2179 = vmatpush.msra.mxu0 %v2130
        %2180 = vmatpush.msra.mxu0 %v2126
        %2181 = vmatpush.msra.mxu0 %v2122
        %2182 = vmatpush.msra.mxu0 %v2118
        %2183 = vmatpush.msra.mxu0 %v2114
        %2184 = vmatpush.msra.mxu0 %v2110
        %2185 = vmatpush.msra.mxu0 %v2106
        %2186 = vmatpush.msra.mxu0 %v2102
        %2187 = vmatpush.msra.mxu0 %v2098
        %2188 = vmatpush.msra.mxu0 %v2094
        %2189 = vmatpush.msra.mxu0 %v2090
        %2190 = vmatpush.msra.mxu0 %v2086
        %2191 = vmatpush.msra.mxu0 %v2082
        %2192 = vmatpush.msra.mxu0 %v2078
        %2193 = vmatpush.msra.mxu0 %v2074
        %2194 = vmatpush.msra.mxu0 %v2070
        %2195 = vmatmul.f32.gmra.mxu0 %v2062
        %v2196 = vpop.f32.mrf.mxu0
        %v2197 = vadd.f32 %v2137, %v2196
        %2198 = vdwg.mxu0
        %2199 = vmatpush.msra.mxu0 %v2131
        %2200 = vmatpush.msra.mxu0 %v2127
        %2201 = vmatpush.msra.mxu0 %v2123
        %2202 = vmatpush.msra.mxu0 %v2119
        %2203 = vmatpush.msra.mxu0 %v2115
        %2204 = vmatpush.msra.mxu0 %v2111
        %2205 = vmatpush.msra.mxu0 %v2107
        %2206 = vmatpush.msra.mxu0 %v2103
        %2207 = vmatpush.msra.mxu0 %v2099
        %2208 = vmatpush.msra.mxu0 %v2095
        %2209 = vmatpush.msra.mxu0 %v2091
        %2210 = vmatpush.msra.mxu0 %v2087
        %2211 = vmatpush.msra.mxu0 %v2083
        %2212 = vmatpush.msra.mxu0 %v2079
        %2213 = vmatpush.msra.mxu0 %v2075
        %2214 = vmatpush.msra.mxu0 %v2071
        %2215 = vmatmul.f32.gmra.mxu0 %v2062
        %v2216 = vpop.f32.mrf.mxu0
        %v2217 = vadd.f32 %v2138, %v2216
        %2218 = vdwg.mxu0
        %v2219 = vmul.f32 %v2157, 0.5
        %v2220 = vtanh.pop %v2219
        %v2221 = vmul.f32 %v2220, 0.5
        %v2222 = vadd.f32 %v2221, 0.5
        %v2223 = vmul.f32 %v2177, 0.5
        %v2224 = vtanh.pop %v2223
        %v2225 = vmul.f32 %v2224, 0.5
        %v2226 = vadd.f32 %v2225, 0.5
        %v2227 = vtanh.pop %v2197
        %v2228 = vmul.f32 %v2217, 0.5
        %v2229 = vtanh.pop %v2228
        %v2230 = vmul.f32 %v2229, 0.5
        %v2231 = vadd.f32 %v2230, 0.5
        %v2232 = vmul.f32 %v2226, %v2060
        %v2233 = vmul.f32 %v2222, %v2227
        %v2234 = vadd.f32 %v2232, %v2233
        %v2235 = vtanh.pop %v2234
        %v2236 = vmul.f32 %v2231, %v2235
        %s2237 = smul.u32 %s2067, 8
        %s2238 = scalar_lea.vmem %s411, %s2237 [#allocation5]
        %2239 = vst [vmem:[%s2238] sm:$0xff] %v2236
        %s2240 = smul.u32 %s24, 4294967289
        %s2241 = sadd.s32 %s2240, 7
        %v2242 = vld [vmem:[%s448] sm:$0xff]
        %v2243 = vld [vmem:[%s448 + $0x8] sm:$0xff]
        %v2244 = vld [vmem:[%s448 + $0x10] sm:$0xff]
        %v2245 = vld [vmem:[%s448 + $0x18] sm:$0xff]
        %v2246 = vld [vmem:[%s448 + $0x20] sm:$0xff]
        %v2247 = vld [vmem:[%s448 + $0x28] sm:$0xff]
        %v2248 = vld [vmem:[%s448 + $0x30] sm:$0xff]
        %v2249 = vld [vmem:[%s448 + $0x38] sm:$0xff]
        %v2250 = vld [vmem:[%s448 + $0x40] sm:$0xff]
        %v2251 = vld [vmem:[%s448 + $0x48] sm:$0xff]
        %v2252 = vld [vmem:[%s448 + $0x50] sm:$0xff]
        %v2253 = vld [vmem:[%s448 + $0x58] sm:$0xff]
        %v2254 = vld [vmem:[%s448 + $0x60] sm:$0xff]
        %v2255 = vld [vmem:[%s448 + $0x68] sm:$0xff]
        %v2256 = vld [vmem:[%s448 + $0x70] sm:$0xff]
        %v2257 = vld [vmem:[%s448 + $0x78] sm:$0xff]
        %v2258 = vld [vmem:[%s448 + $0x80] sm:$0xff]
        %v2259 = vld [vmem:[%s448 + $0x88] sm:$0xff]
        %v2260 = vld [vmem:[%s448 + $0x90] sm:$0xff]
        %v2261 = vld [vmem:[%s448 + $0x98] sm:$0xff]
        %v2262 = vld [vmem:[%s448 + $0xa0] sm:$0xff]
        %v2263 = vld [vmem:[%s448 + $0xa8] sm:$0xff]
        %v2264 = vld [vmem:[%s448 + $0xb0] sm:$0xff]
        %v2265 = vld [vmem:[%s448 + $0xb8] sm:$0xff]
        %v2266 = vld [vmem:[%s448 + $0xc0] sm:$0xff]
        %v2267 = vld [vmem:[%s448 + $0xc8] sm:$0xff]
        %v2268 = vld [vmem:[%s448 + $0xd0] sm:$0xff]
        %v2269 = vld [vmem:[%s448 + $0xd8] sm:$0xff]
        %v2270 = vld [vmem:[%s448 + $0xe0] sm:$0xff]
        %v2271 = vld [vmem:[%s448 + $0xe8] sm:$0xff]
        %v2272 = vld [vmem:[%s448 + $0xf0] sm:$0xff]
        %v2273 = vld [vmem:[%s448 + $0xf8] sm:$0xff]
        %v2274 = vld [vmem:[%s448 + $0x100] sm:$0xff]
        %v2275 = vld [vmem:[%s448 + $0x108] sm:$0xff]
        %v2276 = vld [vmem:[%s448 + $0x110] sm:$0xff]
        %v2277 = vld [vmem:[%s448 + $0x118] sm:$0xff]
        %v2278 = vld [vmem:[%s448 + $0x120] sm:$0xff]
        %v2279 = vld [vmem:[%s448 + $0x128] sm:$0xff]
        %v2280 = vld [vmem:[%s448 + $0x130] sm:$0xff]
        %v2281 = vld [vmem:[%s448 + $0x138] sm:$0xff]
        %v2282 = vld [vmem:[%s448 + $0x140] sm:$0xff]
        %v2283 = vld [vmem:[%s448 + $0x148] sm:$0xff]
        %v2284 = vld [vmem:[%s448 + $0x150] sm:$0xff]
        %v2285 = vld [vmem:[%s448 + $0x158] sm:$0xff]
        %v2286 = vld [vmem:[%s448 + $0x160] sm:$0xff]
        %v2287 = vld [vmem:[%s448 + $0x168] sm:$0xff]
        %v2288 = vld [vmem:[%s448 + $0x170] sm:$0xff]
        %v2289 = vld [vmem:[%s448 + $0x178] sm:$0xff]
        %v2290 = vld [vmem:[%s448 + $0x180] sm:$0xff]
        %v2291 = vld [vmem:[%s448 + $0x188] sm:$0xff]
        %v2292 = vld [vmem:[%s448 + $0x190] sm:$0xff]
        %v2293 = vld [vmem:[%s448 + $0x198] sm:$0xff]
        %v2294 = vld [vmem:[%s448 + $0x1a0] sm:$0xff]
        %v2295 = vld [vmem:[%s448 + $0x1a8] sm:$0xff]
        %v2296 = vld [vmem:[%s448 + $0x1b0] sm:$0xff]
        %v2297 = vld [vmem:[%s448 + $0x1b8] sm:$0xff]
        %v2298 = vld [vmem:[%s448 + $0x1c0] sm:$0xff]
        %v2299 = vld [vmem:[%s448 + $0x1c8] sm:$0xff]
        %v2300 = vld [vmem:[%s448 + $0x1d0] sm:$0xff]
        %v2301 = vld [vmem:[%s448 + $0x1d8] sm:$0xff]
        %v2302 = vld [vmem:[%s448 + $0x1e0] sm:$0xff]
        %v2303 = vld [vmem:[%s448 + $0x1e8] sm:$0xff]
        %v2304 = vld [vmem:[%s448 + $0x1f0] sm:$0xff]
        %v2305 = vld [vmem:[%s448 + $0x1f8] sm:$0xff]
        %s2306 = smul.u32 %s2241, 4
        %s2307 = smul.addr %s2306, 8
        %s2308 = scalar_lea.vmem [#allocation2], %s2307
        %v2309 = vld [vmem:[%s2308] sm:$0xff]
        %v2310 = vld [vmem:[%s2308 + $0x8] sm:$0xff]
        %v2311 = vld [vmem:[%s2308 + $0x10] sm:$0xff]
        %v2312 = vld [vmem:[%s2308 + $0x18] sm:$0xff]
        %2313 = vmatpush.msra.mxu0 %v2302
        %2314 = vmatpush.msra.mxu0 %v2298
        %2315 = vmatpush.msra.mxu0 %v2294
        %2316 = vmatpush.msra.mxu0 %v2290
        %2317 = vmatpush.msra.mxu0 %v2286
        %2318 = vmatpush.msra.mxu0 %v2282
        %2319 = vmatpush.msra.mxu0 %v2278
        %2320 = vmatpush.msra.mxu0 %v2274
        %2321 = vmatpush.msra.mxu0 %v2270
        %2322 = vmatpush.msra.mxu0 %v2266
        %2323 = vmatpush.msra.mxu0 %v2262
        %2324 = vmatpush.msra.mxu0 %v2258
        %2325 = vmatpush.msra.mxu0 %v2254
        %2326 = vmatpush.msra.mxu0 %v2250
        %2327 = vmatpush.msra.mxu0 %v2246
        %2328 = vmatpush.msra.mxu0 %v2242
        %2329 = vmatmul.f32.gmra.mxu0 %v2236
        %v2330 = vpop.f32.mrf.mxu0
        %v2331 = vadd.f32 %v2309, %v2330
        %2332 = vdwg.mxu0
        %2333 = vmatpush.msra.mxu0 %v2303
        %2334 = vmatpush.msra.mxu0 %v2299
        %2335 = vmatpush.msra.mxu0 %v2295
        %2336 = vmatpush.msra.mxu0 %v2291
        %2337 = vmatpush.msra.mxu0 %v2287
        %2338 = vmatpush.msra.mxu0 %v2283
        %2339 = vmatpush.msra.mxu0 %v2279
        %2340 = vmatpush.msra.mxu0 %v2275
        %2341 = vmatpush.msra.mxu0 %v2271
        %2342 = vmatpush.msra.mxu0 %v2267
        %2343 = vmatpush.msra.mxu0 %v2263
        %2344 = vmatpush.msra.mxu0 %v2259
        %2345 = vmatpush.msra.mxu0 %v2255
        %2346 = vmatpush.msra.mxu0 %v2251
        %2347 = vmatpush.msra.mxu0 %v2247
        %2348 = vmatpush.msra.mxu0 %v2243
        %2349 = vmatmul.f32.gmra.mxu0 %v2236
        %v2350 = vpop.f32.mrf.mxu0
        %v2351 = vadd.f32 %v2310, %v2350
        %2352 = vdwg.mxu0
        %2353 = vmatpush.msra.mxu0 %v2304
        %2354 = vmatpush.msra.mxu0 %v2300
        %2355 = vmatpush.msra.mxu0 %v2296
        %2356 = vmatpush.msra.mxu0 %v2292
        %2357 = vmatpush.msra.mxu0 %v2288
        %2358 = vmatpush.msra.mxu0 %v2284
        %2359 = vmatpush.msra.mxu0 %v2280
        %2360 = vmatpush.msra.mxu0 %v2276
        %2361 = vmatpush.msra.mxu0 %v2272
        %2362 = vmatpush.msra.mxu0 %v2268
        %2363 = vmatpush.msra.mxu0 %v2264
        %2364 = vmatpush.msra.mxu0 %v2260
        %2365 = vmatpush.msra.mxu0 %v2256
        %2366 = vmatpush.msra.mxu0 %v2252
        %2367 = vmatpush.msra.mxu0 %v2248
        %2368 = vmatpush.msra.mxu0 %v2244
        %2369 = vmatmul.f32.gmra.mxu0 %v2236
        %v2370 = vpop.f32.mrf.mxu0
        %v2371 = vadd.f32 %v2311, %v2370
        %2372 = vdwg.mxu0
        %2373 = vmatpush.msra.mxu0 %v2305
        %2374 = vmatpush.msra.mxu0 %v2301
        %2375 = vmatpush.msra.mxu0 %v2297
        %2376 = vmatpush.msra.mxu0 %v2293
        %2377 = vmatpush.msra.mxu0 %v2289
        %2378 = vmatpush.msra.mxu0 %v2285
        %2379 = vmatpush.msra.mxu0 %v2281
        %2380 = vmatpush.msra.mxu0 %v2277
        %2381 = vmatpush.msra.mxu0 %v2273
        %2382 = vmatpush.msra.mxu0 %v2269
        %2383 = vmatpush.msra.mxu0 %v2265
        %2384 = vmatpush.msra.mxu0 %v2261
        %2385 = vmatpush.msra.mxu0 %v2257
        %2386 = vmatpush.msra.mxu0 %v2253
        %2387 = vmatpush.msra.mxu0 %v2249
        %2388 = vmatpush.msra.mxu0 %v2245
        %2389 = vmatmul.f32.gmra.mxu0 %v2236
        %v2390 = vpop.f32.mrf.mxu0
        %v2391 = vadd.f32 %v2312, %v2390
        %2392 = vdwg.mxu0
        %v2393 = vmul.f32 %v2331, 0.5
        %v2394 = vtanh.pop %v2393
        %v2395 = vmul.f32 %v2394, 0.5
        %v2396 = vadd.f32 %v2395, 0.5
        %v2397 = vmul.f32 %v2351, 0.5
        %v2398 = vtanh.pop %v2397
        %v2399 = vmul.f32 %v2398, 0.5
        %v2400 = vadd.f32 %v2399, 0.5
        %v2401 = vtanh.pop %v2371
        %v2402 = vmul.f32 %v2391, 0.5
        %v2403 = vtanh.pop %v2402
        %v2404 = vmul.f32 %v2403, 0.5
        %v2405 = vadd.f32 %v2404, 0.5
        %v2406 = vmul.f32 %v2400, %v2234
        %v2407 = vmul.f32 %v2396, %v2401
        %v2408 = vadd.f32 %v2406, %v2407
        %v2409 = vtanh.pop %v2408
        %v2410 = vmul.f32 %v2405, %v2409
        %s2411 = smul.u32 %s2241, 8
        %s2412 = scalar_lea.vmem %s411, %s2411 [#allocation5]
        %2413 = vst [vmem:[%s2412] sm:$0xff] %v2410
        %2414 = vst [vmem:[#allocation3] sm:$0xff] %v2410
        %2415 = vst [vmem:[#allocation4] sm:$0xff] %v2408
        %2416 = vst [vmem:[%s470] sm:$0xff] %v2410
        %2417 = vst [vmem:[%s474] sm:$0xff] %v2408
        %s2418 = sand.u32 %s214, 1
        %s2419 = sand.u32 %s214, 1
        %s2420 = smul.addr %s2419, 64
        %s2421 = scalar_lea.vmem [#allocation5], %s2420
        %p2422 = scmp.lt.s32.totalorder %s24, 1
        %s2423 = scalar_select %p2422, %s24, 1
        %s2424 = smul.addr %s2423, 8
        %s2425 = scalar_lea.vmem %s7, %s2424
        %p2426 = scmp.lt.s32.totalorder %s24, 1
        %s2427 = scalar_select %p2426, %s24, 1
        %s2428 = smul.addr %s2427, 8
        %s2429 = scalar_lea.vmem %s8, %s2428
        // Predicated region
        $region49: #{lstm_frame_forward.3} parent=43 // pred_check
          %p2430 = pneg %p224
        $region50: #{lstm_frame_forward.3} parent=43 // pred_check_branch
          %2432 = sbr.rel (%p2430) target = $region52
        $region51: #{lstm_frame_forward.3} parent=43 // pred_region
          %s2433 = smul.u32 %s25, 2
          %s2434 = ssub.s32 0, %s2433
          %s2435 = smul.u32 %s24, %s2434
          %s2436 = sadd.s32 %s25, %s2435
          %s2437 = smul.u32 8, %s2436
          %s2438 = smul.addr %s2437, 2
          %s2439 = sadd.s32 %s24, %s2438
          %s2440 = smul.addr %s2439, 8
          %s2441 = scalar_lea.vmem %s6, %s2440
          // Predicated region
          $region53: #{lstm_frame_forward.3} parent=51 // pred_check
            _
          $region54: #{lstm_frame_forward.3} parent=51 // pred_check_branch
            %2443 = sbr.rel (0) target = $region56
          $region55: #{lstm_frame_forward.3} parent=51 // pred_region
            // Predicated region
            $region57: #{lstm_frame_forward.3} parent=55 // pred_check
              _
            $region58: #{lstm_frame_forward.3} parent=55 // pred_check_branch
              %2445 = sbr.rel (0) target = $region60
            $region59: #{lstm_frame_forward.3} parent=55 // pred_region
              // Predicated region
              $region72: #{lstm_frame_forward.3} parent=59 // pred_check
                _
              $region73: #{lstm_frame_forward.3} parent=59 // pred_check_branch
                %2475 = sbr.rel (0) target = $region75
              $region74: #{lstm_frame_forward.3} parent=59 // pred_region
                loop: start=0, step=1, limit=1
                $region76: #{lstm_frame_forward.3} parent=74 // loop_pre_header
                  _
                $region77: #{lstm_frame_forward.3} parent=74 // loop_header
                  %s2477 = sphi 0, %s2481
                  %p2478 = scmp.ge.s32.totalorder %s2477, 1
                  %s2482 = sphi %s2421, %s2421
                  %s2483 = sphi %s2441, %s2441
                $region78: #{lstm_frame_forward.3} parent=74 // loop_header_branch
                  %2480 = sbr.rel (%p2478) target = $region82
                $region79: #{lstm_frame_forward.3} parent=74 // loop_body
                  %v2484 = vld [vmem:[%s2482] sm:$0xff]
                  %2485 = vst [vmem:[%s2483] sm:$0xff] %v2484
                  %v2486 = vld [vmem:[%s2482 + $0x8] sm:$0xff]
                  %2487 = vst [vmem:[%s2483 + $0x10] sm:$0xff] %v2486
                  %v2488 = vld [vmem:[%s2482 + $0x10] sm:$0xff]
                  %2489 = vst [vmem:[%s2483 + $0x20] sm:$0xff] %v2488
                  %v2490 = vld [vmem:[%s2482 + $0x18] sm:$0xff]
                  %2491 = vst [vmem:[%s2483 + $0x30] sm:$0xff] %v2490
                  %v2492 = vld [vmem:[%s2482 + $0x20] sm:$0xff]
                  %2493 = vst [vmem:[%s2483 + $0x40] sm:$0xff] %v2492
                  %v2494 = vld [vmem:[%s2482 + $0x28] sm:$0xff]
                  %2495 = vst [vmem:[%s2483 + $0x50] sm:$0xff] %v2494
                  %v2496 = vld [vmem:[%s2482 + $0x30] sm:$0xff]
                  %2497 = vst [vmem:[%s2483 + $0x60] sm:$0xff] %v2496
                  %v2498 = vld [vmem:[%s2482 + $0x38] sm:$0xff]
                  %2499 = vst [vmem:[%s2483 + $0x70] sm:$0xff] %v2498
                $region80: #{lstm_frame_forward.3} parent=74 // loop_footer
                  %s2481 = sadd.s32 1, %s2477
                $region81: #{lstm_frame_forward.3} parent=74 // loop_footer_branch
                  %2476 = sbr.rel target = $region77
                $region82: #{lstm_frame_forward.3} parent=74 // loop_exit
                  _
              $region75: #{lstm_frame_forward.3} parent=59 // pred_fallthru
                _
              // Predicated region
              $region83: #{lstm_frame_forward.3} parent=59 // pred_check
                _
              $region84: #{lstm_frame_forward.3} parent=59 // pred_check_branch
                %2501 = sbr.rel target = $region86
              $region85: #{lstm_frame_forward.3} parent=59 // pred_region
                _
              $region86: #{lstm_frame_forward.3} parent=59 // pred_fallthru
                _
            $region60: #{lstm_frame_forward.3} parent=55 // pred_fallthru
              _
            // Predicated region
            $region61: #{lstm_frame_forward.3} parent=55 // pred_check
              _
            $region62: #{lstm_frame_forward.3} parent=55 // pred_check_branch
              %2447 = sbr.rel target = $region64
            $region63: #{lstm_frame_forward.3} parent=55 // pred_region
              %s2449 = ssub.s32 256, 1
              loop: start=0, step=1, limit=1
              $region65: #{lstm_frame_forward.3} parent=63 // loop_pre_header
                _
              $region66: #{lstm_frame_forward.3} parent=63 // loop_header
                %s2451 = sphi 0, %s2455
                %p2452 = scmp.ge.s32.totalorder %s2451, 1
                %s2456 = sphi %s2421, %s2421
                %s2457 = sphi %s2441, %s2441
              $region67: #{lstm_frame_forward.3} parent=63 // loop_header_branch
                %2454 = sbr.rel (%p2452) target = $region71
              $region68: #{lstm_frame_forward.3} parent=63 // loop_body
                %v2458 = vld [vmem:[%s2456] sm:%s2449]
                %2459 = vst [vmem:[%s2457] sm:%s2449] %v2458
                %v2460 = vld [vmem:[%s2456 + $0x8] sm:%s2449]
                %2461 = vst [vmem:[%s2457 + $0x10] sm:%s2449] %v2460
                %v2462 = vld [vmem:[%s2456 + $0x10] sm:%s2449]
                %2463 = vst [vmem:[%s2457 + $0x20] sm:%s2449] %v2462
                %v2464 = vld [vmem:[%s2456 + $0x18] sm:%s2449]
                %2465 = vst [vmem:[%s2457 + $0x30] sm:%s2449] %v2464
                %v2466 = vld [vmem:[%s2456 + $0x20] sm:%s2449]
                %2467 = vst [vmem:[%s2457 + $0x40] sm:%s2449] %v2466
                %v2468 = vld [vmem:[%s2456 + $0x28] sm:%s2449]
                %2469 = vst [vmem:[%s2457 + $0x50] sm:%s2449] %v2468
                %v2470 = vld [vmem:[%s2456 + $0x30] sm:%s2449]
                %2471 = vst [vmem:[%s2457 + $0x60] sm:%s2449] %v2470
                %v2472 = vld [vmem:[%s2456 + $0x38] sm:%s2449]
                %2473 = vst [vmem:[%s2457 + $0x70] sm:%s2449] %v2472
              $region69: #{lstm_frame_forward.3} parent=63 // loop_footer
                %s2455 = sadd.s32 1, %s2451
              $region70: #{lstm_frame_forward.3} parent=63 // loop_footer_branch
                %2450 = sbr.rel target = $region66
              $region71: #{lstm_frame_forward.3} parent=63 // loop_exit
                _
            $region64: #{lstm_frame_forward.3} parent=55 // pred_fallthru
              _
          $region56: #{lstm_frame_forward.3} parent=51 // pred_fallthru
            _
          %2502 = vnop
        $region52: #{lstm_frame_forward.3} parent=43 // pred_fallthru
          _
        // Predicated region
        $region87: #{lstm_frame_forward.3} parent=43 // pred_check
          %p2503 = pneg %p250
        $region88: #{lstm_frame_forward.3} parent=43 // pred_check_branch
          %2505 = sbr.rel (%p2503) target = $region90
        $region89: #{lstm_frame_forward.3} parent=43 // pred_region
          _
        $region90: #{lstm_frame_forward.3} parent=43 // pred_fallthru
          _
        // Predicated region
        $region91: #{lstm_frame_forward.3} parent=43 // pred_check
          %p2506 = pneg %p276
        $region92: #{lstm_frame_forward.3} parent=43 // pred_check_branch
          %2508 = sbr.rel (%p2506) target = $region94
        $region93: #{lstm_frame_forward.3} parent=43 // pred_region
          _
        $region94: #{lstm_frame_forward.3} parent=43 // pred_fallthru
          _
      $region44: #{lstm_frame_forward.3} parent=5 // pred_fallthru
        _
      %p2509 = scmp.le.s32.totalorder 2, %s15
      // Predicated region
      $region95: #{lstm_frame_forward.3} parent=5 // pred_check
        %p2510 = pneg %p2509
      $region96: #{lstm_frame_forward.3} parent=5 // pred_check_branch
        %2512 = sbr.rel (%p2510) target = $region98
      $region97: #{lstm_frame_forward.3} parent=5 // pred_region
        %s2513 = ssub.s32 %s15, 2
        // Predicated region
        $region99: #{lstm_frame_forward.3} parent=97 // pred_check
          %p2514 = pneg %p230
        $region100: #{lstm_frame_forward.3} parent=97 // pred_check_branch
          %2516 = sbr.rel (%p2514) target = $region102
        $region101: #{lstm_frame_forward.3} parent=97 // pred_region
          %s2517 = sand.u32 %s215, 1
          %s2518 = sand.u32 %s215, 1
          %s2519 = smul.addr %s2518, 64
          %s2520 = scalar_lea.vmem [#allocation5], %s2519
        $region102: #{lstm_frame_forward.3} parent=97 // pred_fallthru
          _
        // Predicated region
        $region103: #{lstm_frame_forward.3} parent=97 // pred_check
          %p2521 = pneg %p256
        $region104: #{lstm_frame_forward.3} parent=97 // pred_check_branch
          %2523 = sbr.rel (%p2521) target = $region106
        $region105: #{lstm_frame_forward.3} parent=97 // pred_region
          %p2524 = scmp.lt.s32.totalorder %s26, 1
          %s2525 = scalar_select %p2524, %s26, 1
          %s2526 = smul.addr %s2525, 8
          %s2527 = scalar_lea.vmem %s7, %s2526
        $region106: #{lstm_frame_forward.3} parent=97 // pred_fallthru
          _
        // Predicated region
        $region107: #{lstm_frame_forward.3} parent=97 // pred_check
          %p2528 = pneg %p282
        $region108: #{lstm_frame_forward.3} parent=97 // pred_check_branch
          %2530 = sbr.rel (%p2528) target = $region110
        $region109: #{lstm_frame_forward.3} parent=97 // pred_region
          %p2531 = scmp.lt.s32.totalorder %s26, 1
          %s2532 = scalar_select %p2531, %s26, 1
          %s2533 = smul.addr %s2532, 8
          %s2534 = scalar_lea.vmem %s8, %s2533
        $region110: #{lstm_frame_forward.3} parent=97 // pred_fallthru
          _
      $region98: #{lstm_frame_forward.3} parent=5 // pred_fallthru
        _
    $region6: #{lstm_frame_forward.3} parent=1 // loop_footer
      %s19 = sadd.s32 1, %s15
    $region7: #{lstm_frame_forward.3} parent=1 // loop_footer_branch
      %14 = sbr.rel target = $region3
    $region8: #{lstm_frame_forward.3} parent=1 // loop_exit
      _

// kernel: lstm_frame_forward.2
$region0: #{lstm_frame_forward.2}
  #allocation0 [shape = 'u32[]', space=smem, size = 0x4, offset = 0x4, fixed_abs, tag = 'smem constant byte address 0x4 - core index']
  #allocation1 [shape = 'u32[72,128]{1,0:T(1,128)}', space=vmem, size = 0x9000, scoped, tag = 'internal scratch']
  #allocation2 [shape = 'f32[8,8,512]{2,1,0:T(8,128)}', space=vmem, size = 0x20000, scoped, tag = 'scratch operand']
  #allocation3 [shape = 'f32[8,128]{1,0:T(8,128)}', space=vmem, size = 0x1000, scoped, tag = 'scratch operand']
  #allocation4 [shape = 'f32[8,128]{1,0:T(8,128)}', space=vmem, size = 0x1000, scoped, tag = 'scratch operand']
  %s0 = inlined_call_operand.vmem [shape: f32[8,8,128], index: 0, kind: input, shape index: {}]
  %s1 = inlined_call_operand.vmem [shape: f32[2,128,512], index: 1, kind: input, shape index: {}]
  %s2 = inlined_call_operand.vmem [shape: f32[2,128,512], index: 2, kind: input, shape index: {}]
  %s3 = inlined_call_operand.vmem [shape: f32[2,8,512], index: 3, kind: input, shape index: {}]
  %s4 = inlined_call_operand.vmem [shape: f32[2,8,128], index: 4, kind: input, shape index: {}, may-alias: {4,5}]
  %s5 = inlined_call_operand.vmem [shape: f32[2,8,128], index: 5, kind: input, shape index: {}, may-alias: {4,5}]
  %s6 = inlined_call_operand.vmem [shape: f32[8,8,256], index: 6, kind: output, shape index: {0}]
  %s7 = inlined_call_operand.vmem [shape: f32[2,8,128], index: 7, kind: output, shape index: {1}]
  %s8 = inlined_call_operand.vmem [shape: f32[2,8,128], index: 8, kind: output, shape index: {2}]
  %9 = xla_tuple %s6, %s7, %s8
  %s10 = sld [smem:[#allocation0]]
  $region111: #{lstm_frame_forward.2} parent=0
    _
  %s12 = ssub.s32 1, %s10
  %s13 = scalar_select 0, %s12, %s10
  $region1: #{lstm_frame_forward.2} parent=0
    #allocation5 [shape = 'u8[65536]{0}', space=vmem, size = 0x10000, scoped, tag = 'output window, operand 0']
    loop: start=0, step=1, limit=4
    $region2: #{lstm_frame_forward.2} parent=1 // loop_pre_header
      _
    $region3: #{lstm_frame_forward.2} parent=1 // loop_header
      %s15 = sphi 0, %s19
      %p16 = scmp.ge.s32.totalorder %s15, 4
      %s22 = sphi 0, %s34
      %s23 = sphi 0, %s30
      %s24 = sphi 0, %s22
      %s25 = sphi 0, %s23
      %s26 = sphi 0, %s24
      %s27 = sphi 0, %s25
      %s45 = sphi 0, %s47
      %s48 = sphi 0, %s45
      %s49 = sphi 0, %s48
      %s65 = sphi 0, %s49
      %s71 = sphi 0, %s73
      %s74 = sphi 0, %s71
      %s75 = sphi 0, %s74
      %s91 = sphi 0, %s75
      %s97 = sphi 0, %s99
      %s100 = sphi 0, %s97
      %s101 = sphi 0, %s100
      %s117 = sphi 0, %s101
      %s123 = sphi 0, %s125
      %s126 = sphi 0, %s123
      %s127 = sphi 0, %s126
      %s143 = sphi 0, %s127
      %s149 = sphi 0, %s151
      %s152 = sphi 0, %s149
      %s153 = sphi 0, %s152
      %s169 = sphi 0, %s153
      %s175 = sphi 0, %s177
      %s178 = sphi 0, %s175
      %s179 = sphi 0, %s178
      %s195 = sphi 0, %s179
      %s211 = sphi 0, %s213
      %s214 = sphi 0, %s211
      %s215 = sphi 0, %s214
      %s231 = sphi 0, %s215
      %s237 = sphi 0, %s239
      %s240 = sphi 0, %s237
      %s241 = sphi 0, %s240
      %s257 = sphi 0, %s241
      %s263 = sphi 0, %s265
      %s266 = sphi 0, %s263
      %s267 = sphi 0, %s266
      %s283 = sphi 0, %s267
    $region4: #{lstm_frame_forward.2} parent=1 // loop_header_branch
      %18 = sbr.rel (%p16) target = $region8
    $region5: #{lstm_frame_forward.2} parent=1 // loop_body
      %s20 = ssub.s32 %s15, 1
      %s21 = ssub.s32 %s15, 2
      %s28 = sadd.s32 1, %s23
      %p29 = scmp.ge.s32.totalorder %s28, 1
      %s30 = scalar_select %p29, 0, %s28
      %s31 = sadd.s32 1, %s22
      %s32 = scalar_select %p29, %s31, %s22
      %p33 = scmp.ge.s32.totalorder %s32, 2
      %s34 = scalar_select %p33, 0, %s32
      %s35 = smul.u32 %s23, 2
      %s36 = ssub.s32 0, %s35
      %s37 = smul.u32 %s22, %s36
      %s38 = sadd.s32 %s23, %s37
      %s39 = smul.u32 %s30, 2
      %s40 = ssub.s32 0, %s39
      %s41 = smul.u32 %s34, %s40
      %s42 = sadd.s32 %s30, %s41
      %s43 = ssub.s32 %s38, %s42
      %p44 = scmp.eq.s32.totalorder %s43, 0
      %s46 = sadd.s32 %s45, 1
      %s47 = scalar_select %p44, %s45, %s46
      %p50 = pneg %p44
      %p51 = scmp.eq.s32.totalorder %s15, 1
      %p52 = por %p50, %p51
      %p53 = scmp.ne.s32.totalorder %s45, %s48
      %p54 = scmp.eq.s32.totalorder %s15, 0
      %p55 = por %p53, %p54
      %p56 = scmp.ne.s32.totalorder %s45, %s48
      %p57 = scmp.eq.s32.totalorder %s20, 1
      %p58 = por %p56, %p57
      %p59 = scmp.ne.s32.totalorder %s48, %s49
      %p60 = scmp.eq.s32.totalorder %s20, 0
      %p61 = por %p59, %p60
      %p62 = scmp.ne.s32.totalorder %s48, %s49
      %p63 = scmp.eq.s32.totalorder %s21, 1
      %p64 = por %p62, %p63
      %p66 = scmp.ne.s32.totalorder %s49, %s65
      %p67 = scmp.eq.s32.totalorder %s21, 0
      %p68 = por %p66, %p67
      %s69 = ssub.s32 %s22, %s34
      %p70 = scmp.eq.s32.totalorder %s69, 0
      %s72 = sadd.s32 %s71, 1
      %s73 = scalar_select %p70, %s71, %s72
      %p76 = pneg %p70
      %p77 = scmp.eq.s32.totalorder %s15, 1
      %p78 = por %p76, %p77
      %p79 = scmp.ne.s32.totalorder %s71, %s74
      %p80 = scmp.eq.s32.totalorder %s15, 0
      %p81 = por %p79, %p80
      %p82 = scmp.ne.s32.totalorder %s71, %s74
      %p83 = scmp.eq.s32.totalorder %s20, 1
      %p84 = por %p82, %p83
      %p85 = scmp.ne.s32.totalorder %s74, %s75
      %p86 = scmp.eq.s32.totalorder %s20, 0
      %p87 = por %p85, %p86
      %p88 = scmp.ne.s32.totalorder %s74, %s75
      %p89 = scmp.eq.s32.totalorder %s21, 1
      %p90 = por %p88, %p89
      %p92 = scmp.ne.s32.totalorder %s75, %s91
      %p93 = scmp.eq.s32.totalorder %s21, 0
      %p94 = por %p92, %p93
      %s95 = ssub.s32 %s22, %s34
      %p96 = scmp.eq.s32.totalorder %s95, 0
      %s98 = sadd.s32 %s97, 1
      %s99 = scalar_select %p96, %s97, %s98
      %p102 = pneg %p96
      %p103 = scmp.eq.s32.totalorder %s15, 1
      %p104 = por %p102, %p103
      %p105 = scmp.ne.s32.totalorder %s97, %s100
      %p106 = scmp.eq.s32.totalorder %s15, 0
      %p107 = por %p105, %p106
      %p108 = scmp.ne.s32.totalorder %s97, %s100
      %p109 = scmp.eq.s32.totalorder %s20, 1
      %p110 = por %p108, %p109
      %p111 = scmp.ne.s32.totalorder %s100, %s101
      %p112 = scmp.eq.s32.totalorder %s20, 0
      %p113 = por %p111, %p112
      %p114 = scmp.ne.s32.totalorder %s100, %s101
      %p115 = scmp.eq.s32.totalorder %s21, 1
      %p116 = por %p114, %p115
      %p118 = scmp.ne.s32.totalorder %s101, %s117
      %p119 = scmp.eq.s32.totalorder %s21, 0
      %p120 = por %p118, %p119
      %s121 = ssub.s32 %s22, %s34
      %p122 = scmp.eq.s32.totalorder %s121, 0
      %s124 = sadd.s32 %s123, 1
      %s125 = scalar_select %p122, %s123, %s124
      %p128 = pneg %p122
      %p129 = scmp.eq.s32.totalorder %s15, 1
      %p130 = por %p128, %p129
      %p131 = scmp.ne.s32.totalorder %s123, %s126
      %p132 = scmp.eq.s32.totalorder %s15, 0
      %p133 = por %p131, %p132
      %p134 = scmp.ne.s32.totalorder %s123, %s126
      %p135 = scmp.eq.s32.totalorder %s20, 1
      %p136 = por %p134, %p135
      %p137 = scmp.ne.s32.totalorder %s126, %s127
      %p138 = scmp.eq.s32.totalorder %s20, 0
      %p139 = por %p137, %p138
      %p140 = scmp.ne.s32.totalorder %s126, %s127
      %p141 = scmp.eq.s32.totalorder %s21, 1
      %p142 = por %p140, %p141
      %p144 = scmp.ne.s32.totalorder %s127, %s143
      %p145 = scmp.eq.s32.totalorder %s21, 0
      %p146 = por %p144, %p145
      %s147 = ssub.s32 %s22, %s34
      %p148 = scmp.eq.s32.totalorder %s147, 0
      %s150 = sadd.s32 %s149, 1
      %s151 = scalar_select %p148, %s149, %s150
      %p154 = pneg %p148
      %p155 = scmp.eq.s32.totalorder %s15, 1
      %p156 = por %p154, %p155
      %p157 = scmp.ne.s32.totalorder %s149, %s152
      %p158 = scmp.eq.s32.totalorder %s15, 0
      %p159 = por %p157, %p158
      %p160 = scmp.ne.s32.totalorder %s149, %s152
      %p161 = scmp.eq.s32.totalorder %s20, 1
      %p162 = por %p160, %p161
      %p163 = scmp.ne.s32.totalorder %s152, %s153
      %p164 = scmp.eq.s32.totalorder %s20, 0
      %p165 = por %p163, %p164
      %p166 = scmp.ne.s32.totalorder %s152, %s153
      %p167 = scmp.eq.s32.totalorder %s21, 1
      %p168 = por %p166, %p167
      %p170 = scmp.ne.s32.totalorder %s153, %s169
      %p171 = scmp.eq.s32.totalorder %s21, 0
      %p172 = por %p170, %p171
      %s173 = ssub.s32 %s22, %s34
      %p174 = scmp.eq.s32.totalorder %s173, 0
      %s176 = sadd.s32 %s175, 1
      %s177 = scalar_select %p174, %s175, %s176
      %p180 = pneg %p174
      %p181 = scmp.eq.s32.totalorder %s15, 1
      %p182 = por %p180, %p181
      %p183 = scmp.ne.s32.totalorder %s175, %s178
      %p184 = scmp.eq.s32.totalorder %s15, 0
      %p185 = por %p183, %p184
      %p186 = scmp.ne.s32.totalorder %s175, %s178
      %p187 = scmp.eq.s32.totalorder %s20, 1
      %p188 = por %p186, %p187
      %p189 = scmp.ne.s32.totalorder %s178, %s179
      %p190 = scmp.eq.s32.totalorder %s20, 0
      %p191 = por %p189, %p190
      %p192 = scmp.ne.s32.totalorder %s178, %s179
      %p193 = scmp.eq.s32.totalorder %s21, 1
      %p194 = por %p192, %p193
      %p196 = scmp.ne.s32.totalorder %s179, %s195
      %p197 = scmp.eq.s32.totalorder %s21, 0
      %p198 = por %p196, %p197
      %s199 = smul.u32 %s23, 2
      %s200 = ssub.s32 0, %s199
      %s201 = smul.u32 %s22, %s200
      %s202 = sadd.s32 %s23, %s201
      %s203 = smul.u32 %s30, 2
      %s204 = ssub.s32 0, %s203
      %s205 = smul.u32 %s34, %s204
      %s206 = sadd.s32 %s30, %s205
      %s207 = ssub.s32 %s202, %s206
      %s208 = ssub.s32 %s22, %s34
      %s209 = sor.u32 %s207, %s208
      %p210 = scmp.eq.s32.totalorder %s209, 0
      %s212 = sadd.s32 %s211, 1
      %s213 = scalar_select %p210, %s211, %s212
      %p216 = pneg %p210
      %p217 = scmp.eq.s32.totalorder %s15, 1
      %p218 = por %p216, %p217
      %p219 = scmp.ne.s32.totalorder %s211, %s214
      %p220 = scmp.eq.s32.totalorder %s15, 0
      %p221 = por %p219, %p220
      %p222 = scmp.ne.s32.totalorder %s211, %s214
      %p223 = scmp.eq.s32.totalorder %s20, 1
      %p224 = por %p222, %p223
      %p225 = scmp.ne.s32.totalorder %s214, %s215
      %p226 = scmp.eq.s32.totalorder %s20, 0
      %p227 = por %p225, %p226
      %p228 = scmp.ne.s32.totalorder %s214, %s215
      %p229 = scmp.eq.s32.totalorder %s21, 1
      %p230 = por %p228, %p229
      %p232 = scmp.ne.s32.totalorder %s215, %s231
      %p233 = scmp.eq.s32.totalorder %s21, 0
      %p234 = por %p232, %p233
      %s235 = ssub.s32 %s22, %s34
      %p236 = scmp.eq.s32.totalorder %s235, 0
      %s238 = sadd.s32 %s237, 1
      %s239 = scalar_select %p236, %s237, %s238
      %p242 = pneg %p236
      %p243 = scmp.eq.s32.totalorder %s15, 1
      %p244 = por %p242, %p243
      %p245 = scmp.ne.s32.totalorder %s237, %s240
      %p246 = scmp.eq.s32.totalorder %s15, 0
      %p247 = por %p245, %p246
      %p248 = scmp.ne.s32.totalorder %s237, %s240
      %p249 = scmp.eq.s32.totalorder %s20, 1
      %p250 = por %p248, %p249
      %p251 = scmp.ne.s32.totalorder %s240, %s241
      %p252 = scmp.eq.s32.totalorder %s20, 0
      %p253 = por %p251, %p252
      %p254 = scmp.ne.s32.totalorder %s240, %s241
      %p255 = scmp.eq.s32.totalorder %s21, 1
      %p256 = por %p254, %p255
      %p258 = scmp.ne.s32.totalorder %s241, %s257
      %p259 = scmp.eq.s32.totalorder %s21, 0
      %p260 = por %p258, %p259
      %s261 = ssub.s32 %s22, %s34
      %p262 = scmp.eq.s32.totalorder %s261, 0
      %s264 = sadd.s32 %s263, 1
      %s265 = scalar_select %p262, %s263, %s264
      %p268 = pneg %p262
      %p269 = scmp.eq.s32.totalorder %s15, 1
      %p270 = por %p268, %p269
      %p271 = scmp.ne.s32.totalorder %s263, %s266
      %p272 = scmp.eq.s32.totalorder %s15, 0
      %p273 = por %p271, %p272
      %p274 = scmp.ne.s32.totalorder %s263, %s266
      %p275 = scmp.eq.s32.totalorder %s20, 1
      %p276 = por %p274, %p275
      %p277 = scmp.ne.s32.totalorder %s266, %s267
      %p278 = scmp.eq.s32.totalorder %s20, 0
      %p279 = por %p277, %p278
      %p280 = scmp.ne.s32.totalorder %s266, %s267
      %p281 = scmp.eq.s32.totalorder %s21, 1
      %p282 = por %p280, %p281
      %p284 = scmp.ne.s32.totalorder %s267, %s283
      %p285 = scmp.eq.s32.totalorder %s21, 0
      %p286 = por %p284, %p285
      %p287 = scmp.le.s32.totalorder 1, %s15
      %p288 = scmp.lt.s32.totalorder %s15, 3
      %p289 = pnand %p287, %p288
      %p290 = pneg %p289
      // Predicated region
      $region9: #{lstm_frame_forward.2} parent=5 // pred_check
        _
      $region10: #{lstm_frame_forward.2} parent=5 // pred_check_branch
        %292 = sbr.rel (%p289) target = $region12
      $region11: #{lstm_frame_forward.2} parent=5 // pred_region
        %s293 = ssub.s32 %s15, 1
      $region12: #{lstm_frame_forward.2} parent=5 // pred_fallthru
        _
      %p294 = scmp.lt.s32.totalorder %s15, 2
      // Predicated region
      $region13: #{lstm_frame_forward.2} parent=5 // pred_check
        %p295 = pneg %p294
      $region14: #{lstm_frame_forward.2} parent=5 // pred_check_branch
        %297 = sbr.rel (%p295) target = $region16
      $region15: #{lstm_frame_forward.2} parent=5 // pred_region
        // Predicated region
        $region17: #{lstm_frame_forward.2} parent=15 // pred_check
          %p298 = pneg %p55
        $region18: #{lstm_frame_forward.2} parent=15 // pred_check_branch
          %300 = sbr.rel (%p298) target = $region20
        $region19: #{lstm_frame_forward.2} parent=15 // pred_region
          %s301 = smul.u32 %s23, 2
          %s302 = ssub.s32 0, %s301
          %s303 = smul.u32 %s22, %s302
          %s304 = sadd.s32 %s23, %s303
          %s305 = smul.u32 8, %s304
          %p306 = scmp.lt.s32.totalorder %s305, 7
          %s307 = scalar_select %p306, %s305, 7
          %s308 = smul.addr %s307, 8
          %s309 = scalar_lea.vmem %s0, %s308
          %s310 = smul.u32 %s23, 2
          %s311 = ssub.s32 0, %s310
          %s312 = smul.u32 %s22, %s311
          %s313 = sadd.s32 %s23, %s312
          %s314 = smul.u32 8, %s313
        $region20: #{lstm_frame_forward.2} parent=15 // pred_fallthru
          _
        // Predicated region
        $region21: #{lstm_frame_forward.2} parent=15 // pred_check
          %p315 = pneg %p81
        $region22: #{lstm_frame_forward.2} parent=15 // pred_check_branch
          %317 = sbr.rel (%p315) target = $region24
        $region23: #{lstm_frame_forward.2} parent=15 // pred_region
          %p318 = scmp.lt.s32.totalorder %s22, 1
          %s319 = scalar_select %p318, %s22, 1
          %s320 = smul.addr %s319, 64
          %s321 = smul.addr %s320, 8
          %s322 = scalar_lea.vmem %s1, %s321
        $region24: #{lstm_frame_forward.2} parent=15 // pred_fallthru
          _
        // Predicated region
        $region25: #{lstm_frame_forward.2} parent=15 // pred_check
          %p323 = pneg %p107
        $region26: #{lstm_frame_forward.2} parent=15 // pred_check_branch
          %325 = sbr.rel (%p323) target = $region28
        $region27: #{lstm_frame_forward.2} parent=15 // pred_region
          %p326 = scmp.lt.s32.totalorder %s22, 1
          %s327 = scalar_select %p326, %s22, 1
          %s328 = smul.addr %s327, 64
          %s329 = smul.addr %s328, 8
          %s330 = scalar_lea.vmem %s2, %s329
        $region28: #{lstm_frame_forward.2} parent=15 // pred_fallthru
          _
        // Predicated region
        $region29: #{lstm_frame_forward.2} parent=15 // pred_check
          %p331 = pneg %p133
        $region30: #{lstm_frame_forward.2} parent=15 // pred_check_branch
          %333 = sbr.rel (%p331) target = $region32
        $region31: #{lstm_frame_forward.2} parent=15 // pred_region
          %p334 = scmp.lt.s32.totalorder %s22, 1
          %s335 = scalar_select %p334, %s22, 1
          %s336 = smul.addr %s335, 4
          %s337 = smul.addr %s336, 8
          %s338 = scalar_lea.vmem %s3, %s337
        $region32: #{lstm_frame_forward.2} parent=15 // pred_fallthru
          _
        // Predicated region
        $region33: #{lstm_frame_forward.2} parent=15 // pred_check
          %p339 = pneg %p159
        $region34: #{lstm_frame_forward.2} parent=15 // pred_check_branch
          %341 = sbr.rel (%p339) target = $region36
        $region35: #{lstm_frame_forward.2} parent=15 // pred_region
          %p342 = scmp.lt.s32.totalorder %s22, 1
          %s343 = scalar_select %p342, %s22, 1
          %s344 = smul.addr %s343, 8
          %s345 = scalar_lea.vmem %s4, %s344
        $region36: #{lstm_frame_forward.2} parent=15 // pred_fallthru
          _
        // Predicated region
        $region37: #{lstm_frame_forward.2} parent=15 // pred_check
          %p346 = pneg %p185
        $region38: #{lstm_frame_forward.2} parent=15 // pred_check_branch
          %348 = sbr.rel (%p346) target = $region40
        $region39: #{lstm_frame_forward.2} parent=15 // pred_region
          %p349 = scmp.lt.s32.totalorder %s22, 1
          %s350 = scalar_select %p349, %s22, 1
          %s351 = smul.addr %s350, 8
          %s352 = scalar_lea.vmem %s5, %s351
        $region40: #{lstm_frame_forward.2} parent=15 // pred_fallthru
          _
      $region16: #{lstm_frame_forward.2} parent=5 // pred_fallthru
        _
      %p353 = scmp.le.s32.totalorder 1, %s15
      %p354 = scmp.lt.s32.totalorder %s15, 3
      %p355 = pnand %p353, %p354
      %p356 = pneg %p355
      // Predicated region
      $region41: #{lstm_frame_forward.2} parent=5 // pred_check
        _
      $region42: #{lstm_frame_forward.2} parent=5 // pred_check_branch
        %358 = sbr.rel (%p355) target = $region44
      $region43: #{lstm_frame_forward.2} parent=5 // pred_region
        %s359 = ssub.s32 %s15, 1
        %s360 = smul.u32 %s25, 2
        %s361 = ssub.s32 0, %s360
        %s362 = smul.u32 %s24, %s361
        %s363 = sadd.s32 %s25, %s362
        %s364 = smul.u32 8, %s363
        %p365 = scmp.lt.s32.totalorder %s364, 7
        %s366 = scalar_select %p365, %s364, 7
        %s367 = smul.addr %s366, 8
        %s368 = scalar_lea.vmem %s0, %s367
        %p369 = pneg %p61
        %p370 = pneg %p58
        %p371 = scmp.lt.s32.totalorder %s24, 1
        %s372 = scalar_select %p371, %s24, 1
        %s373 = smul.addr %s372, 64
        %s374 = smul.addr %s373, 8
        %s375 = scalar_lea.vmem %s1, %s374
        %p376 = pneg %p87
        %p377 = pneg %p84
        %p378 = scmp.lt.s32.totalorder %s24, 1
        %s379 = scalar_select %p378, %s24, 1
        %s380 = smul.addr %s379, 64
        %s381 = smul.addr %s380, 8
        %s382 = scalar_lea.vmem %s2, %s381
        %p383 = pneg %p113
        %p384 = pneg %p110
        %p385 = scmp.lt.s32.totalorder %s24, 1
        %s386 = scalar_select %p385, %s24, 1
        %s387 = smul.addr %s386, 4
        %s388 = smul.addr %s387, 8
        %s389 = scalar_lea.vmem %s3, %s388
        %p390 = pneg %p139
        %p391 = pneg %p136
        %p392 = scmp.lt.s32.totalorder %s24, 1
        %s393 = scalar_select %p392, %s24, 1
        %s394 = smul.addr %s393, 8
        %s395 = scalar_lea.vmem %s4, %s394
        %p396 = pneg %p165
        %p397 = pneg %p162
        %p398 = scmp.lt.s32.totalorder %s24, 1
        %s399 = scalar_select %p398, %s24, 1
        %s400 = smul.addr %s399, 8
        %s401 = scalar_lea.vmem %s5, %s400
        %p402 = pneg %p191
        %p403 = pneg %p188
        %p404 = pneg %p227
        %p405 = pneg %p224
        %s406 = sand.u32 %s214, 1
        %s407 = sand.u32 %s214, 1
        %s408 = smul.addr %s407, 64
        %s409 = scalar_lea.vmem [#allocation5], %s408
        %p410 = pneg %p253
        %p411 = pneg %p250
        %p412 = scmp.lt.s32.totalorder %s24, 1
        %s413 = scalar_select %p412, %s24, 1
        %s414 = smul.addr %s413, 8
        %s415 = scalar_lea.vmem %s7, %s414
        %p416 = pneg %p279
        %p417 = pneg %p276
        %p418 = scmp.lt.s32.totalorder %s24, 1
        %s419 = scalar_select %p418, %s24, 1
        %s420 = smul.addr %s419, 8
        %s421 = scalar_lea.vmem %s8, %s420
        %s422 = smul.u32 %s25, 2
        %s423 = ssub.s32 0, %s422
        %s424 = smul.u32 %s24, %s423
        %s425 = sadd.s32 %s25, %s424
        %s426 = smul.u32 8, %s425
        %p427 = scmp.lt.s32.totalorder %s426, 7
        %s428 = scalar_select %p427, %s426, 7
        %s429 = smul.addr %s428, 8
        %s430 = scalar_lea.vmem %s0, %s429
        %s431 = smul.u32 %s25, 2
        %s432 = ssub.s32 0, %s431
        %s433 = smul.u32 %s24, %s432
        %s434 = sadd.s32 %s25, %s433
        %s435 = smul.u32 8, %s434
        %p436 = scmp.lt.s32.totalorder %s24, 1
        %s437 = scalar_select %p436, %s24, 1
        %s438 = smul.addr %s437, 64
        %s439 = smul.addr %s438, 8
        %s440 = scalar_lea.vmem %s1, %s439
        %p441 = scmp.lt.s32.totalorder %s24, 1
        %s442 = scalar_select %p441, %s24, 1
        %s443 = smul.addr %s442, 64
        %s444 = smul.addr %s443, 8
        %s445 = scalar_lea.vmem %s2, %s444
        %p446 = scmp.lt.s32.totalorder %s24, 1
        %s447 = scalar_select %p446, %s24, 1
        %s448 = smul.addr %s447, 4
        %s449 = smul.addr %s448, 8
        %s450 = scalar_lea.vmem %s3, %s449
        %p451 = scmp.lt.s32.totalorder %s24, 1
        %s452 = scalar_select %p451, %s24, 1
        %s453 = smul.addr %s452, 8
        %s454 = scalar_lea.vmem %s4, %s453
        %p455 = scmp.lt.s32.totalorder %s24, 1
        %s456 = scalar_select %p455, %s24, 1
        %s457 = smul.addr %s456, 8
        %s458 = scalar_lea.vmem %s5, %s457
        %s459 = smul.u32 %s25, 2
        %s460 = ssub.s32 0, %s459
        %s461 = smul.u32 %s24, %s460
        %s462 = sadd.s32 %s25, %s461
        %s463 = smul.u32 8, %s462
        %p464 = scmp.lt.s32.totalorder %s24, 1
        %s465 = scalar_select %p464, %s24, 1
        %s466 = smul.addr %s465, 8
        %s467 = scalar_lea.vmem %s7, %s466
        %p468 = scmp.lt.s32.totalorder %s24, 1
        %s469 = scalar_select %p468, %s24, 1
        %s470 = smul.addr %s469, 8
        %s471 = scalar_lea.vmem %s8, %s470
        %p472 = scmp.eq.s32.totalorder %s25, 0
        // Predicated region
        $region45: #{lstm_frame_forward.2} parent=43 // pred_check
          %p473 = pneg %p472
        $region46: #{lstm_frame_forward.2} parent=43 // pred_check_branch
          %475 = sbr.rel (%p473) target = $region48
        $region47: #{lstm_frame_forward.2} parent=43 // pred_region
          %v476 = vld [vmem:[%s454] sm:$0xff]
          %477 = vst [vmem:[#allocation3] sm:$0xff] %v476
          %v478 = vld [vmem:[%s458] sm:$0xff]
          %479 = vst [vmem:[#allocation4] sm:$0xff] %v478
        $region48: #{lstm_frame_forward.2} parent=43 // pred_fallthru
          _
        %v480 = vld [vmem:[%s430] sm:$0xff]
        %v481 = vld [vmem:[%s430 + $0x8] sm:$0xff]
        %v482 = vld [vmem:[%s430 + $0x10] sm:$0xff]
        %v483 = vld [vmem:[%s430 + $0x18] sm:$0xff]
        %v484 = vld [vmem:[%s430 + $0x20] sm:$0xff]
        %v485 = vld [vmem:[%s430 + $0x28] sm:$0xff]
        %v486 = vld [vmem:[%s430 + $0x30] sm:$0xff]
        %v487 = vld [vmem:[%s430 + $0x38] sm:$0xff]
        %v488 = vld [vmem:[%s440] sm:$0xff]
        %v489 = vld [vmem:[%s440 + $0x8] sm:$0xff]
        %v490 = vld [vmem:[%s440 + $0x10] sm:$0xff]
        %v491 = vld [vmem:[%s440 + $0x18] sm:$0xff]
        %v492 = vld [vmem:[%s440 + $0x20] sm:$0xff]
        %v493 = vld [vmem:[%s440 + $0x28] sm:$0xff]
        %v494 = vld [vmem:[%s440 + $0x30] sm:$0xff]
        %v495 = vld [vmem:[%s440 + $0x38] sm:$0xff]
        %v496 = vld [vmem:[%s440 + $0x40] sm:$0xff]
        %v497 = vld [vmem:[%s440 + $0x48] sm:$0xff]
        %v498 = vld [vmem:[%s440 + $0x50] sm:$0xff]
        %v499 = vld [vmem:[%s440 + $0x58] sm:$0xff]
        %v500 = vld [vmem:[%s440 + $0x60] sm:$0xff]
        %v501 = vld [vmem:[%s440 + $0x68] sm:$0xff]
        %v502 = vld [vmem:[%s440 + $0x70] sm:$0xff]
        %v503 = vld [vmem:[%s440 + $0x78] sm:$0xff]
        %v504 = vld [vmem:[%s440 + $0x80] sm:$0xff]
        %v505 = vld [vmem:[%s440 + $0x88] sm:$0xff]
        %v506 = vld [vmem:[%s440 + $0x90] sm:$0xff]
        %v507 = vld [vmem:[%s440 + $0x98] sm:$0xff]
        %v508 = vld [vmem:[%s440 + $0xa0] sm:$0xff]
        %v509 = vld [vmem:[%s440 + $0xa8] sm:$0xff]
        %v510 = vld [vmem:[%s440 + $0xb0] sm:$0xff]
        %v511 = vld [vmem:[%s440 + $0xb8] sm:$0xff]
        %v512 = vld [vmem:[%s440 + $0xc0] sm:$0xff]
        %v513 = vld [vmem:[%s440 + $0xc8] sm:$0xff]
        %v514 = vld [vmem:[%s440 + $0xd0] sm:$0xff]
        %v515 = vld [vmem:[%s440 + $0xd8] sm:$0xff]
        %v516 = vld [vmem:[%s440 + $0xe0] sm:$0xff]
        %v517 = vld [vmem:[%s440 + $0xe8] sm:$0xff]
        %v518 = vld [vmem:[%s440 + $0xf0] sm:$0xff]
        %v519 = vld [vmem:[%s440 + $0xf8] sm:$0xff]
        %v520 = vld [vmem:[%s440 + $0x100] sm:$0xff]
        %v521 = vld [vmem:[%s440 + $0x108] sm:$0xff]
        %v522 = vld [vmem:[%s440 + $0x110] sm:$0xff]
        %v523 = vld [vmem:[%s440 + $0x118] sm:$0xff]
        %v524 = vld [vmem:[%s440 + $0x120] sm:$0xff]
        %v525 = vld [vmem:[%s440 + $0x128] sm:$0xff]
        %v526 = vld [vmem:[%s440 + $0x130] sm:$0xff]
        %v527 = vld [vmem:[%s440 + $0x138] sm:$0xff]
        %v528 = vld [vmem:[%s440 + $0x140] sm:$0xff]
        %v529 = vld [vmem:[%s440 + $0x148] sm:$0xff]
        %v530 = vld [vmem:[%s440 + $0x150] sm:$0xff]
        %v531 = vld [vmem:[%s440 + $0x158] sm:$0xff]
        %v532 = vld [vmem:[%s440 + $0x160] sm:$0xff]
        %v533 = vld [vmem:[%s440 + $0x168] sm:$0xff]
        %v534 = vld [vmem:[%s440 + $0x170] sm:$0xff]
        %v535 = vld [vmem:[%s440 + $0x178] sm:$0xff]
        %v536 = vld [vmem:[%s440 + $0x180] sm:$0xff]
        %v537 = vld [vmem:[%s440 + $0x188] sm:$0xff]
        %v538 = vld [vmem:[%s440 + $0x190] sm:$0xff]
        %v539 = vld [vmem:[%s440 + $0x198] sm:$0xff]
        %v540 = vld [vmem:[%s440 + $0x1a0] sm:$0xff]
        %v541 = vld [vmem:[%s440 + $0x1a8] sm:$0xff]
        %v542 = vld [vmem:[%s440 + $0x1b0] sm:$0xff]
        %v543 = vld [vmem:[%s440 + $0x1b8] sm:$0xff]
        %v544 = vld [vmem:[%s440 + $0x1c0] sm:$0xff]
        %v545 = vld [vmem:[%s440 + $0x1c8] sm:$0xff]
        %v546 = vld [vmem:[%s440 + $0x1d0] sm:$0xff]
        %v547 = vld [vmem:[%s440 + $0x1d8] sm:$0xff]
        %v548 = vld [vmem:[%s440 + $0x1e0] sm:$0xff]
        %v549 = vld [vmem:[%s440 + $0x1e8] sm:$0xff]
        %v550 = vld [vmem:[%s440 + $0x1f0] sm:$0xff]
        %v551 = vld [vmem:[%s440 + $0x1f8] sm:$0xff]
        %552 = vmatpush.msra.mxu0 %v548
        %553 = vmatpush.msra.mxu0 %v544
        %554 = vmatpush.msra.mxu0 %v540
        %555 = vmatpush.msra.mxu0 %v536
        %556 = vmatpush.msra.mxu0 %v532
        %557 = vmatpush.msra.mxu0 %v528
        %558 = vmatpush.msra.mxu0 %v524
        %559 = vmatpush.msra.mxu0 %v520
        %560 = vmatpush.msra.mxu0 %v516
        %561 = vmatpush.msra.mxu0 %v512
        %562 = vmatpush.msra.mxu0 %v508
        %563 = vmatpush.msra.mxu0 %v504
        %564 = vmatpush.msra.mxu0 %v500
        %565 = vmatpush.msra.mxu0 %v496
        %566 = vmatpush.msra.mxu0 %v492
        %567 = vmatpush.msra.mxu0 %v488
        %568 = vmatmul.f32.gmra.mxu0 %v480
        %v569 = vpop.f32.mrf.mxu0
        %v570 = vadd.f32 0.0, %v569
        %571 = vmatmul.f32.gmra.mxu0 %v481
        %v572 = vpop.f32.mrf.mxu0
        %v573 = vadd.f32 0.0, %v572
        %574 = vmatmul.f32.gmra.mxu0 %v482
        %v575 = vpop.f32.mrf.mxu0
        %v576 = vadd.f32 0.0, %v575
        %577 = vmatmul.f32.gmra.mxu0 %v483
        %v578 = vpop.f32.mrf.mxu0
        %v579 = vadd.f32 0.0, %v578
        %580 = vmatmul.f32.gmra.mxu0 %v484
        %v581 = vpop.f32.mrf.mxu0
        %v582 = vadd.f32 0.0, %v581
        %583 = vmatmul.f32.gmra.mxu0 %v485
        %v584 = vpop.f32.mrf.mxu0
        %v585 = vadd.f32 0.0, %v584
        %586 = vmatmul.f32.gmra.mxu0 %v486
        %v587 = vpop.f32.mrf.mxu0
        %v588 = vadd.f32 0.0, %v587
        %589 = vmatmul.f32.gmra.mxu0 %v487
        %v590 = vpop.f32.mrf.mxu0
        %v591 = vadd.f32 0.0, %v590
        %592 = vdwg.mxu0
        %593 = vmatpush.msra.mxu0 %v549
        %594 = vmatpush.msra.mxu0 %v545
        %595 = vmatpush.msra.mxu0 %v541
        %596 = vmatpush.msra.mxu0 %v537
        %597 = vmatpush.msra.mxu0 %v533
        %598 = vmatpush.msra.mxu0 %v529
        %599 = vmatpush.msra.mxu0 %v525
        %600 = vmatpush.msra.mxu0 %v521
        %601 = vmatpush.msra.mxu0 %v517
        %602 = vmatpush.msra.mxu0 %v513
        %603 = vmatpush.msra.mxu0 %v509
        %604 = vmatpush.msra.mxu0 %v505
        %605 = vmatpush.msra.mxu0 %v501
        %606 = vmatpush.msra.mxu0 %v497
        %607 = vmatpush.msra.mxu0 %v493
        %608 = vmatpush.msra.mxu0 %v489
        %609 = vmatmul.f32.gmra.mxu0 %v480
        %v610 = vpop.f32.mrf.mxu0
        %v611 = vadd.f32 0.0, %v610
        %612 = vmatmul.f32.gmra.mxu0 %v481
        %v613 = vpop.f32.mrf.mxu0
        %v614 = vadd.f32 0.0, %v613
        %615 = vmatmul.f32.gmra.mxu0 %v482
        %v616 = vpop.f32.mrf.mxu0
        %v617 = vadd.f32 0.0, %v616
        %618 = vmatmul.f32.gmra.mxu0 %v483
        %v619 = vpop.f32.mrf.mxu0
        %v620 = vadd.f32 0.0, %v619
        %621 = vmatmul.f32.gmra.mxu0 %v484
        %v622 = vpop.f32.mrf.mxu0
        %v623 = vadd.f32 0.0, %v622
        %624 = vmatmul.f32.gmra.mxu0 %v485
        %v625 = vpop.f32.mrf.mxu0
        %v626 = vadd.f32 0.0, %v625
        %627 = vmatmul.f32.gmra.mxu0 %v486
        %v628 = vpop.f32.mrf.mxu0
        %v629 = vadd.f32 0.0, %v628
        %630 = vmatmul.f32.gmra.mxu0 %v487
        %v631 = vpop.f32.mrf.mxu0
        %v632 = vadd.f32 0.0, %v631
        %633 = vdwg.mxu0
        %634 = vmatpush.msra.mxu0 %v550
        %635 = vmatpush.msra.mxu0 %v546
        %636 = vmatpush.msra.mxu0 %v542
        %637 = vmatpush.msra.mxu0 %v538
        %638 = vmatpush.msra.mxu0 %v534
        %639 = vmatpush.msra.mxu0 %v530
        %640 = vmatpush.msra.mxu0 %v526
        %641 = vmatpush.msra.mxu0 %v522
        %642 = vmatpush.msra.mxu0 %v518
        %643 = vmatpush.msra.mxu0 %v514
        %644 = vmatpush.msra.mxu0 %v510
        %645 = vmatpush.msra.mxu0 %v506
        %646 = vmatpush.msra.mxu0 %v502
        %647 = vmatpush.msra.mxu0 %v498
        %648 = vmatpush.msra.mxu0 %v494
        %649 = vmatpush.msra.mxu0 %v490
        %650 = vmatmul.f32.gmra.mxu0 %v480
        %v651 = vpop.f32.mrf.mxu0
        %v652 = vadd.f32 0.0, %v651
        %653 = vmatmul.f32.gmra.mxu0 %v481
        %v654 = vpop.f32.mrf.mxu0
        %v655 = vadd.f32 0.0, %v654
        %656 = vmatmul.f32.gmra.mxu0 %v482
        %v657 = vpop.f32.mrf.mxu0
        %v658 = vadd.f32 0.0, %v657
        %659 = vmatmul.f32.gmra.mxu0 %v483
        %v660 = vpop.f32.mrf.mxu0
        %v661 = vadd.f32 0.0, %v660
        %662 = vmatmul.f32.gmra.mxu0 %v484
        %v663 = vpop.f32.mrf.mxu0
        %v664 = vadd.f32 0.0, %v663
        %665 = vmatmul.f32.gmra.mxu0 %v485
        %v666 = vpop.f32.mrf.mxu0
        %v667 = vadd.f32 0.0, %v666
        %668 = vmatmul.f32.gmra.mxu0 %v486
        %v669 = vpop.f32.mrf.mxu0
        %v670 = vadd.f32 0.0, %v669
        %671 = vmatmul.f32.gmra.mxu0 %v487
        %v672 = vpop.f32.mrf.mxu0
        %v673 = vadd.f32 0.0, %v672
        %674 = vdwg.mxu0
        %675 = vmatpush.msra.mxu0 %v551
        %676 = vmatpush.msra.mxu0 %v547
        %677 = vmatpush.msra.mxu0 %v543
        %678 = vmatpush.msra.mxu0 %v539
        %679 = vmatpush.msra.mxu0 %v535
        %680 = vmatpush.msra.mxu0 %v531
        %681 = vmatpush.msra.mxu0 %v527
        %682 = vmatpush.msra.mxu0 %v523
        %683 = vmatpush.msra.mxu0 %v519
        %684 = vmatpush.msra.mxu0 %v515
        %685 = vmatpush.msra.mxu0 %v511
        %686 = vmatpush.msra.mxu0 %v507
        %687 = vmatpush.msra.mxu0 %v503
        %688 = vmatpush.msra.mxu0 %v499
        %689 = vmatpush.msra.mxu0 %v495
        %690 = vmatpush.msra.mxu0 %v491
        %691 = vmatmul.f32.gmra.mxu0 %v480
        %v692 = vpop.f32.mrf.mxu0
        %v693 = vadd.f32 0.0, %v692
        %694 = vmatmul.f32.gmra.mxu0 %v481
        %v695 = vpop.f32.mrf.mxu0
        %v696 = vadd.f32 0.0, %v695
        %697 = vmatmul.f32.gmra.mxu0 %v482
        %v698 = vpop.f32.mrf.mxu0
        %v699 = vadd.f32 0.0, %v698
        %700 = vmatmul.f32.gmra.mxu0 %v483
        %v701 = vpop.f32.mrf.mxu0
        %v702 = vadd.f32 0.0, %v701
        %703 = vmatmul.f32.gmra.mxu0 %v484
        %v704 = vpop.f32.mrf.mxu0
        %v705 = vadd.f32 0.0, %v704
        %706 = vmatmul.f32.gmra.mxu0 %v485
        %v707 = vpop.f32.mrf.mxu0
        %v708 = vadd.f32 0.0, %v707
        %709 = vmatmul.f32.gmra.mxu0 %v486
        %v710 = vpop.f32.mrf.mxu0
        %v711 = vadd.f32 0.0, %v710
        %712 = vmatmul.f32.gmra.mxu0 %v487
        %v713 = vpop.f32.mrf.mxu0
        %v714 = vadd.f32 0.0, %v713
        %715 = vdwg.mxu0
        %v716 = vld [vmem:[%s450] sm:$0xff]
        %v717 = vld [vmem:[%s450 + $0x8] sm:$0xff]
        %v718 = vld [vmem:[%s450 + $0x10] sm:$0xff]
        %v719 = vld [vmem:[%s450 + $0x18] sm:$0xff]
        %v720 = vadd.f32 %v570, %v716
        %v721 = vadd.f32 %v611, %v717
        %v722 = vadd.f32 %v652, %v718
        %v723 = vadd.f32 %v693, %v719
        %v724 = vadd.f32 %v573, %v716
        %v725 = vadd.f32 %v614, %v717
        %v726 = vadd.f32 %v655, %v718
        %v727 = vadd.f32 %v696, %v719
        %v728 = vadd.f32 %v576, %v716
        %v729 = vadd.f32 %v617, %v717
        %v730 = vadd.f32 %v658, %v718
        %v731 = vadd.f32 %v699, %v719
        %v732 = vadd.f32 %v579, %v716
        %v733 = vadd.f32 %v620, %v717
        %v734 = vadd.f32 %v661, %v718
        %v735 = vadd.f32 %v702, %v719
        %v736 = vadd.f32 %v582, %v716
        %v737 = vadd.f32 %v623, %v717
        %v738 = vadd.f32 %v664, %v718
        %v739 = vadd.f32 %v705, %v719
        %v740 = vadd.f32 %v585, %v716
        %v741 = vadd.f32 %v626, %v717
        %v742 = vadd.f32 %v667, %v718
        %v743 = vadd.f32 %v708, %v719
        %v744 = vadd.f32 %v588, %v716
        %v745 = vadd.f32 %v629, %v717
        %v746 = vadd.f32 %v670, %v718
        %v747 = vadd.f32 %v711, %v719
        %v748 = vadd.f32 %v591, %v716
        %v749 = vadd.f32 %v632, %v717
        %v750 = vadd.f32 %v673, %v718
        %v751 = vadd.f32 %v714, %v719
        %752 = vst [vmem:[#allocation2] sm:$0xff] %v720
        %753 = vst [vmem:[#allocation2 + $0x8] sm:$0xff] %v721
        %754 = vst [vmem:[#allocation2 + $0x10] sm:$0xff] %v722
        %755 = vst [vmem:[#allocation2 + $0x18] sm:$0xff] %v723
        %756 = vst [vmem:[#allocation2 + $0x20] sm:$0xff] %v724
        %757 = vst [vmem:[#allocation2 + $0x28] sm:$0xff] %v725
        %758 = vst [vmem:[#allocation2 + $0x30] sm:$0xff] %v726
        %759 = vst [vmem:[#allocation2 + $0x38] sm:$0xff] %v727
        %760 = vst [vmem:[#allocation2 + $0x40] sm:$0xff] %v728
        %761 = vst [vmem:[#allocation2 + $0x48] sm:$0xff] %v729
        %762 = vst [vmem:[#allocation2 + $0x50] sm:$0xff] %v730
        %763 = vst [vmem:[#allocation2 + $0x58] sm:$0xff] %v731
        %764 = vst [vmem:[#allocation2 + $0x60] sm:$0xff] %v732
        %765 = vst [vmem:[#allocation2 + $0x68] sm:$0xff] %v733
        %766 = vst [vmem:[#allocation2 + $0x70] sm:$0xff] %v734
        %767 = vst [vmem:[#allocation2 + $0x78] sm:$0xff] %v735
        %768 = vst [vmem:[#allocation2 + $0x80] sm:$0xff] %v736
        %769 = vst [vmem:[#allocation2 + $0x88] sm:$0xff] %v737
        %770 = vst [vmem:[#allocation2 + $0x90] sm:$0xff] %v738
        %771 = vst [vmem:[#allocation2 + $0x98] sm:$0xff] %v739
        %772 = vst [vmem:[#allocation2 + $0xa0] sm:$0xff] %v740
        %773 = vst [vmem:[#allocation2 + $0xa8] sm:$0xff] %v741
        %774 = vst [vmem:[#allocation2 + $0xb0] sm:$0xff] %v742
        %775 = vst [vmem:[#allocation2 + $0xb8] sm:$0xff] %v743
        %776 = vst [vmem:[#allocation2 + $0xc0] sm:$0xff] %v744
        %777 = vst [vmem:[#allocation2 + $0xc8] sm:$0xff] %v745
        %778 = vst [vmem:[#allocation2 + $0xd0] sm:$0xff] %v746
        %779 = vst [vmem:[#allocation2 + $0xd8] sm:$0xff] %v747
        %780 = vst [vmem:[#allocation2 + $0xe0] sm:$0xff] %v748
        %781 = vst [vmem:[#allocation2 + $0xe8] sm:$0xff] %v749
        %782 = vst [vmem:[#allocation2 + $0xf0] sm:$0xff] %v750
        %783 = vst [vmem:[#allocation2 + $0xf8] sm:$0xff] %v751
        %v784 = vld [vmem:[#allocation3] sm:$0xff]
        %v785 = vld [vmem:[#allocation4] sm:$0xff]
        %s786 = smul.u32 %s24, 7
        %v787 = vld [vmem:[%s445] sm:$0xff]
        %v788 = vld [vmem:[%s445 + $0x8] sm:$0xff]
        %v789 = vld [vmem:[%s445 + $0x10] sm:$0xff]
        %v790 = vld [vmem:[%s445 + $0x18] sm:$0xff]
        %v791 = vld [vmem:[%s445 + $0x20] sm:$0xff]
        %v792 = vld [vmem:[%s445 + $0x28] sm:$0xff]
        %v793 = vld [vmem:[%s445 + $0x30] sm:$0xff]
        %v794 = vld [vmem:[%s445 + $0x38] sm:$0xff]
        %v795 = vld [vmem:[%s445 + $0x40] sm:$0xff]
        %v796 = vld [vmem:[%s445 + $0x48] sm:$0xff]
        %v797 = vld [vmem:[%s445 + $0x50] sm:$0xff]
        %v798 = vld [vmem:[%s445 + $0x58] sm:$0xff]
        %v799 = vld [vmem:[%s445 + $0x60] sm:$0xff]
        %v800 = vld [vmem:[%s445 + $0x68] sm:$0xff]
        %v801 = vld [vmem:[%s445 + $0x70] sm:$0xff]
        %v802 = vld [vmem:[%s445 + $0x78] sm:$0xff]
        %v803 = vld [vmem:[%s445 + $0x80] sm:$0xff]
        %v804 = vld [vmem:[%s445 + $0x88] sm:$0xff]
        %v805 = vld [vmem:[%s445 + $0x90] sm:$0xff]
        %v806 = vld [vmem:[%s445 + $0x98] sm:$0xff]
        %v807 = vld [vmem:[%s445 + $0xa0] sm:$0xff]
        %v808 = vld [vmem:[%s445 + $0xa8] sm:$0xff]
        %v809 = vld [vmem:[%s445 + $0xb0] sm:$0xff]
        %v810 = vld [vmem:[%s445 + $0xb8] sm:$0xff]
        %v811 = vld [vmem:[%s445 + $0xc0] sm:$0xff]
        %v812 = vld [vmem:[%s445 + $0xc8] sm:$0xff]
        %v813 = vld [vmem:[%s445 + $0xd0] sm:$0xff]
        %v814 = vld [vmem:[%s445 + $0xd8] sm:$0xff]
        %v815 = vld [vmem:[%s445 + $0xe0] sm:$0xff]
        %v816 = vld [vmem:[%s445 + $0xe8] sm:$0xff]
        %v817 = vld [vmem:[%s445 + $0xf0] sm:$0xff]
        %v818 = vld [vmem:[%s445 + $0xf8] sm:$0xff]
        %v819 = vld [vmem:[%s445 + $0x100] sm:$0xff]
        %v820 = vld [vmem:[%s445 + $0x108] sm:$0xff]
        %v821 = vld [vmem:[%s445 + $0x110] sm:$0xff]
        %v822 = vld [vmem:[%s445 + $0x118] sm:$0xff]
        %v823 = vld [vmem:[%s445 + $0x120] sm:$0xff]
        %v824 = vld [vmem:[%s445 + $0x128] sm:$0xff]
        %v825 = vld [vmem:[%s445 + $0x130] sm:$0xff]
        %v826 = vld [vmem:[%s445 + $0x138] sm:$0xff]
        %v827 = vld [vmem:[%s445 + $0x140] sm:$0xff]
        %v828 = vld [vmem:[%s445 + $0x148] sm:$0xff]
        %v829 = vld [vmem:[%s445 + $0x150] sm:$0xff]
        %v830 = vld [vmem:[%s445 + $0x158] sm:$0xff]
        %v831 = vld [vmem:[%s445 + $0x160] sm:$0xff]
        %v832 = vld [vmem:[%s445 + $0x168] sm:$0xff]
        %v833 = vld [vmem:[%s445 + $0x170] sm:$0xff]
        %v834 = vld [vmem:[%s445 + $0x178] sm:$0xff]
        %v835 = vld [vmem:[%s445 + $0x180] sm:$0xff]
        %v836 = vld [vmem:[%s445 + $0x188] sm:$0xff]
        %v837 = vld [vmem:[%s445 + $0x190] sm:$0xff]
        %v838 = vld [vmem:[%s445 + $0x198] sm:$0xff]
        %v839 = vld [vmem:[%s445 + $0x1a0] sm:$0xff]
        %v840 = vld [vmem:[%s445 + $0x1a8] sm:$0xff]
        %v841 = vld [vmem:[%s445 + $0x1b0] sm:$0xff]
        %v842 = vld [vmem:[%s445 + $0x1b8] sm:$0xff]
        %v843 = vld [vmem:[%s445 + $0x1c0] sm:$0xff]
        %v844 = vld [vmem:[%s445 + $0x1c8] sm:$0xff]
        %v845 = vld [vmem:[%s445 + $0x1d0] sm:$0xff]
        %v846 = vld [vmem:[%s445 + $0x1d8] sm:$0xff]
        %v847 = vld [vmem:[%s445 + $0x1e0] sm:$0xff]
        %v848 = vld [vmem:[%s445 + $0x1e8] sm:$0xff]
        %v849 = vld [vmem:[%s445 + $0x1f0] sm:$0xff]
        %v850 = vld [vmem:[%s445 + $0x1f8] sm:$0xff]
        %s851 = smul.u32 %s786, 4
        %s852 = smul.addr %s851, 8
        %s853 = scalar_lea.vmem [#allocation2], %s852
        %v854 = vld [vmem:[%s853] sm:$0xff]
        %v855 = vld [vmem:[%s853 + $0x8] sm:$0xff]
        %v856 = vld [vmem:[%s853 + $0x10] sm:$0xff]
        %v857 = vld [vmem:[%s853 + $0x18] sm:$0xff]
        %858 = vmatpush.msra.mxu0 %v847
        %859 = vmatpush.msra.mxu0 %v843
        %860 = vmatpush.msra.mxu0 %v839
        %861 = vmatpush.msra.mxu0 %v835
        %862 = vmatpush.msra.mxu0 %v831
        %863 = vmatpush.msra.mxu0 %v827
        %864 = vmatpush.msra.mxu0 %v823
        %865 = vmatpush.msra.mxu0 %v819
        %866 = vmatpush.msra.mxu0 %v815
        %867 = vmatpush.msra.mxu0 %v811
        %868 = vmatpush.msra.mxu0 %v807
        %869 = vmatpush.msra.mxu0 %v803
        %870 = vmatpush.msra.mxu0 %v799
        %871 = vmatpush.msra.mxu0 %v795
        %872 = vmatpush.msra.mxu0 %v791
        %873 = vmatpush.msra.mxu0 %v787
        %874 = vmatmul.f32.gmra.mxu0 %v784
        %v875 = vpop.f32.mrf.mxu0
        %v876 = vadd.f32 %v854, %v875
        %877 = vdwg.mxu0
        %878 = vmatpush.msra.mxu0 %v848
        %879 = vmatpush.msra.mxu0 %v844
        %880 = vmatpush.msra.mxu0 %v840
        %881 = vmatpush.msra.mxu0 %v836
        %882 = vmatpush.msra.mxu0 %v832
        %883 = vmatpush.msra.mxu0 %v828
        %884 = vmatpush.msra.mxu0 %v824
        %885 = vmatpush.msra.mxu0 %v820
        %886 = vmatpush.msra.mxu0 %v816
        %887 = vmatpush.msra.mxu0 %v812
        %888 = vmatpush.msra.mxu0 %v808
        %889 = vmatpush.msra.mxu0 %v804
        %890 = vmatpush.msra.mxu0 %v800
        %891 = vmatpush.msra.mxu0 %v796
        %892 = vmatpush.msra.mxu0 %v792
        %893 = vmatpush.msra.mxu0 %v788
        %894 = vmatmul.f32.gmra.mxu0 %v784
        %v895 = vpop.f32.mrf.mxu0
        %v896 = vadd.f32 %v855, %v895
        %897 = vdwg.mxu0
        %898 = vmatpush.msra.mxu0 %v849
        %899 = vmatpush.msra.mxu0 %v845
        %900 = vmatpush.msra.mxu0 %v841
        %901 = vmatpush.msra.mxu0 %v837
        %902 = vmatpush.msra.mxu0 %v833
        %903 = vmatpush.msra.mxu0 %v829
        %904 = vmatpush.msra.mxu0 %v825
        %905 = vmatpush.msra.mxu0 %v821
        %906 = vmatpush.msra.mxu0 %v817
        %907 = vmatpush.msra.mxu0 %v813
        %908 = vmatpush.msra.mxu0 %v809
        %909 = vmatpush.msra.mxu0 %v805
        %910 = vmatpush.msra.mxu0 %v801
        %911 = vmatpush.msra.mxu0 %v797
        %912 = vmatpush.msra.mxu0 %v793
        %913 = vmatpush.msra.mxu0 %v789
        %914 = vmatmul.f32.gmra.mxu0 %v784
        %v915 = vpop.f32.mrf.mxu0
        %v916 = vadd.f32 %v856, %v915
        %917 = vdwg.mxu0
        %918 = vmatpush.msra.mxu0 %v850
        %919 = vmatpush.msra.mxu0 %v846
        %920 = vmatpush.msra.mxu0 %v842
        %921 = vmatpush.msra.mxu0 %v838
        %922 = vmatpush.msra.mxu0 %v834
        %923 = vmatpush.msra.mxu0 %v830
        %924 = vmatpush.msra.mxu0 %v826
        %925 = vmatpush.msra.mxu0 %v822
        %926 = vmatpush.msra.mxu0 %v818
        %927 = vmatpush.msra.mxu0 %v814
        %928 = vmatpush.msra.mxu0 %v810
        %929 = vmatpush.msra.mxu0 %v806
        %930 = vmatpush.msra.mxu0 %v802
        %931 = vmatpush.msra.mxu0 %v798
        %932 = vmatpush.msra.mxu0 %v794
        %933 = vmatpush.msra.mxu0 %v790
        %934 = vmatmul.f32.gmra.mxu0 %v784
        %v935 = vpop.f32.mrf.mxu0
        %v936 = vadd.f32 %v857, %v935
        %937 = vdwg.mxu0
        %v938 = vmul.f32 %v876, 0.5
        %v939 = vtanh.pop %v938
        %v940 = vmul.f32 %v939, 0.5
        %v941 = vadd.f32 %v940, 0.5
        %v942 = vmul.f32 %v896, 0.5
        %v943 = vtanh.pop %v942
        %v944 = vmul.f32 %v943, 0.5
        %v945 = vadd.f32 %v944, 0.5
        %v946 = vtanh.pop %v916
        %v947 = vmul.f32 %v936, 0.5
        %v948 = vtanh.pop %v947
        %v949 = vmul.f32 %v948, 0.5
        %v950 = vadd.f32 %v949, 0.5
        %v951 = vmul.f32 %v945, %v785
        %v952 = vmul.f32 %v941, %v946
        %v953 = vadd.f32 %v951, %v952
        %v954 = vtanh.pop %v953
        %v955 = vmul.f32 %v950, %v954
        %s956 = smul.u32 %s786, 8
        %s957 = scalar_lea.vmem %s409, %s956 [#allocation5]
        %958 = vst [vmem:[%s957] sm:$0xff] %v955
        %s959 = smul.u32 %s24, 5
        %s960 = sadd.s32 %s959, 1
        %v961 = vld [vmem:[%s445] sm:$0xff]
        %v962 = vld [vmem:[%s445 + $0x8] sm:$0xff]
        %v963 = vld [vmem:[%s445 + $0x10] sm:$0xff]
        %v964 = vld [vmem:[%s445 + $0x18] sm:$0xff]
        %v965 = vld [vmem:[%s445 + $0x20] sm:$0xff]
        %v966 = vld [vmem:[%s445 + $0x28] sm:$0xff]
        %v967 = vld [vmem:[%s445 + $0x30] sm:$0xff]
        %v968 = vld [vmem:[%s445 + $0x38] sm:$0xff]
        %v969 = vld [vmem:[%s445 + $0x40] sm:$0xff]
        %v970 = vld [vmem:[%s445 + $0x48] sm:$0xff]
        %v971 = vld [vmem:[%s445 + $0x50] sm:$0xff]
        %v972 = vld [vmem:[%s445 + $0x58] sm:$0xff]
        %v973 = vld [vmem:[%s445 + $0x60] sm:$0xff]
        %v974 = vld [vmem:[%s445 + $0x68] sm:$0xff]
        %v975 = vld [vmem:[%s445 + $0x70] sm:$0xff]
        %v976 = vld [vmem:[%s445 + $0x78] sm:$0xff]
        %v977 = vld [vmem:[%s445 + $0x80] sm:$0xff]
        %v978 = vld [vmem:[%s445 + $0x88] sm:$0xff]
        %v979 = vld [vmem:[%s445 + $0x90] sm:$0xff]
        %v980 = vld [vmem:[%s445 + $0x98] sm:$0xff]
        %v981 = vld [vmem:[%s445 + $0xa0] sm:$0xff]
        %v982 = vld [vmem:[%s445 + $0xa8] sm:$0xff]
        %v983 = vld [vmem:[%s445 + $0xb0] sm:$0xff]
        %v984 = vld [vmem:[%s445 + $0xb8] sm:$0xff]
        %v985 = vld [vmem:[%s445 + $0xc0] sm:$0xff]
        %v986 = vld [vmem:[%s445 + $0xc8] sm:$0xff]
        %v987 = vld [vmem:[%s445 + $0xd0] sm:$0xff]
        %v988 = vld [vmem:[%s445 + $0xd8] sm:$0xff]
        %v989 = vld [vmem:[%s445 + $0xe0] sm:$0xff]
        %v990 = vld [vmem:[%s445 + $0xe8] sm:$0xff]
        %v991 = vld [vmem:[%s445 + $0xf0] sm:$0xff]
        %v992 = vld [vmem:[%s445 + $0xf8] sm:$0xff]
        %v993 = vld [vmem:[%s445 + $0x100] sm:$0xff]
        %v994 = vld [vmem:[%s445 + $0x108] sm:$0xff]
        %v995 = vld [vmem:[%s445 + $0x110] sm:$0xff]
        %v996 = vld [vmem:[%s445 + $0x118] sm:$0xff]
        %v997 = vld [vmem:[%s445 + $0x120] sm:$0xff]
        %v998 = vld [vmem:[%s445 + $0x128] sm:$0xff]
        %v999 = vld [vmem:[%s445 + $0x130] sm:$0xff]
        %v1000 = vld [vmem:[%s445 + $0x138] sm:$0xff]
        %v1001 = vld [vmem:[%s445 + $0x140] sm:$0xff]
        %v1002 = vld [vmem:[%s445 + $0x148] sm:$0xff]
        %v1003 = vld [vmem:[%s445 + $0x150] sm:$0xff]
        %v1004 = vld [vmem:[%s445 + $0x158] sm:$0xff]
        %v1005 = vld [vmem:[%s445 + $0x160] sm:$0xff]
        %v1006 = vld [vmem:[%s445 + $0x168] sm:$0xff]
        %v1007 = vld [vmem:[%s445 + $0x170] sm:$0xff]
        %v1008 = vld [vmem:[%s445 + $0x178] sm:$0xff]
        %v1009 = vld [vmem:[%s445 + $0x180] sm:$0xff]
        %v1010 = vld [vmem:[%s445 + $0x188] sm:$0xff]
        %v1011 = vld [vmem:[%s445 + $0x190] sm:$0xff]
        %v1012 = vld [vmem:[%s445 + $0x198] sm:$0xff]
        %v1013 = vld [vmem:[%s445 + $0x1a0] sm:$0xff]
        %v1014 = vld [vmem:[%s445 + $0x1a8] sm:$0xff]
        %v1015 = vld [vmem:[%s445 + $0x1b0] sm:$0xff]
        %v1016 = vld [vmem:[%s445 + $0x1b8] sm:$0xff]
        %v1017 = vld [vmem:[%s445 + $0x1c0] sm:$0xff]
        %v1018 = vld [vmem:[%s445 + $0x1c8] sm:$0xff]
        %v1019 = vld [vmem:[%s445 + $0x1d0] sm:$0xff]
        %v1020 = vld [vmem:[%s445 + $0x1d8] sm:$0xff]
        %v1021 = vld [vmem:[%s445 + $0x1e0] sm:$0xff]
        %v1022 = vld [vmem:[%s445 + $0x1e8] sm:$0xff]
        %v1023 = vld [vmem:[%s445 + $0x1f0] sm:$0xff]
        %v1024 = vld [vmem:[%s445 + $0x1f8] sm:$0xff]
        %s1025 = smul.u32 %s960, 4
        %s1026 = smul.addr %s1025, 8
        %s1027 = scalar_lea.vmem [#allocation2], %s1026
        %v1028 = vld [vmem:[%s1027] sm:$0xff]
        %v1029 = vld [vmem:[%s1027 + $0x8] sm:$0xff]
        %v1030 = vld [vmem:[%s1027 + $0x10] sm:$0xff]
        %v1031 = vld [vmem:[%s1027 + $0x18] sm:$0xff]
        %1032 = vmatpush.msra.mxu0 %v1021
        %1033 = vmatpush.msra.mxu0 %v1017
        %1034 = vmatpush.msra.mxu0 %v1013
        %1035 = vmatpush.msra.mxu0 %v1009
        %1036 = vmatpush.msra.mxu0 %v1005
        %1037 = vmatpush.msra.mxu0 %v1001
        %1038 = vmatpush.msra.mxu0 %v997
        %1039 = vmatpush.msra.mxu0 %v993
        %1040 = vmatpush.msra.mxu0 %v989
        %1041 = vmatpush.msra.mxu0 %v985
        %1042 = vmatpush.msra.mxu0 %v981
        %1043 = vmatpush.msra.mxu0 %v977
        %1044 = vmatpush.msra.mxu0 %v973
        %1045 = vmatpush.msra.mxu0 %v969
        %1046 = vmatpush.msra.mxu0 %v965
        %1047 = vmatpush.msra.mxu0 %v961
        %1048 = vmatmul.f32.gmra.mxu0 %v955
        %v1049 = vpop.f32.mrf.mxu0
        %v1050 = vadd.f32 %v1028, %v1049
        %1051 = vdwg.mxu0
        %1052 = vmatpush.msra.mxu0 %v1022
        %1053 = vmatpush.msra.mxu0 %v1018
        %1054 = vmatpush.msra.mxu0 %v1014
        %1055 = vmatpush.msra.mxu0 %v1010
        %1056 = vmatpush.msra.mxu0 %v1006
        %1057 = vmatpush.msra.mxu0 %v1002
        %1058 = vmatpush.msra.mxu0 %v998
        %1059 = vmatpush.msra.mxu0 %v994
        %1060 = vmatpush.msra.mxu0 %v990
        %1061 = vmatpush.msra.mxu0 %v986
        %1062 = vmatpush.msra.mxu0 %v982
        %1063 = vmatpush.msra.mxu0 %v978
        %1064 = vmatpush.msra.mxu0 %v974
        %1065 = vmatpush.msra.mxu0 %v970
        %1066 = vmatpush.msra.mxu0 %v966
        %1067 = vmatpush.msra.mxu0 %v962
        %1068 = vmatmul.f32.gmra.mxu0 %v955
        %v1069 = vpop.f32.mrf.mxu0
        %v1070 = vadd.f32 %v1029, %v1069
        %1071 = vdwg.mxu0
        %1072 = vmatpush.msra.mxu0 %v1023
        %1073 = vmatpush.msra.mxu0 %v1019
        %1074 = vmatpush.msra.mxu0 %v1015
        %1075 = vmatpush.msra.mxu0 %v1011
        %1076 = vmatpush.msra.mxu0 %v1007
        %1077 = vmatpush.msra.mxu0 %v1003
        %1078 = vmatpush.msra.mxu0 %v999
        %1079 = vmatpush.msra.mxu0 %v995
        %1080 = vmatpush.msra.mxu0 %v991
        %1081 = vmatpush.msra.mxu0 %v987
        %1082 = vmatpush.msra.mxu0 %v983
        %1083 = vmatpush.msra.mxu0 %v979
        %1084 = vmatpush.msra.mxu0 %v975
        %1085 = vmatpush.msra.mxu0 %v971
        %1086 = vmatpush.msra.mxu0 %v967
        %1087 = vmatpush.msra.mxu0 %v963
        %1088 = vmatmul.f32.gmra.mxu0 %v955
        %v1089 = vpop.f32.mrf.mxu0
        %v1090 = vadd.f32 %v1030, %v1089
        %1091 = vdwg.mxu0
        %1092 = vmatpush.msra.mxu0 %v1024
        %1093 = vmatpush.msra.mxu0 %v1020
        %1094 = vmatpush.msra.mxu0 %v1016
        %1095 = vmatpush.msra.mxu0 %v1012
        %1096 = vmatpush.msra.mxu0 %v1008
        %1097 = vmatpush.msra.mxu0 %v1004
        %1098 = vmatpush.msra.mxu0 %v1000
        %1099 = vmatpush.msra.mxu0 %v996
        %1100 = vmatpush.msra.mxu0 %v992
        %1101 = vmatpush.msra.mxu0 %v988
        %1102 = vmatpush.msra.mxu0 %v984
        %1103 = vmatpush.msra.mxu0 %v980
        %1104 = vmatpush.msra.mxu0 %v976
        %1105 = vmatpush.msra.mxu0 %v972
        %1106 = vmatpush.msra.mxu0 %v968
        %1107 = vmatpush.msra.mxu0 %v964
        %1108 = vmatmul.f32.gmra.mxu0 %v955
        %v1109 = vpop.f32.mrf.mxu0
        %v1110 = vadd.f32 %v1031, %v1109
        %1111 = vdwg.mxu0
        %v1112 = vmul.f32 %v1050, 0.5
        %v1113 = vtanh.pop %v1112
        %v1114 = vmul.f32 %v1113, 0.5
        %v1115 = vadd.f32 %v1114, 0.5
        %v1116 = vmul.f32 %v1070, 0.5
        %v1117 = vtanh.pop %v1116
        %v1118 = vmul.f32 %v1117, 0.5
        %v1119 = vadd.f32 %v1118, 0.5
        %v1120 = vtanh.pop %v1090
        %v1121 = vmul.f32 %v1110, 0.5
        %v1122 = vtanh.pop %v1121
        %v1123 = vmul.f32 %v1122, 0.5
        %v1124 = vadd.f32 %v1123, 0.5
        %v1125 = vmul.f32 %v1119, %v953
        %v1126 = vmul.f32 %v1115, %v1120
        %v1127 = vadd.f32 %v1125, %v1126
        %v1128 = vtanh.pop %v1127
        %v1129 = vmul.f32 %v1124, %v1128
        %s1130 = smul.u32 %s960, 8
        %s1131 = scalar_lea.vmem %s409, %s1130 [#allocation5]
        %1132 = vst [vmem:[%s1131] sm:$0xff] %v1129
        %s1133 = smul.u32 %s24, 3
        %s1134 = sadd.s32 %s1133, 2
        %v1135 = vld [vmem:[%s445] sm:$0xff]
        %v1136 = vld [vmem:[%s445 + $0x8] sm:$0xff]
        %v1137 = vld [vmem:[%s445 + $0x10] sm:$0xff]
        %v1138 = vld [vmem:[%s445 + $0x18] sm:$0xff]
        %v1139 = vld [vmem:[%s445 + $0x20] sm:$0xff]
        %v1140 = vld [vmem:[%s445 + $0x28] sm:$0xff]
        %v1141 = vld [vmem:[%s445 + $0x30] sm:$0xff]
        %v1142 = vld [vmem:[%s445 + $0x38] sm:$0xff]
        %v1143 = vld [vmem:[%s445 + $0x40] sm:$0xff]
        %v1144 = vld [vmem:[%s445 + $0x48] sm:$0xff]
        %v1145 = vld [vmem:[%s445 + $0x50] sm:$0xff]
        %v1146 = vld [vmem:[%s445 + $0x58] sm:$0xff]
        %v1147 = vld [vmem:[%s445 + $0x60] sm:$0xff]
        %v1148 = vld [vmem:[%s445 + $0x68] sm:$0xff]
        %v1149 = vld [vmem:[%s445 + $0x70] sm:$0xff]
        %v1150 = vld [vmem:[%s445 + $0x78] sm:$0xff]
        %v1151 = vld [vmem:[%s445 + $0x80] sm:$0xff]
        %v1152 = vld [vmem:[%s445 + $0x88] sm:$0xff]
        %v1153 = vld [vmem:[%s445 + $0x90] sm:$0xff]
        %v1154 = vld [vmem:[%s445 + $0x98] sm:$0xff]
        %v1155 = vld [vmem:[%s445 + $0xa0] sm:$0xff]
        %v1156 = vld [vmem:[%s445 + $0xa8] sm:$0xff]
        %v1157 = vld [vmem:[%s445 + $0xb0] sm:$0xff]
        %v1158 = vld [vmem:[%s445 + $0xb8] sm:$0xff]
        %v1159 = vld [vmem:[%s445 + $0xc0] sm:$0xff]
        %v1160 = vld [vmem:[%s445 + $0xc8] sm:$0xff]
        %v1161 = vld [vmem:[%s445 + $0xd0] sm:$0xff]
        %v1162 = vld [vmem:[%s445 + $0xd8] sm:$0xff]
        %v1163 = vld [vmem:[%s445 + $0xe0] sm:$0xff]
        %v1164 = vld [vmem:[%s445 + $0xe8] sm:$0xff]
        %v1165 = vld [vmem:[%s445 + $0xf0] sm:$0xff]
        %v1166 = vld [vmem:[%s445 + $0xf8] sm:$0xff]
        %v1167 = vld [vmem:[%s445 + $0x100] sm:$0xff]
        %v1168 = vld [vmem:[%s445 + $0x108] sm:$0xff]
        %v1169 = vld [vmem:[%s445 + $0x110] sm:$0xff]
        %v1170 = vld [vmem:[%s445 + $0x118] sm:$0xff]
        %v1171 = vld [vmem:[%s445 + $0x120] sm:$0xff]
        %v1172 = vld [vmem:[%s445 + $0x128] sm:$0xff]
        %v1173 = vld [vmem:[%s445 + $0x130] sm:$0xff]
        %v1174 = vld [vmem:[%s445 + $0x138] sm:$0xff]
        %v1175 = vld [vmem:[%s445 + $0x140] sm:$0xff]
        %v1176 = vld [vmem:[%s445 + $0x148] sm:$0xff]
        %v1177 = vld [vmem:[%s445 + $0x150] sm:$0xff]
        %v1178 = vld [vmem:[%s445 + $0x158] sm:$0xff]
        %v1179 = vld [vmem:[%s445 + $0x160] sm:$0xff]
        %v1180 = vld [vmem:[%s445 + $0x168] sm:$0xff]
        %v1181 = vld [vmem:[%s445 + $0x170] sm:$0xff]
        %v1182 = vld [vmem:[%s445 + $0x178] sm:$0xff]
        %v1183 = vld [vmem:[%s445 + $0x180] sm:$0xff]
        %v1184 = vld [vmem:[%s445 + $0x188] sm:$0xff]
        %v1185 = vld [vmem:[%s445 + $0x190] sm:$0xff]
        %v1186 = vld [vmem:[%s445 + $0x198] sm:$0xff]
        %v1187 = vld [vmem:[%s445 + $0x1a0] sm:$0xff]
        %v1188 = vld [vmem:[%s445 + $0x1a8] sm:$0xff]
        %v1189 = vld [vmem:[%s445 + $0x1b0] sm:$0xff]
        %v1190 = vld [vmem:[%s445 + $0x1b8] sm:$0xff]
        %v1191 = vld [vmem:[%s445 + $0x1c0] sm:$0xff]
        %v1192 = vld [vmem:[%s445 + $0x1c8] sm:$0xff]
        %v1193 = vld [vmem:[%s445 + $0x1d0] sm:$0xff]
        %v1194 = vld [vmem:[%s445 + $0x1d8] sm:$0xff]
        %v1195 = vld [vmem:[%s445 + $0x1e0] sm:$0xff]
        %v1196 = vld [vmem:[%s445 + $0x1e8] sm:$0xff]
        %v1197 = vld [vmem:[%s445 + $0x1f0] sm:$0xff]
        %v1198 = vld [vmem:[%s445 + $0x1f8] sm:$0xff]
        %s1199 = smul.u32 %s1134, 4
        %s1200 = smul.addr %s1199, 8
        %s1201 = scalar_lea.vmem [#allocation2], %s1200
        %v1202 = vld [vmem:[%s1201] sm:$0xff]
        %v1203 = vld [vmem:[%s1201 + $0x8] sm:$0xff]
        %v1204 = vld [vmem:[%s1201 + $0x10] sm:$0xff]
        %v1205 = vld [vmem:[%s1201 + $0x18] sm:$0xff]
        %1206 = vmatpush.msra.mxu0 %v1195
        %1207 = vmatpush.msra.mxu0 %v1191
        %1208 = vmatpush.msra.mxu0 %v1187
        %1209 = vmatpush.msra.mxu0 %v1183
        %1210 = vmatpush.msra.mxu0 %v1179
        %1211 = vmatpush.msra.mxu0 %v1175
        %1212 = vmatpush.msra.mxu0 %v1171
        %1213 = vmatpush.msra.mxu0 %v1167
        %1214 = vmatpush.msra.mxu0 %v1163
        %1215 = vmatpush.msra.mxu0 %v1159
        %1216 = vmatpush.msra.mxu0 %v1155
        %1217 = vmatpush.msra.mxu0 %v1151
        %1218 = vmatpush.msra.mxu0 %v1147
        %1219 = vmatpush.msra.mxu0 %v1143
        %1220 = vmatpush.msra.mxu0 %v1139
        %1221 = vmatpush.msra.mxu0 %v1135
        %1222 = vmatmul.f32.gmra.mxu0 %v1129
        %v1223 = vpop.f32.mrf.mxu0
        %v1224 = vadd.f32 %v1202, %v1223
        %1225 = vdwg.mxu0
        %1226 = vmatpush.msra.mxu0 %v1196
        %1227 = vmatpush.msra.mxu0 %v1192
        %1228 = vmatpush.msra.mxu0 %v1188
        %1229 = vmatpush.msra.mxu0 %v1184
        %1230 = vmatpush.msra.mxu0 %v1180
        %1231 = vmatpush.msra.mxu0 %v1176
        %1232 = vmatpush.msra.mxu0 %v1172
        %1233 = vmatpush.msra.mxu0 %v1168
        %1234 = vmatpush.msra.mxu0 %v1164
        %1235 = vmatpush.msra.mxu0 %v1160
        %1236 = vmatpush.msra.mxu0 %v1156
        %1237 = vmatpush.msra.mxu0 %v1152
        %1238 = vmatpush.msra.mxu0 %v1148
        %1239 = vmatpush.msra.mxu0 %v1144
        %1240 = vmatpush.msra.mxu0 %v1140
        %1241 = vmatpush.msra.mxu0 %v1136
        %1242 = vmatmul.f32.gmra.mxu0 %v1129
        %v1243 = vpop.f32.mrf.mxu0
        %v1244 = vadd.f32 %v1203, %v1243
        %1245 = vdwg.mxu0
        %1246 = vmatpush.msra.mxu0 %v1197
        %1247 = vmatpush.msra.mxu0 %v1193
        %1248 = vmatpush.msra.mxu0 %v1189
        %1249 = vmatpush.msra.mxu0 %v1185
        %1250 = vmatpush.msra.mxu0 %v1181
        %1251 = vmatpush.msra.mxu0 %v1177
        %1252 = vmatpush.msra.mxu0 %v1173
        %1253 = vmatpush.msra.mxu0 %v1169
        %1254 = vmatpush.msra.mxu0 %v1165
        %1255 = vmatpush.msra.mxu0 %v1161
        %1256 = vmatpush.msra.mxu0 %v1157
        %1257 = vmatpush.msra.mxu0 %v1153
        %1258 = vmatpush.msra.mxu0 %v1149
        %1259 = vmatpush.msra.mxu0 %v1145
        %1260 = vmatpush.msra.mxu0 %v1141
        %1261 = vmatpush.msra.mxu0 %v1137
        %1262 = vmatmul.f32.gmra.mxu0 %v1129
        %v1263 = vpop.f32.mrf.mxu0
        %v1264 = vadd.f32 %v1204, %v1263
        %1265 = vdwg.mxu0
        %1266 = vmatpush.msra.mxu0 %v1198
        %1267 = vmatpush.msra.mxu0 %v1194
        %1268 = vmatpush.msra.mxu0 %v1190
        %1269 = vmatpush.msra.mxu0 %v1186
        %1270 = vmatpush.msra.mxu0 %v1182
        %1271 = vmatpush.msra.mxu0 %v1178
        %1272 = vmatpush.msra.mxu0 %v1174
        %1273 = vmatpush.msra.mxu0 %v1170
        %1274 = vmatpush.msra.mxu0 %v1166
        %1275 = vmatpush.msra.mxu0 %v1162
        %1276 = vmatpush.msra.mxu0 %v1158
        %1277 = vmatpush.msra.mxu0 %v1154
        %1278 = vmatpush.msra.mxu0 %v1150
        %1279 = vmatpush.msra.mxu0 %v1146
        %1280 = vmatpush.msra.mxu0 %v1142
        %1281 = vmatpush.msra.mxu0 %v1138
        %1282 = vmatmul.f32.gmra.mxu0 %v1129
        %v1283 = vpop.f32.mrf.mxu0
        %v1284 = vadd.f32 %v1205, %v1283
        %1285 = vdwg.mxu0
        %v1286 = vmul.f32 %v1224, 0.5
        %v1287 = vtanh.pop %v1286
        %v1288 = vmul.f32 %v1287, 0.5
        %v1289 = vadd.f32 %v1288, 0.5
        %v1290 = vmul.f32 %v1244, 0.5
        %v1291 = vtanh.pop %v1290
        %v1292 = vmul.f32 %v1291, 0.5
        %v1293 = vadd.f32 %v1292, 0.5
        %v1294 = vtanh.pop %v1264
        %v1295 = vmul.f32 %v1284, 0.5
        %v1296 = vtanh.pop %v1295
        %v1297 = vmul.f32 %v1296, 0.5
        %v1298 = vadd.f32 %v1297, 0.5
        %v1299 = vmul.f32 %v1293, %v1127
        %v1300 = vmul.f32 %v1289, %v1294
        %v1301 = vadd.f32 %v1299, %v1300
        %v1302 = vtanh.pop %v1301
        %v1303 = vmul.f32 %v1298, %v1302
        %s1304 = smul.u32 %s1134, 8
        %s1305 = scalar_lea.vmem %s409, %s1304 [#allocation5]
        %1306 = vst [vmem:[%s1305] sm:$0xff] %v1303
        %s1307 = sadd.s32 %s24, 3
        %v1308 = vld [vmem:[%s445] sm:$0xff]
        %v1309 = vld [vmem:[%s445 + $0x8] sm:$0xff]
        %v1310 = vld [vmem:[%s445 + $0x10] sm:$0xff]
        %v1311 = vld [vmem:[%s445 + $0x18] sm:$0xff]
        %v1312 = vld [vmem:[%s445 + $0x20] sm:$0xff]
        %v1313 = vld [vmem:[%s445 + $0x28] sm:$0xff]
        %v1314 = vld [vmem:[%s445 + $0x30] sm:$0xff]
        %v1315 = vld [vmem:[%s445 + $0x38] sm:$0xff]
        %v1316 = vld [vmem:[%s445 + $0x40] sm:$0xff]
        %v1317 = vld [vmem:[%s445 + $0x48] sm:$0xff]
        %v1318 = vld [vmem:[%s445 + $0x50] sm:$0xff]
        %v1319 = vld [vmem:[%s445 + $0x58] sm:$0xff]
        %v1320 = vld [vmem:[%s445 + $0x60] sm:$0xff]
        %v1321 = vld [vmem:[%s445 + $0x68] sm:$0xff]
        %v1322 = vld [vmem:[%s445 + $0x70] sm:$0xff]
        %v1323 = vld [vmem:[%s445 + $0x78] sm:$0xff]
        %v1324 = vld [vmem:[%s445 + $0x80] sm:$0xff]
        %v1325 = vld [vmem:[%s445 + $0x88] sm:$0xff]
        %v1326 = vld [vmem:[%s445 + $0x90] sm:$0xff]
        %v1327 = vld [vmem:[%s445 + $0x98] sm:$0xff]
        %v1328 = vld [vmem:[%s445 + $0xa0] sm:$0xff]
        %v1329 = vld [vmem:[%s445 + $0xa8] sm:$0xff]
        %v1330 = vld [vmem:[%s445 + $0xb0] sm:$0xff]
        %v1331 = vld [vmem:[%s445 + $0xb8] sm:$0xff]
        %v1332 = vld [vmem:[%s445 + $0xc0] sm:$0xff]
        %v1333 = vld [vmem:[%s445 + $0xc8] sm:$0xff]
        %v1334 = vld [vmem:[%s445 + $0xd0] sm:$0xff]
        %v1335 = vld [vmem:[%s445 + $0xd8] sm:$0xff]
        %v1336 = vld [vmem:[%s445 + $0xe0] sm:$0xff]
        %v1337 = vld [vmem:[%s445 + $0xe8] sm:$0xff]
        %v1338 = vld [vmem:[%s445 + $0xf0] sm:$0xff]
        %v1339 = vld [vmem:[%s445 + $0xf8] sm:$0xff]
        %v1340 = vld [vmem:[%s445 + $0x100] sm:$0xff]
        %v1341 = vld [vmem:[%s445 + $0x108] sm:$0xff]
        %v1342 = vld [vmem:[%s445 + $0x110] sm:$0xff]
        %v1343 = vld [vmem:[%s445 + $0x118] sm:$0xff]
        %v1344 = vld [vmem:[%s445 + $0x120] sm:$0xff]
        %v1345 = vld [vmem:[%s445 + $0x128] sm:$0xff]
        %v1346 = vld [vmem:[%s445 + $0x130] sm:$0xff]
        %v1347 = vld [vmem:[%s445 + $0x138] sm:$0xff]
        %v1348 = vld [vmem:[%s445 + $0x140] sm:$0xff]
        %v1349 = vld [vmem:[%s445 + $0x148] sm:$0xff]
        %v1350 = vld [vmem:[%s445 + $0x150] sm:$0xff]
        %v1351 = vld [vmem:[%s445 + $0x158] sm:$0xff]
        %v1352 = vld [vmem:[%s445 + $0x160] sm:$0xff]
        %v1353 = vld [vmem:[%s445 + $0x168] sm:$0xff]
        %v1354 = vld [vmem:[%s445 + $0x170] sm:$0xff]
        %v1355 = vld [vmem:[%s445 + $0x178] sm:$0xff]
        %v1356 = vld [vmem:[%s445 + $0x180] sm:$0xff]
        %v1357 = vld [vmem:[%s445 + $0x188] sm:$0xff]
        %v1358 = vld [vmem:[%s445 + $0x190] sm:$0xff]
        %v1359 = vld [vmem:[%s445 + $0x198] sm:$0xff]
        %v1360 = vld [vmem:[%s445 + $0x1a0] sm:$0xff]
        %v1361 = vld [vmem:[%s445 + $0x1a8] sm:$0xff]
        %v1362 = vld [vmem:[%s445 + $0x1b0] sm:$0xff]
        %v1363 = vld [vmem:[%s445 + $0x1b8] sm:$0xff]
        %v1364 = vld [vmem:[%s445 + $0x1c0] sm:$0xff]
        %v1365 = vld [vmem:[%s445 + $0x1c8] sm:$0xff]
        %v1366 = vld [vmem:[%s445 + $0x1d0] sm:$0xff]
        %v1367 = vld [vmem:[%s445 + $0x1d8] sm:$0xff]
        %v1368 = vld [vmem:[%s445 + $0x1e0] sm:$0xff]
        %v1369 = vld [vmem:[%s445 + $0x1e8] sm:$0xff]
        %v1370 = vld [vmem:[%s445 + $0x1f0] sm:$0xff]
        %v1371 = vld [vmem:[%s445 + $0x1f8] sm:$0xff]
        %s1372 = smul.u32 %s1307, 4
        %s1373 = smul.addr %s1372, 8
        %s1374 = scalar_lea.vmem [#allocation2], %s1373
        %v1375 = vld [vmem:[%s1374] sm:$0xff]
        %v1376 = vld [vmem:[%s1374 + $0x8] sm:$0xff]
        %v1377 = vld [vmem:[%s1374 + $0x10] sm:$0xff]
        %v1378 = vld [vmem:[%s1374 + $0x18] sm:$0xff]
        %1379 = vmatpush.msra.mxu0 %v1368
        %1380 = vmatpush.msra.mxu0 %v1364
        %1381 = vmatpush.msra.mxu0 %v1360
        %1382 = vmatpush.msra.mxu0 %v1356
        %1383 = vmatpush.msra.mxu0 %v1352
        %1384 = vmatpush.msra.mxu0 %v1348
        %1385 = vmatpush.msra.mxu0 %v1344
        %1386 = vmatpush.msra.mxu0 %v1340
        %1387 = vmatpush.msra.mxu0 %v1336
        %1388 = vmatpush.msra.mxu0 %v1332
        %1389 = vmatpush.msra.mxu0 %v1328
        %1390 = vmatpush.msra.mxu0 %v1324
        %1391 = vmatpush.msra.mxu0 %v1320
        %1392 = vmatpush.msra.mxu0 %v1316
        %1393 = vmatpush.msra.mxu0 %v1312
        %1394 = vmatpush.msra.mxu0 %v1308
        %1395 = vmatmul.f32.gmra.mxu0 %v1303
        %v1396 = vpop.f32.mrf.mxu0
        %v1397 = vadd.f32 %v1375, %v1396
        %1398 = vdwg.mxu0
        %1399 = vmatpush.msra.mxu0 %v1369
        %1400 = vmatpush.msra.mxu0 %v1365
        %1401 = vmatpush.msra.mxu0 %v1361
        %1402 = vmatpush.msra.mxu0 %v1357
        %1403 = vmatpush.msra.mxu0 %v1353
        %1404 = vmatpush.msra.mxu0 %v1349
        %1405 = vmatpush.msra.mxu0 %v1345
        %1406 = vmatpush.msra.mxu0 %v1341
        %1407 = vmatpush.msra.mxu0 %v1337
        %1408 = vmatpush.msra.mxu0 %v1333
        %1409 = vmatpush.msra.mxu0 %v1329
        %1410 = vmatpush.msra.mxu0 %v1325
        %1411 = vmatpush.msra.mxu0 %v1321
        %1412 = vmatpush.msra.mxu0 %v1317
        %1413 = vmatpush.msra.mxu0 %v1313
        %1414 = vmatpush.msra.mxu0 %v1309
        %1415 = vmatmul.f32.gmra.mxu0 %v1303
        %v1416 = vpop.f32.mrf.mxu0
        %v1417 = vadd.f32 %v1376, %v1416
        %1418 = vdwg.mxu0
        %1419 = vmatpush.msra.mxu0 %v1370
        %1420 = vmatpush.msra.mxu0 %v1366
        %1421 = vmatpush.msra.mxu0 %v1362
        %1422 = vmatpush.msra.mxu0 %v1358
        %1423 = vmatpush.msra.mxu0 %v1354
        %1424 = vmatpush.msra.mxu0 %v1350
        %1425 = vmatpush.msra.mxu0 %v1346
        %1426 = vmatpush.msra.mxu0 %v1342
        %1427 = vmatpush.msra.mxu0 %v1338
        %1428 = vmatpush.msra.mxu0 %v1334
        %1429 = vmatpush.msra.mxu0 %v1330
        %1430 = vmatpush.msra.mxu0 %v1326
        %1431 = vmatpush.msra.mxu0 %v1322
        %1432 = vmatpush.msra.mxu0 %v1318
        %1433 = vmatpush.msra.mxu0 %v1314
        %1434 = vmatpush.msra.mxu0 %v1310
        %1435 = vmatmul.f32.gmra.mxu0 %v1303
        %v1436 = vpop.f32.mrf.mxu0
        %v1437 = vadd.f32 %v1377, %v1436
        %1438 = vdwg.mxu0
        %1439 = vmatpush.msra.mxu0 %v1371
        %1440 = vmatpush.msra.mxu0 %v1367
        %1441 = vmatpush.msra.mxu0 %v1363
        %1442 = vmatpush.msra.mxu0 %v1359
        %1443 = vmatpush.msra.mxu0 %v1355
        %1444 = vmatpush.msra.mxu0 %v1351
        %1445 = vmatpush.msra.mxu0 %v1347
        %1446 = vmatpush.msra.mxu0 %v1343
        %1447 = vmatpush.msra.mxu0 %v1339
        %1448 = vmatpush.msra.mxu0 %v1335
        %1449 = vmatpush.msra.mxu0 %v1331
        %1450 = vmatpush.msra.mxu0 %v1327
        %1451 = vmatpush.msra.mxu0 %v1323
        %1452 = vmatpush.msra.mxu0 %v1319
        %1453 = vmatpush.msra.mxu0 %v1315
        %1454 = vmatpush.msra.mxu0 %v1311
        %1455 = vmatmul.f32.gmra.mxu0 %v1303
        %v1456 = vpop.f32.mrf.mxu0
        %v1457 = vadd.f32 %v1378, %v1456
        %1458 = vdwg.mxu0
        %v1459 = vmul.f32 %v1397, 0.5
        %v1460 = vtanh.pop %v1459
        %v1461 = vmul.f32 %v1460, 0.5
        %v1462 = vadd.f32 %v1461, 0.5
        %v1463 = vmul.f32 %v1417, 0.5
        %v1464 = vtanh.pop %v1463
        %v1465 = vmul.f32 %v1464, 0.5
        %v1466 = vadd.f32 %v1465, 0.5
        %v1467 = vtanh.pop %v1437
        %v1468 = vmul.f32 %v1457, 0.5
        %v1469 = vtanh.pop %v1468
        %v1470 = vmul.f32 %v1469, 0.5
        %v1471 = vadd.f32 %v1470, 0.5
        %v1472 = vmul.f32 %v1466, %v1301
        %v1473 = vmul.f32 %v1462, %v1467
        %v1474 = vadd.f32 %v1472, %v1473
        %v1475 = vtanh.pop %v1474
        %v1476 = vmul.f32 %v1471, %v1475
        %s1477 = smul.u32 %s1307, 8
        %s1478 = scalar_lea.vmem %s409, %s1477 [#allocation5]
        %1479 = vst [vmem:[%s1478] sm:$0xff] %v1476
        %s1480 = ssub.s32 4, %s24
        %v1481 = vld [vmem:[%s445] sm:$0xff]
        %v1482 = vld [vmem:[%s445 + $0x8] sm:$0xff]
        %v1483 = vld [vmem:[%s445 + $0x10] sm:$0xff]
        %v1484 = vld [vmem:[%s445 + $0x18] sm:$0xff]
        %v1485 = vld [vmem:[%s445 + $0x20] sm:$0xff]
        %v1486 = vld [vmem:[%s445 + $0x28] sm:$0xff]
        %v1487 = vld [vmem:[%s445 + $0x30] sm:$0xff]
        %v1488 = vld [vmem:[%s445 + $0x38] sm:$0xff]
        %v1489 = vld [vmem:[%s445 + $0x40] sm:$0xff]
        %v1490 = vld [vmem:[%s445 + $0x48] sm:$0xff]
        %v1491 = vld [vmem:[%s445 + $0x50] sm:$0xff]
        %v1492 = vld [vmem:[%s445 + $0x58] sm:$0xff]
        %v1493 = vld [vmem:[%s445 + $0x60] sm:$0xff]
        %v1494 = vld [vmem:[%s445 + $0x68] sm:$0xff]
        %v1495 = vld [vmem:[%s445 + $0x70] sm:$0xff]
        %v1496 = vld [vmem:[%s445 + $0x78] sm:$0xff]
        %v1497 = vld [vmem:[%s445 + $0x80] sm:$0xff]
        %v1498 = vld [vmem:[%s445 + $0x88] sm:$0xff]
        %v1499 = vld [vmem:[%s445 + $0x90] sm:$0xff]
        %v1500 = vld [vmem:[%s445 + $0x98] sm:$0xff]
        %v1501 = vld [vmem:[%s445 + $0xa0] sm:$0xff]
        %v1502 = vld [vmem:[%s445 + $0xa8] sm:$0xff]
        %v1503 = vld [vmem:[%s445 + $0xb0] sm:$0xff]
        %v1504 = vld [vmem:[%s445 + $0xb8] sm:$0xff]
        %v1505 = vld [vmem:[%s445 + $0xc0] sm:$0xff]
        %v1506 = vld [vmem:[%s445 + $0xc8] sm:$0xff]
        %v1507 = vld [vmem:[%s445 + $0xd0] sm:$0xff]
        %v1508 = vld [vmem:[%s445 + $0xd8] sm:$0xff]
        %v1509 = vld [vmem:[%s445 + $0xe0] sm:$0xff]
        %v1510 = vld [vmem:[%s445 + $0xe8] sm:$0xff]
        %v1511 = vld [vmem:[%s445 + $0xf0] sm:$0xff]
        %v1512 = vld [vmem:[%s445 + $0xf8] sm:$0xff]
        %v1513 = vld [vmem:[%s445 + $0x100] sm:$0xff]
        %v1514 = vld [vmem:[%s445 + $0x108] sm:$0xff]
        %v1515 = vld [vmem:[%s445 + $0x110] sm:$0xff]
        %v1516 = vld [vmem:[%s445 + $0x118] sm:$0xff]
        %v1517 = vld [vmem:[%s445 + $0x120] sm:$0xff]
        %v1518 = vld [vmem:[%s445 + $0x128] sm:$0xff]
        %v1519 = vld [vmem:[%s445 + $0x130] sm:$0xff]
        %v1520 = vld [vmem:[%s445 + $0x138] sm:$0xff]
        %v1521 = vld [vmem:[%s445 + $0x140] sm:$0xff]
        %v1522 = vld [vmem:[%s445 + $0x148] sm:$0xff]
        %v1523 = vld [vmem:[%s445 + $0x150] sm:$0xff]
        %v1524 = vld [vmem:[%s445 + $0x158] sm:$0xff]
        %v1525 = vld [vmem:[%s445 + $0x160] sm:$0xff]
        %v1526 = vld [vmem:[%s445 + $0x168] sm:$0xff]
        %v1527 = vld [vmem:[%s445 + $0x170] sm:$0xff]
        %v1528 = vld [vmem:[%s445 + $0x178] sm:$0xff]
        %v1529 = vld [vmem:[%s445 + $0x180] sm:$0xff]
        %v1530 = vld [vmem:[%s445 + $0x188] sm:$0xff]
        %v1531 = vld [vmem:[%s445 + $0x190] sm:$0xff]
        %v1532 = vld [vmem:[%s445 + $0x198] sm:$0xff]
        %v1533 = vld [vmem:[%s445 + $0x1a0] sm:$0xff]
        %v1534 = vld [vmem:[%s445 + $0x1a8] sm:$0xff]
        %v1535 = vld [vmem:[%s445 + $0x1b0] sm:$0xff]
        %v1536 = vld [vmem:[%s445 + $0x1b8] sm:$0xff]
        %v1537 = vld [vmem:[%s445 + $0x1c0] sm:$0xff]
        %v1538 = vld [vmem:[%s445 + $0x1c8] sm:$0xff]
        %v1539 = vld [vmem:[%s445 + $0x1d0] sm:$0xff]
        %v1540 = vld [vmem:[%s445 + $0x1d8] sm:$0xff]
        %v1541 = vld [vmem:[%s445 + $0x1e0] sm:$0xff]
        %v1542 = vld [vmem:[%s445 + $0x1e8] sm:$0xff]
        %v1543 = vld [vmem:[%s445 + $0x1f0] sm:$0xff]
        %v1544 = vld [vmem:[%s445 + $0x1f8] sm:$0xff]
        %s1545 = smul.u32 %s1480, 4
        %s1546 = smul.addr %s1545, 8
        %s1547 = scalar_lea.vmem [#allocation2], %s1546
        %v1548 = vld [vmem:[%s1547] sm:$0xff]
        %v1549 = vld [vmem:[%s1547 + $0x8] sm:$0xff]
        %v1550 = vld [vmem:[%s1547 + $0x10] sm:$0xff]
        %v1551 = vld [vmem:[%s1547 + $0x18] sm:$0xff]
        %1552 = vmatpush.msra.mxu0 %v1541
        %1553 = vmatpush.msra.mxu0 %v1537
        %1554 = vmatpush.msra.mxu0 %v1533
        %1555 = vmatpush.msra.mxu0 %v1529
        %1556 = vmatpush.msra.mxu0 %v1525
        %1557 = vmatpush.msra.mxu0 %v1521
        %1558 = vmatpush.msra.mxu0 %v1517
        %1559 = vmatpush.msra.mxu0 %v1513
        %1560 = vmatpush.msra.mxu0 %v1509
        %1561 = vmatpush.msra.mxu0 %v1505
        %1562 = vmatpush.msra.mxu0 %v1501
        %1563 = vmatpush.msra.mxu0 %v1497
        %1564 = vmatpush.msra.mxu0 %v1493
        %1565 = vmatpush.msra.mxu0 %v1489
        %1566 = vmatpush.msra.mxu0 %v1485
        %1567 = vmatpush.msra.mxu0 %v1481
        %1568 = vmatmul.f32.gmra.mxu0 %v1476
        %v1569 = vpop.f32.mrf.mxu0
        %v1570 = vadd.f32 %v1548, %v1569
        %1571 = vdwg.mxu0
        %1572 = vmatpush.msra.mxu0 %v1542
        %1573 = vmatpush.msra.mxu0 %v1538
        %1574 = vmatpush.msra.mxu0 %v1534
        %1575 = vmatpush.msra.mxu0 %v1530
        %1576 = vmatpush.msra.mxu0 %v1526
        %1577 = vmatpush.msra.mxu0 %v1522
        %1578 = vmatpush.msra.mxu0 %v1518
        %1579 = vmatpush.msra.mxu0 %v1514
        %1580 = vmatpush.msra.mxu0 %v1510
        %1581 = vmatpush.msra.mxu0 %v1506
        %1582 = vmatpush.msra.mxu0 %v1502
        %1583 = vmatpush.msra.mxu0 %v1498
        %1584 = vmatpush.msra.mxu0 %v1494
        %1585 = vmatpush.msra.mxu0 %v1490
        %1586 = vmatpush.msra.mxu0 %v1486
        %1587 = vmatpush.msra.mxu0 %v1482
        %1588 = vmatmul.f32.gmra.mxu0 %v1476
        %v1589 = vpop.f32.mrf.mxu0
        %v1590 = vadd.f32 %v1549, %v1589
        %1591 = vdwg.mxu0
        %1592 = vmatpush.msra.mxu0 %v1543
        %1593 = vmatpush.msra.mxu0 %v1539
        %1594 = vmatpush.msra.mxu0 %v1535
        %1595 = vmatpush.msra.mxu0 %v1531
        %1596 = vmatpush.msra.mxu0 %v1527
        %1597 = vmatpush.msra.mxu0 %v1523
        %1598 = vmatpush.msra.mxu0 %v1519
        %1599 = vmatpush.msra.mxu0 %v1515
        %1600 = vmatpush.msra.mxu0 %v1511
        %1601 = vmatpush.msra.mxu0 %v1507
        %1602 = vmatpush.msra.mxu0 %v1503
        %1603 = vmatpush.msra.mxu0 %v1499
        %1604 = vmatpush.msra.mxu0 %v1495
        %1605 = vmatpush.msra.mxu0 %v1491
        %1606 = vmatpush.msra.mxu0 %v1487
        %1607 = vmatpush.msra.mxu0 %v1483
        %1608 = vmatmul.f32.gmra.mxu0 %v1476
        %v1609 = vpop.f32.mrf.mxu0
        %v1610 = vadd.f32 %v1550, %v1609
        %1611 = vdwg.mxu0
        %1612 = vmatpush.msra.mxu0 %v1544
        %1613 = vmatpush.msra.mxu0 %v1540
        %1614 = vmatpush.msra.mxu0 %v1536
        %1615 = vmatpush.msra.mxu0 %v1532
        %1616 = vmatpush.msra.mxu0 %v1528
        %1617 = vmatpush.msra.mxu0 %v1524
        %1618 = vmatpush.msra.mxu0 %v1520
        %1619 = vmatpush.msra.mxu0 %v1516
        %1620 = vmatpush.msra.mxu0 %v1512
        %1621 = vmatpush.msra.mxu0 %v1508
        %1622 = vmatpush.msra.mxu0 %v1504
        %1623 = vmatpush.msra.mxu0 %v1500
        %1624 = vmatpush.msra.mxu0 %v1496
        %1625 = vmatpush.msra.mxu0 %v1492
        %1626 = vmatpush.msra.mxu0 %v1488
        %1627 = vmatpush.msra.mxu0 %v1484
        %1628 = vmatmul.f32.gmra.mxu0 %v1476
        %v1629 = vpop.f32.mrf.mxu0
        %v1630 = vadd.f32 %v1551, %v1629
        %1631 = vdwg.mxu0
        %v1632 = vmul.f32 %v1570, 0.5
        %v1633 = vtanh.pop %v1632
        %v1634 = vmul.f32 %v1633, 0.5
        %v1635 = vadd.f32 %v1634, 0.5
        %v1636 = vmul.f32 %v1590, 0.5
        %v1637 = vtanh.pop %v1636
        %v1638 = vmul.f32 %v1637, 0.5
        %v1639 = vadd.f32 %v1638, 0.5
        %v1640 = vtanh.pop %v1610
        %v1641 = vmul.f32 %v1630, 0.5
        %v1642 = vtanh.pop %v1641
        %v1643 = vmul.f32 %v1642, 0.5
        %v1644 = vadd.f32 %v1643, 0.5
        %v1645 = vmul.f32 %v1639, %v1474
        %v1646 = vmul.f32 %v1635, %v1640
        %v1647 = vadd.f32 %v1645, %v1646
        %v1648 = vtanh.pop %v1647
        %v1649 = vmul.f32 %v1644, %v1648
        %s1650 = smul.u32 %s1480, 8
        %s1651 = scalar_lea.vmem %s409, %s1650 [#allocation5]
        %1652 = vst [vmem:[%s1651] sm:$0xff] %v1649
        %s1653 = smul.u32 %s24, 4294967293
        %s1654 = sadd.s32 %s1653, 5
        %v1655 = vld [vmem:[%s445] sm:$0xff]
        %v1656 = vld [vmem:[%s445 + $0x8] sm:$0xff]
        %v1657 = vld [vmem:[%s445 + $0x10] sm:$0xff]
        %v1658 = vld [vmem:[%s445 + $0x18] sm:$0xff]
        %v1659 = vld [vmem:[%s445 + $0x20] sm:$0xff]
        %v1660 = vld [vmem:[%s445 + $0x28] sm:$0xff]
        %v1661 = vld [vmem:[%s445 + $0x30] sm:$0xff]
        %v1662 = vld [vmem:[%s445 + $0x38] sm:$0xff]
        %v1663 = vld [vmem:[%s445 + $0x40] sm:$0xff]
        %v1664 = vld [vmem:[%s445 + $0x48] sm:$0xff]
        %v1665 = vld [vmem:[%s445 + $0x50] sm:$0xff]
        %v1666 = vld [vmem:[%s445 + $0x58] sm:$0xff]
        %v1667 = vld [vmem:[%s445 + $0x60] sm:$0xff]
        %v1668 = vld [vmem:[%s445 + $0x68] sm:$0xff]
        %v1669 = vld [vmem:[%s445 + $0x70] sm:$0xff]
        %v1670 = vld [vmem:[%s445 + $0x78] sm:$0xff]
        %v1671 = vld [vmem:[%s445 + $0x80] sm:$0xff]
        %v1672 = vld [vmem:[%s445 + $0x88] sm:$0xff]
        %v1673 = vld [vmem:[%s445 + $0x90] sm:$0xff]
        %v1674 = vld [vmem:[%s445 + $0x98] sm:$0xff]
        %v1675 = vld [vmem:[%s445 + $0xa0] sm:$0xff]
        %v1676 = vld [vmem:[%s445 + $0xa8] sm:$0xff]
        %v1677 = vld [vmem:[%s445 + $0xb0] sm:$0xff]
        %v1678 = vld [vmem:[%s445 + $0xb8] sm:$0xff]
        %v1679 = vld [vmem:[%s445 + $0xc0] sm:$0xff]
        %v1680 = vld [vmem:[%s445 + $0xc8] sm:$0xff]
        %v1681 = vld [vmem:[%s445 + $0xd0] sm:$0xff]
        %v1682 = vld [vmem:[%s445 + $0xd8] sm:$0xff]
        %v1683 = vld [vmem:[%s445 + $0xe0] sm:$0xff]
        %v1684 = vld [vmem:[%s445 + $0xe8] sm:$0xff]
        %v1685 = vld [vmem:[%s445 + $0xf0] sm:$0xff]
        %v1686 = vld [vmem:[%s445 + $0xf8] sm:$0xff]
        %v1687 = vld [vmem:[%s445 + $0x100] sm:$0xff]
        %v1688 = vld [vmem:[%s445 + $0x108] sm:$0xff]
        %v1689 = vld [vmem:[%s445 + $0x110] sm:$0xff]
        %v1690 = vld [vmem:[%s445 + $0x118] sm:$0xff]
        %v1691 = vld [vmem:[%s445 + $0x120] sm:$0xff]
        %v1692 = vld [vmem:[%s445 + $0x128] sm:$0xff]
        %v1693 = vld [vmem:[%s445 + $0x130] sm:$0xff]
        %v1694 = vld [vmem:[%s445 + $0x138] sm:$0xff]
        %v1695 = vld [vmem:[%s445 + $0x140] sm:$0xff]
        %v1696 = vld [vmem:[%s445 + $0x148] sm:$0xff]
        %v1697 = vld [vmem:[%s445 + $0x150] sm:$0xff]
        %v1698 = vld [vmem:[%s445 + $0x158] sm:$0xff]
        %v1699 = vld [vmem:[%s445 + $0x160] sm:$0xff]
        %v1700 = vld [vmem:[%s445 + $0x168] sm:$0xff]
        %v1701 = vld [vmem:[%s445 + $0x170] sm:$0xff]
        %v1702 = vld [vmem:[%s445 + $0x178] sm:$0xff]
        %v1703 = vld [vmem:[%s445 + $0x180] sm:$0xff]
        %v1704 = vld [vmem:[%s445 + $0x188] sm:$0xff]
        %v1705 = vld [vmem:[%s445 + $0x190] sm:$0xff]
        %v1706 = vld [vmem:[%s445 + $0x198] sm:$0xff]
        %v1707 = vld [vmem:[%s445 + $0x1a0] sm:$0xff]
        %v1708 = vld [vmem:[%s445 + $0x1a8] sm:$0xff]
        %v1709 = vld [vmem:[%s445 + $0x1b0] sm:$0xff]
        %v1710 = vld [vmem:[%s445 + $0x1b8] sm:$0xff]
        %v1711 = vld [vmem:[%s445 + $0x1c0] sm:$0xff]
        %v1712 = vld [vmem:[%s445 + $0x1c8] sm:$0xff]
        %v1713 = vld [vmem:[%s445 + $0x1d0] sm:$0xff]
        %v1714 = vld [vmem:[%s445 + $0x1d8] sm:$0xff]
        %v1715 = vld [vmem:[%s445 + $0x1e0] sm:$0xff]
        %v1716 = vld [vmem:[%s445 + $0x1e8] sm:$0xff]
        %v1717 = vld [vmem:[%s445 + $0x1f0] sm:$0xff]
        %v1718 = vld [vmem:[%s445 + $0x1f8] sm:$0xff]
        %s1719 = smul.u32 %s1654, 4
        %s1720 = smul.addr %s1719, 8
        %s1721 = scalar_lea.vmem [#allocation2], %s1720
        %v1722 = vld [vmem:[%s1721] sm:$0xff]
        %v1723 = vld [vmem:[%s1721 + $0x8] sm:$0xff]
        %v1724 = vld [vmem:[%s1721 + $0x10] sm:$0xff]
        %v1725 = vld [vmem:[%s1721 + $0x18] sm:$0xff]
        %1726 = vmatpush.msra.mxu0 %v1715
        %1727 = vmatpush.msra.mxu0 %v1711
        %1728 = vmatpush.msra.mxu0 %v1707
        %1729 = vmatpush.msra.mxu0 %v1703
        %1730 = vmatpush.msra.mxu0 %v1699
        %1731 = vmatpush.msra.mxu0 %v1695
        %1732 = vmatpush.msra.mxu0 %v1691
        %1733 = vmatpush.msra.mxu0 %v1687
        %1734 = vmatpush.msra.mxu0 %v1683
        %1735 = vmatpush.msra.mxu0 %v1679
        %1736 = vmatpush.msra.mxu0 %v1675
        %1737 = vmatpush.msra.mxu0 %v1671
        %1738 = vmatpush.msra.mxu0 %v1667
        %1739 = vmatpush.msra.mxu0 %v1663
        %1740 = vmatpush.msra.mxu0 %v1659
        %1741 = vmatpush.msra.mxu0 %v1655
        %1742 = vmatmul.f32.gmra.mxu0 %v1649
        %v1743 = vpop.f32.mrf.mxu0
        %v1744 = vadd.f32 %v1722, %v1743
        %1745 = vdwg.mxu0
        %1746 = vmatpush.msra.mxu0 %v1716
        %1747 = vmatpush.msra.mxu0 %v1712
        %1748 = vmatpush.msra.mxu0 %v1708
        %1749 = vmatpush.msra.mxu0 %v1704
        %1750 = vmatpush.msra.mxu0 %v1700
        %1751 = vmatpush.msra.mxu0 %v1696
        %1752 = vmatpush.msra.mxu0 %v1692
        %1753 = vmatpush.msra.mxu0 %v1688
        %1754 = vmatpush.msra.mxu0 %v1684
        %1755 = vmatpush.msra.mxu0 %v1680
        %1756 = vmatpush.msra.mxu0 %v1676
        %1757 = vmatpush.msra.mxu0 %v1672
        %1758 = vmatpush.msra.mxu0 %v1668
        %1759 = vmatpush.msra.mxu0 %v1664
        %1760 = vmatpush.msra.mxu0 %v1660
        %1761 = vmatpush.msra.mxu0 %v1656
        %1762 = vmatmul.f32.gmra.mxu0 %v1649
        %v1763 = vpop.f32.mrf.mxu0
        %v1764 = vadd.f32 %v1723, %v1763
        %1765 = vdwg.mxu0
        %1766 = vmatpush.msra.mxu0 %v1717
        %1767 = vmatpush.msra.mxu0 %v1713
        %1768 = vmatpush.msra.mxu0 %v1709
        %1769 = vmatpush.msra.mxu0 %v1705
        %1770 = vmatpush.msra.mxu0 %v1701
        %1771 = vmatpush.msra.mxu0 %v1697
        %1772 = vmatpush.msra.mxu0 %v1693
        %1773 = vmatpush.msra.mxu0 %v1689
        %1774 = vmatpush.msra.mxu0 %v1685
        %1775 = vmatpush.msra.mxu0 %v1681
        %1776 = vmatpush.msra.mxu0 %v1677
        %1777 = vmatpush.msra.mxu0 %v1673
        %1778 = vmatpush.msra.mxu0 %v1669
        %1779 = vmatpush.msra.mxu0 %v1665
        %1780 = vmatpush.msra.mxu0 %v1661
        %1781 = vmatpush.msra.mxu0 %v1657
        %1782 = vmatmul.f32.gmra.mxu0 %v1649
        %v1783 = vpop.f32.mrf.mxu0
        %v1784 = vadd.f32 %v1724, %v1783
        %1785 = vdwg.mxu0
        %1786 = vmatpush.msra.mxu0 %v1718
        %1787 = vmatpush.msra.mxu0 %v1714
        %1788 = vmatpush.msra.mxu0 %v1710
        %1789 = vmatpush.msra.mxu0 %v1706
        %1790 = vmatpush.msra.mxu0 %v1702
        %1791 = vmatpush.msra.mxu0 %v1698
        %1792 = vmatpush.msra.mxu0 %v1694
        %1793 = vmatpush.msra.mxu0 %v1690
        %1794 = vmatpush.msra.mxu0 %v1686
        %1795 = vmatpush.msra.mxu0 %v1682
        %1796 = vmatpush.msra.mxu0 %v1678
        %1797 = vmatpush.msra.mxu0 %v1674
        %1798 = vmatpush.msra.mxu0 %v1670
        %1799 = vmatpush.msra.mxu0 %v1666
        %1800 = vmatpush.msra.mxu0 %v1662
        %1801 = vmatpush.msra.mxu0 %v1658
        %1802 = vmatmul.f32.gmra.mxu0 %v1649
        %v1803 = vpop.f32.mrf.mxu0
        %v1804 = vadd.f32 %v1725, %v1803
        %1805 = vdwg.mxu0
        %v1806 = vmul.f32 %v1744, 0.5
        %v1807 = vtanh.pop %v1806
        %v1808 = vmul.f32 %v1807, 0.5
        %v1809 = vadd.f32 %v1808, 0.5
        %v1810 = vmul.f32 %v1764, 0.5
        %v1811 = vtanh.pop %v1810
        %v1812 = vmul.f32 %v1811, 0.5
        %v1813 = vadd.f32 %v1812, 0.5
        %v1814 = vtanh.pop %v1784
        %v1815 = vmul.f32 %v1804, 0.5
        %v1816 = vtanh.pop %v1815
        %v1817 = vmul.f32 %v1816, 0.5
        %v1818 = vadd.f32 %v1817, 0.5
        %v1819 = vmul.f32 %v1813, %v1647
        %v1820 = vmul.f32 %v1809, %v1814
        %v1821 = vadd.f32 %v1819, %v1820
        %v1822 = vtanh.pop %v1821
        %v1823 = vmul.f32 %v1818, %v1822
        %s1824 = smul.u32 %s1654, 8
        %s1825 = scalar_lea.vmem %s409, %s1824 [#allocation5]
        %1826 = vst [vmem:[%s1825] sm:$0xff] %v1823
        %s1827 = smul.u32 %s24, 4294967291
        %s1828 = sadd.s32 %s1827, 6
        %v1829 = vld [vmem:[%s445] sm:$0xff]
        %v1830 = vld [vmem:[%s445 + $0x8] sm:$0xff]
        %v1831 = vld [vmem:[%s445 + $0x10] sm:$0xff]
        %v1832 = vld [vmem:[%s445 + $0x18] sm:$0xff]
        %v1833 = vld [vmem:[%s445 + $0x20] sm:$0xff]
        %v1834 = vld [vmem:[%s445 + $0x28] sm:$0xff]
        %v1835 = vld [vmem:[%s445 + $0x30] sm:$0xff]
        %v1836 = vld [vmem:[%s445 + $0x38] sm:$0xff]
        %v1837 = vld [vmem:[%s445 + $0x40] sm:$0xff]
        %v1838 = vld [vmem:[%s445 + $0x48] sm:$0xff]
        %v1839 = vld [vmem:[%s445 + $0x50] sm:$0xff]
        %v1840 = vld [vmem:[%s445 + $0x58] sm:$0xff]
        %v1841 = vld [vmem:[%s445 + $0x60] sm:$0xff]
        %v1842 = vld [vmem:[%s445 + $0x68] sm:$0xff]
        %v1843 = vld [vmem:[%s445 + $0x70] sm:$0xff]
        %v1844 = vld [vmem:[%s445 + $0x78] sm:$0xff]
        %v1845 = vld [vmem:[%s445 + $0x80] sm:$0xff]
        %v1846 = vld [vmem:[%s445 + $0x88] sm:$0xff]
        %v1847 = vld [vmem:[%s445 + $0x90] sm:$0xff]
        %v1848 = vld [vmem:[%s445 + $0x98] sm:$0xff]
        %v1849 = vld [vmem:[%s445 + $0xa0] sm:$0xff]
        %v1850 = vld [vmem:[%s445 + $0xa8] sm:$0xff]
        %v1851 = vld [vmem:[%s445 + $0xb0] sm:$0xff]
        %v1852 = vld [vmem:[%s445 + $0xb8] sm:$0xff]
        %v1853 = vld [vmem:[%s445 + $0xc0] sm:$0xff]
        %v1854 = vld [vmem:[%s445 + $0xc8] sm:$0xff]
        %v1855 = vld [vmem:[%s445 + $0xd0] sm:$0xff]
        %v1856 = vld [vmem:[%s445 + $0xd8] sm:$0xff]
        %v1857 = vld [vmem:[%s445 + $0xe0] sm:$0xff]
        %v1858 = vld [vmem:[%s445 + $0xe8] sm:$0xff]
        %v1859 = vld [vmem:[%s445 + $0xf0] sm:$0xff]
        %v1860 = vld [vmem:[%s445 + $0xf8] sm:$0xff]
        %v1861 = vld [vmem:[%s445 + $0x100] sm:$0xff]
        %v1862 = vld [vmem:[%s445 + $0x108] sm:$0xff]
        %v1863 = vld [vmem:[%s445 + $0x110] sm:$0xff]
        %v1864 = vld [vmem:[%s445 + $0x118] sm:$0xff]
        %v1865 = vld [vmem:[%s445 + $0x120] sm:$0xff]
        %v1866 = vld [vmem:[%s445 + $0x128] sm:$0xff]
        %v1867 = vld [vmem:[%s445 + $0x130] sm:$0xff]
        %v1868 = vld [vmem:[%s445 + $0x138] sm:$0xff]
        %v1869 = vld [vmem:[%s445 + $0x140] sm:$0xff]
        %v1870 = vld [vmem:[%s445 + $0x148] sm:$0xff]
        %v1871 = vld [vmem:[%s445 + $0x150] sm:$0xff]
        %v1872 = vld [vmem:[%s445 + $0x158] sm:$0xff]
        %v1873 = vld [vmem:[%s445 + $0x160] sm:$0xff]
        %v1874 = vld [vmem:[%s445 + $0x168] sm:$0xff]
        %v1875 = vld [vmem:[%s445 + $0x170] sm:$0xff]
        %v1876 = vld [vmem:[%s445 + $0x178] sm:$0xff]
        %v1877 = vld [vmem:[%s445 + $0x180] sm:$0xff]
        %v1878 = vld [vmem:[%s445 + $0x188] sm:$0xff]
        %v1879 = vld [vmem:[%s445 + $0x190] sm:$0xff]
        %v1880 = vld [vmem:[%s445 + $0x198] sm:$0xff]
        %v1881 = vld [vmem:[%s445 + $0x1a0] sm:$0xff]
        %v1882 = vld [vmem:[%s445 + $0x1a8] sm:$0xff]
        %v1883 = vld [vmem:[%s445 + $0x1b0] sm:$0xff]
        %v1884 = vld [vmem:[%s445 + $0x1b8] sm:$0xff]
        %v1885 = vld [vmem:[%s445 + $0x1c0] sm:$0xff]
        %v1886 = vld [vmem:[%s445 + $0x1c8] sm:$0xff]
        %v1887 = vld [vmem:[%s445 + $0x1d0] sm:$0xff]
        %v1888 = vld [vmem:[%s445 + $0x1d8] sm:$0xff]
        %v1889 = vld [vmem:[%s445 + $0x1e0] sm:$0xff]
        %v1890 = vld [vmem:[%s445 + $0x1e8] sm:$0xff]
        %v1891 = vld [vmem:[%s445 + $0x1f0] sm:$0xff]
        %v1892 = vld [vmem:[%s445 + $0x1f8] sm:$0xff]
        %s1893 = smul.u32 %s1828, 4
        %s1894 = smul.addr %s1893, 8
        %s1895 = scalar_lea.vmem [#allocation2], %s1894
        %v1896 = vld [vmem:[%s1895] sm:$0xff]
        %v1897 = vld [vmem:[%s1895 + $0x8] sm:$0xff]
        %v1898 = vld [vmem:[%s1895 + $0x10] sm:$0xff]
        %v1899 = vld [vmem:[%s1895 + $0x18] sm:$0xff]
        %1900 = vmatpush.msra.mxu0 %v1889
        %1901 = vmatpush.msra.mxu0 %v1885
        %1902 = vmatpush.msra.mxu0 %v1881
        %1903 = vmatpush.msra.mxu0 %v1877
        %1904 = vmatpush.msra.mxu0 %v1873
        %1905 = vmatpush.msra.mxu0 %v1869
        %1906 = vmatpush.msra.mxu0 %v1865
        %1907 = vmatpush.msra.mxu0 %v1861
        %1908 = vmatpush.msra.mxu0 %v1857
        %1909 = vmatpush.msra.mxu0 %v1853
        %1910 = vmatpush.msra.mxu0 %v1849
        %1911 = vmatpush.msra.mxu0 %v1845
        %1912 = vmatpush.msra.mxu0 %v1841
        %1913 = vmatpush.msra.mxu0 %v1837
        %1914 = vmatpush.msra.mxu0 %v1833
        %1915 = vmatpush.msra.mxu0 %v1829
        %1916 = vmatmul.f32.gmra.mxu0 %v1823
        %v1917 = vpop.f32.mrf.mxu0
        %v1918 = vadd.f32 %v1896, %v1917
        %1919 = vdwg.mxu0
        %1920 = vmatpush.msra.mxu0 %v1890
        %1921 = vmatpush.msra.mxu0 %v1886
        %1922 = vmatpush.msra.mxu0 %v1882
        %1923 = vmatpush.msra.mxu0 %v1878
        %1924 = vmatpush.msra.mxu0 %v1874
        %1925 = vmatpush.msra.mxu0 %v1870
        %1926 = vmatpush.msra.mxu0 %v1866
        %1927 = vmatpush.msra.mxu0 %v1862
        %1928 = vmatpush.msra.mxu0 %v1858
        %1929 = vmatpush.msra.mxu0 %v1854
        %1930 = vmatpush.msra.mxu0 %v1850
        %1931 = vmatpush.msra.mxu0 %v1846
        %1932 = vmatpush.msra.mxu0 %v1842
        %1933 = vmatpush.msra.mxu0 %v1838
        %1934 = vmatpush.msra.mxu0 %v1834
        %1935 = vmatpush.msra.mxu0 %v1830
        %1936 = vmatmul.f32.gmra.mxu0 %v1823
        %v1937 = vpop.f32.mrf.mxu0
        %v1938 = vadd.f32 %v1897, %v1937
        %1939 = vdwg.mxu0
        %1940 = vmatpush.msra.mxu0 %v1891
        %1941 = vmatpush.msra.mxu0 %v1887
        %1942 = vmatpush.msra.mxu0 %v1883
        %1943 = vmatpush.msra.mxu0 %v1879
        %1944 = vmatpush.msra.mxu0 %v1875
        %1945 = vmatpush.msra.mxu0 %v1871
        %1946 = vmatpush.msra.mxu0 %v1867
        %1947 = vmatpush.msra.mxu0 %v1863
        %1948 = vmatpush.msra.mxu0 %v1859
        %1949 = vmatpush.msra.mxu0 %v1855
        %1950 = vmatpush.msra.mxu0 %v1851
        %1951 = vmatpush.msra.mxu0 %v1847
        %1952 = vmatpush.msra.mxu0 %v1843
        %1953 = vmatpush.msra.mxu0 %v1839
        %1954 = vmatpush.msra.mxu0 %v1835
        %1955 = vmatpush.msra.mxu0 %v1831
        %1956 = vmatmul.f32.gmra.mxu0 %v1823
        %v1957 = vpop.f32.mrf.mxu0
        %v1958 = vadd.f32 %v1898, %v1957
        %1959 = vdwg.mxu0
        %1960 = vmatpush.msra.mxu0 %v1892
        %1961 = vmatpush.msra.mxu0 %v1888
        %1962 = vmatpush.msra.mxu0 %v1884
        %1963 = vmatpush.msra.mxu0 %v1880
        %1964 = vmatpush.msra.mxu0 %v1876
        %1965 = vmatpush.msra.mxu0 %v1872
        %1966 = vmatpush.msra.mxu0 %v1868
        %1967 = vmatpush.msra.mxu0 %v1864
        %1968 = vmatpush.msra.mxu0 %v1860
        %1969 = vmatpush.msra.mxu0 %v1856
        %1970 = vmatpush.msra.mxu0 %v1852
        %1971 = vmatpush.msra.mxu0 %v1848
        %1972 = vmatpush.msra.mxu0 %v1844
        %1973 = vmatpush.msra.mxu0 %v1840
        %1974 = vmatpush.msra.mxu0 %v1836
        %1975 = vmatpush.msra.mxu0 %v1832
        %1976 = vmatmul.f32.gmra.mxu0 %v1823
        %v1977 = vpop.f32.mrf.mxu0
        %v1978 = vadd.f32 %v1899, %v1977
        %1979 = vdwg.mxu0
        %v1980 = vmul.f32 %v1918, 0.5
        %v1981 = vtanh.pop %v1980
        %v1982 = vmul.f32 %v1981, 0.5
        %v1983 = vadd.f32 %v1982, 0.5
        %v1984 = vmul.f32 %v1938, 0.5
        %v1985 = vtanh.pop %v1984
        %v1986 = vmul.f32 %v1985, 0.5
        %v1987 = vadd.f32 %v1986, 0.5
        %v1988 = vtanh.pop %v1958
        %v1989 = vmul.f32 %v1978, 0.5
        %v1990 = vtanh.pop %v1989
        %v1991 = vmul.f32 %v1990, 0.5
        %v1992 = vadd.f32 %v1991, 0.5
        %v1993 = vmul.f32 %v1987, %v1821
        %v1994 = vmul.f32 %v1983, %v1988
        %v1995 = vadd.f32 %v1993, %v1994
        %v1996 = vtanh.pop %v1995
        %v1997 = vmul.f32 %v1992, %v1996
        %s1998 = smul.u32 %s1828, 8
        %s1999 = scalar_lea.vmem %s409, %s1998 [#allocation5]
        %2000 = vst [vmem:[%s1999] sm:$0xff] %v1997
        %s2001 = smul.u32 %s24, 4294967289
        %s2002 = sadd.s32 %s2001, 7
        %v2003 = vld [vmem:[%s445] sm:$0xff]
        %v2004 = vld [vmem:[%s445 + $0x8] sm:$0xff]
        %v2005 = vld [vmem:[%s445 + $0x10] sm:$0xff]
        %v2006 = vld [vmem:[%s445 + $0x18] sm:$0xff]
        %v2007 = vld [vmem:[%s445 + $0x20] sm:$0xff]
        %v2008 = vld [vmem:[%s445 + $0x28] sm:$0xff]
        %v2009 = vld [vmem:[%s445 + $0x30] sm:$0xff]
        %v2010 = vld [vmem:[%s445 + $0x38] sm:$0xff]
        %v2011 = vld [vmem:[%s445 + $0x40] sm:$0xff]
        %v2012 = vld [vmem:[%s445 + $0x48] sm:$0xff]
        %v2013 = vld [vmem:[%s445 + $0x50] sm:$0xff]
        %v2014 = vld [vmem:[%s445 + $0x58] sm:$0xff]
        %v2015 = vld [vmem:[%s445 + $0x60] sm:$0xff]
        %v2016 = vld [vmem:[%s445 + $0x68] sm:$0xff]
        %v2017 = vld [vmem:[%s445 + $0x70] sm:$0xff]
        %v2018 = vld [vmem:[%s445 + $0x78] sm:$0xff]
        %v2019 = vld [vmem:[%s445 + $0x80] sm:$0xff]
        %v2020 = vld [vmem:[%s445 + $0x88] sm:$0xff]
        %v2021 = vld [vmem:[%s445 + $0x90] sm:$0xff]
        %v2022 = vld [vmem:[%s445 + $0x98] sm:$0xff]
        %v2023 = vld [vmem:[%s445 + $0xa0] sm:$0xff]
        %v2024 = vld [vmem:[%s445 + $0xa8] sm:$0xff]
        %v2025 = vld [vmem:[%s445 + $0xb0] sm:$0xff]
        %v2026 = vld [vmem:[%s445 + $0xb8] sm:$0xff]
        %v2027 = vld [vmem:[%s445 + $0xc0] sm:$0xff]
        %v2028 = vld [vmem:[%s445 + $0xc8] sm:$0xff]
        %v2029 = vld [vmem:[%s445 + $0xd0] sm:$0xff]
        %v2030 = vld [vmem:[%s445 + $0xd8] sm:$0xff]
        %v2031 = vld [vmem:[%s445 + $0xe0] sm:$0xff]
        %v2032 = vld [vmem:[%s445 + $0xe8] sm:$0xff]
        %v2033 = vld [vmem:[%s445 + $0xf0] sm:$0xff]
        %v2034 = vld [vmem:[%s445 + $0xf8] sm:$0xff]
        %v2035 = vld [vmem:[%s445 + $0x100] sm:$0xff]
        %v2036 = vld [vmem:[%s445 + $0x108] sm:$0xff]
        %v2037 = vld [vmem:[%s445 + $0x110] sm:$0xff]
        %v2038 = vld [vmem:[%s445 + $0x118] sm:$0xff]
        %v2039 = vld [vmem:[%s445 + $0x120] sm:$0xff]
        %v2040 = vld [vmem:[%s445 + $0x128] sm:$0xff]
        %v2041 = vld [vmem:[%s445 + $0x130] sm:$0xff]
        %v2042 = vld [vmem:[%s445 + $0x138] sm:$0xff]
        %v2043 = vld [vmem:[%s445 + $0x140] sm:$0xff]
        %v2044 = vld [vmem:[%s445 + $0x148] sm:$0xff]
        %v2045 = vld [vmem:[%s445 + $0x150] sm:$0xff]
        %v2046 = vld [vmem:[%s445 + $0x158] sm:$0xff]
        %v2047 = vld [vmem:[%s445 + $0x160] sm:$0xff]
        %v2048 = vld [vmem:[%s445 + $0x168] sm:$0xff]
        %v2049 = vld [vmem:[%s445 + $0x170] sm:$0xff]
        %v2050 = vld [vmem:[%s445 + $0x178] sm:$0xff]
        %v2051 = vld [vmem:[%s445 + $0x180] sm:$0xff]
        %v2052 = vld [vmem:[%s445 + $0x188] sm:$0xff]
        %v2053 = vld [vmem:[%s445 + $0x190] sm:$0xff]
        %v2054 = vld [vmem:[%s445 + $0x198] sm:$0xff]
        %v2055 = vld [vmem:[%s445 + $0x1a0] sm:$0xff]
        %v2056 = vld [vmem:[%s445 + $0x1a8] sm:$0xff]
        %v2057 = vld [vmem:[%s445 + $0x1b0] sm:$0xff]
        %v2058 = vld [vmem:[%s445 + $0x1b8] sm:$0xff]
        %v2059 = vld [vmem:[%s445 + $0x1c0] sm:$0xff]
        %v2060 = vld [vmem:[%s445 + $0x1c8] sm:$0xff]
        %v2061 = vld [vmem:[%s445 + $0x1d0] sm:$0xff]
        %v2062 = vld [vmem:[%s445 + $0x1d8] sm:$0xff]
        %v2063 = vld [vmem:[%s445 + $0x1e0] sm:$0xff]
        %v2064 = vld [vmem:[%s445 + $0x1e8] sm:$0xff]
        %v2065 = vld [vmem:[%s445 + $0x1f0] sm:$0xff]
        %v2066 = vld [vmem:[%s445 + $0x1f8] sm:$0xff]
        %s2067 = smul.u32 %s2002, 4
        %s2068 = smul.addr %s2067, 8
        %s2069 = scalar_lea.vmem [#allocation2], %s2068
        %v2070 = vld [vmem:[%s2069] sm:$0xff]
        %v2071 = vld [vmem:[%s2069 + $0x8] sm:$0xff]
        %v2072 = vld [vmem:[%s2069 + $0x10] sm:$0xff]
        %v2073 = vld [vmem:[%s2069 + $0x18] sm:$0xff]
        %2074 = vmatpush.msra.mxu0 %v2063
        %2075 = vmatpush.msra.mxu0 %v2059
        %2076 = vmatpush.msra.mxu0 %v2055
        %2077 = vmatpush.msra.mxu0 %v2051
        %2078 = vmatpush.msra.mxu0 %v2047
        %2079 = vmatpush.msra.mxu0 %v2043
        %2080 = vmatpush.msra.mxu0 %v2039
        %2081 = vmatpush.msra.mxu0 %v2035
        %2082 = vmatpush.msra.mxu0 %v2031
        %2083 = vmatpush.msra.mxu0 %v2027
        %2084 = vmatpush.msra.mxu0 %v2023
        %2085 = vmatpush.msra.mxu0 %v2019
        %2086 = vmatpush.msra.mxu0 %v2015
        %2087 = vmatpush.msra.mxu0 %v2011
        %2088 = vmatpush.msra.mxu0 %v2007
        %2089 = vmatpush.msra.mxu0 %v2003
        %2090 = vmatmul.f32.gmra.mxu0 %v1997
        %v2091 = vpop.f32.mrf.mxu0
        %v2092 = vadd.f32 %v2070, %v2091
        %2093 = vdwg.mxu0
        %2094 = vmatpush.msra.mxu0 %v2064
        %2095 = vmatpush.msra.mxu0 %v2060
        %2096 = vmatpush.msra.mxu0 %v2056
        %2097 = vmatpush.msra.mxu0 %v2052
        %2098 = vmatpush.msra.mxu0 %v2048
        %2099 = vmatpush.msra.mxu0 %v2044
        %2100 = vmatpush.msra.mxu0 %v2040
        %2101 = vmatpush.msra.mxu0 %v2036
        %2102 = vmatpush.msra.mxu0 %v2032
        %2103 = vmatpush.msra.mxu0 %v2028
        %2104 = vmatpush.msra.mxu0 %v2024
        %2105 = vmatpush.msra.mxu0 %v2020
        %2106 = vmatpush.msra.mxu0 %v2016
        %2107 = vmatpush.msra.mxu0 %v2012
        %2108 = vmatpush.msra.mxu0 %v2008
        %2109 = vmatpush.msra.mxu0 %v2004
        %2110 = vmatmul.f32.gmra.mxu0 %v1997
        %v2111 = vpop.f32.mrf.mxu0
        %v2112 = vadd.f32 %v2071, %v2111
        %2113 = vdwg.mxu0
        %2114 = vmatpush.msra.mxu0 %v2065
        %2115 = vmatpush.msra.mxu0 %v2061
        %2116 = vmatpush.msra.mxu0 %v2057
        %2117 = vmatpush.msra.mxu0 %v2053
        %2118 = vmatpush.msra.mxu0 %v2049
        %2119 = vmatpush.msra.mxu0 %v2045
        %2120 = vmatpush.msra.mxu0 %v2041
        %2121 = vmatpush.msra.mxu0 %v2037
        %2122 = vmatpush.msra.mxu0 %v2033
        %2123 = vmatpush.msra.mxu0 %v2029
        %2124 = vmatpush.msra.mxu0 %v2025
        %2125 = vmatpush.msra.mxu0 %v2021
        %2126 = vmatpush.msra.mxu0 %v2017
        %2127 = vmatpush.msra.mxu0 %v2013
        %2128 = vmatpush.msra.mxu0 %v2009
        %2129 = vmatpush.msra.mxu0 %v2005
        %2130 = vmatmul.f32.gmra.mxu0 %v1997
        %v2131 = vpop.f32.mrf.mxu0
        %v2132 = vadd.f32 %v2072, %v2131
        %2133 = vdwg.mxu0
        %2134 = vmatpush.msra.mxu0 %v2066
        %2135 = vmatpush.msra.mxu0 %v2062
        %2136 = vmatpush.msra.mxu0 %v2058
        %2137 = vmatpush.msra.mxu0 %v2054
        %2138 = vmatpush.msra.mxu0 %v2050
        %2139 = vmatpush.msra.mxu0 %v2046
        %2140 = vmatpush.msra.mxu0 %v2042
        %2141 = vmatpush.msra.mxu0 %v2038
        %2142 = vmatpush.msra.mxu0 %v2034
        %2143 = vmatpush.msra.mxu0 %v2030
        %2144 = vmatpush.msra.mxu0 %v2026
        %2145 = vmatpush.msra.mxu0 %v2022
        %2146 = vmatpush.msra.mxu0 %v2018
        %2147 = vmatpush.msra.mxu0 %v2014
        %2148 = vmatpush.msra.mxu0 %v2010
        %2149 = vmatpush.msra.mxu0 %v2006
        %2150 = vmatmul.f32.gmra.mxu0 %v1997
        %v2151 = vpop.f32.mrf.mxu0
        %v2152 = vadd.f32 %v2073, %v2151
        %2153 = vdwg.mxu0
        %v2154 = vmul.f32 %v2092, 0.5
        %v2155 = vtanh.pop %v2154
        %v2156 = vmul.f32 %v2155, 0.5
        %v2157 = vadd.f32 %v2156, 0.5
        %v2158 = vmul.f32 %v2112, 0.5
        %v2159 = vtanh.pop %v2158
        %v2160 = vmul.f32 %v2159, 0.5
        %v2161 = vadd.f32 %v2160, 0.5
        %v2162 = vtanh.pop %v2132
        %v2163 = vmul.f32 %v2152, 0.5
        %v2164 = vtanh.pop %v2163
        %v2165 = vmul.f32 %v2164, 0.5
        %v2166 = vadd.f32 %v2165, 0.5
        %v2167 = vmul.f32 %v2161, %v1995
        %v2168 = vmul.f32 %v2157, %v2162
        %v2169 = vadd.f32 %v2167, %v2168
        %v2170 = vtanh.pop %v2169
        %v2171 = vmul.f32 %v2166, %v2170
        %s2172 = smul.u32 %s2002, 8
        %s2173 = scalar_lea.vmem %s409, %s2172 [#allocation5]
        %2174 = vst [vmem:[%s2173] sm:$0xff] %v2171
        %2175 = vst [vmem:[#allocation3] sm:$0xff] %v2171
        %2176 = vst [vmem:[#allocation4] sm:$0xff] %v2169
        %2177 = vst [vmem:[%s467] sm:$0xff] %v2171
        %2178 = vst [vmem:[%s471] sm:$0xff] %v2169
        %s2179 = sand.u32 %s214, 1
        %s2180 = sand.u32 %s214, 1
        %s2181 = smul.addr %s2180, 64
        %s2182 = scalar_lea.vmem [#allocation5], %s2181
        %p2183 = scmp.lt.s32.totalorder %s24, 1
        %s2184 = scalar_select %p2183, %s24, 1
        %s2185 = smul.addr %s2184, 8
        %s2186 = scalar_lea.vmem %s7, %s2185
        %p2187 = scmp.lt.s32.totalorder %s24, 1
        %s2188 = scalar_select %p2187, %s24, 1
        %s2189 = smul.addr %s2188, 8
        %s2190 = scalar_lea.vmem %s8, %s2189
        // Predicated region
        $region49: #{lstm_frame_forward.2} parent=43 // pred_check
          %p2191 = pneg %p224
        $region50: #{lstm_frame_forward.2} parent=43 // pred_check_branch
          %2193 = sbr.rel (%p2191) target = $region52
        $region51: #{lstm_frame_forward.2} parent=43 // pred_region
          %s2194 = smul.u32 %s25, 2
          %s2195 = ssub.s32 0, %s2194
          %s2196 = smul.u32 %s24, %s2195
          %s2197 = sadd.s32 %s25, %s2196
          %s2198 = smul.u32 8, %s2197
          %s2199 = smul.addr %s2198, 2
          %s2200 = sadd.s32 %s24, %s2199
          %s2201 = smul.addr %s2200, 8
          %s2202 = scalar_lea.vmem %s6, %s2201
          // Predicated region
          $region53: #{lstm_frame_forward.2} parent=51 // pred_check
            _
          $region54: #{lstm_frame_forward.2} parent=51 // pred_check_branch
            %2204 = sbr.rel (0) target = $region56
          $region55: #{lstm_frame_forward.2} parent=51 // pred_region
            // Predicated region
            $region57: #{lstm_frame_forward.2} parent=55 // pred_check
              _
            $region58: #{lstm_frame_forward.2} parent=55 // pred_check_branch
              %2206 = sbr.rel (0) target = $region60
            $region59: #{lstm_frame_forward.2} parent=55 // pred_region
              // Predicated region
              $region72: #{lstm_frame_forward.2} parent=59 // pred_check
                _
              $region73: #{lstm_frame_forward.2} parent=59 // pred_check_branch
                %2236 = sbr.rel (0) target = $region75
              $region74: #{lstm_frame_forward.2} parent=59 // pred_region
                loop: start=0, step=1, limit=1
                $region76: #{lstm_frame_forward.2} parent=74 // loop_pre_header
                  _
                $region77: #{lstm_frame_forward.2} parent=74 // loop_header
                  %s2238 = sphi 0, %s2242
                  %p2239 = scmp.ge.s32.totalorder %s2238, 1
                  %s2243 = sphi %s2182, %s2182
                  %s2244 = sphi %s2202, %s2202
                $region78: #{lstm_frame_forward.2} parent=74 // loop_header_branch
                  %2241 = sbr.rel (%p2239) target = $region82
                $region79: #{lstm_frame_forward.2} parent=74 // loop_body
                  %v2245 = vld [vmem:[%s2243] sm:$0xff]
                  %2246 = vst [vmem:[%s2244] sm:$0xff] %v2245
                  %v2247 = vld [vmem:[%s2243 + $0x8] sm:$0xff]
                  %2248 = vst [vmem:[%s2244 + $0x10] sm:$0xff] %v2247
                  %v2249 = vld [vmem:[%s2243 + $0x10] sm:$0xff]
                  %2250 = vst [vmem:[%s2244 + $0x20] sm:$0xff] %v2249
                  %v2251 = vld [vmem:[%s2243 + $0x18] sm:$0xff]
                  %2252 = vst [vmem:[%s2244 + $0x30] sm:$0xff] %v2251
                  %v2253 = vld [vmem:[%s2243 + $0x20] sm:$0xff]
                  %2254 = vst [vmem:[%s2244 + $0x40] sm:$0xff] %v2253
                  %v2255 = vld [vmem:[%s2243 + $0x28] sm:$0xff]
                  %2256 = vst [vmem:[%s2244 + $0x50] sm:$0xff] %v2255
                  %v2257 = vld [vmem:[%s2243 + $0x30] sm:$0xff]
                  %2258 = vst [vmem:[%s2244 + $0x60] sm:$0xff] %v2257
                  %v2259 = vld [vmem:[%s2243 + $0x38] sm:$0xff]
                  %2260 = vst [vmem:[%s2244 + $0x70] sm:$0xff] %v2259
                $region80: #{lstm_frame_forward.2} parent=74 // loop_footer
                  %s2242 = sadd.s32 1, %s2238
                $region81: #{lstm_frame_forward.2} parent=74 // loop_footer_branch
                  %2237 = sbr.rel target = $region77
                $region82: #{lstm_frame_forward.2} parent=74 // loop_exit
                  _
              $region75: #{lstm_frame_forward.2} parent=59 // pred_fallthru
                _
              // Predicated region
              $region83: #{lstm_frame_forward.2} parent=59 // pred_check
                _
              $region84: #{lstm_frame_forward.2} parent=59 // pred_check_branch
                %2262 = sbr.rel target = $region86
              $region85: #{lstm_frame_forward.2} parent=59 // pred_region
                _
              $region86: #{lstm_frame_forward.2} parent=59 // pred_fallthru
                _
            $region60: #{lstm_frame_forward.2} parent=55 // pred_fallthru
              _
            // Predicated region
            $region61: #{lstm_frame_forward.2} parent=55 // pred_check
              _
            $region62: #{lstm_frame_forward.2} parent=55 // pred_check_branch
              %2208 = sbr.rel target = $region64
            $region63: #{lstm_frame_forward.2} parent=55 // pred_region
              %s2210 = ssub.s32 256, 1
              loop: start=0, step=1, limit=1
              $region65: #{lstm_frame_forward.2} parent=63 // loop_pre_header
                _
              $region66: #{lstm_frame_forward.2} parent=63 // loop_header
                %s2212 = sphi 0, %s2216
                %p2213 = scmp.ge.s32.totalorder %s2212, 1
                %s2217 = sphi %s2182, %s2182
                %s2218 = sphi %s2202, %s2202
              $region67: #{lstm_frame_forward.2} parent=63 // loop_header_branch
                %2215 = sbr.rel (%p2213) target = $region71
              $region68: #{lstm_frame_forward.2} parent=63 // loop_body
                %v2219 = vld [vmem:[%s2217] sm:%s2210]
                %2220 = vst [vmem:[%s2218] sm:%s2210] %v2219
                %v2221 = vld [vmem:[%s2217 + $0x8] sm:%s2210]
                %2222 = vst [vmem:[%s2218 + $0x10] sm:%s2210] %v2221
                %v2223 = vld [vmem:[%s2217 + $0x10] sm:%s2210]
                %2224 = vst [vmem:[%s2218 + $0x20] sm:%s2210] %v2223
                %v2225 = vld [vmem:[%s2217 + $0x18] sm:%s2210]
                %2226 = vst [vmem:[%s2218 + $0x30] sm:%s2210] %v2225
                %v2227 = vld [vmem:[%s2217 + $0x20] sm:%s2210]
                %2228 = vst [vmem:[%s2218 + $0x40] sm:%s2210] %v2227
                %v2229 = vld [vmem:[%s2217 + $0x28] sm:%s2210]
                %2230 = vst [vmem:[%s2218 + $0x50] sm:%s2210] %v2229
                %v2231 = vld [vmem:[%s2217 + $0x30] sm:%s2210]
                %2232 = vst [vmem:[%s2218 + $0x60] sm:%s2210] %v2231
                %v2233 = vld [vmem:[%s2217 + $0x38] sm:%s2210]
                %2234 = vst [vmem:[%s2218 + $0x70] sm:%s2210] %v2233
              $region69: #{lstm_frame_forward.2} parent=63 // loop_footer
                %s2216 = sadd.s32 1, %s2212
              $region70: #{lstm_frame_forward.2} parent=63 // loop_footer_branch
                %2211 = sbr.rel target = $region66
              $region71: #{lstm_frame_forward.2} parent=63 // loop_exit
                _
            $region64: #{lstm_frame_forward.2} parent=55 // pred_fallthru
              _
          $region56: #{lstm_frame_forward.2} parent=51 // pred_fallthru
            _
          %2263 = vnop
        $region52: #{lstm_frame_forward.2} parent=43 // pred_fallthru
          _
        // Predicated region
        $region87: #{lstm_frame_forward.2} parent=43 // pred_check
          %p2264 = pneg %p250
        $region88: #{lstm_frame_forward.2} parent=43 // pred_check_branch
          %2266 = sbr.rel (%p2264) target = $region90
        $region89: #{lstm_frame_forward.2} parent=43 // pred_region
          _
        $region90: #{lstm_frame_forward.2} parent=43 // pred_fallthru
          _
        // Predicated region
        $region91: #{lstm_frame_forward.2} parent=43 // pred_check
          %p2267 = pneg %p276
        $region92: #{lstm_frame_forward.2} parent=43 // pred_check_branch
          %2269 = sbr.rel (%p2267) target = $region94
        $region93: #{lstm_frame_forward.2} parent=43 // pred_region
          _
        $region94: #{lstm_frame_forward.2} parent=43 // pred_fallthru
          _
      $region44: #{lstm_frame_forward.2} parent=5 // pred_fallthru
        _
      %p2270 = scmp.le.s32.totalorder 2, %s15
      // Predicated region
      $region95: #{lstm_frame_forward.2} parent=5 // pred_check
        %p2271 = pneg %p2270
      $region96: #{lstm_frame_forward.2} parent=5 // pred_check_branch
        %2273 = sbr.rel (%p2271) target = $region98
      $region97: #{lstm_frame_forward.2} parent=5 // pred_region
        %s2274 = ssub.s32 %s15, 2
        // Predicated region
        $region99: #{lstm_frame_forward.2} parent=97 // pred_check
          %p2275 = pneg %p230
        $region100: #{lstm_frame_forward.2} parent=97 // pred_check_branch
          %2277 = sbr.rel (%p2275) target = $region102
        $region101: #{lstm_frame_forward.2} parent=97 // pred_region
          %s2278 = sand.u32 %s215, 1
          %s2279 = sand.u32 %s215, 1
          %s2280 = smul.addr %s2279, 64
          %s2281 = scalar_lea.vmem [#allocation5], %s2280
        $region102: #{lstm_frame_forward.2} parent=97 // pred_fallthru
          _
        // Predicated region
        $region103: #{lstm_frame_forward.2} parent=97 // pred_check
          %p2282 = pneg %p256
        $region104: #{lstm_frame_forward.2} parent=97 // pred_check_branch
          %2284 = sbr.rel (%p2282) target = $region106
        $region105: #{lstm_frame_forward.2} parent=97 // pred_region
          %p2285 = scmp.lt.s32.totalorder %s26, 1
          %s2286 = scalar_select %p2285, %s26, 1
          %s2287 = smul.addr %s2286, 8
          %s2288 = scalar_lea.vmem %s7, %s2287
        $region106: #{lstm_frame_forward.2} parent=97 // pred_fallthru
          _
        // Predicated region
        $region107: #{lstm_frame_forward.2} parent=97 // pred_check
          %p2289 = pneg %p282
        $region108: #{lstm_frame_forward.2} parent=97 // pred_check_branch
          %2291 = sbr.rel (%p2289) target = $region110
        $region109: #{lstm_frame_forward.2} parent=97 // pred_region
          %p2292 = scmp.lt.s32.totalorder %s26, 1
          %s2293 = scalar_select %p2292, %s26, 1
          %s2294 = smul.addr %s2293, 8
          %s2295 = scalar_lea.vmem %s8, %s2294
        $region110: #{lstm_frame_forward.2} parent=97 // pred_fallthru
          _
      $region98: #{lstm_frame_forward.2} parent=5 // pred_fallthru
        _
    $region6: #{lstm_frame_forward.2} parent=1 // loop_footer
      %s19 = sadd.s32 1, %s15
    $region7: #{lstm_frame_forward.2} parent=1 // loop_footer_branch
      %14 = sbr.rel target = $region3
    $region8: #{lstm_frame_forward.2} parent=1 // loop_exit
      _

</llo_original>
